<compile_context>
chip_gen: v6e
topology: v6e:2x2x1
jax: 0.10.0
libtpu: 0.0.40
codegen_flags: <defaults>
</compile_context>

<pallas_src>
import jax
import jax.numpy as jnp
from jax.experimental import pallas as pl
from jax.experimental.pallas import tpu as pltpu


BB = 8  # images per grid step (batch block)


# ----------------------------------------------------------------------------
# Fused kernel: [conv1 + BN + LReLU -> conv2 + BN + LReLU -> mean] x BB -> MLP
# ----------------------------------------------------------------------------
def _fused_forward_kernel(p1_ref, sp_ref, w1_ref, b1_ref, w2_ref, b2_ref,
                          w1f_ref, w2f_ref, o_ref, y1_s):
    # conv2 zero-padding border predicates, built once from iota (no operand).
    row = jax.lax.broadcasted_iota(jnp.int32, (576, 1), 0)
    # row // 24 via multiply-shift (exact for row < 576) -> avoids vector idiv.
    ho_t24 = jnp.right_shift(row * 2731, 16) * 24
    ok_h = row >= 24                    # conv2 output row ho != 0
    ok_w = (row - ho_t24) != 0          # conv2 output col wo != 0
    ok_hw = jnp.logical_and(ok_h, ok_w)

    def image_body(i, feats):
        # ---- conv1 (im2col matmul, /255 + BN folded into W) + LeakyReLU ----
        # rows of y1_s are ordered (ph, pw, ho, wo): 4 parity blocks of 576.
        for q in range(4):
            yq = jnp.dot(p1_ref[i, pl.ds(q * 576, 576), :], w1_ref[...],
                         preferred_element_type=jnp.float32) + b1_ref[...]
            y1_s[pl.ds(q * 576, 576), :] = jnp.maximum(yq, 0.2 * yq)

        # ---- conv2 (BN folded in W): build (576, 288) patch matrix from 9
        #      shifted row-slices of y1_s, then a single K=288 bf16 matmul ----
        pieces = []
        for kh in range(3):
            ph = 0 if kh == 1 else 1           # parity block holding 2*ho+kh-1
            dh = -1 if kh == 0 else 0          # shift within the parity block
            for kw in range(3):
                pw = 0 if kw == 1 else 1
                dw = -1 if kw == 0 else 0
                start = (ph * 2 + pw) * 576 + 24 * dh + dw   # static, >= 0
                s = y1_s[pl.ds(start, 576), :]               # (576, 32) f32
                if dh == -1 and dw == -1:                    # zero-pad border
                    s = jnp.where(ok_hw, s, 0.0)
                elif dh == -1:
                    s = jnp.where(ok_h, s, 0.0)
                elif dw == -1:
                    s = jnp.where(ok_w, s, 0.0)
                pieces.append(s.astype(jnp.bfloat16))
        p2 = jnp.concatenate(pieces, axis=1)                  # (576, 288) bf16
        y2 = jnp.dot(p2, w2_ref[...],
                     preferred_element_type=jnp.float32) + b2_ref[...]
        y2 = jnp.maximum(y2, 0.2 * y2)
        feat = jnp.mean(y2, axis=0, keepdims=True)            # (1, 64)

        # scatter-free update of row i of the per-step feature matrix
        sel = jax.lax.broadcasted_iota(jnp.int32, (BB, 1), 0) == i
        return jnp.where(sel, feat, feats)

    feats = jax.lax.fori_loop(0, BB, image_body,
                              jnp.zeros((BB, 64), jnp.float32))

    # ---- MLP head at M=BB: Linear -> (Dropout=identity) -> LReLU -> Linear --
    # sp_ref already holds sensors @ W1_sens + b1 (computed in XLA glue).
    h = jnp.dot(feats, w1f_ref[...],
                preferred_element_type=jnp.float32) + sp_ref[...]
    h = jnp.maximum(h, 0.2 * h)
    # fc2 is zero-padded to 128 output columns so the store is lane-dense;
    # bias / tanh / scale / clip happen on the (B, 2) slice in XLA.
    o_ref[...] = jnp.dot(h, w2f_ref[...], preferred_element_type=jnp.float32)


def fused_forward(p1, sens_proj, fp):
    """p1: (Bp, 2304, 32) bf16 conv1 patches, sens_proj: (Bp, 128) f32."""
    Bp = p1.shape[0]
    assert Bp % BB == 0
    return pl.pallas_call(
        _fused_forward_kernel,
        out_shape=jax.ShapeDtypeStruct((Bp, 128), jnp.float32),
        grid_spec=pltpu.PrefetchScalarGridSpec(
            num_scalar_prefetch=0,
            grid=(Bp // BB,),
            in_specs=[
                pl.BlockSpec((BB, 2304, 32), lambda b: (b, 0, 0)),  # conv1 patches (bf16)
                pl.BlockSpec((BB, 128), lambda b: (b, 0)),          # sensors@fc1_sens + b1
                pl.BlockSpec((32, 32), lambda b: (0, 0)),           # conv1 W (folded, bf16)
                pl.BlockSpec((1, 32), lambda b: (0, 0)),            # conv1 bias (folded)
                pl.BlockSpec((288, 64), lambda b: (0, 0)),          # conv2 W (folded, bf16)
                pl.BlockSpec((1, 64), lambda b: (0, 0)),            # conv2 bias (folded)
                pl.BlockSpec((64, 128), lambda b: (0, 0)),          # fc1 (feature rows)
                pl.BlockSpec((128, 128), lambda b: (0, 0)),         # fc2 (zero-padded)
            ],
            out_specs=pl.BlockSpec((BB, 128), lambda b: (b, 0)),
            scratch_shapes=[pltpu.VMEM((2304, 32), jnp.float32)],   # y1, VMEM resident
        ),
        compiler_params=pltpu.CompilerParams(
            dimension_semantics=("parallel",),
        ),
    )(p1, sens_proj, fp["conv1_w"], fp["conv1_b"], fp["conv2_w"], fp["conv2_b"],
      fp["fc1_w_feat"], fp["fc2_w_pad"])


# ----------------------------------------------------------------------------
# XLA glue: sensor crops, conv1 patch extraction, parameter folding
# ----------------------------------------------------------------------------
def extract_sensor_values(obs):
    """Matches ClassificationNetwork.extract_sensor_values (raw pixel values)."""
    B = obs.shape[0]
    speed = obs[:, 84:94, 12, 0].reshape(B, -1).sum(axis=1, keepdims=True) / 255.0
    abs_sensors = obs[:, 84:94, 18:25:2, 2].reshape(B, 10, 4).sum(axis=1) / 255.0
    steering = obs[:, 88, 38:58, 1].reshape(B, -1).sum(axis=1, keepdims=True) / 255.0
    gyro = obs[:, 88, 58:86, 0].reshape(B, -1).sum(axis=1, keepdims=True) / 255.0
    return jnp.concatenate([speed, abs_sensors, steering, gyro], axis=1)  # (B, 7)


def conv1_patches(obs):
    """obs (B, 96, 96, 3) -> conv1 im2col patches (B, 2304, 32) bf16.

    Rows are ordered (ph, pw, ho, wo) (spatial parity de-interleave) so that
    conv2's stride-2 3x3 windows become contiguous row-slices of conv1's
    output.  Features are in (kh, kw, cin) order, zero-padded 27 -> 32.
    The /255 is NOT applied here (folded into the conv1 weights)."""
    B = obs.shape[0]
    xp = jnp.pad(obs, ((0, 0), (1, 1), (1, 1), (0, 0)))
    cols = [xp[:, kh:kh + 95:2, kw:kw + 95:2, :]
            for kh in range(3) for kw in range(3)]
    p = jnp.concatenate(cols, axis=-1)                                # (B, 48, 48, 27)
    p = p.reshape(B, 24, 2, 24, 2, 27).transpose(0, 2, 4, 1, 3, 5)    # (B, 2, 2, 24, 24, 27)
    p = p.reshape(B, 24 * 24 * 4, 27)
    p = jnp.pad(p, ((0, 0), (0, 0), (0, 5)))                          # K 27 -> 32
    return p.astype(jnp.bfloat16)


def init_params(key):
    """Deterministic synthetic parameters in PyTorch layout (Linear weights
    already stored transposed as (in, out))."""
    ks = jax.random.split(key, 16)
    p = {}
    p["conv1_w"] = 0.10 * jax.random.normal(ks[0], (32, 3, 3, 3), jnp.float32)
    p["conv1_b"] = 0.10 * jax.random.normal(ks[1], (32,), jnp.float32)
    p["bn1_g"] = 1.0 + 0.10 * jax.random.normal(ks[2], (32,), jnp.float32)
    p["bn1_b"] = 0.10 * jax.random.normal(ks[3], (32,), jnp.float32)
    p["bn1_m"] = 0.10 * jax.random.normal(ks[4], (32,), jnp.float32)
    p["bn1_v"] = 1.0 + 0.10 * jnp.abs(jax.random.normal(ks[5], (32,), jnp.float32))
    p["conv2_w"] = 0.05 * jax.random.normal(ks[6], (64, 32, 3, 3), jnp.float32)
    p["conv2_b"] = 0.10 * jax.random.normal(ks[7], (64,), jnp.float32)
    p["bn2_g"] = 1.0 + 0.10 * jax.random.normal(ks[8], (64,), jnp.float32)
    p["bn2_b"] = 0.10 * jax.random.normal(ks[9], (64,), jnp.float32)
    p["bn2_m"] = 0.10 * jax.random.normal(ks[10], (64,), jnp.float32)
    p["bn2_v"] = 1.0 + 0.10 * jnp.abs(jax.random.normal(ks[11], (64,), jnp.float32))
    p["fc1_w"] = 0.10 * jax.random.normal(ks[12], (71, 128), jnp.float32)
    p["fc1_b"] = 0.10 * jax.random.normal(ks[13], (128,), jnp.float32)
    p["fc2_w"] = 0.10 * jax.random.normal(ks[14], (128, 2), jnp.float32)
    p["fc2_b"] = 0.10 * jax.random.normal(ks[15], (2,), jnp.float32)
    return p


def fold_params(raw, eps=1e-5):
    """Fold /255 and eval-mode BatchNorm into the conv weights/biases and
    reshape everything into the kernel-friendly layout (done once)."""
    s1 = raw["bn1_g"] / jnp.sqrt(raw["bn1_v"] + eps)
    s2 = raw["bn2_g"] / jnp.sqrt(raw["bn2_v"] + eps)
    # (Cout, Cin, kh, kw) -> (kh, kw, Cin, Cout) -> (k*k*Cin, Cout)
    w1 = jnp.transpose(raw["conv1_w"], (2, 3, 1, 0)).reshape(27, 32)
    w2 = jnp.transpose(raw["conv2_w"], (2, 3, 1, 0)).reshape(288, 64)
    w1 = w1 * (s1 / 255.0)[None, :]                 # fold BN scale and /255
    w2 = w2 * s2[None, :]                           # fold BN scale
    b1 = (raw["conv1_b"] - raw["bn1_m"]) * s1 + raw["bn1_b"]
    b2 = (raw["conv2_b"] - raw["bn2_m"]) * s2 + raw["bn2_b"]
    return {
        "conv1_w": jnp.pad(w1, ((0, 5), (0, 0))).astype(jnp.bfloat16),  # (32, 32)
        "conv1_b": b1.reshape(1, 32),
        "conv2_w": w2.astype(jnp.bfloat16),                             # (288, 64)
        "conv2_b": b2.reshape(1, 64),
        "fc1_w_feat": raw["fc1_w"][:64],                                # (64, 128)
        "fc1_w_sens": raw["fc1_w"][64:],                                # (7, 128)
        "fc1_b": raw["fc1_b"].reshape(1, 128),
        "fc2_w_pad": jnp.pad(raw["fc2_w"], ((0, 0), (0, 126))),         # (128, 128)
        "fc2_b": raw["fc2_b"].reshape(1, 2),
        "out_scale": jnp.array([[1.1, 1.0]], jnp.float32),
    }


# ----------------------------------------------------------------------------
# Full forward pass
# ----------------------------------------------------------------------------
@jax.jit
def classification_forward(obs, fp):
    B = obs.shape[0]
    sensors = extract_sensor_values(obs)                                # (B, 7)
    sens_proj = sensors @ fp["fc1_w_sens"] + fp["fc1_b"]                # (B, 128)
    p1 = conv1_patches(obs)                                             # (B, 2304, 32) bf16
    Bp = ((B + BB - 1) // BB) * BB                                      # pad batch to BB
    if Bp != B:
        p1 = jnp.pad(p1, ((0, Bp - B), (0, 0), (0, 0)))
        sens_proj = jnp.pad(sens_proj, ((0, Bp - B), (0, 0)))
    z = fused_forward(p1, sens_proj, fp)                                # (Bp, 128)
    z = z[:B, :2] + fp["fc2_b"]                                         # fc2 bias
    out = jnp.tanh(z) * fp["out_scale"]                                 # * [1.1, 1.0]
    return jnp.clip(out, -1.0, 1.0)


# ----------------------------------------------------------------------------
# Plain-JAX reference (eval-mode PyTorch semantics) for validation
# ----------------------------------------------------------------------------
def _lrelu(x):
    return jnp.where(x >= 0.0, x, 0.2 * x)


@jax.jit
def reference_forward(obs, raw):
    eps = 1e-5

    def conv(x, w, b):
        y = jax.lax.conv_general_dilated(
            x, w, window_strides=(2, 2), padding=((1, 1), (1, 1)),
            dimension_numbers=("NCHW", "OIHW", "NCHW"))
        return y + b[None, :, None, None]

    def bn(x, g, bta, m, v):
        inv = g / jnp.sqrt(v + eps)
        return (x - m[None, :, None, None]) * inv[None, :, None, None] \
            + bta[None, :, None, None]

    x = jnp.transpose(obs / 255.0, (0, 3, 1, 2))
    x = _lrelu(bn(conv(x, raw["conv1_w"], raw["conv1_b"]),
                  raw["bn1_g"], raw["bn1_b"], raw["bn1_m"], raw["bn1_v"]))
    x = _lrelu(bn(conv(x, raw["conv2_w"], raw["conv2_b"]),
                  raw["bn2_g"], raw["bn2_b"], raw["bn2_m"], raw["bn2_v"]))
    feat = jnp.mean(x, axis=(2, 3))
    sens = extract_sensor_values(obs)
    z = jnp.concatenate([feat, sens], axis=1)
    h = _lrelu(z @ raw["fc1_w"] + raw["fc1_b"])
    o = jnp.tanh(h @ raw["fc2_w"] + raw["fc2_b"]) * jnp.array([1.1, 1.0], jnp.float32)
    return jnp.clip(o, -1.0, 1.0)


if __name__ == "__main__":
    key = jax.random.PRNGKey(0)
    k_obs, k_params = jax.random.split(key)
    B = 16  # two grid steps of BB=8 -> both v7x TensorCores get work
    # Spatial size must be 96x96 (sensor crops & Linear(71) hard-code it).
    obs = jax.random.uniform(k_obs, (B, 96, 96, 3), jnp.float32,
                             minval=0.0, maxval=255.0)
    raw = init_params(k_params)
    fp = fold_params(raw)

    out = jax.block_until_ready(classification_forward(obs, fp))

    assert out.shape == (B, 2), out.shape
    assert bool(jnp.all(jnp.isfinite(out)))
    assert bool(jnp.all(out <= 1.0)) and bool(jnp.all(out >= -1.0))

    # Cross-check against the plain-JAX reference of the PyTorch forward
    # (bf16 conv1 patches + bf16 conv2 operands, f32 accumulation).
    ref = jax.block_until_ready(reference_forward(obs, raw))
    assert float(jnp.max(jnp.abs(out - ref))) < 3e-2

    print("KERNEL_OK")
</pallas_src>

<mosaic_0001>
module attributes {stable_mosaic.version = 11 : i64} {
  func.func @_fused_forward_kernel(%arg0: i32, %arg1: memref<8x2304x32xbf16, #tpu.memory_space<vmem>>, %arg2: memref<8x128xf32, #tpu.memory_space<vmem>>, %arg3: memref<32x32xbf16, #tpu.memory_space<vmem>>, %arg4: memref<1x32xf32, #tpu.memory_space<vmem>>, %arg5: memref<288x64xbf16, #tpu.memory_space<vmem>>, %arg6: memref<1x64xf32, #tpu.memory_space<vmem>>, %arg7: memref<64x128xf32, #tpu.memory_space<vmem>>, %arg8: memref<128x128xf32, #tpu.memory_space<vmem>>, %arg9: memref<8x128xf32, #tpu.memory_space<vmem>>, %arg10: memref<2304x32xf32, #tpu.memory_space<vmem>>) attributes {dimension_semantics = [#tpu.dimension_semantics<parallel>], iteration_bounds = array<i64: 2>, scalar_prefetch = 0 : i64, scratch_operands = 1 : i64, tpu.core_type = #tpu.core_type<tc>, window_params = [{transform_indices = @transform_0, window_bounds = array<i64: 8, 2304, 32>}, {transform_indices = @transform_1, window_bounds = array<i64: 8, 128>}, {pipeline_mode = #tpu.pipeline_mode<synchronous>, transform_indices = @transform_2, window_bounds = array<i64: 32, 32>}, {pipeline_mode = #tpu.pipeline_mode<synchronous>, transform_indices = @transform_3, window_bounds = array<i64: 1, 32>}, {pipeline_mode = #tpu.pipeline_mode<synchronous>, transform_indices = @transform_4, window_bounds = array<i64: 288, 64>}, {pipeline_mode = #tpu.pipeline_mode<synchronous>, transform_indices = @transform_5, window_bounds = array<i64: 1, 64>}, {pipeline_mode = #tpu.pipeline_mode<synchronous>, transform_indices = @transform_6, window_bounds = array<i64: 64, 128>}, {pipeline_mode = #tpu.pipeline_mode<synchronous>, transform_indices = @transform_7, window_bounds = array<i64: 128, 128>}, {transform_indices = @transform_8, window_bounds = array<i64: 8, 128>}]} {
    %0 = tpu.iota {dimensions = array<i32: 0>} : vector<576x1xi32>
    %c2731_i32 = arith.constant 2731 : i32
    %1 = vector.broadcast %c2731_i32 : i32 to vector<576x1xi32>
    %2 = arith.muli %0, %1 : vector<576x1xi32>
    %c16_i32 = arith.constant 16 : i32
    %3 = vector.broadcast %c16_i32 : i32 to vector<576x1xi32>
    %4 = arith.shrsi %2, %3 : vector<576x1xi32>
    %c24_i32 = arith.constant 24 : i32
    %5 = vector.broadcast %c24_i32 : i32 to vector<576x1xi32>
    %6 = arith.muli %4, %5 : vector<576x1xi32>
    %c24_i32_0 = arith.constant 24 : i32
    %7 = vector.broadcast %c24_i32_0 : i32 to vector<576x1xi32>
    %8 = arith.cmpi sge, %0, %7 : vector<576x1xi32>
    %9 = arith.subi %0, %6 : vector<576x1xi32>
    %c0_i32 = arith.constant 0 : i32
    %10 = vector.broadcast %c0_i32 : i32 to vector<576x1xi32>
    %11 = arith.cmpi ne, %9, %10 : vector<576x1xi32>
    %12 = arith.andi %8, %11 : vector<576x1xi1>
    %cst = arith.constant 0.000000e+00 : f32
    %13 = vector.broadcast %cst : f32 to vector<8x64xf32>
    %c0_i32_1 = arith.constant 0 : i32
    %c8_i32 = arith.constant 8 : i32
    %14 = arith.addi %c0_i32_1, %c8_i32 : i32
    %c1_i32 = arith.constant 1 : i32
    %15 = scf.for %arg11 = %c0_i32_1 to %14 step %c1_i32 iter_args(%arg12 = %13) -> (vector<8x64xf32>)  : i32 {
      %26 = arith.index_cast %arg11 : i32 to index
      %c0_13 = arith.constant 0 : index
      %c0_14 = arith.constant 0 : index
      %27 = vector.load %arg1[%26, %c0_13, %c0_14] : memref<8x2304x32xbf16, #tpu.memory_space<vmem>>, vector<1x576x32xbf16>
      %28 = vector.shape_cast %27 : vector<1x576x32xbf16> to vector<576x32xbf16>
      %c0_15 = arith.constant 0 : index
      %c0_16 = arith.constant 0 : index
      %29 = vector.load %arg3[%c0_15, %c0_16] : memref<32x32xbf16, #tpu.memory_space<vmem>>, vector<32x32xbf16>
      %cst_17 = arith.constant dense<0.000000e+00> : vector<576x32xf32>
      %30 = tpu.matmul %28, %29, %cst_17 {dimension_numbers = #tpu.dot_dimension_numbers<[1], [0], [0], [1], [0, 0, 1, 1], [], []>} : vector<576x32xbf16>, vector<32x32xbf16>, vector<576x32xf32> -> vector<576x32xf32>
      %c0_18 = arith.constant 0 : index
      %c0_19 = arith.constant 0 : index
      %31 = vector.load %arg4[%c0_18, %c0_19] : memref<1x32xf32, #tpu.memory_space<vmem>>, vector<1x32xf32>
      %32 = vector.broadcast %31 : vector<1x32xf32> to vector<576x32xf32>
      %33 = arith.addf %30, %32 : vector<576x32xf32>
      %cst_20 = arith.constant 2.000000e-01 : f32
      %34 = vector.broadcast %cst_20 : f32 to vector<576x32xf32>
      %35 = arith.mulf %34, %33 : vector<576x32xf32>
      %36 = arith.maximumf %33, %35 : vector<576x32xf32>
      %c0_21 = arith.constant 0 : index
      %c0_22 = arith.constant 0 : index
      %37 = vector.load %arg10[%c0_21, %c0_22] : memref<2304x32xf32, #tpu.memory_space<vmem>>, vector<576x32xf32>
      tpu.vector_store %arg10[%c0_21, %c0_22], %36 {strides = array<i32>} : memref<2304x32xf32, #tpu.memory_space<vmem>>, vector<576x32xf32>,
      %38 = arith.index_cast %arg11 : i32 to index
      %c576 = arith.constant 576 : index
      %c0_23 = arith.constant 0 : index
      %39 = vector.load %arg1[%38, %c576, %c0_23] : memref<8x2304x32xbf16, #tpu.memory_space<vmem>>, vector<1x576x32xbf16>
      %40 = vector.shape_cast %39 : vector<1x576x32xbf16> to vector<576x32xbf16>
      %c0_24 = arith.constant 0 : index
      %c0_25 = arith.constant 0 : index
      %41 = vector.load %arg3[%c0_24, %c0_25] : memref<32x32xbf16, #tpu.memory_space<vmem>>, vector<32x32xbf16>
      %cst_26 = arith.constant dense<0.000000e+00> : vector<576x32xf32>
      %42 = tpu.matmul %40, %41, %cst_26 {dimension_numbers = #tpu.dot_dimension_numbers<[1], [0], [0], [1], [0, 0, 1, 1], [], []>} : vector<576x32xbf16>, vector<32x32xbf16>, vector<576x32xf32> -> vector<576x32xf32>
      %c0_27 = arith.constant 0 : index
      %c0_28 = arith.constant 0 : index
      %43 = vector.load %arg4[%c0_27, %c0_28] : memref<1x32xf32, #tpu.memory_space<vmem>>, vector<1x32xf32>
      %44 = vector.broadcast %43 : vector<1x32xf32> to vector<576x32xf32>
      %45 = arith.addf %42, %44 : vector<576x32xf32>
      %cst_29 = arith.constant 2.000000e-01 : f32
      %46 = vector.broadcast %cst_29 : f32 to vector<576x32xf32>
      %47 = arith.mulf %46, %45 : vector<576x32xf32>
      %48 = arith.maximumf %45, %47 : vector<576x32xf32>
      %c576_30 = arith.constant 576 : index
      %c0_31 = arith.constant 0 : index
      %49 = vector.load %arg10[%c576_30, %c0_31] : memref<2304x32xf32, #tpu.memory_space<vmem>>, vector<576x32xf32>
      tpu.vector_store %arg10[%c576_30, %c0_31], %48 {strides = array<i32>} : memref<2304x32xf32, #tpu.memory_space<vmem>>, vector<576x32xf32>,
      %50 = arith.index_cast %arg11 : i32 to index
      %c1152 = arith.constant 1152 : index
      %c0_32 = arith.constant 0 : index
      %51 = vector.load %arg1[%50, %c1152, %c0_32] : memref<8x2304x32xbf16, #tpu.memory_space<vmem>>, vector<1x576x32xbf16>
      %52 = vector.shape_cast %51 : vector<1x576x32xbf16> to vector<576x32xbf16>
      %c0_33 = arith.constant 0 : index
      %c0_34 = arith.constant 0 : index
      %53 = vector.load %arg3[%c0_33, %c0_34] : memref<32x32xbf16, #tpu.memory_space<vmem>>, vector<32x32xbf16>
      %cst_35 = arith.constant dense<0.000000e+00> : vector<576x32xf32>
      %54 = tpu.matmul %52, %53, %cst_35 {dimension_numbers = #tpu.dot_dimension_numbers<[1], [0], [0], [1], [0, 0, 1, 1], [], []>} : vector<576x32xbf16>, vector<32x32xbf16>, vector<576x32xf32> -> vector<576x32xf32>
      %c0_36 = arith.constant 0 : index
      %c0_37 = arith.constant 0 : index
      %55 = vector.load %arg4[%c0_36, %c0_37] : memref<1x32xf32, #tpu.memory_space<vmem>>, vector<1x32xf32>
      %56 = vector.broadcast %55 : vector<1x32xf32> to vector<576x32xf32>
      %57 = arith.addf %54, %56 : vector<576x32xf32>
      %cst_38 = arith.constant 2.000000e-01 : f32
      %58 = vector.broadcast %cst_38 : f32 to vector<576x32xf32>
      %59 = arith.mulf %58, %57 : vector<576x32xf32>
      %60 = arith.maximumf %57, %59 : vector<576x32xf32>
      %c1152_39 = arith.constant 1152 : index
      %c0_40 = arith.constant 0 : index
      %61 = vector.load %arg10[%c1152_39, %c0_40] : memref<2304x32xf32, #tpu.memory_space<vmem>>, vector<576x32xf32>
      tpu.vector_store %arg10[%c1152_39, %c0_40], %60 {strides = array<i32>} : memref<2304x32xf32, #tpu.memory_space<vmem>>, vector<576x32xf32>,
      %62 = arith.index_cast %arg11 : i32 to index
      %c1728 = arith.constant 1728 : index
      %c0_41 = arith.constant 0 : index
      %63 = vector.load %arg1[%62, %c1728, %c0_41] : memref<8x2304x32xbf16, #tpu.memory_space<vmem>>, vector<1x576x32xbf16>
      %64 = vector.shape_cast %63 : vector<1x576x32xbf16> to vector<576x32xbf16>
      %c0_42 = arith.constant 0 : index
      %c0_43 = arith.constant 0 : index
      %65 = vector.load %arg3[%c0_42, %c0_43] : memref<32x32xbf16, #tpu.memory_space<vmem>>, vector<32x32xbf16>
      %cst_44 = arith.constant dense<0.000000e+00> : vector<576x32xf32>
      %66 = tpu.matmul %64, %65, %cst_44 {dimension_numbers = #tpu.dot_dimension_numbers<[1], [0], [0], [1], [0, 0, 1, 1], [], []>} : vector<576x32xbf16>, vector<32x32xbf16>, vector<576x32xf32> -> vector<576x32xf32>
      %c0_45 = arith.constant 0 : index
      %c0_46 = arith.constant 0 : index
      %67 = vector.load %arg4[%c0_45, %c0_46] : memref<1x32xf32, #tpu.memory_space<vmem>>, vector<1x32xf32>
      %68 = vector.broadcast %67 : vector<1x32xf32> to vector<576x32xf32>
      %69 = arith.addf %66, %68 : vector<576x32xf32>
      %cst_47 = arith.constant 2.000000e-01 : f32
      %70 = vector.broadcast %cst_47 : f32 to vector<576x32xf32>
      %71 = arith.mulf %70, %69 : vector<576x32xf32>
      %72 = arith.maximumf %69, %71 : vector<576x32xf32>
      %c1728_48 = arith.constant 1728 : index
      %c0_49 = arith.constant 0 : index
      %73 = vector.load %arg10[%c1728_48, %c0_49] : memref<2304x32xf32, #tpu.memory_space<vmem>>, vector<576x32xf32>
      tpu.vector_store %arg10[%c1728_48, %c0_49], %72 {strides = array<i32>} : memref<2304x32xf32, #tpu.memory_space<vmem>>, vector<576x32xf32>,
      %c1703 = arith.constant 1703 : index
      %c0_50 = arith.constant 0 : index
      %74 = vector.load %arg10[%c1703, %c0_50] : memref<2304x32xf32, #tpu.memory_space<vmem>>, vector<576x32xf32>
      %cst_51 = arith.constant 0.000000e+00 : f32
      %75 = vector.shape_cast %12 : vector<576x1xi1> to vector<576x1xi1>
      %76 = vector.broadcast %75 : vector<576x1xi1> to vector<576x32xi1>
      %77 = vector.broadcast %cst_51 : f32 to vector<576x32xf32>
      %78 = arith.select %76, %74, %77 : vector<576x32xi1>, vector<576x32xf32>
      %79 = arith.truncf %78 : vector<576x32xf32> to vector<576x32xbf16>
      %c1128 = arith.constant 1128 : index
      %c0_52 = arith.constant 0 : index
      %80 = vector.load %arg10[%c1128, %c0_52] : memref<2304x32xf32, #tpu.memory_space<vmem>>, vector<576x32xf32>
      %cst_53 = arith.constant 0.000000e+00 : f32
      %81 = vector.shape_cast %8 : vector<576x1xi1> to vector<576x1xi1>
      %82 = vector.broadcast %81 : vector<576x1xi1> to vector<576x32xi1>
      %83 = vector.broadcast %cst_53 : f32 to vector<576x32xf32>
      %84 = arith.select %82, %80, %83 : vector<576x32xi1>, vector<576x32xf32>
      %85 = arith.truncf %84 : vector<576x32xf32> to vector<576x32xbf16>
      %c1704 = arith.constant 1704 : index
      %c0_54 = arith.constant 0 : index
      %86 = vector.load %arg10[%c1704, %c0_54] : memref<2304x32xf32, #tpu.memory_space<vmem>>, vector<576x32xf32>
      %cst_55 = arith.constant 0.000000e+00 : f32
      %87 = vector.shape_cast %8 : vector<576x1xi1> to vector<576x1xi1>
      %88 = vector.broadcast %87 : vector<576x1xi1> to vector<576x32xi1>
      %89 = vector.broadcast %cst_55 : f32 to vector<576x32xf32>
      %90 = arith.select %88, %86, %89 : vector<576x32xi1>, vector<576x32xf32>
      %91 = arith.truncf %90 : vector<576x32xf32> to vector<576x32xbf16>
      %c575 = arith.constant 575 : index
      %c0_56 = arith.constant 0 : index
      %92 = vector.load %arg10[%c575, %c0_56] : memref<2304x32xf32, #tpu.memory_space<vmem>>, vector<576x32xf32>
      %cst_57 = arith.constant 0.000000e+00 : f32
      %93 = vector.shape_cast %11 : vector<576x1xi1> to vector<576x1xi1>
      %94 = vector.broadcast %93 : vector<576x1xi1> to vector<576x32xi1>
      %95 = vector.broadcast %cst_57 : f32 to vector<576x32xf32>
      %96 = arith.select %94, %92, %95 : vector<576x32xi1>, vector<576x32xf32>
      %97 = arith.truncf %96 : vector<576x32xf32> to vector<576x32xbf16>
      %c0_58 = arith.constant 0 : index
      %c0_59 = arith.constant 0 : index
      %98 = vector.load %arg10[%c0_58, %c0_59] : memref<2304x32xf32, #tpu.memory_space<vmem>>, vector<576x32xf32>
      %99 = arith.truncf %98 : vector<576x32xf32> to vector<576x32xbf16>
      %c576_60 = arith.constant 576 : index
      %c0_61 = arith.constant 0 : index
      %100 = vector.load %arg10[%c576_60, %c0_61] : memref<2304x32xf32, #tpu.memory_space<vmem>>, vector<576x32xf32>
      %101 = arith.truncf %100 : vector<576x32xf32> to vector<576x32xbf16>
      %c1727 = arith.constant 1727 : index
      %c0_62 = arith.constant 0 : index
      %102 = vector.load %arg10[%c1727, %c0_62] : memref<2304x32xf32, #tpu.memory_space<vmem>>, vector<576x32xf32>
      %cst_63 = arith.constant 0.000000e+00 : f32
      %103 = vector.shape_cast %11 : vector<576x1xi1> to vector<576x1xi1>
      %104 = vector.broadcast %103 : vector<576x1xi1> to vector<576x32xi1>
      %105 = vector.broadcast %cst_63 : f32 to vector<576x32xf32>
      %106 = arith.select %104, %102, %105 : vector<576x32xi1>, vector<576x32xf32>
      %107 = arith.truncf %106 : vector<576x32xf32> to vector<576x32xbf16>
      %c1152_64 = arith.constant 1152 : index
      %c0_65 = arith.constant 0 : index
      %108 = vector.load %arg10[%c1152_64, %c0_65] : memref<2304x32xf32, #tpu.memory_space<vmem>>, vector<576x32xf32>
      %109 = arith.truncf %108 : vector<576x32xf32> to vector<576x32xbf16>
      %c1728_66 = arith.constant 1728 : index
      %c0_67 = arith.constant 0 : index
      %110 = vector.load %arg10[%c1728_66, %c0_67] : memref<2304x32xf32, #tpu.memory_space<vmem>>, vector<576x32xf32>
      %111 = arith.truncf %110 : vector<576x32xf32> to vector<576x32xbf16>
      %112 = tpu.concatenate %79, %85, %91, %97, %99, %101, %107, %109, %111 in 1 : vector<576x32xbf16>, vector<576x32xbf16>, vector<576x32xbf16>, vector<576x32xbf16>, vector<576x32xbf16>, vector<576x32xbf16>, vector<576x32xbf16>, vector<576x32xbf16>, vector<576x32xbf16> -> vector<576x288xbf16>
      %c0_68 = arith.constant 0 : index
      %c0_69 = arith.constant 0 : index
      %113 = vector.load %arg5[%c0_68, %c0_69] : memref<288x64xbf16, #tpu.memory_space<vmem>>, vector<288x64xbf16>
      %cst_70 = arith.constant dense<0.000000e+00> : vector<576x64xf32>
      %114 = tpu.matmul %112, %113, %cst_70 {dimension_numbers = #tpu.dot_dimension_numbers<[1], [0], [0], [1], [0, 0, 1, 1], [], []>} : vector<576x288xbf16>, vector<288x64xbf16>, vector<576x64xf32> -> vector<576x64xf32>
      %c0_71 = arith.constant 0 : index
      %c0_72 = arith.constant 0 : index
      %115 = vector.load %arg6[%c0_71, %c0_72] : memref<1x64xf32, #tpu.memory_space<vmem>>, vector<1x64xf32>
      %116 = vector.broadcast %115 : vector<1x64xf32> to vector<576x64xf32>
      %117 = arith.addf %114, %116 : vector<576x64xf32>
      %cst_73 = arith.constant 2.000000e-01 : f32
      %118 = vector.broadcast %cst_73 : f32 to vector<576x64xf32>
      %119 = arith.mulf %118, %117 : vector<576x64xf32>
      %120 = arith.maximumf %117, %119 : vector<576x64xf32>
      %cst_74 = arith.constant dense<0.000000e+00> : vector<64xf32>
      %121 = vector.multi_reduction <add>, %120, %cst_74 [0] : vector<576x64xf32> to vector<64xf32>
      %122 = vector.shape_cast %121 : vector<64xf32> to vector<1x64xf32>
      %cst_75 = arith.constant 5.760000e+02 : f32
      %123 = vector.broadcast %cst_75 : f32 to vector<1x64xf32>
      %124 = arith.divf %122, %123 : vector<1x64xf32>
      %125 = tpu.iota {dimensions = array<i32: 0>} : vector<8x1xi32>
      %126 = vector.broadcast %arg11 : i32 to vector<8x1xi32>
      %127 = arith.cmpi eq, %125, %126 : vector<8x1xi32>
      %128 = vector.shape_cast %127 : vector<8x1xi1> to vector<8x1xi1>
      %129 = vector.broadcast %128 : vector<8x1xi1> to vector<8x64xi1>
      %130 = vector.shape_cast %124 : vector<1x64xf32> to vector<1x64xf32>
      %131 = vector.broadcast %130 : vector<1x64xf32> to vector<8x64xf32>
      %132 = arith.select %129, %131, %arg12 : vector<8x64xi1>, vector<8x64xf32>
      scf.yield %132 : vector<8x64xf32>
    }
    %c8_i32_2 = arith.constant 8 : i32
    %c0 = arith.constant 0 : index
    %c0_3 = arith.constant 0 : index
    %16 = vector.load %arg7[%c0, %c0_3] : memref<64x128xf32, #tpu.memory_space<vmem>>, vector<64x128xf32>
    %cst_4 = arith.constant dense<0.000000e+00> : vector<8x128xf32>
    %17 = tpu.matmul %15, %16, %cst_4 {dimension_numbers = #tpu.dot_dimension_numbers<[1], [0], [0], [1], [0, 0, 1, 1], [], []>} : vector<8x64xf32>, vector<64x128xf32>, vector<8x128xf32> -> vector<8x128xf32>
    %c0_5 = arith.constant 0 : index
    %c0_6 = arith.constant 0 : index
    %18 = vector.load %arg2[%c0_5, %c0_6] : memref<8x128xf32, #tpu.memory_space<vmem>>, vector<8x128xf32>
    %19 = arith.addf %17, %18 : vector<8x128xf32>
    %cst_7 = arith.constant 2.000000e-01 : f32
    %20 = vector.broadcast %cst_7 : f32 to vector<8x128xf32>
    %21 = arith.mulf %20, %19 : vector<8x128xf32>
    %22 = arith.maximumf %19, %21 : vector<8x128xf32>
    %c0_8 = arith.constant 0 : index
    %c0_9 = arith.constant 0 : index
    %23 = vector.load %arg8[%c0_8, %c0_9] : memref<128x128xf32, #tpu.memory_space<vmem>>, vector<128x128xf32>
    %cst_10 = arith.constant dense<0.000000e+00> : vector<8x128xf32>
    %24 = tpu.matmul %22, %23, %cst_10 {dimension_numbers = #tpu.dot_dimension_numbers<[1], [0], [0], [1], [0, 0, 1, 1], [], []>} : vector<8x128xf32>, vector<128x128xf32>, vector<8x128xf32> -> vector<8x128xf32>
    %c0_11 = arith.constant 0 : index
    %c0_12 = arith.constant 0 : index
    %25 = vector.load %arg9[%c0_11, %c0_12] : memref<8x128xf32, #tpu.memory_space<vmem>>, vector<8x128xf32>
    tpu.vector_store %arg9[%c0_11, %c0_12], %24 {strides = array<i32>} : memref<8x128xf32, #tpu.memory_space<vmem>>, vector<8x128xf32>,
    return
  }
  func.func @transform_0(%arg0: i32) -> (i32, i32, i32) {
    %c0_i32 = arith.constant 0 : i32
    %c0_i32_0 = arith.constant 0 : i32
    %c0_i32_1 = arith.constant 0 : i32
    return %arg0, %c0_i32, %c0_i32_0 : i32, i32, i32
  }
  func.func @transform_1(%arg0: i32) -> (i32, i32) {
    %c0_i32 = arith.constant 0 : i32
    %c0_i32_0 = arith.constant 0 : i32
    return %arg0, %c0_i32 : i32, i32
  }
  func.func @transform_2(%arg0: i32) -> (i32, i32) {
    %c0_i32 = arith.constant 0 : i32
    %c0_i32_0 = arith.constant 0 : i32
    %c0_i32_1 = arith.constant 0 : i32
    return %c0_i32, %c0_i32_0 : i32, i32
  }
  func.func @transform_3(%arg0: i32) -> (i32, i32) {
    %c0_i32 = arith.constant 0 : i32
    %c0_i32_0 = arith.constant 0 : i32
    %c0_i32_1 = arith.constant 0 : i32
    return %c0_i32, %c0_i32_0 : i32, i32
  }
  func.func @transform_4(%arg0: i32) -> (i32, i32) {
    %c0_i32 = arith.constant 0 : i32
    %c0_i32_0 = arith.constant 0 : i32
    %c0_i32_1 = arith.constant 0 : i32
    return %c0_i32, %c0_i32_0 : i32, i32
  }
  func.func @transform_5(%arg0: i32) -> (i32, i32) {
    %c0_i32 = arith.constant 0 : i32
    %c0_i32_0 = arith.constant 0 : i32
    %c0_i32_1 = arith.constant 0 : i32
    return %c0_i32, %c0_i32_0 : i32, i32
  }
  func.func @transform_6(%arg0: i32) -> (i32, i32) {
    %c0_i32 = arith.constant 0 : i32
    %c0_i32_0 = arith.constant 0 : i32
    %c0_i32_1 = arith.constant 0 : i32
    return %c0_i32, %c0_i32_0 : i32, i32
  }
  func.func @transform_7(%arg0: i32) -> (i32, i32) {
    %c0_i32 = arith.constant 0 : i32
    %c0_i32_0 = arith.constant 0 : i32
    %c0_i32_1 = arith.constant 0 : i32
    return %c0_i32, %c0_i32_0 : i32, i32
  }
  func.func @transform_8(%arg0: i32) -> (i32, i32) {
    %c0_i32 = arith.constant 0 : i32
    %c0_i32_0 = arith.constant 0 : i32
    return %arg0, %c0_i32 : i32, i32
  }
}

</mosaic_0001>

<llo_original>
// kernel: classification_forward.1
$region0: #{classification_forward.1}
  #allocation0 [shape = 'u32[]', space=smem, size = 0x4, offset = 0x4, fixed_abs, tag = 'smem constant byte address 0x4 - core index']
  #allocation1 [shape = 'u32[144,128]{1,0:T(1,128)}', space=vmem, size = 0x12000, scoped, tag = 'internal scratch']
  #allocation2 [shape = 'f32[2304,32]{1,0:T(8,128)}', space=vmem, size = 0x120000, scoped, tag = 'scratch operand']
  %s0 = inlined_call_operand.vmem [shape: bf16[16,2304,32], index: 0, kind: input, shape index: {}]
  %s1 = inlined_call_operand.vmem [shape: f32[16,128], index: 1, kind: input, shape index: {}]
  %s2 = inlined_call_operand.vmem [shape: bf16[32,32], index: 2, kind: input, shape index: {}]
  %s3 = inlined_call_operand.vmem [shape: f32[1,32], index: 3, kind: input, shape index: {}]
  %s4 = inlined_call_operand.vmem [shape: bf16[288,64], index: 4, kind: input, shape index: {}]
  %s5 = inlined_call_operand.vmem [shape: f32[1,64], index: 5, kind: input, shape index: {}]
  %s6 = inlined_call_operand.vmem [shape: f32[64,128], index: 6, kind: input, shape index: {}]
  %s7 = inlined_call_operand.vmem [shape: f32[128,128], index: 7, kind: input, shape index: {}]
  %s8 = inlined_call_operand.vmem [shape: f32[16,128], index: 8, kind: output, shape index: {}]
  %s9 = sld [smem:[#allocation0]]
  $region72: #{classification_forward.1} parent=0
    _
  %s11 = ssub.s32 1, %s9
  %s12 = scalar_select 0, %s11, %s9
  loop: start=0, step=1, limit=4
  $region2: #{classification_forward.1} parent=0 // loop_pre_header
    _
  $region3: #{classification_forward.1} parent=0 // loop_header
    %s14 = sphi 0, %s18
    %p15 = scmp.ge.s32.totalorder %s14, 4
    %s24 = sphi 0, %s26
    %s27 = sphi 0, %s24
    %s28 = sphi 0, %s27
    %s44 = sphi 0, %s28
    %s50 = sphi 0, %s52
    %s53 = sphi 0, %s50
    %s54 = sphi 0, %s53
    %s70 = sphi 0, %s54
    %s74 = sphi 0, %s74
    %s76 = sphi 0, %s74
    %s77 = sphi 0, %s76
    %s91 = sphi 0, %s77
    %s95 = sphi 0, %s95
    %s97 = sphi 0, %s95
    %s98 = sphi 0, %s97
    %s112 = sphi 0, %s98
    %s116 = sphi 0, %s116
    %s118 = sphi 0, %s116
    %s119 = sphi 0, %s118
    %s133 = sphi 0, %s119
    %s137 = sphi 0, %s137
    %s139 = sphi 0, %s137
    %s140 = sphi 0, %s139
    %s154 = sphi 0, %s140
    %s158 = sphi 0, %s158
    %s160 = sphi 0, %s158
    %s161 = sphi 0, %s160
    %s175 = sphi 0, %s161
    %s179 = sphi 0, %s179
    %s181 = sphi 0, %s179
    %s182 = sphi 0, %s181
    %s196 = sphi 0, %s182
    %s202 = sphi 0, %s204
    %s205 = sphi 0, %s202
    %s206 = sphi 0, %s205
    %s222 = sphi 0, %s206
  $region4: #{classification_forward.1} parent=0 // loop_header_branch
    %17 = sbr.rel (%p15) target = $region8
  $region5: #{classification_forward.1} parent=0 // loop_body
    %s19 = ssub.s32 %s14, 1
    %s20 = ssub.s32 %s14, 2
    %s21 = sadd.s32 %s14, 1
    %s22 = ssub.s32 %s14, %s21
    %p23 = scmp.eq.s32.totalorder %s22, 0
    %s25 = sadd.s32 %s24, 1
    %s26 = scalar_select %p23, %s24, %s25
    %p29 = pneg %p23
    %p30 = scmp.eq.s32.totalorder %s14, 1
    %p31 = por %p29, %p30
    %p32 = scmp.ne.s32.totalorder %s24, %s27
    %p33 = scmp.eq.s32.totalorder %s14, 0
    %p34 = por %p32, %p33
    %p35 = scmp.ne.s32.totalorder %s24, %s27
    %p36 = scmp.eq.s32.totalorder %s19, 1
    %p37 = por %p35, %p36
    %p38 = scmp.ne.s32.totalorder %s27, %s28
    %p39 = scmp.eq.s32.totalorder %s19, 0
    %p40 = por %p38, %p39
    %p41 = scmp.ne.s32.totalorder %s27, %s28
    %p42 = scmp.eq.s32.totalorder %s20, 1
    %p43 = por %p41, %p42
    %p45 = scmp.ne.s32.totalorder %s28, %s44
    %p46 = scmp.eq.s32.totalorder %s20, 0
    %p47 = por %p45, %p46
    %s48 = ssub.s32 %s14, %s21
    %p49 = scmp.eq.s32.totalorder %s48, 0
    %s51 = sadd.s32 %s50, 1
    %s52 = scalar_select %p49, %s50, %s51
    %p55 = pneg %p49
    %p56 = scmp.eq.s32.totalorder %s14, 1
    %p57 = por %p55, %p56
    %p58 = scmp.ne.s32.totalorder %s50, %s53
    %p59 = scmp.eq.s32.totalorder %s14, 0
    %p60 = por %p58, %p59
    %p61 = scmp.ne.s32.totalorder %s50, %s53
    %p62 = scmp.eq.s32.totalorder %s19, 1
    %p63 = por %p61, %p62
    %p64 = scmp.ne.s32.totalorder %s53, %s54
    %p65 = scmp.eq.s32.totalorder %s19, 0
    %p66 = por %p64, %p65
    %p67 = scmp.ne.s32.totalorder %s53, %s54
    %p68 = scmp.eq.s32.totalorder %s20, 1
    %p69 = por %p67, %p68
    %p71 = scmp.ne.s32.totalorder %s54, %s70
    %p72 = scmp.eq.s32.totalorder %s20, 0
    %p73 = por %p71, %p72
    %s75 = sadd.s32 %s74, 1
    %p78 = scmp.eq.s32.totalorder %s14, 1
    %p79 = scmp.ne.s32.totalorder %s74, %s76
    %p80 = scmp.eq.s32.totalorder %s14, 0
    %p81 = por %p79, %p80
    %p82 = scmp.ne.s32.totalorder %s74, %s76
    %p83 = scmp.eq.s32.totalorder %s19, 1
    %p84 = por %p82, %p83
    %p85 = scmp.ne.s32.totalorder %s76, %s77
    %p86 = scmp.eq.s32.totalorder %s19, 0
    %p87 = por %p85, %p86
    %p88 = scmp.ne.s32.totalorder %s76, %s77
    %p89 = scmp.eq.s32.totalorder %s20, 1
    %p90 = por %p88, %p89
    %p92 = scmp.ne.s32.totalorder %s77, %s91
    %p93 = scmp.eq.s32.totalorder %s20, 0
    %p94 = por %p92, %p93
    %s96 = sadd.s32 %s95, 1
    %p99 = scmp.eq.s32.totalorder %s14, 1
    %p100 = scmp.ne.s32.totalorder %s95, %s97
    %p101 = scmp.eq.s32.totalorder %s14, 0
    %p102 = por %p100, %p101
    %p103 = scmp.ne.s32.totalorder %s95, %s97
    %p104 = scmp.eq.s32.totalorder %s19, 1
    %p105 = por %p103, %p104
    %p106 = scmp.ne.s32.totalorder %s97, %s98
    %p107 = scmp.eq.s32.totalorder %s19, 0
    %p108 = por %p106, %p107
    %p109 = scmp.ne.s32.totalorder %s97, %s98
    %p110 = scmp.eq.s32.totalorder %s20, 1
    %p111 = por %p109, %p110
    %p113 = scmp.ne.s32.totalorder %s98, %s112
    %p114 = scmp.eq.s32.totalorder %s20, 0
    %p115 = por %p113, %p114
    %s117 = sadd.s32 %s116, 1
    %p120 = scmp.eq.s32.totalorder %s14, 1
    %p121 = scmp.ne.s32.totalorder %s116, %s118
    %p122 = scmp.eq.s32.totalorder %s14, 0
    %p123 = por %p121, %p122
    %p124 = scmp.ne.s32.totalorder %s116, %s118
    %p125 = scmp.eq.s32.totalorder %s19, 1
    %p126 = por %p124, %p125
    %p127 = scmp.ne.s32.totalorder %s118, %s119
    %p128 = scmp.eq.s32.totalorder %s19, 0
    %p129 = por %p127, %p128
    %p130 = scmp.ne.s32.totalorder %s118, %s119
    %p131 = scmp.eq.s32.totalorder %s20, 1
    %p132 = por %p130, %p131
    %p134 = scmp.ne.s32.totalorder %s119, %s133
    %p135 = scmp.eq.s32.totalorder %s20, 0
    %p136 = por %p134, %p135
    %s138 = sadd.s32 %s137, 1
    %p141 = scmp.eq.s32.totalorder %s14, 1
    %p142 = scmp.ne.s32.totalorder %s137, %s139
    %p143 = scmp.eq.s32.totalorder %s14, 0
    %p144 = por %p142, %p143
    %p145 = scmp.ne.s32.totalorder %s137, %s139
    %p146 = scmp.eq.s32.totalorder %s19, 1
    %p147 = por %p145, %p146
    %p148 = scmp.ne.s32.totalorder %s139, %s140
    %p149 = scmp.eq.s32.totalorder %s19, 0
    %p150 = por %p148, %p149
    %p151 = scmp.ne.s32.totalorder %s139, %s140
    %p152 = scmp.eq.s32.totalorder %s20, 1
    %p153 = por %p151, %p152
    %p155 = scmp.ne.s32.totalorder %s140, %s154
    %p156 = scmp.eq.s32.totalorder %s20, 0
    %p157 = por %p155, %p156
    %s159 = sadd.s32 %s158, 1
    %p162 = scmp.eq.s32.totalorder %s14, 1
    %p163 = scmp.ne.s32.totalorder %s158, %s160
    %p164 = scmp.eq.s32.totalorder %s14, 0
    %p165 = por %p163, %p164
    %p166 = scmp.ne.s32.totalorder %s158, %s160
    %p167 = scmp.eq.s32.totalorder %s19, 1
    %p168 = por %p166, %p167
    %p169 = scmp.ne.s32.totalorder %s160, %s161
    %p170 = scmp.eq.s32.totalorder %s19, 0
    %p171 = por %p169, %p170
    %p172 = scmp.ne.s32.totalorder %s160, %s161
    %p173 = scmp.eq.s32.totalorder %s20, 1
    %p174 = por %p172, %p173
    %p176 = scmp.ne.s32.totalorder %s161, %s175
    %p177 = scmp.eq.s32.totalorder %s20, 0
    %p178 = por %p176, %p177
    %s180 = sadd.s32 %s179, 1
    %p183 = scmp.eq.s32.totalorder %s14, 1
    %p184 = scmp.ne.s32.totalorder %s179, %s181
    %p185 = scmp.eq.s32.totalorder %s14, 0
    %p186 = por %p184, %p185
    %p187 = scmp.ne.s32.totalorder %s179, %s181
    %p188 = scmp.eq.s32.totalorder %s19, 1
    %p189 = por %p187, %p188
    %p190 = scmp.ne.s32.totalorder %s181, %s182
    %p191 = scmp.eq.s32.totalorder %s19, 0
    %p192 = por %p190, %p191
    %p193 = scmp.ne.s32.totalorder %s181, %s182
    %p194 = scmp.eq.s32.totalorder %s20, 1
    %p195 = por %p193, %p194
    %p197 = scmp.ne.s32.totalorder %s182, %s196
    %p198 = scmp.eq.s32.totalorder %s20, 0
    %p199 = por %p197, %p198
    %s200 = ssub.s32 %s14, %s21
    %p201 = scmp.eq.s32.totalorder %s200, 0
    %s203 = sadd.s32 %s202, 1
    %s204 = scalar_select %p201, %s202, %s203
    %p207 = pneg %p201
    %p208 = scmp.eq.s32.totalorder %s14, 1
    %p209 = por %p207, %p208
    %p210 = scmp.ne.s32.totalorder %s202, %s205
    %p211 = scmp.eq.s32.totalorder %s14, 0
    %p212 = por %p210, %p211
    %p213 = scmp.ne.s32.totalorder %s202, %s205
    %p214 = scmp.eq.s32.totalorder %s19, 1
    %p215 = por %p213, %p214
    %p216 = scmp.ne.s32.totalorder %s205, %s206
    %p217 = scmp.eq.s32.totalorder %s19, 0
    %p218 = por %p216, %p217
    %p219 = scmp.ne.s32.totalorder %s205, %s206
    %p220 = scmp.eq.s32.totalorder %s20, 1
    %p221 = por %p219, %p220
    %p223 = scmp.ne.s32.totalorder %s206, %s222
    %p224 = scmp.eq.s32.totalorder %s20, 0
    %p225 = por %p223, %p224
    %p226 = scmp.le.s32.totalorder 1, %s14
    %p227 = scmp.lt.s32.totalorder %s14, 3
    %p228 = pnand %p226, %p227
    %p229 = pneg %p228
    // Predicated region
    $region9: #{classification_forward.1} parent=5 // pred_check
      _
    $region10: #{classification_forward.1} parent=5 // pred_check_branch
      %231 = sbr.rel (%p228) target = $region12
    $region11: #{classification_forward.1} parent=5 // pred_region
      %s232 = ssub.s32 %s14, 1
      // Predicated region
      $region13: #{classification_forward.1} parent=11 // pred_check
        %p233 = pneg %p87
      $region14: #{classification_forward.1} parent=11 // pred_check_branch
        %235 = sbr.rel (%p233) target = $region16
      $region15: #{classification_forward.1} parent=11 // pred_region
        _
      $region16: #{classification_forward.1} parent=11 // pred_fallthru
        _
      // Predicated region
      $region17: #{classification_forward.1} parent=11 // pred_check
        %p236 = pneg %p108
      $region18: #{classification_forward.1} parent=11 // pred_check_branch
        %238 = sbr.rel (%p236) target = $region20
      $region19: #{classification_forward.1} parent=11 // pred_region
        _
      $region20: #{classification_forward.1} parent=11 // pred_fallthru
        _
      // Predicated region
      $region21: #{classification_forward.1} parent=11 // pred_check
        %p239 = pneg %p129
      $region22: #{classification_forward.1} parent=11 // pred_check_branch
        %241 = sbr.rel (%p239) target = $region24
      $region23: #{classification_forward.1} parent=11 // pred_region
        _
      $region24: #{classification_forward.1} parent=11 // pred_fallthru
        _
      // Predicated region
      $region25: #{classification_forward.1} parent=11 // pred_check
        %p242 = pneg %p150
      $region26: #{classification_forward.1} parent=11 // pred_check_branch
        %244 = sbr.rel (%p242) target = $region28
      $region27: #{classification_forward.1} parent=11 // pred_region
        _
      $region28: #{classification_forward.1} parent=11 // pred_fallthru
        _
      // Predicated region
      $region29: #{classification_forward.1} parent=11 // pred_check
        %p245 = pneg %p171
      $region30: #{classification_forward.1} parent=11 // pred_check_branch
        %247 = sbr.rel (%p245) target = $region32
      $region31: #{classification_forward.1} parent=11 // pred_region
        _
      $region32: #{classification_forward.1} parent=11 // pred_fallthru
        _
      // Predicated region
      $region33: #{classification_forward.1} parent=11 // pred_check
        %p248 = pneg %p192
      $region34: #{classification_forward.1} parent=11 // pred_check_branch
        %250 = sbr.rel (%p248) target = $region36
      $region35: #{classification_forward.1} parent=11 // pred_region
        _
      $region36: #{classification_forward.1} parent=11 // pred_fallthru
        _
    $region12: #{classification_forward.1} parent=5 // pred_fallthru
      _
    %p251 = scmp.lt.s32.totalorder %s14, 2
    // Predicated region
    $region37: #{classification_forward.1} parent=5 // pred_check
      %p252 = pneg %p251
    $region38: #{classification_forward.1} parent=5 // pred_check_branch
      %254 = sbr.rel (%p252) target = $region40
    $region39: #{classification_forward.1} parent=5 // pred_region
      // Predicated region
      $region41: #{classification_forward.1} parent=39 // pred_check
        %p255 = pneg %p34
      $region42: #{classification_forward.1} parent=39 // pred_check_branch
        %257 = sbr.rel (%p255) target = $region44
      $region43: #{classification_forward.1} parent=39 // pred_region
        %s258 = smul.u32 8, %s14
        %p259 = scmp.lt.s32.totalorder %s258, 15
        %s260 = scalar_select %p259, %s258, 15
        %s261 = smul.addr %s260, 288
        %s262 = smul.addr %s261, 4
        %s263 = scalar_lea.vmem %s0, %s262
        %s264 = smul.u32 8, %s14
      $region44: #{classification_forward.1} parent=39 // pred_fallthru
        _
      // Predicated region
      $region45: #{classification_forward.1} parent=39 // pred_check
        %p265 = pneg %p60
      $region46: #{classification_forward.1} parent=39 // pred_check_branch
        %267 = sbr.rel (%p265) target = $region48
      $region47: #{classification_forward.1} parent=39 // pred_region
        %p268 = scmp.lt.s32.totalorder %s14, 1
        %s269 = scalar_select %p268, %s14, 1
        %s270 = smul.addr %s269, 8
        %s271 = scalar_lea.vmem %s1, %s270
      $region48: #{classification_forward.1} parent=39 // pred_fallthru
        _
    $region40: #{classification_forward.1} parent=5 // pred_fallthru
      _
    %p272 = scmp.le.s32.totalorder 1, %s14
    %p273 = scmp.lt.s32.totalorder %s14, 3
    %p274 = pnand %p272, %p273
    %p275 = pneg %p274
    // Predicated region
    $region49: #{classification_forward.1} parent=5 // pred_check
      _
    $region50: #{classification_forward.1} parent=5 // pred_check_branch
      %277 = sbr.rel (%p274) target = $region52
    $region51: #{classification_forward.1} parent=5 // pred_region
      %s278 = ssub.s32 %s14, 1
      %s279 = smul.u32 8, %s19
      %p280 = scmp.lt.s32.totalorder %s279, 15
      %s281 = scalar_select %p280, %s279, 15
      %s282 = smul.addr %s281, 288
      %s283 = smul.addr %s282, 4
      %s284 = scalar_lea.vmem %s0, %s283
      %p285 = pneg %p40
      %p286 = pneg %p37
      %p287 = scmp.lt.s32.totalorder %s19, 1
      %s288 = scalar_select %p287, %s19, 1
      %s289 = smul.addr %s288, 8
      %s290 = scalar_lea.vmem %s1, %s289
      %p291 = pneg %p66
      %p292 = pneg %p63
      %p293 = pneg %p87
      %p294 = pneg %p84
      %p295 = pneg %p108
      %p296 = pneg %p105
      %p297 = pneg %p129
      %p298 = pneg %p126
      %p299 = pneg %p150
      %p300 = pneg %p147
      %p301 = pneg %p171
      %p302 = pneg %p168
      %p303 = pneg %p192
      %p304 = pneg %p189
      %p305 = pneg %p218
      %p306 = pneg %p215
      %p307 = scmp.lt.s32.totalorder %s19, 1
      %s308 = scalar_select %p307, %s19, 1
      %s309 = smul.addr %s308, 8
      %s310 = scalar_lea.vmem %s8, %s309
      %s311 = smul.u32 8, %s19
      %p312 = scmp.lt.s32.totalorder %s311, 15
      %s313 = scalar_select %p312, %s311, 15
      %s314 = smul.addr %s313, 288
      %s315 = smul.addr %s314, 4
      %s316 = scalar_lea.vmem %s0, %s315
      %s317 = smul.u32 8, %s19
      %p318 = scmp.lt.s32.totalorder %s19, 1
      %s319 = scalar_select %p318, %s19, 1
      %s320 = smul.addr %s319, 8
      %s321 = scalar_lea.vmem %s1, %s320
      %p322 = scmp.lt.s32.totalorder %s19, 1
      %s323 = scalar_select %p322, %s19, 1
      %s324 = smul.addr %s323, 8
      %s325 = scalar_lea.vmem %s8, %s324
      %v327 = vlaneseq
      %v328 = vshrl.u32 %v327, 7
      %v329 = vadd.s32 %v328, 8
      %v330 = vadd.s32 %v328, 16
      %v331 = vadd.s32 %v328, 24
      %v332 = vadd.s32 %v328, 32
      %v333 = vadd.s32 %v328, 40
      %v334 = vadd.s32 %v328, 48
      %v335 = vadd.s32 %v328, 56
      %v336 = vadd.s32 %v328, 64
      %v337 = vadd.s32 %v328, 72
      %v338 = vadd.s32 %v328, 80
      %v339 = vadd.s32 %v328, 88
      %v340 = vadd.s32 %v328, 96
      %v341 = vadd.s32 %v328, 104
      %v342 = vadd.s32 %v328, 112
      %v343 = vadd.s32 %v328, 120
      %v344 = vadd.s32 %v328, 128
      %v345 = vadd.s32 %v328, 136
      %v346 = vadd.s32 %v328, 144
      %v347 = vadd.s32 %v328, 152
      %v348 = vadd.s32 %v328, 160
      %v349 = vadd.s32 %v328, 168
      %v350 = vadd.s32 %v328, 176
      %v351 = vadd.s32 %v328, 184
      %v352 = vadd.s32 %v328, 192
      %v353 = vadd.s32 %v328, 200
      %v354 = vadd.s32 %v328, 208
      %v355 = vadd.s32 %v328, 216
      %v356 = vadd.s32 %v328, 224
      %v357 = vadd.s32 %v328, 232
      %v358 = vadd.s32 %v328, 240
      %v359 = vadd.s32 %v328, 248
      %v360 = vadd.s32 %v328, 256
      %v361 = vadd.s32 %v328, 264
      %v362 = vadd.s32 %v328, 272
      %v363 = vadd.s32 %v328, 280
      %v364 = vadd.s32 %v328, 288
      %v365 = vadd.s32 %v328, 296
      %v366 = vadd.s32 %v328, 304
      %v367 = vadd.s32 %v328, 312
      %v368 = vadd.s32 %v328, 320
      %v369 = vadd.s32 %v328, 328
      %v370 = vadd.s32 %v328, 336
      %v371 = vadd.s32 %v328, 344
      %v372 = vadd.s32 %v328, 352
      %v373 = vadd.s32 %v328, 360
      %v374 = vadd.s32 %v328, 368
      %v375 = vadd.s32 %v328, 376
      %v376 = vadd.s32 %v328, 384
      %v377 = vadd.s32 %v328, 392
      %v378 = vadd.s32 %v328, 400
      %v379 = vadd.s32 %v328, 408
      %v380 = vadd.s32 %v328, 416
      %v381 = vadd.s32 %v328, 424
      %v382 = vadd.s32 %v328, 432
      %v383 = vadd.s32 %v328, 440
      %v384 = vadd.s32 %v328, 448
      %v385 = vadd.s32 %v328, 456
      %v386 = vadd.s32 %v328, 464
      %v387 = vadd.s32 %v328, 472
      %v388 = vadd.s32 %v328, 480
      %v389 = vadd.s32 %v328, 488
      %v390 = vadd.s32 %v328, 496
      %v391 = vadd.s32 %v328, 504
      %v392 = vadd.s32 %v328, 512
      %v393 = vadd.s32 %v328, 520
      %v394 = vadd.s32 %v328, 528
      %v395 = vadd.s32 %v328, 536
      %v396 = vadd.s32 %v328, 544
      %v397 = vadd.s32 %v328, 552
      %v398 = vadd.s32 %v328, 560
      %v399 = vadd.s32 %v328, 568
      %v400 = vmul.u32 %v328, 2731
      %v401 = vmul.u32 %v329, 2731
      %v402 = vmul.u32 %v330, 2731
      %v403 = vmul.u32 %v331, 2731
      %v404 = vmul.u32 %v332, 2731
      %v405 = vmul.u32 %v333, 2731
      %v406 = vmul.u32 %v334, 2731
      %v407 = vmul.u32 %v335, 2731
      %v408 = vmul.u32 %v336, 2731
      %v409 = vmul.u32 %v337, 2731
      %v410 = vmul.u32 %v338, 2731
      %v411 = vmul.u32 %v339, 2731
      %v412 = vmul.u32 %v340, 2731
      %v413 = vmul.u32 %v341, 2731
      %v414 = vmul.u32 %v342, 2731
      %v415 = vmul.u32 %v343, 2731
      %v416 = vmul.u32 %v344, 2731
      %v417 = vmul.u32 %v345, 2731
      %v418 = vmul.u32 %v346, 2731
      %v419 = vmul.u32 %v347, 2731
      %v420 = vmul.u32 %v348, 2731
      %v421 = vmul.u32 %v349, 2731
      %v422 = vmul.u32 %v350, 2731
      %v423 = vmul.u32 %v351, 2731
      %v424 = vmul.u32 %v352, 2731
      %v425 = vmul.u32 %v353, 2731
      %v426 = vmul.u32 %v354, 2731
      %v427 = vmul.u32 %v355, 2731
      %v428 = vmul.u32 %v356, 2731
      %v429 = vmul.u32 %v357, 2731
      %v430 = vmul.u32 %v358, 2731
      %v431 = vmul.u32 %v359, 2731
      %v432 = vmul.u32 %v360, 2731
      %v433 = vmul.u32 %v361, 2731
      %v434 = vmul.u32 %v362, 2731
      %v435 = vmul.u32 %v363, 2731
      %v436 = vmul.u32 %v364, 2731
      %v437 = vmul.u32 %v365, 2731
      %v438 = vmul.u32 %v366, 2731
      %v439 = vmul.u32 %v367, 2731
      %v440 = vmul.u32 %v368, 2731
      %v441 = vmul.u32 %v369, 2731
      %v442 = vmul.u32 %v370, 2731
      %v443 = vmul.u32 %v371, 2731
      %v444 = vmul.u32 %v372, 2731
      %v445 = vmul.u32 %v373, 2731
      %v446 = vmul.u32 %v374, 2731
      %v447 = vmul.u32 %v375, 2731
      %v448 = vmul.u32 %v376, 2731
      %v449 = vmul.u32 %v377, 2731
      %v450 = vmul.u32 %v378, 2731
      %v451 = vmul.u32 %v379, 2731
      %v452 = vmul.u32 %v380, 2731
      %v453 = vmul.u32 %v381, 2731
      %v454 = vmul.u32 %v382, 2731
      %v455 = vmul.u32 %v383, 2731
      %v456 = vmul.u32 %v384, 2731
      %v457 = vmul.u32 %v385, 2731
      %v458 = vmul.u32 %v386, 2731
      %v459 = vmul.u32 %v387, 2731
      %v460 = vmul.u32 %v388, 2731
      %v461 = vmul.u32 %v389, 2731
      %v462 = vmul.u32 %v390, 2731
      %v463 = vmul.u32 %v391, 2731
      %v464 = vmul.u32 %v392, 2731
      %v465 = vmul.u32 %v393, 2731
      %v466 = vmul.u32 %v394, 2731
      %v467 = vmul.u32 %v395, 2731
      %v468 = vmul.u32 %v396, 2731
      %v469 = vmul.u32 %v397, 2731
      %v470 = vmul.u32 %v398, 2731
      %v471 = vmul.u32 %v399, 2731
      %v472 = vshra.s32 %v400, 16
      %v473 = vshra.s32 %v401, 16
      %v474 = vshra.s32 %v402, 16
      %v475 = vshra.s32 %v403, 16
      %v476 = vshra.s32 %v404, 16
      %v477 = vshra.s32 %v405, 16
      %v478 = vshra.s32 %v406, 16
      %v479 = vshra.s32 %v407, 16
      %v480 = vshra.s32 %v408, 16
      %v481 = vshra.s32 %v409, 16
      %v482 = vshra.s32 %v410, 16
      %v483 = vshra.s32 %v411, 16
      %v484 = vshra.s32 %v412, 16
      %v485 = vshra.s32 %v413, 16
      %v486 = vshra.s32 %v414, 16
      %v487 = vshra.s32 %v415, 16
      %v488 = vshra.s32 %v416, 16
      %v489 = vshra.s32 %v417, 16
      %v490 = vshra.s32 %v418, 16
      %v491 = vshra.s32 %v419, 16
      %v492 = vshra.s32 %v420, 16
      %v493 = vshra.s32 %v421, 16
      %v494 = vshra.s32 %v422, 16
      %v495 = vshra.s32 %v423, 16
      %v496 = vshra.s32 %v424, 16
      %v497 = vshra.s32 %v425, 16
      %v498 = vshra.s32 %v426, 16
      %v499 = vshra.s32 %v427, 16
      %v500 = vshra.s32 %v428, 16
      %v501 = vshra.s32 %v429, 16
      %v502 = vshra.s32 %v430, 16
      %v503 = vshra.s32 %v431, 16
      %v504 = vshra.s32 %v432, 16
      %v505 = vshra.s32 %v433, 16
      %v506 = vshra.s32 %v434, 16
      %v507 = vshra.s32 %v435, 16
      %v508 = vshra.s32 %v436, 16
      %v509 = vshra.s32 %v437, 16
      %v510 = vshra.s32 %v438, 16
      %v511 = vshra.s32 %v439, 16
      %v512 = vshra.s32 %v440, 16
      %v513 = vshra.s32 %v441, 16
      %v514 = vshra.s32 %v442, 16
      %v515 = vshra.s32 %v443, 16
      %v516 = vshra.s32 %v444, 16
      %v517 = vshra.s32 %v445, 16
      %v518 = vshra.s32 %v446, 16
      %v519 = vshra.s32 %v447, 16
      %v520 = vshra.s32 %v448, 16
      %v521 = vshra.s32 %v449, 16
      %v522 = vshra.s32 %v450, 16
      %v523 = vshra.s32 %v451, 16
      %v524 = vshra.s32 %v452, 16
      %v525 = vshra.s32 %v453, 16
      %v526 = vshra.s32 %v454, 16
      %v527 = vshra.s32 %v455, 16
      %v528 = vshra.s32 %v456, 16
      %v529 = vshra.s32 %v457, 16
      %v530 = vshra.s32 %v458, 16
      %v531 = vshra.s32 %v459, 16
      %v532 = vshra.s32 %v460, 16
      %v533 = vshra.s32 %v461, 16
      %v534 = vshra.s32 %v462, 16
      %v535 = vshra.s32 %v463, 16
      %v536 = vshra.s32 %v464, 16
      %v537 = vshra.s32 %v465, 16
      %v538 = vshra.s32 %v466, 16
      %v539 = vshra.s32 %v467, 16
      %v540 = vshra.s32 %v468, 16
      %v541 = vshra.s32 %v469, 16
      %v542 = vshra.s32 %v470, 16
      %v543 = vshra.s32 %v471, 16
      %v544 = vmul.u32 %v472, 24
      %v545 = vmul.u32 %v473, 24
      %v546 = vmul.u32 %v474, 24
      %v547 = vmul.u32 %v475, 24
      %v548 = vmul.u32 %v476, 24
      %v549 = vmul.u32 %v477, 24
      %v550 = vmul.u32 %v478, 24
      %v551 = vmul.u32 %v479, 24
      %v552 = vmul.u32 %v480, 24
      %v553 = vmul.u32 %v481, 24
      %v554 = vmul.u32 %v482, 24
      %v555 = vmul.u32 %v483, 24
      %v556 = vmul.u32 %v484, 24
      %v557 = vmul.u32 %v485, 24
      %v558 = vmul.u32 %v486, 24
      %v559 = vmul.u32 %v487, 24
      %v560 = vmul.u32 %v488, 24
      %v561 = vmul.u32 %v489, 24
      %v562 = vmul.u32 %v490, 24
      %v563 = vmul.u32 %v491, 24
      %v564 = vmul.u32 %v492, 24
      %v565 = vmul.u32 %v493, 24
      %v566 = vmul.u32 %v494, 24
      %v567 = vmul.u32 %v495, 24
      %v568 = vmul.u32 %v496, 24
      %v569 = vmul.u32 %v497, 24
      %v570 = vmul.u32 %v498, 24
      %v571 = vmul.u32 %v499, 24
      %v572 = vmul.u32 %v500, 24
      %v573 = vmul.u32 %v501, 24
      %v574 = vmul.u32 %v502, 24
      %v575 = vmul.u32 %v503, 24
      %v576 = vmul.u32 %v504, 24
      %v577 = vmul.u32 %v505, 24
      %v578 = vmul.u32 %v506, 24
      %v579 = vmul.u32 %v507, 24
      %v580 = vmul.u32 %v508, 24
      %v581 = vmul.u32 %v509, 24
      %v582 = vmul.u32 %v510, 24
      %v583 = vmul.u32 %v511, 24
      %v584 = vmul.u32 %v512, 24
      %v585 = vmul.u32 %v513, 24
      %v586 = vmul.u32 %v514, 24
      %v587 = vmul.u32 %v515, 24
      %v588 = vmul.u32 %v516, 24
      %v589 = vmul.u32 %v517, 24
      %v590 = vmul.u32 %v518, 24
      %v591 = vmul.u32 %v519, 24
      %v592 = vmul.u32 %v520, 24
      %v593 = vmul.u32 %v521, 24
      %v594 = vmul.u32 %v522, 24
      %v595 = vmul.u32 %v523, 24
      %v596 = vmul.u32 %v524, 24
      %v597 = vmul.u32 %v525, 24
      %v598 = vmul.u32 %v526, 24
      %v599 = vmul.u32 %v527, 24
      %v600 = vmul.u32 %v528, 24
      %v601 = vmul.u32 %v529, 24
      %v602 = vmul.u32 %v530, 24
      %v603 = vmul.u32 %v531, 24
      %v604 = vmul.u32 %v532, 24
      %v605 = vmul.u32 %v533, 24
      %v606 = vmul.u32 %v534, 24
      %v607 = vmul.u32 %v535, 24
      %v608 = vmul.u32 %v536, 24
      %v609 = vmul.u32 %v537, 24
      %v610 = vmul.u32 %v538, 24
      %v611 = vmul.u32 %v539, 24
      %v612 = vmul.u32 %v540, 24
      %v613 = vmul.u32 %v541, 24
      %v614 = vmul.u32 %v542, 24
      %v615 = vmul.u32 %v543, 24
      %vm616 = vcmp.ge.s32.totalorder %v328, 24
      %vm617 = vcmp.ge.s32.totalorder %v329, 24
      %vm618 = vcmp.ge.s32.totalorder %v330, 24
      %vm619 = vcmp.ge.s32.totalorder %v331, 24
      %vm620 = vcmp.ge.s32.totalorder %v332, 24
      %vm621 = vcmp.ge.s32.totalorder %v333, 24
      %vm622 = vcmp.ge.s32.totalorder %v334, 24
      %vm623 = vcmp.ge.s32.totalorder %v335, 24
      %vm624 = vcmp.ge.s32.totalorder %v336, 24
      %vm625 = vcmp.ge.s32.totalorder %v337, 24
      %vm626 = vcmp.ge.s32.totalorder %v338, 24
      %vm627 = vcmp.ge.s32.totalorder %v339, 24
      %vm628 = vcmp.ge.s32.totalorder %v340, 24
      %vm629 = vcmp.ge.s32.totalorder %v341, 24
      %vm630 = vcmp.ge.s32.totalorder %v342, 24
      %vm631 = vcmp.ge.s32.totalorder %v343, 24
      %vm632 = vcmp.ge.s32.totalorder %v344, 24
      %vm633 = vcmp.ge.s32.totalorder %v345, 24
      %vm634 = vcmp.ge.s32.totalorder %v346, 24
      %vm635 = vcmp.ge.s32.totalorder %v347, 24
      %vm636 = vcmp.ge.s32.totalorder %v348, 24
      %vm637 = vcmp.ge.s32.totalorder %v349, 24
      %vm638 = vcmp.ge.s32.totalorder %v350, 24
      %vm639 = vcmp.ge.s32.totalorder %v351, 24
      %vm640 = vcmp.ge.s32.totalorder %v352, 24
      %vm641 = vcmp.ge.s32.totalorder %v353, 24
      %vm642 = vcmp.ge.s32.totalorder %v354, 24
      %vm643 = vcmp.ge.s32.totalorder %v355, 24
      %vm644 = vcmp.ge.s32.totalorder %v356, 24
      %vm645 = vcmp.ge.s32.totalorder %v357, 24
      %vm646 = vcmp.ge.s32.totalorder %v358, 24
      %vm647 = vcmp.ge.s32.totalorder %v359, 24
      %vm648 = vcmp.ge.s32.totalorder %v360, 24
      %vm649 = vcmp.ge.s32.totalorder %v361, 24
      %vm650 = vcmp.ge.s32.totalorder %v362, 24
      %vm651 = vcmp.ge.s32.totalorder %v363, 24
      %vm652 = vcmp.ge.s32.totalorder %v364, 24
      %vm653 = vcmp.ge.s32.totalorder %v365, 24
      %vm654 = vcmp.ge.s32.totalorder %v366, 24
      %vm655 = vcmp.ge.s32.totalorder %v367, 24
      %vm656 = vcmp.ge.s32.totalorder %v368, 24
      %vm657 = vcmp.ge.s32.totalorder %v369, 24
      %vm658 = vcmp.ge.s32.totalorder %v370, 24
      %vm659 = vcmp.ge.s32.totalorder %v371, 24
      %vm660 = vcmp.ge.s32.totalorder %v372, 24
      %vm661 = vcmp.ge.s32.totalorder %v373, 24
      %vm662 = vcmp.ge.s32.totalorder %v374, 24
      %vm663 = vcmp.ge.s32.totalorder %v375, 24
      %vm664 = vcmp.ge.s32.totalorder %v376, 24
      %vm665 = vcmp.ge.s32.totalorder %v377, 24
      %vm666 = vcmp.ge.s32.totalorder %v378, 24
      %vm667 = vcmp.ge.s32.totalorder %v379, 24
      %vm668 = vcmp.ge.s32.totalorder %v380, 24
      %vm669 = vcmp.ge.s32.totalorder %v381, 24
      %vm670 = vcmp.ge.s32.totalorder %v382, 24
      %vm671 = vcmp.ge.s32.totalorder %v383, 24
      %vm672 = vcmp.ge.s32.totalorder %v384, 24
      %vm673 = vcmp.ge.s32.totalorder %v385, 24
      %vm674 = vcmp.ge.s32.totalorder %v386, 24
      %vm675 = vcmp.ge.s32.totalorder %v387, 24
      %vm676 = vcmp.ge.s32.totalorder %v388, 24
      %vm677 = vcmp.ge.s32.totalorder %v389, 24
      %vm678 = vcmp.ge.s32.totalorder %v390, 24
      %vm679 = vcmp.ge.s32.totalorder %v391, 24
      %vm680 = vcmp.ge.s32.totalorder %v392, 24
      %vm681 = vcmp.ge.s32.totalorder %v393, 24
      %vm682 = vcmp.ge.s32.totalorder %v394, 24
      %vm683 = vcmp.ge.s32.totalorder %v395, 24
      %vm684 = vcmp.ge.s32.totalorder %v396, 24
      %vm685 = vcmp.ge.s32.totalorder %v397, 24
      %vm686 = vcmp.ge.s32.totalorder %v398, 24
      %vm687 = vcmp.ge.s32.totalorder %v399, 24
      %v688 = vsub.s32 %v328, %v544
      %v689 = vsub.s32 %v329, %v545
      %v690 = vsub.s32 %v330, %v546
      %v691 = vsub.s32 %v331, %v547
      %v692 = vsub.s32 %v332, %v548
      %v693 = vsub.s32 %v333, %v549
      %v694 = vsub.s32 %v334, %v550
      %v695 = vsub.s32 %v335, %v551
      %v696 = vsub.s32 %v336, %v552
      %v697 = vsub.s32 %v337, %v553
      %v698 = vsub.s32 %v338, %v554
      %v699 = vsub.s32 %v339, %v555
      %v700 = vsub.s32 %v340, %v556
      %v701 = vsub.s32 %v341, %v557
      %v702 = vsub.s32 %v342, %v558
      %v703 = vsub.s32 %v343, %v559
      %v704 = vsub.s32 %v344, %v560
      %v705 = vsub.s32 %v345, %v561
      %v706 = vsub.s32 %v346, %v562
      %v707 = vsub.s32 %v347, %v563
      %v708 = vsub.s32 %v348, %v564
      %v709 = vsub.s32 %v349, %v565
      %v710 = vsub.s32 %v350, %v566
      %v711 = vsub.s32 %v351, %v567
      %v712 = vsub.s32 %v352, %v568
      %v713 = vsub.s32 %v353, %v569
      %v714 = vsub.s32 %v354, %v570
      %v715 = vsub.s32 %v355, %v571
      %v716 = vsub.s32 %v356, %v572
      %v717 = vsub.s32 %v357, %v573
      %v718 = vsub.s32 %v358, %v574
      %v719 = vsub.s32 %v359, %v575
      %v720 = vsub.s32 %v360, %v576
      %v721 = vsub.s32 %v361, %v577
      %v722 = vsub.s32 %v362, %v578
      %v723 = vsub.s32 %v363, %v579
      %v724 = vsub.s32 %v364, %v580
      %v725 = vsub.s32 %v365, %v581
      %v726 = vsub.s32 %v366, %v582
      %v727 = vsub.s32 %v367, %v583
      %v728 = vsub.s32 %v368, %v584
      %v729 = vsub.s32 %v369, %v585
      %v730 = vsub.s32 %v370, %v586
      %v731 = vsub.s32 %v371, %v587
      %v732 = vsub.s32 %v372, %v588
      %v733 = vsub.s32 %v373, %v589
      %v734 = vsub.s32 %v374, %v590
      %v735 = vsub.s32 %v375, %v591
      %v736 = vsub.s32 %v376, %v592
      %v737 = vsub.s32 %v377, %v593
      %v738 = vsub.s32 %v378, %v594
      %v739 = vsub.s32 %v379, %v595
      %v740 = vsub.s32 %v380, %v596
      %v741 = vsub.s32 %v381, %v597
      %v742 = vsub.s32 %v382, %v598
      %v743 = vsub.s32 %v383, %v599
      %v744 = vsub.s32 %v384, %v600
      %v745 = vsub.s32 %v385, %v601
      %v746 = vsub.s32 %v386, %v602
      %v747 = vsub.s32 %v387, %v603
      %v748 = vsub.s32 %v388, %v604
      %v749 = vsub.s32 %v389, %v605
      %v750 = vsub.s32 %v390, %v606
      %v751 = vsub.s32 %v391, %v607
      %v752 = vsub.s32 %v392, %v608
      %v753 = vsub.s32 %v393, %v609
      %v754 = vsub.s32 %v394, %v610
      %v755 = vsub.s32 %v395, %v611
      %v756 = vsub.s32 %v396, %v612
      %v757 = vsub.s32 %v397, %v613
      %v758 = vsub.s32 %v398, %v614
      %v759 = vsub.s32 %v399, %v615
      %vm760 = vcmp.ne.s32.totalorder %v688, 0
      %vm761 = vcmp.ne.s32.totalorder %v689, 0
      %vm762 = vcmp.ne.s32.totalorder %v690, 0
      %vm763 = vcmp.ne.s32.totalorder %v691, 0
      %vm764 = vcmp.ne.s32.totalorder %v692, 0
      %vm765 = vcmp.ne.s32.totalorder %v693, 0
      %vm766 = vcmp.ne.s32.totalorder %v694, 0
      %vm767 = vcmp.ne.s32.totalorder %v695, 0
      %vm768 = vcmp.ne.s32.totalorder %v696, 0
      %vm769 = vcmp.ne.s32.totalorder %v697, 0
      %vm770 = vcmp.ne.s32.totalorder %v698, 0
      %vm771 = vcmp.ne.s32.totalorder %v699, 0
      %vm772 = vcmp.ne.s32.totalorder %v700, 0
      %vm773 = vcmp.ne.s32.totalorder %v701, 0
      %vm774 = vcmp.ne.s32.totalorder %v702, 0
      %vm775 = vcmp.ne.s32.totalorder %v703, 0
      %vm776 = vcmp.ne.s32.totalorder %v704, 0
      %vm777 = vcmp.ne.s32.totalorder %v705, 0
      %vm778 = vcmp.ne.s32.totalorder %v706, 0
      %vm779 = vcmp.ne.s32.totalorder %v707, 0
      %vm780 = vcmp.ne.s32.totalorder %v708, 0
      %vm781 = vcmp.ne.s32.totalorder %v709, 0
      %vm782 = vcmp.ne.s32.totalorder %v710, 0
      %vm783 = vcmp.ne.s32.totalorder %v711, 0
      %vm784 = vcmp.ne.s32.totalorder %v712, 0
      %vm785 = vcmp.ne.s32.totalorder %v713, 0
      %vm786 = vcmp.ne.s32.totalorder %v714, 0
      %vm787 = vcmp.ne.s32.totalorder %v715, 0
      %vm788 = vcmp.ne.s32.totalorder %v716, 0
      %vm789 = vcmp.ne.s32.totalorder %v717, 0
      %vm790 = vcmp.ne.s32.totalorder %v718, 0
      %vm791 = vcmp.ne.s32.totalorder %v719, 0
      %vm792 = vcmp.ne.s32.totalorder %v720, 0
      %vm793 = vcmp.ne.s32.totalorder %v721, 0
      %vm794 = vcmp.ne.s32.totalorder %v722, 0
      %vm795 = vcmp.ne.s32.totalorder %v723, 0
      %vm796 = vcmp.ne.s32.totalorder %v724, 0
      %vm797 = vcmp.ne.s32.totalorder %v725, 0
      %vm798 = vcmp.ne.s32.totalorder %v726, 0
      %vm799 = vcmp.ne.s32.totalorder %v727, 0
      %vm800 = vcmp.ne.s32.totalorder %v728, 0
      %vm801 = vcmp.ne.s32.totalorder %v729, 0
      %vm802 = vcmp.ne.s32.totalorder %v730, 0
      %vm803 = vcmp.ne.s32.totalorder %v731, 0
      %vm804 = vcmp.ne.s32.totalorder %v732, 0
      %vm805 = vcmp.ne.s32.totalorder %v733, 0
      %vm806 = vcmp.ne.s32.totalorder %v734, 0
      %vm807 = vcmp.ne.s32.totalorder %v735, 0
      %vm808 = vcmp.ne.s32.totalorder %v736, 0
      %vm809 = vcmp.ne.s32.totalorder %v737, 0
      %vm810 = vcmp.ne.s32.totalorder %v738, 0
      %vm811 = vcmp.ne.s32.totalorder %v739, 0
      %vm812 = vcmp.ne.s32.totalorder %v740, 0
      %vm813 = vcmp.ne.s32.totalorder %v741, 0
      %vm814 = vcmp.ne.s32.totalorder %v742, 0
      %vm815 = vcmp.ne.s32.totalorder %v743, 0
      %vm816 = vcmp.ne.s32.totalorder %v744, 0
      %vm817 = vcmp.ne.s32.totalorder %v745, 0
      %vm818 = vcmp.ne.s32.totalorder %v746, 0
      %vm819 = vcmp.ne.s32.totalorder %v747, 0
      %vm820 = vcmp.ne.s32.totalorder %v748, 0
      %vm821 = vcmp.ne.s32.totalorder %v749, 0
      %vm822 = vcmp.ne.s32.totalorder %v750, 0
      %vm823 = vcmp.ne.s32.totalorder %v751, 0
      %vm824 = vcmp.ne.s32.totalorder %v752, 0
      %vm825 = vcmp.ne.s32.totalorder %v753, 0
      %vm826 = vcmp.ne.s32.totalorder %v754, 0
      %vm827 = vcmp.ne.s32.totalorder %v755, 0
      %vm828 = vcmp.ne.s32.totalorder %v756, 0
      %vm829 = vcmp.ne.s32.totalorder %v757, 0
      %vm830 = vcmp.ne.s32.totalorder %v758, 0
      %vm831 = vcmp.ne.s32.totalorder %v759, 0
      %vm832 = vmand %vm616, %vm760
      %vm833 = vmand %vm617, %vm761
      %vm834 = vmand %vm618, %vm762
      %vm835 = vmand %vm619, %vm763
      %vm836 = vmand %vm620, %vm764
      %vm837 = vmand %vm621, %vm765
      %vm838 = vmand %vm622, %vm766
      %vm839 = vmand %vm623, %vm767
      %vm840 = vmand %vm624, %vm768
      %vm841 = vmand %vm625, %vm769
      %vm842 = vmand %vm626, %vm770
      %vm843 = vmand %vm627, %vm771
      %vm844 = vmand %vm628, %vm772
      %vm845 = vmand %vm629, %vm773
      %vm846 = vmand %vm630, %vm774
      %vm847 = vmand %vm631, %vm775
      %vm848 = vmand %vm632, %vm776
      %vm849 = vmand %vm633, %vm777
      %vm850 = vmand %vm634, %vm778
      %vm851 = vmand %vm635, %vm779
      %vm852 = vmand %vm636, %vm780
      %vm853 = vmand %vm637, %vm781
      %vm854 = vmand %vm638, %vm782
      %vm855 = vmand %vm639, %vm783
      %vm856 = vmand %vm640, %vm784
      %vm857 = vmand %vm641, %vm785
      %vm858 = vmand %vm642, %vm786
      %vm859 = vmand %vm643, %vm787
      %vm860 = vmand %vm644, %vm788
      %vm861 = vmand %vm645, %vm789
      %vm862 = vmand %vm646, %vm790
      %vm863 = vmand %vm647, %vm791
      %vm864 = vmand %vm648, %vm792
      %vm865 = vmand %vm649, %vm793
      %vm866 = vmand %vm650, %vm794
      %vm867 = vmand %vm651, %vm795
      %vm868 = vmand %vm652, %vm796
      %vm869 = vmand %vm653, %vm797
      %vm870 = vmand %vm654, %vm798
      %vm871 = vmand %vm655, %vm799
      %vm872 = vmand %vm656, %vm800
      %vm873 = vmand %vm657, %vm801
      %vm874 = vmand %vm658, %vm802
      %vm875 = vmand %vm659, %vm803
      %vm876 = vmand %vm660, %vm804
      %vm877 = vmand %vm661, %vm805
      %vm878 = vmand %vm662, %vm806
      %vm879 = vmand %vm663, %vm807
      %vm880 = vmand %vm664, %vm808
      %vm881 = vmand %vm665, %vm809
      %vm882 = vmand %vm666, %vm810
      %vm883 = vmand %vm667, %vm811
      %vm884 = vmand %vm668, %vm812
      %vm885 = vmand %vm669, %vm813
      %vm886 = vmand %vm670, %vm814
      %vm887 = vmand %vm671, %vm815
      %vm888 = vmand %vm672, %vm816
      %vm889 = vmand %vm673, %vm817
      %vm890 = vmand %vm674, %vm818
      %vm891 = vmand %vm675, %vm819
      %vm892 = vmand %vm676, %vm820
      %vm893 = vmand %vm677, %vm821
      %vm894 = vmand %vm678, %vm822
      %vm895 = vmand %vm679, %vm823
      %vm896 = vmand %vm680, %vm824
      %vm897 = vmand %vm681, %vm825
      %vm898 = vmand %vm682, %vm826
      %vm899 = vmand %vm683, %vm827
      %vm900 = vmand %vm684, %vm828
      %vm901 = vmand %vm685, %vm829
      %vm902 = vmand %vm686, %vm830
      %vm903 = vmand %vm687, %vm831
      loop: start=0, step=1, limit=8
      $region53: #{classification_forward.1} parent=51 // loop_pre_header
        _
      $region54: #{classification_forward.1} parent=51 // loop_header
        %s905 = sphi 0, %s909
        %p906 = scmp.ge.s32.totalorder %s905, 8
        %v910 = vphi 0.0, %v8572
      $region55: #{classification_forward.1} parent=51 // loop_header_branch
        %908 = sbr.rel (%p906) target = $region59
      $region56: #{classification_forward.1} parent=51 // loop_body
        %s911 = smul.u32 %s905, 288
        %s912 = smul.addr %s911, 4
        %s913 = scalar_lea.vmem %s316, %s912
        %v914 = vld [vmem:[%s913] sm:$0xf]
        %v915 = vld [vmem:[%s913 + $0x4] sm:$0xf]
        %v916 = vld [vmem:[%s913 + $0x8] sm:$0xf]
        %v917 = vld [vmem:[%s913 + $0xc] sm:$0xf]
        %v918 = vld [vmem:[%s913 + $0x10] sm:$0xf]
        %v919 = vld [vmem:[%s913 + $0x14] sm:$0xf]
        %v920 = vld [vmem:[%s913 + $0x18] sm:$0xf]
        %v921 = vld [vmem:[%s913 + $0x1c] sm:$0xf]
        %v922 = vld [vmem:[%s913 + $0x20] sm:$0xf]
        %v923 = vld [vmem:[%s913 + $0x24] sm:$0xf]
        %v924 = vld [vmem:[%s913 + $0x28] sm:$0xf]
        %v925 = vld [vmem:[%s913 + $0x2c] sm:$0xf]
        %v926 = vld [vmem:[%s913 + $0x30] sm:$0xf]
        %v927 = vld [vmem:[%s913 + $0x34] sm:$0xf]
        %v928 = vld [vmem:[%s913 + $0x38] sm:$0xf]
        %v929 = vld [vmem:[%s913 + $0x3c] sm:$0xf]
        %v930 = vld [vmem:[%s913 + $0x40] sm:$0xf]
        %v931 = vld [vmem:[%s913 + $0x44] sm:$0xf]
        %v932 = vld [vmem:[%s913 + $0x48] sm:$0xf]
        %v933 = vld [vmem:[%s913 + $0x4c] sm:$0xf]
        %v934 = vld [vmem:[%s913 + $0x50] sm:$0xf]
        %v935 = vld [vmem:[%s913 + $0x54] sm:$0xf]
        %v936 = vld [vmem:[%s913 + $0x58] sm:$0xf]
        %v937 = vld [vmem:[%s913 + $0x5c] sm:$0xf]
        %v938 = vld [vmem:[%s913 + $0x60] sm:$0xf]
        %v939 = vld [vmem:[%s913 + $0x64] sm:$0xf]
        %v940 = vld [vmem:[%s913 + $0x68] sm:$0xf]
        %v941 = vld [vmem:[%s913 + $0x6c] sm:$0xf]
        %v942 = vld [vmem:[%s913 + $0x70] sm:$0xf]
        %v943 = vld [vmem:[%s913 + $0x74] sm:$0xf]
        %v944 = vld [vmem:[%s913 + $0x78] sm:$0xf]
        %v945 = vld [vmem:[%s913 + $0x7c] sm:$0xf]
        %v946 = vld [vmem:[%s913 + $0x80] sm:$0xf]
        %v947 = vld [vmem:[%s913 + $0x84] sm:$0xf]
        %v948 = vld [vmem:[%s913 + $0x88] sm:$0xf]
        %v949 = vld [vmem:[%s913 + $0x8c] sm:$0xf]
        %v950 = vld [vmem:[%s913 + $0x90] sm:$0xf]
        %v951 = vld [vmem:[%s913 + $0x94] sm:$0xf]
        %v952 = vld [vmem:[%s913 + $0x98] sm:$0xf]
        %v953 = vld [vmem:[%s913 + $0x9c] sm:$0xf]
        %v954 = vld [vmem:[%s913 + $0xa0] sm:$0xf]
        %v955 = vld [vmem:[%s913 + $0xa4] sm:$0xf]
        %v956 = vld [vmem:[%s913 + $0xa8] sm:$0xf]
        %v957 = vld [vmem:[%s913 + $0xac] sm:$0xf]
        %v958 = vld [vmem:[%s913 + $0xb0] sm:$0xf]
        %v959 = vld [vmem:[%s913 + $0xb4] sm:$0xf]
        %v960 = vld [vmem:[%s913 + $0xb8] sm:$0xf]
        %v961 = vld [vmem:[%s913 + $0xbc] sm:$0xf]
        %v962 = vld [vmem:[%s913 + $0xc0] sm:$0xf]
        %v963 = vld [vmem:[%s913 + $0xc4] sm:$0xf]
        %v964 = vld [vmem:[%s913 + $0xc8] sm:$0xf]
        %v965 = vld [vmem:[%s913 + $0xcc] sm:$0xf]
        %v966 = vld [vmem:[%s913 + $0xd0] sm:$0xf]
        %v967 = vld [vmem:[%s913 + $0xd4] sm:$0xf]
        %v968 = vld [vmem:[%s913 + $0xd8] sm:$0xf]
        %v969 = vld [vmem:[%s913 + $0xdc] sm:$0xf]
        %v970 = vld [vmem:[%s913 + $0xe0] sm:$0xf]
        %v971 = vld [vmem:[%s913 + $0xe4] sm:$0xf]
        %v972 = vld [vmem:[%s913 + $0xe8] sm:$0xf]
        %v973 = vld [vmem:[%s913 + $0xec] sm:$0xf]
        %v974 = vld [vmem:[%s913 + $0xf0] sm:$0xf]
        %v975 = vld [vmem:[%s913 + $0xf4] sm:$0xf]
        %v976 = vld [vmem:[%s913 + $0xf8] sm:$0xf]
        %v977 = vld [vmem:[%s913 + $0xfc] sm:$0xf]
        %v978 = vld [vmem:[%s913 + $0x100] sm:$0xf]
        %v979 = vld [vmem:[%s913 + $0x104] sm:$0xf]
        %v980 = vld [vmem:[%s913 + $0x108] sm:$0xf]
        %v981 = vld [vmem:[%s913 + $0x10c] sm:$0xf]
        %v982 = vld [vmem:[%s913 + $0x110] sm:$0xf]
        %v983 = vld [vmem:[%s913 + $0x114] sm:$0xf]
        %v984 = vld [vmem:[%s913 + $0x118] sm:$0xf]
        %v985 = vld [vmem:[%s913 + $0x11c] sm:$0xf]
        %v986 = vld [vmem:[%s2] sm:$0xf]
        %v987 = vld [vmem:[%s2 + $0x4] sm:$0xf]
        %v988 = vld [vmem:[%s2 + $0x8] sm:$0xf]
        %v989 = vld [vmem:[%s2 + $0xc] sm:$0xf]
        %v990 = vld [vmem:[%s3] sm:$0x1]
        %v992 = vlaneseq
        %v993 = vshrl.u32 %v992, 7
        %v994 = vsub.s32 0, %v993
        %v995 = vrot.slane %v990, %v994
        %v1069 = vunpack.c.l.b16 %v914
        %v1070 = vunpack.c.l.b16 %v915
        %v1071 = vunpack.c.l.b16 %v916
        %v1072 = vunpack.c.l.b16 %v917
        %v1073 = vunpack.c.l.b16 %v918
        %v1074 = vunpack.c.l.b16 %v919
        %v1075 = vunpack.c.l.b16 %v920
        %v1076 = vunpack.c.l.b16 %v921
        %v1077 = vunpack.c.l.b16 %v922
        %v1078 = vunpack.c.l.b16 %v923
        %v1079 = vunpack.c.l.b16 %v924
        %v1080 = vunpack.c.l.b16 %v925
        %v1081 = vunpack.c.l.b16 %v926
        %v1082 = vunpack.c.l.b16 %v927
        %v1083 = vunpack.c.l.b16 %v928
        %v1084 = vunpack.c.l.b16 %v929
        %v1085 = vunpack.c.l.b16 %v930
        %v1086 = vunpack.c.l.b16 %v931
        %v1087 = vunpack.c.l.b16 %v932
        %v1088 = vunpack.c.l.b16 %v933
        %v1089 = vunpack.c.l.b16 %v934
        %v1090 = vunpack.c.l.b16 %v935
        %v1091 = vunpack.c.l.b16 %v936
        %v1092 = vunpack.c.l.b16 %v937
        %v1093 = vunpack.c.l.b16 %v938
        %v1094 = vunpack.c.l.b16 %v939
        %v1095 = vunpack.c.l.b16 %v940
        %v1096 = vunpack.c.l.b16 %v941
        %v1097 = vunpack.c.l.b16 %v942
        %v1098 = vunpack.c.l.b16 %v943
        %v1099 = vunpack.c.l.b16 %v944
        %v1100 = vunpack.c.l.b16 %v945
        %v1101 = vunpack.c.l.b16 %v946
        %v1102 = vunpack.c.l.b16 %v947
        %v1103 = vunpack.c.l.b16 %v948
        %v1104 = vunpack.c.l.b16 %v949
        %v1105 = vunpack.c.l.b16 %v950
        %v1106 = vunpack.c.l.b16 %v951
        %v1107 = vunpack.c.l.b16 %v952
        %v1108 = vunpack.c.l.b16 %v953
        %v1109 = vunpack.c.l.b16 %v954
        %v1110 = vunpack.c.l.b16 %v955
        %v1111 = vunpack.c.l.b16 %v956
        %v1112 = vunpack.c.l.b16 %v957
        %v1113 = vunpack.c.l.b16 %v958
        %v1114 = vunpack.c.l.b16 %v959
        %v1115 = vunpack.c.l.b16 %v960
        %v1116 = vunpack.c.l.b16 %v961
        %v1117 = vunpack.c.l.b16 %v962
        %v1118 = vunpack.c.l.b16 %v963
        %v1119 = vunpack.c.l.b16 %v964
        %v1120 = vunpack.c.l.b16 %v965
        %v1121 = vunpack.c.l.b16 %v966
        %v1122 = vunpack.c.l.b16 %v967
        %v1123 = vunpack.c.l.b16 %v968
        %v1124 = vunpack.c.l.b16 %v969
        %v1125 = vunpack.c.l.b16 %v970
        %v1126 = vunpack.c.l.b16 %v971
        %v1127 = vunpack.c.l.b16 %v972
        %v1128 = vunpack.c.l.b16 %v973
        %v1129 = vunpack.c.l.b16 %v974
        %v1130 = vunpack.c.l.b16 %v975
        %v1131 = vunpack.c.l.b16 %v976
        %v1132 = vunpack.c.l.b16 %v977
        %v1133 = vunpack.c.l.b16 %v978
        %v1134 = vunpack.c.l.b16 %v979
        %v1135 = vunpack.c.l.b16 %v980
        %v1136 = vunpack.c.l.b16 %v981
        %v1137 = vunpack.c.l.b16 %v982
        %v1138 = vunpack.c.l.b16 %v983
        %v1139 = vunpack.c.l.b16 %v984
        %v1140 = vunpack.c.l.b16 %v985
        %v1141 = vpack.c.b16 %v1070, %v1069
        %v1142 = vpack.c.b16 %v1072, %v1071
        %v1143 = vpack.c.b16 %v1074, %v1073
        %v1144 = vpack.c.b16 %v1076, %v1075
        %v1145 = vpack.c.b16 %v1078, %v1077
        %v1146 = vpack.c.b16 %v1080, %v1079
        %v1147 = vpack.c.b16 %v1082, %v1081
        %v1148 = vpack.c.b16 %v1084, %v1083
        %v1149 = vpack.c.b16 %v1086, %v1085
        %v1150 = vpack.c.b16 %v1088, %v1087
        %v1151 = vpack.c.b16 %v1090, %v1089
        %v1152 = vpack.c.b16 %v1092, %v1091
        %v1153 = vpack.c.b16 %v1094, %v1093
        %v1154 = vpack.c.b16 %v1096, %v1095
        %v1155 = vpack.c.b16 %v1098, %v1097
        %v1156 = vpack.c.b16 %v1100, %v1099
        %v1157 = vpack.c.b16 %v1102, %v1101
        %v1158 = vpack.c.b16 %v1104, %v1103
        %v1159 = vpack.c.b16 %v1106, %v1105
        %v1160 = vpack.c.b16 %v1108, %v1107
        %v1161 = vpack.c.b16 %v1110, %v1109
        %v1162 = vpack.c.b16 %v1112, %v1111
        %v1163 = vpack.c.b16 %v1114, %v1113
        %v1164 = vpack.c.b16 %v1116, %v1115
        %v1165 = vpack.c.b16 %v1118, %v1117
        %v1166 = vpack.c.b16 %v1120, %v1119
        %v1167 = vpack.c.b16 %v1122, %v1121
        %v1168 = vpack.c.b16 %v1124, %v1123
        %v1169 = vpack.c.b16 %v1126, %v1125
        %v1170 = vpack.c.b16 %v1128, %v1127
        %v1171 = vpack.c.b16 %v1130, %v1129
        %v1172 = vpack.c.b16 %v1132, %v1131
        %v1173 = vpack.c.b16 %v1134, %v1133
        %v1174 = vpack.c.b16 %v1136, %v1135
        %v1175 = vpack.c.b16 %v1138, %v1137
        %v1176 = vpack.c.b16 %v1140, %v1139
        %v1181 = vunpack.c.l.b16 %v986
        %v1182 = vunpack.c.l.b16 %v987
        %v1183 = vunpack.c.l.b16 %v988
        %v1184 = vunpack.c.l.b16 %v989
        %v1185 = vpack.c.b16 %v1182, %v1181
        %v1186 = vpack.c.b16 %v1184, %v1183
        %vm1189 = vcmask 261120
        %v1191 = vsel %vm1189, %v1141, 0
        %v1194 = vsel %vm1189, %v1142, 0
        %v1197 = vsel %vm1189, %v1143, 0
        %v1200 = vsel %vm1189, %v1144, 0
        %v1203 = vsel %vm1189, %v1145, 0
        %v1206 = vsel %vm1189, %v1146, 0
        %v1209 = vsel %vm1189, %v1147, 0
        %v1212 = vsel %vm1189, %v1148, 0
        %v1215 = vsel %vm1189, %v1149, 0
        %v1218 = vsel %vm1189, %v1150, 0
        %v1221 = vsel %vm1189, %v1151, 0
        %v1224 = vsel %vm1189, %v1152, 0
        %v1227 = vsel %vm1189, %v1153, 0
        %v1230 = vsel %vm1189, %v1154, 0
        %v1233 = vsel %vm1189, %v1155, 0
        %v1236 = vsel %vm1189, %v1156, 0
        %v1239 = vsel %vm1189, %v1157, 0
        %v1242 = vsel %vm1189, %v1158, 0
        %v1245 = vsel %vm1189, %v1159, 0
        %v1248 = vsel %vm1189, %v1160, 0
        %v1251 = vsel %vm1189, %v1161, 0
        %v1254 = vsel %vm1189, %v1162, 0
        %v1257 = vsel %vm1189, %v1163, 0
        %v1260 = vsel %vm1189, %v1164, 0
        %v1263 = vsel %vm1189, %v1165, 0
        %v1266 = vsel %vm1189, %v1166, 0
        %v1269 = vsel %vm1189, %v1167, 0
        %v1272 = vsel %vm1189, %v1168, 0
        %v1275 = vsel %vm1189, %v1169, 0
        %v1278 = vsel %vm1189, %v1170, 0
        %v1281 = vsel %vm1189, %v1171, 0
        %v1284 = vsel %vm1189, %v1172, 0
        %v1287 = vsel %vm1189, %v1173, 0
        %v1290 = vsel %vm1189, %v1174, 0
        %v1293 = vsel %vm1189, %v1175, 0
        %v1296 = vsel %vm1189, %v1176, 0
        %1298 = vmatprep.subr.bf16.mxu0 0
        %1299 = vmatpush1.bf16.msra.mxu0 0
        %1300 = vmatprep.subr.bf16.mxu0 0
        %1301 = vmatpush1.bf16.msra.mxu0 0
        %1302 = vmatprep.subr.bf16.mxu0 0
        %1303 = vmatpush1.bf16.msra.mxu0 0
        %1304 = vmatprep.subr.bf16.mxu0 0
        %1305 = vmatpush1.bf16.msra.mxu0 0
        %1306 = vmatprep.subr.bf16.mxu0 0
        %1307 = vmatpush1.bf16.msra.mxu0 0
        %1308 = vmatprep.subr.bf16.mxu0 0
        %1309 = vmatpush1.bf16.msra.mxu0 0
        %1310 = vmatprep.subr.bf16.mxu0 0
        %1311 = vmatpush1.bf16.msra.mxu0 %v1186
        %1312 = vmatprep.subr.bf16.mxu0 0
        %1313 = vmatpush1.bf16.msra.mxu0 %v1185
        %1314 = vmatprep.subr.bf16.mxu0 0
        %1315 = vmatpush2.bf16.msra.mxu0 0
        %1316 = vmatprep.subr.bf16.mxu0 0
        %1317 = vmatpush2.bf16.msra.mxu0 0
        %1318 = vmatprep.subr.bf16.mxu0 0
        %1319 = vmatpush2.bf16.msra.mxu0 0
        %1320 = vmatprep.subr.bf16.mxu0 0
        %1321 = vmatpush2.bf16.msra.mxu0 0
        %1322 = vmatprep.subr.bf16.mxu0 0
        %1323 = vmatpush2.bf16.msra.mxu0 0
        %1324 = vmatprep.subr.bf16.mxu0 0
        %1325 = vmatpush2.bf16.msra.mxu0 0
        %1326 = vmatprep.subr.bf16.mxu0 0
        %1327 = vmatpush2.bf16.msra.mxu0 0
        %1328 = vmatprep.subr.bf16.mxu0 0
        %1329 = vmatpush2.bf16.msra.mxu0 0
        %1330 = vmatprep.mubr.bf16.mxu0 0
        %1331 = vmatmul.mubr.bf16.gmra.mxu0 %v1191
        %v1332 = vpop.f32.mrf.mxu0
        %v1333 = vadd.f32 %v995, %v1332
        %v1334 = vpop.f32.mrf.mxu0
        %v1335 = vpop.f32.mrf.mxu0
        %v1336 = vadd.f32 %v995, %v1335
        %v1337 = vpop.f32.mrf.mxu0
        %1338 = vmatprep.mubr.bf16.mxu0 0
        %1339 = vmatmul.mubr.bf16.gmra.mxu0 %v1194
        %v1340 = vpop.f32.mrf.mxu0
        %v1341 = vadd.f32 %v995, %v1340
        %v1342 = vpop.f32.mrf.mxu0
        %v1343 = vpop.f32.mrf.mxu0
        %v1344 = vadd.f32 %v995, %v1343
        %v1345 = vpop.f32.mrf.mxu0
        %1346 = vmatprep.mubr.bf16.mxu0 0
        %1347 = vmatmul.mubr.bf16.gmra.mxu0 %v1197
        %v1348 = vpop.f32.mrf.mxu0
        %v1349 = vadd.f32 %v995, %v1348
        %v1350 = vpop.f32.mrf.mxu0
        %v1351 = vpop.f32.mrf.mxu0
        %v1352 = vadd.f32 %v995, %v1351
        %v1353 = vpop.f32.mrf.mxu0
        %1354 = vmatprep.mubr.bf16.mxu0 0
        %1355 = vmatmul.mubr.bf16.gmra.mxu0 %v1200
        %v1356 = vpop.f32.mrf.mxu0
        %v1357 = vadd.f32 %v995, %v1356
        %v1358 = vpop.f32.mrf.mxu0
        %v1359 = vpop.f32.mrf.mxu0
        %v1360 = vadd.f32 %v995, %v1359
        %v1361 = vpop.f32.mrf.mxu0
        %1362 = vmatprep.mubr.bf16.mxu0 0
        %1363 = vmatmul.mubr.bf16.gmra.mxu0 %v1203
        %v1364 = vpop.f32.mrf.mxu0
        %v1365 = vadd.f32 %v995, %v1364
        %v1366 = vpop.f32.mrf.mxu0
        %v1367 = vpop.f32.mrf.mxu0
        %v1368 = vadd.f32 %v995, %v1367
        %v1369 = vpop.f32.mrf.mxu0
        %1370 = vmatprep.mubr.bf16.mxu0 0
        %1371 = vmatmul.mubr.bf16.gmra.mxu0 %v1206
        %v1372 = vpop.f32.mrf.mxu0
        %v1373 = vadd.f32 %v995, %v1372
        %v1374 = vpop.f32.mrf.mxu0
        %v1375 = vpop.f32.mrf.mxu0
        %v1376 = vadd.f32 %v995, %v1375
        %v1377 = vpop.f32.mrf.mxu0
        %1378 = vmatprep.mubr.bf16.mxu0 0
        %1379 = vmatmul.mubr.bf16.gmra.mxu0 %v1209
        %v1380 = vpop.f32.mrf.mxu0
        %v1381 = vadd.f32 %v995, %v1380
        %v1382 = vpop.f32.mrf.mxu0
        %v1383 = vpop.f32.mrf.mxu0
        %v1384 = vadd.f32 %v995, %v1383
        %v1385 = vpop.f32.mrf.mxu0
        %1386 = vmatprep.mubr.bf16.mxu0 0
        %1387 = vmatmul.mubr.bf16.gmra.mxu0 %v1212
        %v1388 = vpop.f32.mrf.mxu0
        %v1389 = vadd.f32 %v995, %v1388
        %v1390 = vpop.f32.mrf.mxu0
        %v1391 = vpop.f32.mrf.mxu0
        %v1392 = vadd.f32 %v995, %v1391
        %v1393 = vpop.f32.mrf.mxu0
        %1394 = vmatprep.mubr.bf16.mxu0 0
        %1395 = vmatmul.mubr.bf16.gmra.mxu0 %v1215
        %v1396 = vpop.f32.mrf.mxu0
        %v1397 = vadd.f32 %v995, %v1396
        %v1398 = vpop.f32.mrf.mxu0
        %v1399 = vpop.f32.mrf.mxu0
        %v1400 = vadd.f32 %v995, %v1399
        %v1401 = vpop.f32.mrf.mxu0
        %1402 = vmatprep.mubr.bf16.mxu0 0
        %1403 = vmatmul.mubr.bf16.gmra.mxu0 %v1218
        %v1404 = vpop.f32.mrf.mxu0
        %v1405 = vadd.f32 %v995, %v1404
        %v1406 = vpop.f32.mrf.mxu0
        %v1407 = vpop.f32.mrf.mxu0
        %v1408 = vadd.f32 %v995, %v1407
        %v1409 = vpop.f32.mrf.mxu0
        %1410 = vmatprep.mubr.bf16.mxu0 0
        %1411 = vmatmul.mubr.bf16.gmra.mxu0 %v1221
        %v1412 = vpop.f32.mrf.mxu0
        %v1413 = vadd.f32 %v995, %v1412
        %v1414 = vpop.f32.mrf.mxu0
        %v1415 = vpop.f32.mrf.mxu0
        %v1416 = vadd.f32 %v995, %v1415
        %v1417 = vpop.f32.mrf.mxu0
        %1418 = vmatprep.mubr.bf16.mxu0 0
        %1419 = vmatmul.mubr.bf16.gmra.mxu0 %v1224
        %v1420 = vpop.f32.mrf.mxu0
        %v1421 = vadd.f32 %v995, %v1420
        %v1422 = vpop.f32.mrf.mxu0
        %v1423 = vpop.f32.mrf.mxu0
        %v1424 = vadd.f32 %v995, %v1423
        %v1425 = vpop.f32.mrf.mxu0
        %1426 = vmatprep.mubr.bf16.mxu0 0
        %1427 = vmatmul.mubr.bf16.gmra.mxu0 %v1227
        %v1428 = vpop.f32.mrf.mxu0
        %v1429 = vadd.f32 %v995, %v1428
        %v1430 = vpop.f32.mrf.mxu0
        %v1431 = vpop.f32.mrf.mxu0
        %v1432 = vadd.f32 %v995, %v1431
        %v1433 = vpop.f32.mrf.mxu0
        %1434 = vmatprep.mubr.bf16.mxu0 0
        %1435 = vmatmul.mubr.bf16.gmra.mxu0 %v1230
        %v1436 = vpop.f32.mrf.mxu0
        %v1437 = vadd.f32 %v995, %v1436
        %v1438 = vpop.f32.mrf.mxu0
        %v1439 = vpop.f32.mrf.mxu0
        %v1440 = vadd.f32 %v995, %v1439
        %v1441 = vpop.f32.mrf.mxu0
        %1442 = vmatprep.mubr.bf16.mxu0 0
        %1443 = vmatmul.mubr.bf16.gmra.mxu0 %v1233
        %v1444 = vpop.f32.mrf.mxu0
        %v1445 = vadd.f32 %v995, %v1444
        %v1446 = vpop.f32.mrf.mxu0
        %v1447 = vpop.f32.mrf.mxu0
        %v1448 = vadd.f32 %v995, %v1447
        %v1449 = vpop.f32.mrf.mxu0
        %1450 = vmatprep.mubr.bf16.mxu0 0
        %1451 = vmatmul.mubr.bf16.gmra.mxu0 %v1236
        %v1452 = vpop.f32.mrf.mxu0
        %v1453 = vadd.f32 %v995, %v1452
        %v1454 = vpop.f32.mrf.mxu0
        %v1455 = vpop.f32.mrf.mxu0
        %v1456 = vadd.f32 %v995, %v1455
        %v1457 = vpop.f32.mrf.mxu0
        %1458 = vmatprep.mubr.bf16.mxu0 0
        %1459 = vmatmul.mubr.bf16.gmra.mxu0 %v1239
        %v1460 = vpop.f32.mrf.mxu0
        %v1461 = vadd.f32 %v995, %v1460
        %v1462 = vpop.f32.mrf.mxu0
        %v1463 = vpop.f32.mrf.mxu0
        %v1464 = vadd.f32 %v995, %v1463
        %v1465 = vpop.f32.mrf.mxu0
        %1466 = vmatprep.mubr.bf16.mxu0 0
        %1467 = vmatmul.mubr.bf16.gmra.mxu0 %v1242
        %v1468 = vpop.f32.mrf.mxu0
        %v1469 = vadd.f32 %v995, %v1468
        %v1470 = vpop.f32.mrf.mxu0
        %v1471 = vpop.f32.mrf.mxu0
        %v1472 = vadd.f32 %v995, %v1471
        %v1473 = vpop.f32.mrf.mxu0
        %1474 = vmatprep.mubr.bf16.mxu0 0
        %1475 = vmatmul.mubr.bf16.gmra.mxu0 %v1245
        %v1476 = vpop.f32.mrf.mxu0
        %v1477 = vadd.f32 %v995, %v1476
        %v1478 = vpop.f32.mrf.mxu0
        %v1479 = vpop.f32.mrf.mxu0
        %v1480 = vadd.f32 %v995, %v1479
        %v1481 = vpop.f32.mrf.mxu0
        %1482 = vmatprep.mubr.bf16.mxu0 0
        %1483 = vmatmul.mubr.bf16.gmra.mxu0 %v1248
        %v1484 = vpop.f32.mrf.mxu0
        %v1485 = vadd.f32 %v995, %v1484
        %v1486 = vpop.f32.mrf.mxu0
        %v1487 = vpop.f32.mrf.mxu0
        %v1488 = vadd.f32 %v995, %v1487
        %v1489 = vpop.f32.mrf.mxu0
        %1490 = vmatprep.mubr.bf16.mxu0 0
        %1491 = vmatmul.mubr.bf16.gmra.mxu0 %v1251
        %v1492 = vpop.f32.mrf.mxu0
        %v1493 = vadd.f32 %v995, %v1492
        %v1494 = vpop.f32.mrf.mxu0
        %v1495 = vpop.f32.mrf.mxu0
        %v1496 = vadd.f32 %v995, %v1495
        %v1497 = vpop.f32.mrf.mxu0
        %1498 = vmatprep.mubr.bf16.mxu0 0
        %1499 = vmatmul.mubr.bf16.gmra.mxu0 %v1254
        %v1500 = vpop.f32.mrf.mxu0
        %v1501 = vadd.f32 %v995, %v1500
        %v1502 = vpop.f32.mrf.mxu0
        %v1503 = vpop.f32.mrf.mxu0
        %v1504 = vadd.f32 %v995, %v1503
        %v1505 = vpop.f32.mrf.mxu0
        %1506 = vmatprep.mubr.bf16.mxu0 0
        %1507 = vmatmul.mubr.bf16.gmra.mxu0 %v1257
        %v1508 = vpop.f32.mrf.mxu0
        %v1509 = vadd.f32 %v995, %v1508
        %v1510 = vpop.f32.mrf.mxu0
        %v1511 = vpop.f32.mrf.mxu0
        %v1512 = vadd.f32 %v995, %v1511
        %v1513 = vpop.f32.mrf.mxu0
        %1514 = vmatprep.mubr.bf16.mxu0 0
        %1515 = vmatmul.mubr.bf16.gmra.mxu0 %v1260
        %v1516 = vpop.f32.mrf.mxu0
        %v1517 = vadd.f32 %v995, %v1516
        %v1518 = vpop.f32.mrf.mxu0
        %v1519 = vpop.f32.mrf.mxu0
        %v1520 = vadd.f32 %v995, %v1519
        %v1521 = vpop.f32.mrf.mxu0
        %1522 = vmatprep.mubr.bf16.mxu0 0
        %1523 = vmatmul.mubr.bf16.gmra.mxu0 %v1263
        %v1524 = vpop.f32.mrf.mxu0
        %v1525 = vadd.f32 %v995, %v1524
        %v1526 = vpop.f32.mrf.mxu0
        %v1527 = vpop.f32.mrf.mxu0
        %v1528 = vadd.f32 %v995, %v1527
        %v1529 = vpop.f32.mrf.mxu0
        %1530 = vmatprep.mubr.bf16.mxu0 0
        %1531 = vmatmul.mubr.bf16.gmra.mxu0 %v1266
        %v1532 = vpop.f32.mrf.mxu0
        %v1533 = vadd.f32 %v995, %v1532
        %v1534 = vpop.f32.mrf.mxu0
        %v1535 = vpop.f32.mrf.mxu0
        %v1536 = vadd.f32 %v995, %v1535
        %v1537 = vpop.f32.mrf.mxu0
        %1538 = vmatprep.mubr.bf16.mxu0 0
        %1539 = vmatmul.mubr.bf16.gmra.mxu0 %v1269
        %v1540 = vpop.f32.mrf.mxu0
        %v1541 = vadd.f32 %v995, %v1540
        %v1542 = vpop.f32.mrf.mxu0
        %v1543 = vpop.f32.mrf.mxu0
        %v1544 = vadd.f32 %v995, %v1543
        %v1545 = vpop.f32.mrf.mxu0
        %1546 = vmatprep.mubr.bf16.mxu0 0
        %1547 = vmatmul.mubr.bf16.gmra.mxu0 %v1272
        %v1548 = vpop.f32.mrf.mxu0
        %v1549 = vadd.f32 %v995, %v1548
        %v1550 = vpop.f32.mrf.mxu0
        %v1551 = vpop.f32.mrf.mxu0
        %v1552 = vadd.f32 %v995, %v1551
        %v1553 = vpop.f32.mrf.mxu0
        %1554 = vmatprep.mubr.bf16.mxu0 0
        %1555 = vmatmul.mubr.bf16.gmra.mxu0 %v1275
        %v1556 = vpop.f32.mrf.mxu0
        %v1557 = vadd.f32 %v995, %v1556
        %v1558 = vpop.f32.mrf.mxu0
        %v1559 = vpop.f32.mrf.mxu0
        %v1560 = vadd.f32 %v995, %v1559
        %v1561 = vpop.f32.mrf.mxu0
        %1562 = vmatprep.mubr.bf16.mxu0 0
        %1563 = vmatmul.mubr.bf16.gmra.mxu0 %v1278
        %v1564 = vpop.f32.mrf.mxu0
        %v1565 = vadd.f32 %v995, %v1564
        %v1566 = vpop.f32.mrf.mxu0
        %v1567 = vpop.f32.mrf.mxu0
        %v1568 = vadd.f32 %v995, %v1567
        %v1569 = vpop.f32.mrf.mxu0
        %1570 = vmatprep.mubr.bf16.mxu0 0
        %1571 = vmatmul.mubr.bf16.gmra.mxu0 %v1281
        %v1572 = vpop.f32.mrf.mxu0
        %v1573 = vadd.f32 %v995, %v1572
        %v1574 = vpop.f32.mrf.mxu0
        %v1575 = vpop.f32.mrf.mxu0
        %v1576 = vadd.f32 %v995, %v1575
        %v1577 = vpop.f32.mrf.mxu0
        %1578 = vmatprep.mubr.bf16.mxu0 0
        %1579 = vmatmul.mubr.bf16.gmra.mxu0 %v1284
        %v1580 = vpop.f32.mrf.mxu0
        %v1581 = vadd.f32 %v995, %v1580
        %v1582 = vpop.f32.mrf.mxu0
        %v1583 = vpop.f32.mrf.mxu0
        %v1584 = vadd.f32 %v995, %v1583
        %v1585 = vpop.f32.mrf.mxu0
        %1586 = vmatprep.mubr.bf16.mxu0 0
        %1587 = vmatmul.mubr.bf16.gmra.mxu0 %v1287
        %v1588 = vpop.f32.mrf.mxu0
        %v1589 = vadd.f32 %v995, %v1588
        %v1590 = vpop.f32.mrf.mxu0
        %v1591 = vpop.f32.mrf.mxu0
        %v1592 = vadd.f32 %v995, %v1591
        %v1593 = vpop.f32.mrf.mxu0
        %1594 = vmatprep.mubr.bf16.mxu0 0
        %1595 = vmatmul.mubr.bf16.gmra.mxu0 %v1290
        %v1596 = vpop.f32.mrf.mxu0
        %v1597 = vadd.f32 %v995, %v1596
        %v1598 = vpop.f32.mrf.mxu0
        %v1599 = vpop.f32.mrf.mxu0
        %v1600 = vadd.f32 %v995, %v1599
        %v1601 = vpop.f32.mrf.mxu0
        %1602 = vmatprep.mubr.bf16.mxu0 0
        %1603 = vmatmul.mubr.bf16.gmra.mxu0 %v1293
        %v1604 = vpop.f32.mrf.mxu0
        %v1605 = vadd.f32 %v995, %v1604
        %v1606 = vpop.f32.mrf.mxu0
        %v1607 = vpop.f32.mrf.mxu0
        %v1608 = vadd.f32 %v995, %v1607
        %v1609 = vpop.f32.mrf.mxu0
        %1610 = vmatprep.mubr.bf16.mxu0 0
        %1611 = vmatmul.mubr.bf16.gmra.mxu0 %v1296
        %v1612 = vpop.f32.mrf.mxu0
        %v1613 = vadd.f32 %v995, %v1612
        %v1614 = vpop.f32.mrf.mxu0
        %v1615 = vpop.f32.mrf.mxu0
        %v1616 = vadd.f32 %v995, %v1615
        %v1617 = vpop.f32.mrf.mxu0
        %1618 = vdwg.mxu0
        %v1619 = vmul.f32 %v1333, 0.2
        %v1620 = vmul.f32 %v1336, 0.2
        %v1621 = vmul.f32 %v1341, 0.2
        %v1622 = vmul.f32 %v1344, 0.2
        %v1623 = vmul.f32 %v1349, 0.2
        %v1624 = vmul.f32 %v1352, 0.2
        %v1625 = vmul.f32 %v1357, 0.2
        %v1626 = vmul.f32 %v1360, 0.2
        %v1627 = vmul.f32 %v1365, 0.2
        %v1628 = vmul.f32 %v1368, 0.2
        %v1629 = vmul.f32 %v1373, 0.2
        %v1630 = vmul.f32 %v1376, 0.2
        %v1631 = vmul.f32 %v1381, 0.2
        %v1632 = vmul.f32 %v1384, 0.2
        %v1633 = vmul.f32 %v1389, 0.2
        %v1634 = vmul.f32 %v1392, 0.2
        %v1635 = vmul.f32 %v1397, 0.2
        %v1636 = vmul.f32 %v1400, 0.2
        %v1637 = vmul.f32 %v1405, 0.2
        %v1638 = vmul.f32 %v1408, 0.2
        %v1639 = vmul.f32 %v1413, 0.2
        %v1640 = vmul.f32 %v1416, 0.2
        %v1641 = vmul.f32 %v1421, 0.2
        %v1642 = vmul.f32 %v1424, 0.2
        %v1643 = vmul.f32 %v1429, 0.2
        %v1644 = vmul.f32 %v1432, 0.2
        %v1645 = vmul.f32 %v1437, 0.2
        %v1646 = vmul.f32 %v1440, 0.2
        %v1647 = vmul.f32 %v1445, 0.2
        %v1648 = vmul.f32 %v1448, 0.2
        %v1649 = vmul.f32 %v1453, 0.2
        %v1650 = vmul.f32 %v1456, 0.2
        %v1651 = vmul.f32 %v1461, 0.2
        %v1652 = vmul.f32 %v1464, 0.2
        %v1653 = vmul.f32 %v1469, 0.2
        %v1654 = vmul.f32 %v1472, 0.2
        %v1655 = vmul.f32 %v1477, 0.2
        %v1656 = vmul.f32 %v1480, 0.2
        %v1657 = vmul.f32 %v1485, 0.2
        %v1658 = vmul.f32 %v1488, 0.2
        %v1659 = vmul.f32 %v1493, 0.2
        %v1660 = vmul.f32 %v1496, 0.2
        %v1661 = vmul.f32 %v1501, 0.2
        %v1662 = vmul.f32 %v1504, 0.2
        %v1663 = vmul.f32 %v1509, 0.2
        %v1664 = vmul.f32 %v1512, 0.2
        %v1665 = vmul.f32 %v1517, 0.2
        %v1666 = vmul.f32 %v1520, 0.2
        %v1667 = vmul.f32 %v1525, 0.2
        %v1668 = vmul.f32 %v1528, 0.2
        %v1669 = vmul.f32 %v1533, 0.2
        %v1670 = vmul.f32 %v1536, 0.2
        %v1671 = vmul.f32 %v1541, 0.2
        %v1672 = vmul.f32 %v1544, 0.2
        %v1673 = vmul.f32 %v1549, 0.2
        %v1674 = vmul.f32 %v1552, 0.2
        %v1675 = vmul.f32 %v1557, 0.2
        %v1676 = vmul.f32 %v1560, 0.2
        %v1677 = vmul.f32 %v1565, 0.2
        %v1678 = vmul.f32 %v1568, 0.2
        %v1679 = vmul.f32 %v1573, 0.2
        %v1680 = vmul.f32 %v1576, 0.2
        %v1681 = vmul.f32 %v1581, 0.2
        %v1682 = vmul.f32 %v1584, 0.2
        %v1683 = vmul.f32 %v1589, 0.2
        %v1684 = vmul.f32 %v1592, 0.2
        %v1685 = vmul.f32 %v1597, 0.2
        %v1686 = vmul.f32 %v1600, 0.2
        %v1687 = vmul.f32 %v1605, 0.2
        %v1688 = vmul.f32 %v1608, 0.2
        %v1689 = vmul.f32 %v1613, 0.2
        %v1690 = vmul.f32 %v1616, 0.2
        %v1691 = vmax.f32 %v1333, %v1619
        %v1692 = vmax.f32 %v1336, %v1620
        %v1693 = vmax.f32 %v1341, %v1621
        %v1694 = vmax.f32 %v1344, %v1622
        %v1695 = vmax.f32 %v1349, %v1623
        %v1696 = vmax.f32 %v1352, %v1624
        %v1697 = vmax.f32 %v1357, %v1625
        %v1698 = vmax.f32 %v1360, %v1626
        %v1699 = vmax.f32 %v1365, %v1627
        %v1700 = vmax.f32 %v1368, %v1628
        %v1701 = vmax.f32 %v1373, %v1629
        %v1702 = vmax.f32 %v1376, %v1630
        %v1703 = vmax.f32 %v1381, %v1631
        %v1704 = vmax.f32 %v1384, %v1632
        %v1705 = vmax.f32 %v1389, %v1633
        %v1706 = vmax.f32 %v1392, %v1634
        %v1707 = vmax.f32 %v1397, %v1635
        %v1708 = vmax.f32 %v1400, %v1636
        %v1709 = vmax.f32 %v1405, %v1637
        %v1710 = vmax.f32 %v1408, %v1638
        %v1711 = vmax.f32 %v1413, %v1639
        %v1712 = vmax.f32 %v1416, %v1640
        %v1713 = vmax.f32 %v1421, %v1641
        %v1714 = vmax.f32 %v1424, %v1642
        %v1715 = vmax.f32 %v1429, %v1643
        %v1716 = vmax.f32 %v1432, %v1644
        %v1717 = vmax.f32 %v1437, %v1645
        %v1718 = vmax.f32 %v1440, %v1646
        %v1719 = vmax.f32 %v1445, %v1647
        %v1720 = vmax.f32 %v1448, %v1648
        %v1721 = vmax.f32 %v1453, %v1649
        %v1722 = vmax.f32 %v1456, %v1650
        %v1723 = vmax.f32 %v1461, %v1651
        %v1724 = vmax.f32 %v1464, %v1652
        %v1725 = vmax.f32 %v1469, %v1653
        %v1726 = vmax.f32 %v1472, %v1654
        %v1727 = vmax.f32 %v1477, %v1655
        %v1728 = vmax.f32 %v1480, %v1656
        %v1729 = vmax.f32 %v1485, %v1657
        %v1730 = vmax.f32 %v1488, %v1658
        %v1731 = vmax.f32 %v1493, %v1659
        %v1732 = vmax.f32 %v1496, %v1660
        %v1733 = vmax.f32 %v1501, %v1661
        %v1734 = vmax.f32 %v1504, %v1662
        %v1735 = vmax.f32 %v1509, %v1663
        %v1736 = vmax.f32 %v1512, %v1664
        %v1737 = vmax.f32 %v1517, %v1665
        %v1738 = vmax.f32 %v1520, %v1666
        %v1739 = vmax.f32 %v1525, %v1667
        %v1740 = vmax.f32 %v1528, %v1668
        %v1741 = vmax.f32 %v1533, %v1669
        %v1742 = vmax.f32 %v1536, %v1670
        %v1743 = vmax.f32 %v1541, %v1671
        %v1744 = vmax.f32 %v1544, %v1672
        %v1745 = vmax.f32 %v1549, %v1673
        %v1746 = vmax.f32 %v1552, %v1674
        %v1747 = vmax.f32 %v1557, %v1675
        %v1748 = vmax.f32 %v1560, %v1676
        %v1749 = vmax.f32 %v1565, %v1677
        %v1750 = vmax.f32 %v1568, %v1678
        %v1751 = vmax.f32 %v1573, %v1679
        %v1752 = vmax.f32 %v1576, %v1680
        %v1753 = vmax.f32 %v1581, %v1681
        %v1754 = vmax.f32 %v1584, %v1682
        %v1755 = vmax.f32 %v1589, %v1683
        %v1756 = vmax.f32 %v1592, %v1684
        %v1757 = vmax.f32 %v1597, %v1685
        %v1758 = vmax.f32 %v1600, %v1686
        %v1759 = vmax.f32 %v1605, %v1687
        %v1760 = vmax.f32 %v1608, %v1688
        %v1761 = vmax.f32 %v1613, %v1689
        %v1762 = vmax.f32 %v1616, %v1690
        %1763 = vst.msk [vmem:[#allocation2] sm:$0xff] %vm1189, %v1691
        %1764 = vst.msk [vmem:[#allocation2 + $0x8] sm:$0xff] %vm1189, %v1692
        %1765 = vst.msk [vmem:[#allocation2 + $0x10] sm:$0xff] %vm1189, %v1693
        %1766 = vst.msk [vmem:[#allocation2 + $0x18] sm:$0xff] %vm1189, %v1694
        %1767 = vst.msk [vmem:[#allocation2 + $0x20] sm:$0xff] %vm1189, %v1695
        %1768 = vst.msk [vmem:[#allocation2 + $0x28] sm:$0xff] %vm1189, %v1696
        %1769 = vst.msk [vmem:[#allocation2 + $0x30] sm:$0xff] %vm1189, %v1697
        %1770 = vst.msk [vmem:[#allocation2 + $0x38] sm:$0xff] %vm1189, %v1698
        %1771 = vst.msk [vmem:[#allocation2 + $0x40] sm:$0xff] %vm1189, %v1699
        %1772 = vst.msk [vmem:[#allocation2 + $0x48] sm:$0xff] %vm1189, %v1700
        %1773 = vst.msk [vmem:[#allocation2 + $0x50] sm:$0xff] %vm1189, %v1701
        %1774 = vst.msk [vmem:[#allocation2 + $0x58] sm:$0xff] %vm1189, %v1702
        %1775 = vst.msk [vmem:[#allocation2 + $0x60] sm:$0xff] %vm1189, %v1703
        %1776 = vst.msk [vmem:[#allocation2 + $0x68] sm:$0xff] %vm1189, %v1704
        %1777 = vst.msk [vmem:[#allocation2 + $0x70] sm:$0xff] %vm1189, %v1705
        %1778 = vst.msk [vmem:[#allocation2 + $0x78] sm:$0xff] %vm1189, %v1706
        %1779 = vst.msk [vmem:[#allocation2 + $0x80] sm:$0xff] %vm1189, %v1707
        %1780 = vst.msk [vmem:[#allocation2 + $0x88] sm:$0xff] %vm1189, %v1708
        %1781 = vst.msk [vmem:[#allocation2 + $0x90] sm:$0xff] %vm1189, %v1709
        %1782 = vst.msk [vmem:[#allocation2 + $0x98] sm:$0xff] %vm1189, %v1710
        %1783 = vst.msk [vmem:[#allocation2 + $0xa0] sm:$0xff] %vm1189, %v1711
        %1784 = vst.msk [vmem:[#allocation2 + $0xa8] sm:$0xff] %vm1189, %v1712
        %1785 = vst.msk [vmem:[#allocation2 + $0xb0] sm:$0xff] %vm1189, %v1713
        %1786 = vst.msk [vmem:[#allocation2 + $0xb8] sm:$0xff] %vm1189, %v1714
        %1787 = vst.msk [vmem:[#allocation2 + $0xc0] sm:$0xff] %vm1189, %v1715
        %1788 = vst.msk [vmem:[#allocation2 + $0xc8] sm:$0xff] %vm1189, %v1716
        %1789 = vst.msk [vmem:[#allocation2 + $0xd0] sm:$0xff] %vm1189, %v1717
        %1790 = vst.msk [vmem:[#allocation2 + $0xd8] sm:$0xff] %vm1189, %v1718
        %1791 = vst.msk [vmem:[#allocation2 + $0xe0] sm:$0xff] %vm1189, %v1719
        %1792 = vst.msk [vmem:[#allocation2 + $0xe8] sm:$0xff] %vm1189, %v1720
        %1793 = vst.msk [vmem:[#allocation2 + $0xf0] sm:$0xff] %vm1189, %v1721
        %1794 = vst.msk [vmem:[#allocation2 + $0xf8] sm:$0xff] %vm1189, %v1722
        %1795 = vst.msk [vmem:[#allocation2 + $0x100] sm:$0xff] %vm1189, %v1723
        %1796 = vst.msk [vmem:[#allocation2 + $0x108] sm:$0xff] %vm1189, %v1724
        %1797 = vst.msk [vmem:[#allocation2 + $0x110] sm:$0xff] %vm1189, %v1725
        %1798 = vst.msk [vmem:[#allocation2 + $0x118] sm:$0xff] %vm1189, %v1726
        %1799 = vst.msk [vmem:[#allocation2 + $0x120] sm:$0xff] %vm1189, %v1727
        %1800 = vst.msk [vmem:[#allocation2 + $0x128] sm:$0xff] %vm1189, %v1728
        %1801 = vst.msk [vmem:[#allocation2 + $0x130] sm:$0xff] %vm1189, %v1729
        %1802 = vst.msk [vmem:[#allocation2 + $0x138] sm:$0xff] %vm1189, %v1730
        %1803 = vst.msk [vmem:[#allocation2 + $0x140] sm:$0xff] %vm1189, %v1731
        %1804 = vst.msk [vmem:[#allocation2 + $0x148] sm:$0xff] %vm1189, %v1732
        %1805 = vst.msk [vmem:[#allocation2 + $0x150] sm:$0xff] %vm1189, %v1733
        %1806 = vst.msk [vmem:[#allocation2 + $0x158] sm:$0xff] %vm1189, %v1734
        %1807 = vst.msk [vmem:[#allocation2 + $0x160] sm:$0xff] %vm1189, %v1735
        %1808 = vst.msk [vmem:[#allocation2 + $0x168] sm:$0xff] %vm1189, %v1736
        %1809 = vst.msk [vmem:[#allocation2 + $0x170] sm:$0xff] %vm1189, %v1737
        %1810 = vst.msk [vmem:[#allocation2 + $0x178] sm:$0xff] %vm1189, %v1738
        %1811 = vst.msk [vmem:[#allocation2 + $0x180] sm:$0xff] %vm1189, %v1739
        %1812 = vst.msk [vmem:[#allocation2 + $0x188] sm:$0xff] %vm1189, %v1740
        %1813 = vst.msk [vmem:[#allocation2 + $0x190] sm:$0xff] %vm1189, %v1741
        %1814 = vst.msk [vmem:[#allocation2 + $0x198] sm:$0xff] %vm1189, %v1742
        %1815 = vst.msk [vmem:[#allocation2 + $0x1a0] sm:$0xff] %vm1189, %v1743
        %1816 = vst.msk [vmem:[#allocation2 + $0x1a8] sm:$0xff] %vm1189, %v1744
        %1817 = vst.msk [vmem:[#allocation2 + $0x1b0] sm:$0xff] %vm1189, %v1745
        %1818 = vst.msk [vmem:[#allocation2 + $0x1b8] sm:$0xff] %vm1189, %v1746
        %1819 = vst.msk [vmem:[#allocation2 + $0x1c0] sm:$0xff] %vm1189, %v1747
        %1820 = vst.msk [vmem:[#allocation2 + $0x1c8] sm:$0xff] %vm1189, %v1748
        %1821 = vst.msk [vmem:[#allocation2 + $0x1d0] sm:$0xff] %vm1189, %v1749
        %1822 = vst.msk [vmem:[#allocation2 + $0x1d8] sm:$0xff] %vm1189, %v1750
        %1823 = vst.msk [vmem:[#allocation2 + $0x1e0] sm:$0xff] %vm1189, %v1751
        %1824 = vst.msk [vmem:[#allocation2 + $0x1e8] sm:$0xff] %vm1189, %v1752
        %1825 = vst.msk [vmem:[#allocation2 + $0x1f0] sm:$0xff] %vm1189, %v1753
        %1826 = vst.msk [vmem:[#allocation2 + $0x1f8] sm:$0xff] %vm1189, %v1754
        %1827 = vst.msk [vmem:[#allocation2 + $0x200] sm:$0xff] %vm1189, %v1755
        %1828 = vst.msk [vmem:[#allocation2 + $0x208] sm:$0xff] %vm1189, %v1756
        %1829 = vst.msk [vmem:[#allocation2 + $0x210] sm:$0xff] %vm1189, %v1757
        %1830 = vst.msk [vmem:[#allocation2 + $0x218] sm:$0xff] %vm1189, %v1758
        %1831 = vst.msk [vmem:[#allocation2 + $0x220] sm:$0xff] %vm1189, %v1759
        %1832 = vst.msk [vmem:[#allocation2 + $0x228] sm:$0xff] %vm1189, %v1760
        %1833 = vst.msk [vmem:[#allocation2 + $0x230] sm:$0xff] %vm1189, %v1761
        %1834 = vst.msk [vmem:[#allocation2 + $0x238] sm:$0xff] %vm1189, %v1762
        %v1835 = vld [vmem:[%s913 + $0x120] sm:$0xf]
        %v1836 = vld [vmem:[%s913 + $0x124] sm:$0xf]
        %v1837 = vld [vmem:[%s913 + $0x128] sm:$0xf]
        %v1838 = vld [vmem:[%s913 + $0x12c] sm:$0xf]
        %v1839 = vld [vmem:[%s913 + $0x130] sm:$0xf]
        %v1840 = vld [vmem:[%s913 + $0x134] sm:$0xf]
        %v1841 = vld [vmem:[%s913 + $0x138] sm:$0xf]
        %v1842 = vld [vmem:[%s913 + $0x13c] sm:$0xf]
        %v1843 = vld [vmem:[%s913 + $0x140] sm:$0xf]
        %v1844 = vld [vmem:[%s913 + $0x144] sm:$0xf]
        %v1845 = vld [vmem:[%s913 + $0x148] sm:$0xf]
        %v1846 = vld [vmem:[%s913 + $0x14c] sm:$0xf]
        %v1847 = vld [vmem:[%s913 + $0x150] sm:$0xf]
        %v1848 = vld [vmem:[%s913 + $0x154] sm:$0xf]
        %v1849 = vld [vmem:[%s913 + $0x158] sm:$0xf]
        %v1850 = vld [vmem:[%s913 + $0x15c] sm:$0xf]
        %v1851 = vld [vmem:[%s913 + $0x160] sm:$0xf]
        %v1852 = vld [vmem:[%s913 + $0x164] sm:$0xf]
        %v1853 = vld [vmem:[%s913 + $0x168] sm:$0xf]
        %v1854 = vld [vmem:[%s913 + $0x16c] sm:$0xf]
        %v1855 = vld [vmem:[%s913 + $0x170] sm:$0xf]
        %v1856 = vld [vmem:[%s913 + $0x174] sm:$0xf]
        %v1857 = vld [vmem:[%s913 + $0x178] sm:$0xf]
        %v1858 = vld [vmem:[%s913 + $0x17c] sm:$0xf]
        %v1859 = vld [vmem:[%s913 + $0x180] sm:$0xf]
        %v1860 = vld [vmem:[%s913 + $0x184] sm:$0xf]
        %v1861 = vld [vmem:[%s913 + $0x188] sm:$0xf]
        %v1862 = vld [vmem:[%s913 + $0x18c] sm:$0xf]
        %v1863 = vld [vmem:[%s913 + $0x190] sm:$0xf]
        %v1864 = vld [vmem:[%s913 + $0x194] sm:$0xf]
        %v1865 = vld [vmem:[%s913 + $0x198] sm:$0xf]
        %v1866 = vld [vmem:[%s913 + $0x19c] sm:$0xf]
        %v1867 = vld [vmem:[%s913 + $0x1a0] sm:$0xf]
        %v1868 = vld [vmem:[%s913 + $0x1a4] sm:$0xf]
        %v1869 = vld [vmem:[%s913 + $0x1a8] sm:$0xf]
        %v1870 = vld [vmem:[%s913 + $0x1ac] sm:$0xf]
        %v1871 = vld [vmem:[%s913 + $0x1b0] sm:$0xf]
        %v1872 = vld [vmem:[%s913 + $0x1b4] sm:$0xf]
        %v1873 = vld [vmem:[%s913 + $0x1b8] sm:$0xf]
        %v1874 = vld [vmem:[%s913 + $0x1bc] sm:$0xf]
        %v1875 = vld [vmem:[%s913 + $0x1c0] sm:$0xf]
        %v1876 = vld [vmem:[%s913 + $0x1c4] sm:$0xf]
        %v1877 = vld [vmem:[%s913 + $0x1c8] sm:$0xf]
        %v1878 = vld [vmem:[%s913 + $0x1cc] sm:$0xf]
        %v1879 = vld [vmem:[%s913 + $0x1d0] sm:$0xf]
        %v1880 = vld [vmem:[%s913 + $0x1d4] sm:$0xf]
        %v1881 = vld [vmem:[%s913 + $0x1d8] sm:$0xf]
        %v1882 = vld [vmem:[%s913 + $0x1dc] sm:$0xf]
        %v1883 = vld [vmem:[%s913 + $0x1e0] sm:$0xf]
        %v1884 = vld [vmem:[%s913 + $0x1e4] sm:$0xf]
        %v1885 = vld [vmem:[%s913 + $0x1e8] sm:$0xf]
        %v1886 = vld [vmem:[%s913 + $0x1ec] sm:$0xf]
        %v1887 = vld [vmem:[%s913 + $0x1f0] sm:$0xf]
        %v1888 = vld [vmem:[%s913 + $0x1f4] sm:$0xf]
        %v1889 = vld [vmem:[%s913 + $0x1f8] sm:$0xf]
        %v1890 = vld [vmem:[%s913 + $0x1fc] sm:$0xf]
        %v1891 = vld [vmem:[%s913 + $0x200] sm:$0xf]
        %v1892 = vld [vmem:[%s913 + $0x204] sm:$0xf]
        %v1893 = vld [vmem:[%s913 + $0x208] sm:$0xf]
        %v1894 = vld [vmem:[%s913 + $0x20c] sm:$0xf]
        %v1895 = vld [vmem:[%s913 + $0x210] sm:$0xf]
        %v1896 = vld [vmem:[%s913 + $0x214] sm:$0xf]
        %v1897 = vld [vmem:[%s913 + $0x218] sm:$0xf]
        %v1898 = vld [vmem:[%s913 + $0x21c] sm:$0xf]
        %v1899 = vld [vmem:[%s913 + $0x220] sm:$0xf]
        %v1900 = vld [vmem:[%s913 + $0x224] sm:$0xf]
        %v1901 = vld [vmem:[%s913 + $0x228] sm:$0xf]
        %v1902 = vld [vmem:[%s913 + $0x22c] sm:$0xf]
        %v1903 = vld [vmem:[%s913 + $0x230] sm:$0xf]
        %v1904 = vld [vmem:[%s913 + $0x234] sm:$0xf]
        %v1905 = vld [vmem:[%s913 + $0x238] sm:$0xf]
        %v1906 = vld [vmem:[%s913 + $0x23c] sm:$0xf]
        %v1907 = vld [vmem:[%s2] sm:$0xf]
        %v1908 = vld [vmem:[%s2 + $0x4] sm:$0xf]
        %v1909 = vld [vmem:[%s2 + $0x8] sm:$0xf]
        %v1910 = vld [vmem:[%s2 + $0xc] sm:$0xf]
        %v1911 = vld [vmem:[%s3] sm:$0x1]
        %v1913 = vlaneseq
        %v1914 = vshrl.u32 %v1913, 7
        %v1915 = vsub.s32 0, %v1914
        %v1916 = vrot.slane %v1911, %v1915
        %v1990 = vunpack.c.l.b16 %v1835
        %v1991 = vunpack.c.l.b16 %v1836
        %v1992 = vunpack.c.l.b16 %v1837
        %v1993 = vunpack.c.l.b16 %v1838
        %v1994 = vunpack.c.l.b16 %v1839
        %v1995 = vunpack.c.l.b16 %v1840
        %v1996 = vunpack.c.l.b16 %v1841
        %v1997 = vunpack.c.l.b16 %v1842
        %v1998 = vunpack.c.l.b16 %v1843
        %v1999 = vunpack.c.l.b16 %v1844
        %v2000 = vunpack.c.l.b16 %v1845
        %v2001 = vunpack.c.l.b16 %v1846
        %v2002 = vunpack.c.l.b16 %v1847
        %v2003 = vunpack.c.l.b16 %v1848
        %v2004 = vunpack.c.l.b16 %v1849
        %v2005 = vunpack.c.l.b16 %v1850
        %v2006 = vunpack.c.l.b16 %v1851
        %v2007 = vunpack.c.l.b16 %v1852
        %v2008 = vunpack.c.l.b16 %v1853
        %v2009 = vunpack.c.l.b16 %v1854
        %v2010 = vunpack.c.l.b16 %v1855
        %v2011 = vunpack.c.l.b16 %v1856
        %v2012 = vunpack.c.l.b16 %v1857
        %v2013 = vunpack.c.l.b16 %v1858
        %v2014 = vunpack.c.l.b16 %v1859
        %v2015 = vunpack.c.l.b16 %v1860
        %v2016 = vunpack.c.l.b16 %v1861
        %v2017 = vunpack.c.l.b16 %v1862
        %v2018 = vunpack.c.l.b16 %v1863
        %v2019 = vunpack.c.l.b16 %v1864
        %v2020 = vunpack.c.l.b16 %v1865
        %v2021 = vunpack.c.l.b16 %v1866
        %v2022 = vunpack.c.l.b16 %v1867
        %v2023 = vunpack.c.l.b16 %v1868
        %v2024 = vunpack.c.l.b16 %v1869
        %v2025 = vunpack.c.l.b16 %v1870
        %v2026 = vunpack.c.l.b16 %v1871
        %v2027 = vunpack.c.l.b16 %v1872
        %v2028 = vunpack.c.l.b16 %v1873
        %v2029 = vunpack.c.l.b16 %v1874
        %v2030 = vunpack.c.l.b16 %v1875
        %v2031 = vunpack.c.l.b16 %v1876
        %v2032 = vunpack.c.l.b16 %v1877
        %v2033 = vunpack.c.l.b16 %v1878
        %v2034 = vunpack.c.l.b16 %v1879
        %v2035 = vunpack.c.l.b16 %v1880
        %v2036 = vunpack.c.l.b16 %v1881
        %v2037 = vunpack.c.l.b16 %v1882
        %v2038 = vunpack.c.l.b16 %v1883
        %v2039 = vunpack.c.l.b16 %v1884
        %v2040 = vunpack.c.l.b16 %v1885
        %v2041 = vunpack.c.l.b16 %v1886
        %v2042 = vunpack.c.l.b16 %v1887
        %v2043 = vunpack.c.l.b16 %v1888
        %v2044 = vunpack.c.l.b16 %v1889
        %v2045 = vunpack.c.l.b16 %v1890
        %v2046 = vunpack.c.l.b16 %v1891
        %v2047 = vunpack.c.l.b16 %v1892
        %v2048 = vunpack.c.l.b16 %v1893
        %v2049 = vunpack.c.l.b16 %v1894
        %v2050 = vunpack.c.l.b16 %v1895
        %v2051 = vunpack.c.l.b16 %v1896
        %v2052 = vunpack.c.l.b16 %v1897
        %v2053 = vunpack.c.l.b16 %v1898
        %v2054 = vunpack.c.l.b16 %v1899
        %v2055 = vunpack.c.l.b16 %v1900
        %v2056 = vunpack.c.l.b16 %v1901
        %v2057 = vunpack.c.l.b16 %v1902
        %v2058 = vunpack.c.l.b16 %v1903
        %v2059 = vunpack.c.l.b16 %v1904
        %v2060 = vunpack.c.l.b16 %v1905
        %v2061 = vunpack.c.l.b16 %v1906
        %v2062 = vpack.c.b16 %v1991, %v1990
        %v2063 = vpack.c.b16 %v1993, %v1992
        %v2064 = vpack.c.b16 %v1995, %v1994
        %v2065 = vpack.c.b16 %v1997, %v1996
        %v2066 = vpack.c.b16 %v1999, %v1998
        %v2067 = vpack.c.b16 %v2001, %v2000
        %v2068 = vpack.c.b16 %v2003, %v2002
        %v2069 = vpack.c.b16 %v2005, %v2004
        %v2070 = vpack.c.b16 %v2007, %v2006
        %v2071 = vpack.c.b16 %v2009, %v2008
        %v2072 = vpack.c.b16 %v2011, %v2010
        %v2073 = vpack.c.b16 %v2013, %v2012
        %v2074 = vpack.c.b16 %v2015, %v2014
        %v2075 = vpack.c.b16 %v2017, %v2016
        %v2076 = vpack.c.b16 %v2019, %v2018
        %v2077 = vpack.c.b16 %v2021, %v2020
        %v2078 = vpack.c.b16 %v2023, %v2022
        %v2079 = vpack.c.b16 %v2025, %v2024
        %v2080 = vpack.c.b16 %v2027, %v2026
        %v2081 = vpack.c.b16 %v2029, %v2028
        %v2082 = vpack.c.b16 %v2031, %v2030
        %v2083 = vpack.c.b16 %v2033, %v2032
        %v2084 = vpack.c.b16 %v2035, %v2034
        %v2085 = vpack.c.b16 %v2037, %v2036
        %v2086 = vpack.c.b16 %v2039, %v2038
        %v2087 = vpack.c.b16 %v2041, %v2040
        %v2088 = vpack.c.b16 %v2043, %v2042
        %v2089 = vpack.c.b16 %v2045, %v2044
        %v2090 = vpack.c.b16 %v2047, %v2046
        %v2091 = vpack.c.b16 %v2049, %v2048
        %v2092 = vpack.c.b16 %v2051, %v2050
        %v2093 = vpack.c.b16 %v2053, %v2052
        %v2094 = vpack.c.b16 %v2055, %v2054
        %v2095 = vpack.c.b16 %v2057, %v2056
        %v2096 = vpack.c.b16 %v2059, %v2058
        %v2097 = vpack.c.b16 %v2061, %v2060
        %v2102 = vunpack.c.l.b16 %v1907
        %v2103 = vunpack.c.l.b16 %v1908
        %v2104 = vunpack.c.l.b16 %v1909
        %v2105 = vunpack.c.l.b16 %v1910
        %v2106 = vpack.c.b16 %v2103, %v2102
        %v2107 = vpack.c.b16 %v2105, %v2104
        %v2111 = vsel %vm1189, %v2062, 0
        %v2114 = vsel %vm1189, %v2063, 0
        %v2117 = vsel %vm1189, %v2064, 0
        %v2120 = vsel %vm1189, %v2065, 0
        %v2123 = vsel %vm1189, %v2066, 0
        %v2126 = vsel %vm1189, %v2067, 0
        %v2129 = vsel %vm1189, %v2068, 0
        %v2132 = vsel %vm1189, %v2069, 0
        %v2135 = vsel %vm1189, %v2070, 0
        %v2138 = vsel %vm1189, %v2071, 0
        %v2141 = vsel %vm1189, %v2072, 0
        %v2144 = vsel %vm1189, %v2073, 0
        %v2147 = vsel %vm1189, %v2074, 0
        %v2150 = vsel %vm1189, %v2075, 0
        %v2153 = vsel %vm1189, %v2076, 0
        %v2156 = vsel %vm1189, %v2077, 0
        %v2159 = vsel %vm1189, %v2078, 0
        %v2162 = vsel %vm1189, %v2079, 0
        %v2165 = vsel %vm1189, %v2080, 0
        %v2168 = vsel %vm1189, %v2081, 0
        %v2171 = vsel %vm1189, %v2082, 0
        %v2174 = vsel %vm1189, %v2083, 0
        %v2177 = vsel %vm1189, %v2084, 0
        %v2180 = vsel %vm1189, %v2085, 0
        %v2183 = vsel %vm1189, %v2086, 0
        %v2186 = vsel %vm1189, %v2087, 0
        %v2189 = vsel %vm1189, %v2088, 0
        %v2192 = vsel %vm1189, %v2089, 0
        %v2195 = vsel %vm1189, %v2090, 0
        %v2198 = vsel %vm1189, %v2091, 0
        %v2201 = vsel %vm1189, %v2092, 0
        %v2204 = vsel %vm1189, %v2093, 0
        %v2207 = vsel %vm1189, %v2094, 0
        %v2210 = vsel %vm1189, %v2095, 0
        %v2213 = vsel %vm1189, %v2096, 0
        %v2216 = vsel %vm1189, %v2097, 0
        %2218 = vmatprep.subr.bf16.mxu0 0
        %2219 = vmatpush1.bf16.msra.mxu0 0
        %2220 = vmatprep.subr.bf16.mxu0 0
        %2221 = vmatpush1.bf16.msra.mxu0 0
        %2222 = vmatprep.subr.bf16.mxu0 0
        %2223 = vmatpush1.bf16.msra.mxu0 0
        %2224 = vmatprep.subr.bf16.mxu0 0
        %2225 = vmatpush1.bf16.msra.mxu0 0
        %2226 = vmatprep.subr.bf16.mxu0 0
        %2227 = vmatpush1.bf16.msra.mxu0 0
        %2228 = vmatprep.subr.bf16.mxu0 0
        %2229 = vmatpush1.bf16.msra.mxu0 0
        %2230 = vmatprep.subr.bf16.mxu0 0
        %2231 = vmatpush1.bf16.msra.mxu0 %v2107
        %2232 = vmatprep.subr.bf16.mxu0 0
        %2233 = vmatpush1.bf16.msra.mxu0 %v2106
        %2234 = vmatprep.subr.bf16.mxu0 0
        %2235 = vmatpush2.bf16.msra.mxu0 0
        %2236 = vmatprep.subr.bf16.mxu0 0
        %2237 = vmatpush2.bf16.msra.mxu0 0
        %2238 = vmatprep.subr.bf16.mxu0 0
        %2239 = vmatpush2.bf16.msra.mxu0 0
        %2240 = vmatprep.subr.bf16.mxu0 0
        %2241 = vmatpush2.bf16.msra.mxu0 0
        %2242 = vmatprep.subr.bf16.mxu0 0
        %2243 = vmatpush2.bf16.msra.mxu0 0
        %2244 = vmatprep.subr.bf16.mxu0 0
        %2245 = vmatpush2.bf16.msra.mxu0 0
        %2246 = vmatprep.subr.bf16.mxu0 0
        %2247 = vmatpush2.bf16.msra.mxu0 0
        %2248 = vmatprep.subr.bf16.mxu0 0
        %2249 = vmatpush2.bf16.msra.mxu0 0
        %2250 = vmatprep.mubr.bf16.mxu0 0
        %2251 = vmatmul.mubr.bf16.gmra.mxu0 %v2111
        %v2252 = vpop.f32.mrf.mxu0
        %v2253 = vadd.f32 %v1916, %v2252
        %v2254 = vpop.f32.mrf.mxu0
        %v2255 = vpop.f32.mrf.mxu0
        %v2256 = vadd.f32 %v1916, %v2255
        %v2257 = vpop.f32.mrf.mxu0
        %2258 = vmatprep.mubr.bf16.mxu0 0
        %2259 = vmatmul.mubr.bf16.gmra.mxu0 %v2114
        %v2260 = vpop.f32.mrf.mxu0
        %v2261 = vadd.f32 %v1916, %v2260
        %v2262 = vpop.f32.mrf.mxu0
        %v2263 = vpop.f32.mrf.mxu0
        %v2264 = vadd.f32 %v1916, %v2263
        %v2265 = vpop.f32.mrf.mxu0
        %2266 = vmatprep.mubr.bf16.mxu0 0
        %2267 = vmatmul.mubr.bf16.gmra.mxu0 %v2117
        %v2268 = vpop.f32.mrf.mxu0
        %v2269 = vadd.f32 %v1916, %v2268
        %v2270 = vpop.f32.mrf.mxu0
        %v2271 = vpop.f32.mrf.mxu0
        %v2272 = vadd.f32 %v1916, %v2271
        %v2273 = vpop.f32.mrf.mxu0
        %2274 = vmatprep.mubr.bf16.mxu0 0
        %2275 = vmatmul.mubr.bf16.gmra.mxu0 %v2120
        %v2276 = vpop.f32.mrf.mxu0
        %v2277 = vadd.f32 %v1916, %v2276
        %v2278 = vpop.f32.mrf.mxu0
        %v2279 = vpop.f32.mrf.mxu0
        %v2280 = vadd.f32 %v1916, %v2279
        %v2281 = vpop.f32.mrf.mxu0
        %2282 = vmatprep.mubr.bf16.mxu0 0
        %2283 = vmatmul.mubr.bf16.gmra.mxu0 %v2123
        %v2284 = vpop.f32.mrf.mxu0
        %v2285 = vadd.f32 %v1916, %v2284
        %v2286 = vpop.f32.mrf.mxu0
        %v2287 = vpop.f32.mrf.mxu0
        %v2288 = vadd.f32 %v1916, %v2287
        %v2289 = vpop.f32.mrf.mxu0
        %2290 = vmatprep.mubr.bf16.mxu0 0
        %2291 = vmatmul.mubr.bf16.gmra.mxu0 %v2126
        %v2292 = vpop.f32.mrf.mxu0
        %v2293 = vadd.f32 %v1916, %v2292
        %v2294 = vpop.f32.mrf.mxu0
        %v2295 = vpop.f32.mrf.mxu0
        %v2296 = vadd.f32 %v1916, %v2295
        %v2297 = vpop.f32.mrf.mxu0
        %2298 = vmatprep.mubr.bf16.mxu0 0
        %2299 = vmatmul.mubr.bf16.gmra.mxu0 %v2129
        %v2300 = vpop.f32.mrf.mxu0
        %v2301 = vadd.f32 %v1916, %v2300
        %v2302 = vpop.f32.mrf.mxu0
        %v2303 = vpop.f32.mrf.mxu0
        %v2304 = vadd.f32 %v1916, %v2303
        %v2305 = vpop.f32.mrf.mxu0
        %2306 = vmatprep.mubr.bf16.mxu0 0
        %2307 = vmatmul.mubr.bf16.gmra.mxu0 %v2132
        %v2308 = vpop.f32.mrf.mxu0
        %v2309 = vadd.f32 %v1916, %v2308
        %v2310 = vpop.f32.mrf.mxu0
        %v2311 = vpop.f32.mrf.mxu0
        %v2312 = vadd.f32 %v1916, %v2311
        %v2313 = vpop.f32.mrf.mxu0
        %2314 = vmatprep.mubr.bf16.mxu0 0
        %2315 = vmatmul.mubr.bf16.gmra.mxu0 %v2135
        %v2316 = vpop.f32.mrf.mxu0
        %v2317 = vadd.f32 %v1916, %v2316
        %v2318 = vpop.f32.mrf.mxu0
        %v2319 = vpop.f32.mrf.mxu0
        %v2320 = vadd.f32 %v1916, %v2319
        %v2321 = vpop.f32.mrf.mxu0
        %2322 = vmatprep.mubr.bf16.mxu0 0
        %2323 = vmatmul.mubr.bf16.gmra.mxu0 %v2138
        %v2324 = vpop.f32.mrf.mxu0
        %v2325 = vadd.f32 %v1916, %v2324
        %v2326 = vpop.f32.mrf.mxu0
        %v2327 = vpop.f32.mrf.mxu0
        %v2328 = vadd.f32 %v1916, %v2327
        %v2329 = vpop.f32.mrf.mxu0
        %2330 = vmatprep.mubr.bf16.mxu0 0
        %2331 = vmatmul.mubr.bf16.gmra.mxu0 %v2141
        %v2332 = vpop.f32.mrf.mxu0
        %v2333 = vadd.f32 %v1916, %v2332
        %v2334 = vpop.f32.mrf.mxu0
        %v2335 = vpop.f32.mrf.mxu0
        %v2336 = vadd.f32 %v1916, %v2335
        %v2337 = vpop.f32.mrf.mxu0
        %2338 = vmatprep.mubr.bf16.mxu0 0
        %2339 = vmatmul.mubr.bf16.gmra.mxu0 %v2144
        %v2340 = vpop.f32.mrf.mxu0
        %v2341 = vadd.f32 %v1916, %v2340
        %v2342 = vpop.f32.mrf.mxu0
        %v2343 = vpop.f32.mrf.mxu0
        %v2344 = vadd.f32 %v1916, %v2343
        %v2345 = vpop.f32.mrf.mxu0
        %2346 = vmatprep.mubr.bf16.mxu0 0
        %2347 = vmatmul.mubr.bf16.gmra.mxu0 %v2147
        %v2348 = vpop.f32.mrf.mxu0
        %v2349 = vadd.f32 %v1916, %v2348
        %v2350 = vpop.f32.mrf.mxu0
        %v2351 = vpop.f32.mrf.mxu0
        %v2352 = vadd.f32 %v1916, %v2351
        %v2353 = vpop.f32.mrf.mxu0
        %2354 = vmatprep.mubr.bf16.mxu0 0
        %2355 = vmatmul.mubr.bf16.gmra.mxu0 %v2150
        %v2356 = vpop.f32.mrf.mxu0
        %v2357 = vadd.f32 %v1916, %v2356
        %v2358 = vpop.f32.mrf.mxu0
        %v2359 = vpop.f32.mrf.mxu0
        %v2360 = vadd.f32 %v1916, %v2359
        %v2361 = vpop.f32.mrf.mxu0
        %2362 = vmatprep.mubr.bf16.mxu0 0
        %2363 = vmatmul.mubr.bf16.gmra.mxu0 %v2153
        %v2364 = vpop.f32.mrf.mxu0
        %v2365 = vadd.f32 %v1916, %v2364
        %v2366 = vpop.f32.mrf.mxu0
        %v2367 = vpop.f32.mrf.mxu0
        %v2368 = vadd.f32 %v1916, %v2367
        %v2369 = vpop.f32.mrf.mxu0
        %2370 = vmatprep.mubr.bf16.mxu0 0
        %2371 = vmatmul.mubr.bf16.gmra.mxu0 %v2156
        %v2372 = vpop.f32.mrf.mxu0
        %v2373 = vadd.f32 %v1916, %v2372
        %v2374 = vpop.f32.mrf.mxu0
        %v2375 = vpop.f32.mrf.mxu0
        %v2376 = vadd.f32 %v1916, %v2375
        %v2377 = vpop.f32.mrf.mxu0
        %2378 = vmatprep.mubr.bf16.mxu0 0
        %2379 = vmatmul.mubr.bf16.gmra.mxu0 %v2159
        %v2380 = vpop.f32.mrf.mxu0
        %v2381 = vadd.f32 %v1916, %v2380
        %v2382 = vpop.f32.mrf.mxu0
        %v2383 = vpop.f32.mrf.mxu0
        %v2384 = vadd.f32 %v1916, %v2383
        %v2385 = vpop.f32.mrf.mxu0
        %2386 = vmatprep.mubr.bf16.mxu0 0
        %2387 = vmatmul.mubr.bf16.gmra.mxu0 %v2162
        %v2388 = vpop.f32.mrf.mxu0
        %v2389 = vadd.f32 %v1916, %v2388
        %v2390 = vpop.f32.mrf.mxu0
        %v2391 = vpop.f32.mrf.mxu0
        %v2392 = vadd.f32 %v1916, %v2391
        %v2393 = vpop.f32.mrf.mxu0
        %2394 = vmatprep.mubr.bf16.mxu0 0
        %2395 = vmatmul.mubr.bf16.gmra.mxu0 %v2165
        %v2396 = vpop.f32.mrf.mxu0
        %v2397 = vadd.f32 %v1916, %v2396
        %v2398 = vpop.f32.mrf.mxu0
        %v2399 = vpop.f32.mrf.mxu0
        %v2400 = vadd.f32 %v1916, %v2399
        %v2401 = vpop.f32.mrf.mxu0
        %2402 = vmatprep.mubr.bf16.mxu0 0
        %2403 = vmatmul.mubr.bf16.gmra.mxu0 %v2168
        %v2404 = vpop.f32.mrf.mxu0
        %v2405 = vadd.f32 %v1916, %v2404
        %v2406 = vpop.f32.mrf.mxu0
        %v2407 = vpop.f32.mrf.mxu0
        %v2408 = vadd.f32 %v1916, %v2407
        %v2409 = vpop.f32.mrf.mxu0
        %2410 = vmatprep.mubr.bf16.mxu0 0
        %2411 = vmatmul.mubr.bf16.gmra.mxu0 %v2171
        %v2412 = vpop.f32.mrf.mxu0
        %v2413 = vadd.f32 %v1916, %v2412
        %v2414 = vpop.f32.mrf.mxu0
        %v2415 = vpop.f32.mrf.mxu0
        %v2416 = vadd.f32 %v1916, %v2415
        %v2417 = vpop.f32.mrf.mxu0
        %2418 = vmatprep.mubr.bf16.mxu0 0
        %2419 = vmatmul.mubr.bf16.gmra.mxu0 %v2174
        %v2420 = vpop.f32.mrf.mxu0
        %v2421 = vadd.f32 %v1916, %v2420
        %v2422 = vpop.f32.mrf.mxu0
        %v2423 = vpop.f32.mrf.mxu0
        %v2424 = vadd.f32 %v1916, %v2423
        %v2425 = vpop.f32.mrf.mxu0
        %2426 = vmatprep.mubr.bf16.mxu0 0
        %2427 = vmatmul.mubr.bf16.gmra.mxu0 %v2177
        %v2428 = vpop.f32.mrf.mxu0
        %v2429 = vadd.f32 %v1916, %v2428
        %v2430 = vpop.f32.mrf.mxu0
        %v2431 = vpop.f32.mrf.mxu0
        %v2432 = vadd.f32 %v1916, %v2431
        %v2433 = vpop.f32.mrf.mxu0
        %2434 = vmatprep.mubr.bf16.mxu0 0
        %2435 = vmatmul.mubr.bf16.gmra.mxu0 %v2180
        %v2436 = vpop.f32.mrf.mxu0
        %v2437 = vadd.f32 %v1916, %v2436
        %v2438 = vpop.f32.mrf.mxu0
        %v2439 = vpop.f32.mrf.mxu0
        %v2440 = vadd.f32 %v1916, %v2439
        %v2441 = vpop.f32.mrf.mxu0
        %2442 = vmatprep.mubr.bf16.mxu0 0
        %2443 = vmatmul.mubr.bf16.gmra.mxu0 %v2183
        %v2444 = vpop.f32.mrf.mxu0
        %v2445 = vadd.f32 %v1916, %v2444
        %v2446 = vpop.f32.mrf.mxu0
        %v2447 = vpop.f32.mrf.mxu0
        %v2448 = vadd.f32 %v1916, %v2447
        %v2449 = vpop.f32.mrf.mxu0
        %2450 = vmatprep.mubr.bf16.mxu0 0
        %2451 = vmatmul.mubr.bf16.gmra.mxu0 %v2186
        %v2452 = vpop.f32.mrf.mxu0
        %v2453 = vadd.f32 %v1916, %v2452
        %v2454 = vpop.f32.mrf.mxu0
        %v2455 = vpop.f32.mrf.mxu0
        %v2456 = vadd.f32 %v1916, %v2455
        %v2457 = vpop.f32.mrf.mxu0
        %2458 = vmatprep.mubr.bf16.mxu0 0
        %2459 = vmatmul.mubr.bf16.gmra.mxu0 %v2189
        %v2460 = vpop.f32.mrf.mxu0
        %v2461 = vadd.f32 %v1916, %v2460
        %v2462 = vpop.f32.mrf.mxu0
        %v2463 = vpop.f32.mrf.mxu0
        %v2464 = vadd.f32 %v1916, %v2463
        %v2465 = vpop.f32.mrf.mxu0
        %2466 = vmatprep.mubr.bf16.mxu0 0
        %2467 = vmatmul.mubr.bf16.gmra.mxu0 %v2192
        %v2468 = vpop.f32.mrf.mxu0
        %v2469 = vadd.f32 %v1916, %v2468
        %v2470 = vpop.f32.mrf.mxu0
        %v2471 = vpop.f32.mrf.mxu0
        %v2472 = vadd.f32 %v1916, %v2471
        %v2473 = vpop.f32.mrf.mxu0
        %2474 = vmatprep.mubr.bf16.mxu0 0
        %2475 = vmatmul.mubr.bf16.gmra.mxu0 %v2195
        %v2476 = vpop.f32.mrf.mxu0
        %v2477 = vadd.f32 %v1916, %v2476
        %v2478 = vpop.f32.mrf.mxu0
        %v2479 = vpop.f32.mrf.mxu0
        %v2480 = vadd.f32 %v1916, %v2479
        %v2481 = vpop.f32.mrf.mxu0
        %2482 = vmatprep.mubr.bf16.mxu0 0
        %2483 = vmatmul.mubr.bf16.gmra.mxu0 %v2198
        %v2484 = vpop.f32.mrf.mxu0
        %v2485 = vadd.f32 %v1916, %v2484
        %v2486 = vpop.f32.mrf.mxu0
        %v2487 = vpop.f32.mrf.mxu0
        %v2488 = vadd.f32 %v1916, %v2487
        %v2489 = vpop.f32.mrf.mxu0
        %2490 = vmatprep.mubr.bf16.mxu0 0
        %2491 = vmatmul.mubr.bf16.gmra.mxu0 %v2201
        %v2492 = vpop.f32.mrf.mxu0
        %v2493 = vadd.f32 %v1916, %v2492
        %v2494 = vpop.f32.mrf.mxu0
        %v2495 = vpop.f32.mrf.mxu0
        %v2496 = vadd.f32 %v1916, %v2495
        %v2497 = vpop.f32.mrf.mxu0
        %2498 = vmatprep.mubr.bf16.mxu0 0
        %2499 = vmatmul.mubr.bf16.gmra.mxu0 %v2204
        %v2500 = vpop.f32.mrf.mxu0
        %v2501 = vadd.f32 %v1916, %v2500
        %v2502 = vpop.f32.mrf.mxu0
        %v2503 = vpop.f32.mrf.mxu0
        %v2504 = vadd.f32 %v1916, %v2503
        %v2505 = vpop.f32.mrf.mxu0
        %2506 = vmatprep.mubr.bf16.mxu0 0
        %2507 = vmatmul.mubr.bf16.gmra.mxu0 %v2207
        %v2508 = vpop.f32.mrf.mxu0
        %v2509 = vadd.f32 %v1916, %v2508
        %v2510 = vpop.f32.mrf.mxu0
        %v2511 = vpop.f32.mrf.mxu0
        %v2512 = vadd.f32 %v1916, %v2511
        %v2513 = vpop.f32.mrf.mxu0
        %2514 = vmatprep.mubr.bf16.mxu0 0
        %2515 = vmatmul.mubr.bf16.gmra.mxu0 %v2210
        %v2516 = vpop.f32.mrf.mxu0
        %v2517 = vadd.f32 %v1916, %v2516
        %v2518 = vpop.f32.mrf.mxu0
        %v2519 = vpop.f32.mrf.mxu0
        %v2520 = vadd.f32 %v1916, %v2519
        %v2521 = vpop.f32.mrf.mxu0
        %2522 = vmatprep.mubr.bf16.mxu0 0
        %2523 = vmatmul.mubr.bf16.gmra.mxu0 %v2213
        %v2524 = vpop.f32.mrf.mxu0
        %v2525 = vadd.f32 %v1916, %v2524
        %v2526 = vpop.f32.mrf.mxu0
        %v2527 = vpop.f32.mrf.mxu0
        %v2528 = vadd.f32 %v1916, %v2527
        %v2529 = vpop.f32.mrf.mxu0
        %2530 = vmatprep.mubr.bf16.mxu0 0
        %2531 = vmatmul.mubr.bf16.gmra.mxu0 %v2216
        %v2532 = vpop.f32.mrf.mxu0
        %v2533 = vadd.f32 %v1916, %v2532
        %v2534 = vpop.f32.mrf.mxu0
        %v2535 = vpop.f32.mrf.mxu0
        %v2536 = vadd.f32 %v1916, %v2535
        %v2537 = vpop.f32.mrf.mxu0
        %2538 = vdwg.mxu0
        %v2539 = vmul.f32 %v2253, 0.2
        %v2540 = vmul.f32 %v2256, 0.2
        %v2541 = vmul.f32 %v2261, 0.2
        %v2542 = vmul.f32 %v2264, 0.2
        %v2543 = vmul.f32 %v2269, 0.2
        %v2544 = vmul.f32 %v2272, 0.2
        %v2545 = vmul.f32 %v2277, 0.2
        %v2546 = vmul.f32 %v2280, 0.2
        %v2547 = vmul.f32 %v2285, 0.2
        %v2548 = vmul.f32 %v2288, 0.2
        %v2549 = vmul.f32 %v2293, 0.2
        %v2550 = vmul.f32 %v2296, 0.2
        %v2551 = vmul.f32 %v2301, 0.2
        %v2552 = vmul.f32 %v2304, 0.2
        %v2553 = vmul.f32 %v2309, 0.2
        %v2554 = vmul.f32 %v2312, 0.2
        %v2555 = vmul.f32 %v2317, 0.2
        %v2556 = vmul.f32 %v2320, 0.2
        %v2557 = vmul.f32 %v2325, 0.2
        %v2558 = vmul.f32 %v2328, 0.2
        %v2559 = vmul.f32 %v2333, 0.2
        %v2560 = vmul.f32 %v2336, 0.2
        %v2561 = vmul.f32 %v2341, 0.2
        %v2562 = vmul.f32 %v2344, 0.2
        %v2563 = vmul.f32 %v2349, 0.2
        %v2564 = vmul.f32 %v2352, 0.2
        %v2565 = vmul.f32 %v2357, 0.2
        %v2566 = vmul.f32 %v2360, 0.2
        %v2567 = vmul.f32 %v2365, 0.2
        %v2568 = vmul.f32 %v2368, 0.2
        %v2569 = vmul.f32 %v2373, 0.2
        %v2570 = vmul.f32 %v2376, 0.2
        %v2571 = vmul.f32 %v2381, 0.2
        %v2572 = vmul.f32 %v2384, 0.2
        %v2573 = vmul.f32 %v2389, 0.2
        %v2574 = vmul.f32 %v2392, 0.2
        %v2575 = vmul.f32 %v2397, 0.2
        %v2576 = vmul.f32 %v2400, 0.2
        %v2577 = vmul.f32 %v2405, 0.2
        %v2578 = vmul.f32 %v2408, 0.2
        %v2579 = vmul.f32 %v2413, 0.2
        %v2580 = vmul.f32 %v2416, 0.2
        %v2581 = vmul.f32 %v2421, 0.2
        %v2582 = vmul.f32 %v2424, 0.2
        %v2583 = vmul.f32 %v2429, 0.2
        %v2584 = vmul.f32 %v2432, 0.2
        %v2585 = vmul.f32 %v2437, 0.2
        %v2586 = vmul.f32 %v2440, 0.2
        %v2587 = vmul.f32 %v2445, 0.2
        %v2588 = vmul.f32 %v2448, 0.2
        %v2589 = vmul.f32 %v2453, 0.2
        %v2590 = vmul.f32 %v2456, 0.2
        %v2591 = vmul.f32 %v2461, 0.2
        %v2592 = vmul.f32 %v2464, 0.2
        %v2593 = vmul.f32 %v2469, 0.2
        %v2594 = vmul.f32 %v2472, 0.2
        %v2595 = vmul.f32 %v2477, 0.2
        %v2596 = vmul.f32 %v2480, 0.2
        %v2597 = vmul.f32 %v2485, 0.2
        %v2598 = vmul.f32 %v2488, 0.2
        %v2599 = vmul.f32 %v2493, 0.2
        %v2600 = vmul.f32 %v2496, 0.2
        %v2601 = vmul.f32 %v2501, 0.2
        %v2602 = vmul.f32 %v2504, 0.2
        %v2603 = vmul.f32 %v2509, 0.2
        %v2604 = vmul.f32 %v2512, 0.2
        %v2605 = vmul.f32 %v2517, 0.2
        %v2606 = vmul.f32 %v2520, 0.2
        %v2607 = vmul.f32 %v2525, 0.2
        %v2608 = vmul.f32 %v2528, 0.2
        %v2609 = vmul.f32 %v2533, 0.2
        %v2610 = vmul.f32 %v2536, 0.2
        %v2611 = vmax.f32 %v2253, %v2539
        %v2612 = vmax.f32 %v2256, %v2540
        %v2613 = vmax.f32 %v2261, %v2541
        %v2614 = vmax.f32 %v2264, %v2542
        %v2615 = vmax.f32 %v2269, %v2543
        %v2616 = vmax.f32 %v2272, %v2544
        %v2617 = vmax.f32 %v2277, %v2545
        %v2618 = vmax.f32 %v2280, %v2546
        %v2619 = vmax.f32 %v2285, %v2547
        %v2620 = vmax.f32 %v2288, %v2548
        %v2621 = vmax.f32 %v2293, %v2549
        %v2622 = vmax.f32 %v2296, %v2550
        %v2623 = vmax.f32 %v2301, %v2551
        %v2624 = vmax.f32 %v2304, %v2552
        %v2625 = vmax.f32 %v2309, %v2553
        %v2626 = vmax.f32 %v2312, %v2554
        %v2627 = vmax.f32 %v2317, %v2555
        %v2628 = vmax.f32 %v2320, %v2556
        %v2629 = vmax.f32 %v2325, %v2557
        %v2630 = vmax.f32 %v2328, %v2558
        %v2631 = vmax.f32 %v2333, %v2559
        %v2632 = vmax.f32 %v2336, %v2560
        %v2633 = vmax.f32 %v2341, %v2561
        %v2634 = vmax.f32 %v2344, %v2562
        %v2635 = vmax.f32 %v2349, %v2563
        %v2636 = vmax.f32 %v2352, %v2564
        %v2637 = vmax.f32 %v2357, %v2565
        %v2638 = vmax.f32 %v2360, %v2566
        %v2639 = vmax.f32 %v2365, %v2567
        %v2640 = vmax.f32 %v2368, %v2568
        %v2641 = vmax.f32 %v2373, %v2569
        %v2642 = vmax.f32 %v2376, %v2570
        %v2643 = vmax.f32 %v2381, %v2571
        %v2644 = vmax.f32 %v2384, %v2572
        %v2645 = vmax.f32 %v2389, %v2573
        %v2646 = vmax.f32 %v2392, %v2574
        %v2647 = vmax.f32 %v2397, %v2575
        %v2648 = vmax.f32 %v2400, %v2576
        %v2649 = vmax.f32 %v2405, %v2577
        %v2650 = vmax.f32 %v2408, %v2578
        %v2651 = vmax.f32 %v2413, %v2579
        %v2652 = vmax.f32 %v2416, %v2580
        %v2653 = vmax.f32 %v2421, %v2581
        %v2654 = vmax.f32 %v2424, %v2582
        %v2655 = vmax.f32 %v2429, %v2583
        %v2656 = vmax.f32 %v2432, %v2584
        %v2657 = vmax.f32 %v2437, %v2585
        %v2658 = vmax.f32 %v2440, %v2586
        %v2659 = vmax.f32 %v2445, %v2587
        %v2660 = vmax.f32 %v2448, %v2588
        %v2661 = vmax.f32 %v2453, %v2589
        %v2662 = vmax.f32 %v2456, %v2590
        %v2663 = vmax.f32 %v2461, %v2591
        %v2664 = vmax.f32 %v2464, %v2592
        %v2665 = vmax.f32 %v2469, %v2593
        %v2666 = vmax.f32 %v2472, %v2594
        %v2667 = vmax.f32 %v2477, %v2595
        %v2668 = vmax.f32 %v2480, %v2596
        %v2669 = vmax.f32 %v2485, %v2597
        %v2670 = vmax.f32 %v2488, %v2598
        %v2671 = vmax.f32 %v2493, %v2599
        %v2672 = vmax.f32 %v2496, %v2600
        %v2673 = vmax.f32 %v2501, %v2601
        %v2674 = vmax.f32 %v2504, %v2602
        %v2675 = vmax.f32 %v2509, %v2603
        %v2676 = vmax.f32 %v2512, %v2604
        %v2677 = vmax.f32 %v2517, %v2605
        %v2678 = vmax.f32 %v2520, %v2606
        %v2679 = vmax.f32 %v2525, %v2607
        %v2680 = vmax.f32 %v2528, %v2608
        %v2681 = vmax.f32 %v2533, %v2609
        %v2682 = vmax.f32 %v2536, %v2610
        %2683 = vst.msk [vmem:[#allocation2 + $0x240] sm:$0xff] %vm1189, %v2611
        %2684 = vst.msk [vmem:[#allocation2 + $0x248] sm:$0xff] %vm1189, %v2612
        %2685 = vst.msk [vmem:[#allocation2 + $0x250] sm:$0xff] %vm1189, %v2613
        %2686 = vst.msk [vmem:[#allocation2 + $0x258] sm:$0xff] %vm1189, %v2614
        %2687 = vst.msk [vmem:[#allocation2 + $0x260] sm:$0xff] %vm1189, %v2615
        %2688 = vst.msk [vmem:[#allocation2 + $0x268] sm:$0xff] %vm1189, %v2616
        %2689 = vst.msk [vmem:[#allocation2 + $0x270] sm:$0xff] %vm1189, %v2617
        %2690 = vst.msk [vmem:[#allocation2 + $0x278] sm:$0xff] %vm1189, %v2618
        %2691 = vst.msk [vmem:[#allocation2 + $0x280] sm:$0xff] %vm1189, %v2619
        %2692 = vst.msk [vmem:[#allocation2 + $0x288] sm:$0xff] %vm1189, %v2620
        %2693 = vst.msk [vmem:[#allocation2 + $0x290] sm:$0xff] %vm1189, %v2621
        %2694 = vst.msk [vmem:[#allocation2 + $0x298] sm:$0xff] %vm1189, %v2622
        %2695 = vst.msk [vmem:[#allocation2 + $0x2a0] sm:$0xff] %vm1189, %v2623
        %2696 = vst.msk [vmem:[#allocation2 + $0x2a8] sm:$0xff] %vm1189, %v2624
        %2697 = vst.msk [vmem:[#allocation2 + $0x2b0] sm:$0xff] %vm1189, %v2625
        %2698 = vst.msk [vmem:[#allocation2 + $0x2b8] sm:$0xff] %vm1189, %v2626
        %2699 = vst.msk [vmem:[#allocation2 + $0x2c0] sm:$0xff] %vm1189, %v2627
        %2700 = vst.msk [vmem:[#allocation2 + $0x2c8] sm:$0xff] %vm1189, %v2628
        %2701 = vst.msk [vmem:[#allocation2 + $0x2d0] sm:$0xff] %vm1189, %v2629
        %2702 = vst.msk [vmem:[#allocation2 + $0x2d8] sm:$0xff] %vm1189, %v2630
        %2703 = vst.msk [vmem:[#allocation2 + $0x2e0] sm:$0xff] %vm1189, %v2631
        %2704 = vst.msk [vmem:[#allocation2 + $0x2e8] sm:$0xff] %vm1189, %v2632
        %2705 = vst.msk [vmem:[#allocation2 + $0x2f0] sm:$0xff] %vm1189, %v2633
        %2706 = vst.msk [vmem:[#allocation2 + $0x2f8] sm:$0xff] %vm1189, %v2634
        %2707 = vst.msk [vmem:[#allocation2 + $0x300] sm:$0xff] %vm1189, %v2635
        %2708 = vst.msk [vmem:[#allocation2 + $0x308] sm:$0xff] %vm1189, %v2636
        %2709 = vst.msk [vmem:[#allocation2 + $0x310] sm:$0xff] %vm1189, %v2637
        %2710 = vst.msk [vmem:[#allocation2 + $0x318] sm:$0xff] %vm1189, %v2638
        %2711 = vst.msk [vmem:[#allocation2 + $0x320] sm:$0xff] %vm1189, %v2639
        %2712 = vst.msk [vmem:[#allocation2 + $0x328] sm:$0xff] %vm1189, %v2640
        %2713 = vst.msk [vmem:[#allocation2 + $0x330] sm:$0xff] %vm1189, %v2641
        %2714 = vst.msk [vmem:[#allocation2 + $0x338] sm:$0xff] %vm1189, %v2642
        %2715 = vst.msk [vmem:[#allocation2 + $0x340] sm:$0xff] %vm1189, %v2643
        %2716 = vst.msk [vmem:[#allocation2 + $0x348] sm:$0xff] %vm1189, %v2644
        %2717 = vst.msk [vmem:[#allocation2 + $0x350] sm:$0xff] %vm1189, %v2645
        %2718 = vst.msk [vmem:[#allocation2 + $0x358] sm:$0xff] %vm1189, %v2646
        %2719 = vst.msk [vmem:[#allocation2 + $0x360] sm:$0xff] %vm1189, %v2647
        %2720 = vst.msk [vmem:[#allocation2 + $0x368] sm:$0xff] %vm1189, %v2648
        %2721 = vst.msk [vmem:[#allocation2 + $0x370] sm:$0xff] %vm1189, %v2649
        %2722 = vst.msk [vmem:[#allocation2 + $0x378] sm:$0xff] %vm1189, %v2650
        %2723 = vst.msk [vmem:[#allocation2 + $0x380] sm:$0xff] %vm1189, %v2651
        %2724 = vst.msk [vmem:[#allocation2 + $0x388] sm:$0xff] %vm1189, %v2652
        %2725 = vst.msk [vmem:[#allocation2 + $0x390] sm:$0xff] %vm1189, %v2653
        %2726 = vst.msk [vmem:[#allocation2 + $0x398] sm:$0xff] %vm1189, %v2654
        %2727 = vst.msk [vmem:[#allocation2 + $0x3a0] sm:$0xff] %vm1189, %v2655
        %2728 = vst.msk [vmem:[#allocation2 + $0x3a8] sm:$0xff] %vm1189, %v2656
        %2729 = vst.msk [vmem:[#allocation2 + $0x3b0] sm:$0xff] %vm1189, %v2657
        %2730 = vst.msk [vmem:[#allocation2 + $0x3b8] sm:$0xff] %vm1189, %v2658
        %2731 = vst.msk [vmem:[#allocation2 + $0x3c0] sm:$0xff] %vm1189, %v2659
        %2732 = vst.msk [vmem:[#allocation2 + $0x3c8] sm:$0xff] %vm1189, %v2660
        %2733 = vst.msk [vmem:[#allocation2 + $0x3d0] sm:$0xff] %vm1189, %v2661
        %2734 = vst.msk [vmem:[#allocation2 + $0x3d8] sm:$0xff] %vm1189, %v2662
        %2735 = vst.msk [vmem:[#allocation2 + $0x3e0] sm:$0xff] %vm1189, %v2663
        %2736 = vst.msk [vmem:[#allocation2 + $0x3e8] sm:$0xff] %vm1189, %v2664
        %2737 = vst.msk [vmem:[#allocation2 + $0x3f0] sm:$0xff] %vm1189, %v2665
        %2738 = vst.msk [vmem:[#allocation2 + $0x3f8] sm:$0xff] %vm1189, %v2666
        %2739 = vst.msk [vmem:[#allocation2 + $0x400] sm:$0xff] %vm1189, %v2667
        %2740 = vst.msk [vmem:[#allocation2 + $0x408] sm:$0xff] %vm1189, %v2668
        %2741 = vst.msk [vmem:[#allocation2 + $0x410] sm:$0xff] %vm1189, %v2669
        %2742 = vst.msk [vmem:[#allocation2 + $0x418] sm:$0xff] %vm1189, %v2670
        %2743 = vst.msk [vmem:[#allocation2 + $0x420] sm:$0xff] %vm1189, %v2671
        %2744 = vst.msk [vmem:[#allocation2 + $0x428] sm:$0xff] %vm1189, %v2672
        %2745 = vst.msk [vmem:[#allocation2 + $0x430] sm:$0xff] %vm1189, %v2673
        %2746 = vst.msk [vmem:[#allocation2 + $0x438] sm:$0xff] %vm1189, %v2674
        %2747 = vst.msk [vmem:[#allocation2 + $0x440] sm:$0xff] %vm1189, %v2675
        %2748 = vst.msk [vmem:[#allocation2 + $0x448] sm:$0xff] %vm1189, %v2676
        %2749 = vst.msk [vmem:[#allocation2 + $0x450] sm:$0xff] %vm1189, %v2677
        %2750 = vst.msk [vmem:[#allocation2 + $0x458] sm:$0xff] %vm1189, %v2678
        %2751 = vst.msk [vmem:[#allocation2 + $0x460] sm:$0xff] %vm1189, %v2679
        %2752 = vst.msk [vmem:[#allocation2 + $0x468] sm:$0xff] %vm1189, %v2680
        %2753 = vst.msk [vmem:[#allocation2 + $0x470] sm:$0xff] %vm1189, %v2681
        %2754 = vst.msk [vmem:[#allocation2 + $0x478] sm:$0xff] %vm1189, %v2682
        %v2755 = vld [vmem:[%s913 + $0x240] sm:$0xf]
        %v2756 = vld [vmem:[%s913 + $0x244] sm:$0xf]
        %v2757 = vld [vmem:[%s913 + $0x248] sm:$0xf]
        %v2758 = vld [vmem:[%s913 + $0x24c] sm:$0xf]
        %v2759 = vld [vmem:[%s913 + $0x250] sm:$0xf]
        %v2760 = vld [vmem:[%s913 + $0x254] sm:$0xf]
        %v2761 = vld [vmem:[%s913 + $0x258] sm:$0xf]
        %v2762 = vld [vmem:[%s913 + $0x25c] sm:$0xf]
        %v2763 = vld [vmem:[%s913 + $0x260] sm:$0xf]
        %v2764 = vld [vmem:[%s913 + $0x264] sm:$0xf]
        %v2765 = vld [vmem:[%s913 + $0x268] sm:$0xf]
        %v2766 = vld [vmem:[%s913 + $0x26c] sm:$0xf]
        %v2767 = vld [vmem:[%s913 + $0x270] sm:$0xf]
        %v2768 = vld [vmem:[%s913 + $0x274] sm:$0xf]
        %v2769 = vld [vmem:[%s913 + $0x278] sm:$0xf]
        %v2770 = vld [vmem:[%s913 + $0x27c] sm:$0xf]
        %v2771 = vld [vmem:[%s913 + $0x280] sm:$0xf]
        %v2772 = vld [vmem:[%s913 + $0x284] sm:$0xf]
        %v2773 = vld [vmem:[%s913 + $0x288] sm:$0xf]
        %v2774 = vld [vmem:[%s913 + $0x28c] sm:$0xf]
        %v2775 = vld [vmem:[%s913 + $0x290] sm:$0xf]
        %v2776 = vld [vmem:[%s913 + $0x294] sm:$0xf]
        %v2777 = vld [vmem:[%s913 + $0x298] sm:$0xf]
        %v2778 = vld [vmem:[%s913 + $0x29c] sm:$0xf]
        %v2779 = vld [vmem:[%s913 + $0x2a0] sm:$0xf]
        %v2780 = vld [vmem:[%s913 + $0x2a4] sm:$0xf]
        %v2781 = vld [vmem:[%s913 + $0x2a8] sm:$0xf]
        %v2782 = vld [vmem:[%s913 + $0x2ac] sm:$0xf]
        %v2783 = vld [vmem:[%s913 + $0x2b0] sm:$0xf]
        %v2784 = vld [vmem:[%s913 + $0x2b4] sm:$0xf]
        %v2785 = vld [vmem:[%s913 + $0x2b8] sm:$0xf]
        %v2786 = vld [vmem:[%s913 + $0x2bc] sm:$0xf]
        %v2787 = vld [vmem:[%s913 + $0x2c0] sm:$0xf]
        %v2788 = vld [vmem:[%s913 + $0x2c4] sm:$0xf]
        %v2789 = vld [vmem:[%s913 + $0x2c8] sm:$0xf]
        %v2790 = vld [vmem:[%s913 + $0x2cc] sm:$0xf]
        %v2791 = vld [vmem:[%s913 + $0x2d0] sm:$0xf]
        %v2792 = vld [vmem:[%s913 + $0x2d4] sm:$0xf]
        %v2793 = vld [vmem:[%s913 + $0x2d8] sm:$0xf]
        %v2794 = vld [vmem:[%s913 + $0x2dc] sm:$0xf]
        %v2795 = vld [vmem:[%s913 + $0x2e0] sm:$0xf]
        %v2796 = vld [vmem:[%s913 + $0x2e4] sm:$0xf]
        %v2797 = vld [vmem:[%s913 + $0x2e8] sm:$0xf]
        %v2798 = vld [vmem:[%s913 + $0x2ec] sm:$0xf]
        %v2799 = vld [vmem:[%s913 + $0x2f0] sm:$0xf]
        %v2800 = vld [vmem:[%s913 + $0x2f4] sm:$0xf]
        %v2801 = vld [vmem:[%s913 + $0x2f8] sm:$0xf]
        %v2802 = vld [vmem:[%s913 + $0x2fc] sm:$0xf]
        %v2803 = vld [vmem:[%s913 + $0x300] sm:$0xf]
        %v2804 = vld [vmem:[%s913 + $0x304] sm:$0xf]
        %v2805 = vld [vmem:[%s913 + $0x308] sm:$0xf]
        %v2806 = vld [vmem:[%s913 + $0x30c] sm:$0xf]
        %v2807 = vld [vmem:[%s913 + $0x310] sm:$0xf]
        %v2808 = vld [vmem:[%s913 + $0x314] sm:$0xf]
        %v2809 = vld [vmem:[%s913 + $0x318] sm:$0xf]
        %v2810 = vld [vmem:[%s913 + $0x31c] sm:$0xf]
        %v2811 = vld [vmem:[%s913 + $0x320] sm:$0xf]
        %v2812 = vld [vmem:[%s913 + $0x324] sm:$0xf]
        %v2813 = vld [vmem:[%s913 + $0x328] sm:$0xf]
        %v2814 = vld [vmem:[%s913 + $0x32c] sm:$0xf]
        %v2815 = vld [vmem:[%s913 + $0x330] sm:$0xf]
        %v2816 = vld [vmem:[%s913 + $0x334] sm:$0xf]
        %v2817 = vld [vmem:[%s913 + $0x338] sm:$0xf]
        %v2818 = vld [vmem:[%s913 + $0x33c] sm:$0xf]
        %v2819 = vld [vmem:[%s913 + $0x340] sm:$0xf]
        %v2820 = vld [vmem:[%s913 + $0x344] sm:$0xf]
        %v2821 = vld [vmem:[%s913 + $0x348] sm:$0xf]
        %v2822 = vld [vmem:[%s913 + $0x34c] sm:$0xf]
        %v2823 = vld [vmem:[%s913 + $0x350] sm:$0xf]
        %v2824 = vld [vmem:[%s913 + $0x354] sm:$0xf]
        %v2825 = vld [vmem:[%s913 + $0x358] sm:$0xf]
        %v2826 = vld [vmem:[%s913 + $0x35c] sm:$0xf]
        %v2827 = vld [vmem:[%s2] sm:$0xf]
        %v2828 = vld [vmem:[%s2 + $0x4] sm:$0xf]
        %v2829 = vld [vmem:[%s2 + $0x8] sm:$0xf]
        %v2830 = vld [vmem:[%s2 + $0xc] sm:$0xf]
        %v2831 = vld [vmem:[%s3] sm:$0x1]
        %v2833 = vlaneseq
        %v2834 = vshrl.u32 %v2833, 7
        %v2835 = vsub.s32 0, %v2834
        %v2836 = vrot.slane %v2831, %v2835
        %v2910 = vunpack.c.l.b16 %v2755
        %v2911 = vunpack.c.l.b16 %v2756
        %v2912 = vunpack.c.l.b16 %v2757
        %v2913 = vunpack.c.l.b16 %v2758
        %v2914 = vunpack.c.l.b16 %v2759
        %v2915 = vunpack.c.l.b16 %v2760
        %v2916 = vunpack.c.l.b16 %v2761
        %v2917 = vunpack.c.l.b16 %v2762
        %v2918 = vunpack.c.l.b16 %v2763
        %v2919 = vunpack.c.l.b16 %v2764
        %v2920 = vunpack.c.l.b16 %v2765
        %v2921 = vunpack.c.l.b16 %v2766
        %v2922 = vunpack.c.l.b16 %v2767
        %v2923 = vunpack.c.l.b16 %v2768
        %v2924 = vunpack.c.l.b16 %v2769
        %v2925 = vunpack.c.l.b16 %v2770
        %v2926 = vunpack.c.l.b16 %v2771
        %v2927 = vunpack.c.l.b16 %v2772
        %v2928 = vunpack.c.l.b16 %v2773
        %v2929 = vunpack.c.l.b16 %v2774
        %v2930 = vunpack.c.l.b16 %v2775
        %v2931 = vunpack.c.l.b16 %v2776
        %v2932 = vunpack.c.l.b16 %v2777
        %v2933 = vunpack.c.l.b16 %v2778
        %v2934 = vunpack.c.l.b16 %v2779
        %v2935 = vunpack.c.l.b16 %v2780
        %v2936 = vunpack.c.l.b16 %v2781
        %v2937 = vunpack.c.l.b16 %v2782
        %v2938 = vunpack.c.l.b16 %v2783
        %v2939 = vunpack.c.l.b16 %v2784
        %v2940 = vunpack.c.l.b16 %v2785
        %v2941 = vunpack.c.l.b16 %v2786
        %v2942 = vunpack.c.l.b16 %v2787
        %v2943 = vunpack.c.l.b16 %v2788
        %v2944 = vunpack.c.l.b16 %v2789
        %v2945 = vunpack.c.l.b16 %v2790
        %v2946 = vunpack.c.l.b16 %v2791
        %v2947 = vunpack.c.l.b16 %v2792
        %v2948 = vunpack.c.l.b16 %v2793
        %v2949 = vunpack.c.l.b16 %v2794
        %v2950 = vunpack.c.l.b16 %v2795
        %v2951 = vunpack.c.l.b16 %v2796
        %v2952 = vunpack.c.l.b16 %v2797
        %v2953 = vunpack.c.l.b16 %v2798
        %v2954 = vunpack.c.l.b16 %v2799
        %v2955 = vunpack.c.l.b16 %v2800
        %v2956 = vunpack.c.l.b16 %v2801
        %v2957 = vunpack.c.l.b16 %v2802
        %v2958 = vunpack.c.l.b16 %v2803
        %v2959 = vunpack.c.l.b16 %v2804
        %v2960 = vunpack.c.l.b16 %v2805
        %v2961 = vunpack.c.l.b16 %v2806
        %v2962 = vunpack.c.l.b16 %v2807
        %v2963 = vunpack.c.l.b16 %v2808
        %v2964 = vunpack.c.l.b16 %v2809
        %v2965 = vunpack.c.l.b16 %v2810
        %v2966 = vunpack.c.l.b16 %v2811
        %v2967 = vunpack.c.l.b16 %v2812
        %v2968 = vunpack.c.l.b16 %v2813
        %v2969 = vunpack.c.l.b16 %v2814
        %v2970 = vunpack.c.l.b16 %v2815
        %v2971 = vunpack.c.l.b16 %v2816
        %v2972 = vunpack.c.l.b16 %v2817
        %v2973 = vunpack.c.l.b16 %v2818
        %v2974 = vunpack.c.l.b16 %v2819
        %v2975 = vunpack.c.l.b16 %v2820
        %v2976 = vunpack.c.l.b16 %v2821
        %v2977 = vunpack.c.l.b16 %v2822
        %v2978 = vunpack.c.l.b16 %v2823
        %v2979 = vunpack.c.l.b16 %v2824
        %v2980 = vunpack.c.l.b16 %v2825
        %v2981 = vunpack.c.l.b16 %v2826
        %v2982 = vpack.c.b16 %v2911, %v2910
        %v2983 = vpack.c.b16 %v2913, %v2912
        %v2984 = vpack.c.b16 %v2915, %v2914
        %v2985 = vpack.c.b16 %v2917, %v2916
        %v2986 = vpack.c.b16 %v2919, %v2918
        %v2987 = vpack.c.b16 %v2921, %v2920
        %v2988 = vpack.c.b16 %v2923, %v2922
        %v2989 = vpack.c.b16 %v2925, %v2924
        %v2990 = vpack.c.b16 %v2927, %v2926
        %v2991 = vpack.c.b16 %v2929, %v2928
        %v2992 = vpack.c.b16 %v2931, %v2930
        %v2993 = vpack.c.b16 %v2933, %v2932
        %v2994 = vpack.c.b16 %v2935, %v2934
        %v2995 = vpack.c.b16 %v2937, %v2936
        %v2996 = vpack.c.b16 %v2939, %v2938
        %v2997 = vpack.c.b16 %v2941, %v2940
        %v2998 = vpack.c.b16 %v2943, %v2942
        %v2999 = vpack.c.b16 %v2945, %v2944
        %v3000 = vpack.c.b16 %v2947, %v2946
        %v3001 = vpack.c.b16 %v2949, %v2948
        %v3002 = vpack.c.b16 %v2951, %v2950
        %v3003 = vpack.c.b16 %v2953, %v2952
        %v3004 = vpack.c.b16 %v2955, %v2954
        %v3005 = vpack.c.b16 %v2957, %v2956
        %v3006 = vpack.c.b16 %v2959, %v2958
        %v3007 = vpack.c.b16 %v2961, %v2960
        %v3008 = vpack.c.b16 %v2963, %v2962
        %v3009 = vpack.c.b16 %v2965, %v2964
        %v3010 = vpack.c.b16 %v2967, %v2966
        %v3011 = vpack.c.b16 %v2969, %v2968
        %v3012 = vpack.c.b16 %v2971, %v2970
        %v3013 = vpack.c.b16 %v2973, %v2972
        %v3014 = vpack.c.b16 %v2975, %v2974
        %v3015 = vpack.c.b16 %v2977, %v2976
        %v3016 = vpack.c.b16 %v2979, %v2978
        %v3017 = vpack.c.b16 %v2981, %v2980
        %v3022 = vunpack.c.l.b16 %v2827
        %v3023 = vunpack.c.l.b16 %v2828
        %v3024 = vunpack.c.l.b16 %v2829
        %v3025 = vunpack.c.l.b16 %v2830
        %v3026 = vpack.c.b16 %v3023, %v3022
        %v3027 = vpack.c.b16 %v3025, %v3024
        %v3031 = vsel %vm1189, %v2982, 0
        %v3034 = vsel %vm1189, %v2983, 0
        %v3037 = vsel %vm1189, %v2984, 0
        %v3040 = vsel %vm1189, %v2985, 0
        %v3043 = vsel %vm1189, %v2986, 0
        %v3046 = vsel %vm1189, %v2987, 0
        %v3049 = vsel %vm1189, %v2988, 0
        %v3052 = vsel %vm1189, %v2989, 0
        %v3055 = vsel %vm1189, %v2990, 0
        %v3058 = vsel %vm1189, %v2991, 0
        %v3061 = vsel %vm1189, %v2992, 0
        %v3064 = vsel %vm1189, %v2993, 0
        %v3067 = vsel %vm1189, %v2994, 0
        %v3070 = vsel %vm1189, %v2995, 0
        %v3073 = vsel %vm1189, %v2996, 0
        %v3076 = vsel %vm1189, %v2997, 0
        %v3079 = vsel %vm1189, %v2998, 0
        %v3082 = vsel %vm1189, %v2999, 0
        %v3085 = vsel %vm1189, %v3000, 0
        %v3088 = vsel %vm1189, %v3001, 0
        %v3091 = vsel %vm1189, %v3002, 0
        %v3094 = vsel %vm1189, %v3003, 0
        %v3097 = vsel %vm1189, %v3004, 0
        %v3100 = vsel %vm1189, %v3005, 0
        %v3103 = vsel %vm1189, %v3006, 0
        %v3106 = vsel %vm1189, %v3007, 0
        %v3109 = vsel %vm1189, %v3008, 0
        %v3112 = vsel %vm1189, %v3009, 0
        %v3115 = vsel %vm1189, %v3010, 0
        %v3118 = vsel %vm1189, %v3011, 0
        %v3121 = vsel %vm1189, %v3012, 0
        %v3124 = vsel %vm1189, %v3013, 0
        %v3127 = vsel %vm1189, %v3014, 0
        %v3130 = vsel %vm1189, %v3015, 0
        %v3133 = vsel %vm1189, %v3016, 0
        %v3136 = vsel %vm1189, %v3017, 0
        %3138 = vmatprep.subr.bf16.mxu0 0
        %3139 = vmatpush1.bf16.msra.mxu0 0
        %3140 = vmatprep.subr.bf16.mxu0 0
        %3141 = vmatpush1.bf16.msra.mxu0 0
        %3142 = vmatprep.subr.bf16.mxu0 0
        %3143 = vmatpush1.bf16.msra.mxu0 0
        %3144 = vmatprep.subr.bf16.mxu0 0
        %3145 = vmatpush1.bf16.msra.mxu0 0
        %3146 = vmatprep.subr.bf16.mxu0 0
        %3147 = vmatpush1.bf16.msra.mxu0 0
        %3148 = vmatprep.subr.bf16.mxu0 0
        %3149 = vmatpush1.bf16.msra.mxu0 0
        %3150 = vmatprep.subr.bf16.mxu0 0
        %3151 = vmatpush1.bf16.msra.mxu0 %v3027
        %3152 = vmatprep.subr.bf16.mxu0 0
        %3153 = vmatpush1.bf16.msra.mxu0 %v3026
        %3154 = vmatprep.subr.bf16.mxu0 0
        %3155 = vmatpush2.bf16.msra.mxu0 0
        %3156 = vmatprep.subr.bf16.mxu0 0
        %3157 = vmatpush2.bf16.msra.mxu0 0
        %3158 = vmatprep.subr.bf16.mxu0 0
        %3159 = vmatpush2.bf16.msra.mxu0 0
        %3160 = vmatprep.subr.bf16.mxu0 0
        %3161 = vmatpush2.bf16.msra.mxu0 0
        %3162 = vmatprep.subr.bf16.mxu0 0
        %3163 = vmatpush2.bf16.msra.mxu0 0
        %3164 = vmatprep.subr.bf16.mxu0 0
        %3165 = vmatpush2.bf16.msra.mxu0 0
        %3166 = vmatprep.subr.bf16.mxu0 0
        %3167 = vmatpush2.bf16.msra.mxu0 0
        %3168 = vmatprep.subr.bf16.mxu0 0
        %3169 = vmatpush2.bf16.msra.mxu0 0
        %3170 = vmatprep.mubr.bf16.mxu0 0
        %3171 = vmatmul.mubr.bf16.gmra.mxu0 %v3031
        %v3172 = vpop.f32.mrf.mxu0
        %v3173 = vadd.f32 %v2836, %v3172
        %v3174 = vpop.f32.mrf.mxu0
        %v3175 = vpop.f32.mrf.mxu0
        %v3176 = vadd.f32 %v2836, %v3175
        %v3177 = vpop.f32.mrf.mxu0
        %3178 = vmatprep.mubr.bf16.mxu0 0
        %3179 = vmatmul.mubr.bf16.gmra.mxu0 %v3034
        %v3180 = vpop.f32.mrf.mxu0
        %v3181 = vadd.f32 %v2836, %v3180
        %v3182 = vpop.f32.mrf.mxu0
        %v3183 = vpop.f32.mrf.mxu0
        %v3184 = vadd.f32 %v2836, %v3183
        %v3185 = vpop.f32.mrf.mxu0
        %3186 = vmatprep.mubr.bf16.mxu0 0
        %3187 = vmatmul.mubr.bf16.gmra.mxu0 %v3037
        %v3188 = vpop.f32.mrf.mxu0
        %v3189 = vadd.f32 %v2836, %v3188
        %v3190 = vpop.f32.mrf.mxu0
        %v3191 = vpop.f32.mrf.mxu0
        %v3192 = vadd.f32 %v2836, %v3191
        %v3193 = vpop.f32.mrf.mxu0
        %3194 = vmatprep.mubr.bf16.mxu0 0
        %3195 = vmatmul.mubr.bf16.gmra.mxu0 %v3040
        %v3196 = vpop.f32.mrf.mxu0
        %v3197 = vadd.f32 %v2836, %v3196
        %v3198 = vpop.f32.mrf.mxu0
        %v3199 = vpop.f32.mrf.mxu0
        %v3200 = vadd.f32 %v2836, %v3199
        %v3201 = vpop.f32.mrf.mxu0
        %3202 = vmatprep.mubr.bf16.mxu0 0
        %3203 = vmatmul.mubr.bf16.gmra.mxu0 %v3043
        %v3204 = vpop.f32.mrf.mxu0
        %v3205 = vadd.f32 %v2836, %v3204
        %v3206 = vpop.f32.mrf.mxu0
        %v3207 = vpop.f32.mrf.mxu0
        %v3208 = vadd.f32 %v2836, %v3207
        %v3209 = vpop.f32.mrf.mxu0
        %3210 = vmatprep.mubr.bf16.mxu0 0
        %3211 = vmatmul.mubr.bf16.gmra.mxu0 %v3046
        %v3212 = vpop.f32.mrf.mxu0
        %v3213 = vadd.f32 %v2836, %v3212
        %v3214 = vpop.f32.mrf.mxu0
        %v3215 = vpop.f32.mrf.mxu0
        %v3216 = vadd.f32 %v2836, %v3215
        %v3217 = vpop.f32.mrf.mxu0
        %3218 = vmatprep.mubr.bf16.mxu0 0
        %3219 = vmatmul.mubr.bf16.gmra.mxu0 %v3049
        %v3220 = vpop.f32.mrf.mxu0
        %v3221 = vadd.f32 %v2836, %v3220
        %v3222 = vpop.f32.mrf.mxu0
        %v3223 = vpop.f32.mrf.mxu0
        %v3224 = vadd.f32 %v2836, %v3223
        %v3225 = vpop.f32.mrf.mxu0
        %3226 = vmatprep.mubr.bf16.mxu0 0
        %3227 = vmatmul.mubr.bf16.gmra.mxu0 %v3052
        %v3228 = vpop.f32.mrf.mxu0
        %v3229 = vadd.f32 %v2836, %v3228
        %v3230 = vpop.f32.mrf.mxu0
        %v3231 = vpop.f32.mrf.mxu0
        %v3232 = vadd.f32 %v2836, %v3231
        %v3233 = vpop.f32.mrf.mxu0
        %3234 = vmatprep.mubr.bf16.mxu0 0
        %3235 = vmatmul.mubr.bf16.gmra.mxu0 %v3055
        %v3236 = vpop.f32.mrf.mxu0
        %v3237 = vadd.f32 %v2836, %v3236
        %v3238 = vpop.f32.mrf.mxu0
        %v3239 = vpop.f32.mrf.mxu0
        %v3240 = vadd.f32 %v2836, %v3239
        %v3241 = vpop.f32.mrf.mxu0
        %3242 = vmatprep.mubr.bf16.mxu0 0
        %3243 = vmatmul.mubr.bf16.gmra.mxu0 %v3058
        %v3244 = vpop.f32.mrf.mxu0
        %v3245 = vadd.f32 %v2836, %v3244
        %v3246 = vpop.f32.mrf.mxu0
        %v3247 = vpop.f32.mrf.mxu0
        %v3248 = vadd.f32 %v2836, %v3247
        %v3249 = vpop.f32.mrf.mxu0
        %3250 = vmatprep.mubr.bf16.mxu0 0
        %3251 = vmatmul.mubr.bf16.gmra.mxu0 %v3061
        %v3252 = vpop.f32.mrf.mxu0
        %v3253 = vadd.f32 %v2836, %v3252
        %v3254 = vpop.f32.mrf.mxu0
        %v3255 = vpop.f32.mrf.mxu0
        %v3256 = vadd.f32 %v2836, %v3255
        %v3257 = vpop.f32.mrf.mxu0
        %3258 = vmatprep.mubr.bf16.mxu0 0
        %3259 = vmatmul.mubr.bf16.gmra.mxu0 %v3064
        %v3260 = vpop.f32.mrf.mxu0
        %v3261 = vadd.f32 %v2836, %v3260
        %v3262 = vpop.f32.mrf.mxu0
        %v3263 = vpop.f32.mrf.mxu0
        %v3264 = vadd.f32 %v2836, %v3263
        %v3265 = vpop.f32.mrf.mxu0
        %3266 = vmatprep.mubr.bf16.mxu0 0
        %3267 = vmatmul.mubr.bf16.gmra.mxu0 %v3067
        %v3268 = vpop.f32.mrf.mxu0
        %v3269 = vadd.f32 %v2836, %v3268
        %v3270 = vpop.f32.mrf.mxu0
        %v3271 = vpop.f32.mrf.mxu0
        %v3272 = vadd.f32 %v2836, %v3271
        %v3273 = vpop.f32.mrf.mxu0
        %3274 = vmatprep.mubr.bf16.mxu0 0
        %3275 = vmatmul.mubr.bf16.gmra.mxu0 %v3070
        %v3276 = vpop.f32.mrf.mxu0
        %v3277 = vadd.f32 %v2836, %v3276
        %v3278 = vpop.f32.mrf.mxu0
        %v3279 = vpop.f32.mrf.mxu0
        %v3280 = vadd.f32 %v2836, %v3279
        %v3281 = vpop.f32.mrf.mxu0
        %3282 = vmatprep.mubr.bf16.mxu0 0
        %3283 = vmatmul.mubr.bf16.gmra.mxu0 %v3073
        %v3284 = vpop.f32.mrf.mxu0
        %v3285 = vadd.f32 %v2836, %v3284
        %v3286 = vpop.f32.mrf.mxu0
        %v3287 = vpop.f32.mrf.mxu0
        %v3288 = vadd.f32 %v2836, %v3287
        %v3289 = vpop.f32.mrf.mxu0
        %3290 = vmatprep.mubr.bf16.mxu0 0
        %3291 = vmatmul.mubr.bf16.gmra.mxu0 %v3076
        %v3292 = vpop.f32.mrf.mxu0
        %v3293 = vadd.f32 %v2836, %v3292
        %v3294 = vpop.f32.mrf.mxu0
        %v3295 = vpop.f32.mrf.mxu0
        %v3296 = vadd.f32 %v2836, %v3295
        %v3297 = vpop.f32.mrf.mxu0
        %3298 = vmatprep.mubr.bf16.mxu0 0
        %3299 = vmatmul.mubr.bf16.gmra.mxu0 %v3079
        %v3300 = vpop.f32.mrf.mxu0
        %v3301 = vadd.f32 %v2836, %v3300
        %v3302 = vpop.f32.mrf.mxu0
        %v3303 = vpop.f32.mrf.mxu0
        %v3304 = vadd.f32 %v2836, %v3303
        %v3305 = vpop.f32.mrf.mxu0
        %3306 = vmatprep.mubr.bf16.mxu0 0
        %3307 = vmatmul.mubr.bf16.gmra.mxu0 %v3082
        %v3308 = vpop.f32.mrf.mxu0
        %v3309 = vadd.f32 %v2836, %v3308
        %v3310 = vpop.f32.mrf.mxu0
        %v3311 = vpop.f32.mrf.mxu0
        %v3312 = vadd.f32 %v2836, %v3311
        %v3313 = vpop.f32.mrf.mxu0
        %3314 = vmatprep.mubr.bf16.mxu0 0
        %3315 = vmatmul.mubr.bf16.gmra.mxu0 %v3085
        %v3316 = vpop.f32.mrf.mxu0
        %v3317 = vadd.f32 %v2836, %v3316
        %v3318 = vpop.f32.mrf.mxu0
        %v3319 = vpop.f32.mrf.mxu0
        %v3320 = vadd.f32 %v2836, %v3319
        %v3321 = vpop.f32.mrf.mxu0
        %3322 = vmatprep.mubr.bf16.mxu0 0
        %3323 = vmatmul.mubr.bf16.gmra.mxu0 %v3088
        %v3324 = vpop.f32.mrf.mxu0
        %v3325 = vadd.f32 %v2836, %v3324
        %v3326 = vpop.f32.mrf.mxu0
        %v3327 = vpop.f32.mrf.mxu0
        %v3328 = vadd.f32 %v2836, %v3327
        %v3329 = vpop.f32.mrf.mxu0
        %3330 = vmatprep.mubr.bf16.mxu0 0
        %3331 = vmatmul.mubr.bf16.gmra.mxu0 %v3091
        %v3332 = vpop.f32.mrf.mxu0
        %v3333 = vadd.f32 %v2836, %v3332
        %v3334 = vpop.f32.mrf.mxu0
        %v3335 = vpop.f32.mrf.mxu0
        %v3336 = vadd.f32 %v2836, %v3335
        %v3337 = vpop.f32.mrf.mxu0
        %3338 = vmatprep.mubr.bf16.mxu0 0
        %3339 = vmatmul.mubr.bf16.gmra.mxu0 %v3094
        %v3340 = vpop.f32.mrf.mxu0
        %v3341 = vadd.f32 %v2836, %v3340
        %v3342 = vpop.f32.mrf.mxu0
        %v3343 = vpop.f32.mrf.mxu0
        %v3344 = vadd.f32 %v2836, %v3343
        %v3345 = vpop.f32.mrf.mxu0
        %3346 = vmatprep.mubr.bf16.mxu0 0
        %3347 = vmatmul.mubr.bf16.gmra.mxu0 %v3097
        %v3348 = vpop.f32.mrf.mxu0
        %v3349 = vadd.f32 %v2836, %v3348
        %v3350 = vpop.f32.mrf.mxu0
        %v3351 = vpop.f32.mrf.mxu0
        %v3352 = vadd.f32 %v2836, %v3351
        %v3353 = vpop.f32.mrf.mxu0
        %3354 = vmatprep.mubr.bf16.mxu0 0
        %3355 = vmatmul.mubr.bf16.gmra.mxu0 %v3100
        %v3356 = vpop.f32.mrf.mxu0
        %v3357 = vadd.f32 %v2836, %v3356
        %v3358 = vpop.f32.mrf.mxu0
        %v3359 = vpop.f32.mrf.mxu0
        %v3360 = vadd.f32 %v2836, %v3359
        %v3361 = vpop.f32.mrf.mxu0
        %3362 = vmatprep.mubr.bf16.mxu0 0
        %3363 = vmatmul.mubr.bf16.gmra.mxu0 %v3103
        %v3364 = vpop.f32.mrf.mxu0
        %v3365 = vadd.f32 %v2836, %v3364
        %v3366 = vpop.f32.mrf.mxu0
        %v3367 = vpop.f32.mrf.mxu0
        %v3368 = vadd.f32 %v2836, %v3367
        %v3369 = vpop.f32.mrf.mxu0
        %3370 = vmatprep.mubr.bf16.mxu0 0
        %3371 = vmatmul.mubr.bf16.gmra.mxu0 %v3106
        %v3372 = vpop.f32.mrf.mxu0
        %v3373 = vadd.f32 %v2836, %v3372
        %v3374 = vpop.f32.mrf.mxu0
        %v3375 = vpop.f32.mrf.mxu0
        %v3376 = vadd.f32 %v2836, %v3375
        %v3377 = vpop.f32.mrf.mxu0
        %3378 = vmatprep.mubr.bf16.mxu0 0
        %3379 = vmatmul.mubr.bf16.gmra.mxu0 %v3109
        %v3380 = vpop.f32.mrf.mxu0
        %v3381 = vadd.f32 %v2836, %v3380
        %v3382 = vpop.f32.mrf.mxu0
        %v3383 = vpop.f32.mrf.mxu0
        %v3384 = vadd.f32 %v2836, %v3383
        %v3385 = vpop.f32.mrf.mxu0
        %3386 = vmatprep.mubr.bf16.mxu0 0
        %3387 = vmatmul.mubr.bf16.gmra.mxu0 %v3112
        %v3388 = vpop.f32.mrf.mxu0
        %v3389 = vadd.f32 %v2836, %v3388
        %v3390 = vpop.f32.mrf.mxu0
        %v3391 = vpop.f32.mrf.mxu0
        %v3392 = vadd.f32 %v2836, %v3391
        %v3393 = vpop.f32.mrf.mxu0
        %3394 = vmatprep.mubr.bf16.mxu0 0
        %3395 = vmatmul.mubr.bf16.gmra.mxu0 %v3115
        %v3396 = vpop.f32.mrf.mxu0
        %v3397 = vadd.f32 %v2836, %v3396
        %v3398 = vpop.f32.mrf.mxu0
        %v3399 = vpop.f32.mrf.mxu0
        %v3400 = vadd.f32 %v2836, %v3399
        %v3401 = vpop.f32.mrf.mxu0
        %3402 = vmatprep.mubr.bf16.mxu0 0
        %3403 = vmatmul.mubr.bf16.gmra.mxu0 %v3118
        %v3404 = vpop.f32.mrf.mxu0
        %v3405 = vadd.f32 %v2836, %v3404
        %v3406 = vpop.f32.mrf.mxu0
        %v3407 = vpop.f32.mrf.mxu0
        %v3408 = vadd.f32 %v2836, %v3407
        %v3409 = vpop.f32.mrf.mxu0
        %3410 = vmatprep.mubr.bf16.mxu0 0
        %3411 = vmatmul.mubr.bf16.gmra.mxu0 %v3121
        %v3412 = vpop.f32.mrf.mxu0
        %v3413 = vadd.f32 %v2836, %v3412
        %v3414 = vpop.f32.mrf.mxu0
        %v3415 = vpop.f32.mrf.mxu0
        %v3416 = vadd.f32 %v2836, %v3415
        %v3417 = vpop.f32.mrf.mxu0
        %3418 = vmatprep.mubr.bf16.mxu0 0
        %3419 = vmatmul.mubr.bf16.gmra.mxu0 %v3124
        %v3420 = vpop.f32.mrf.mxu0
        %v3421 = vadd.f32 %v2836, %v3420
        %v3422 = vpop.f32.mrf.mxu0
        %v3423 = vpop.f32.mrf.mxu0
        %v3424 = vadd.f32 %v2836, %v3423
        %v3425 = vpop.f32.mrf.mxu0
        %3426 = vmatprep.mubr.bf16.mxu0 0
        %3427 = vmatmul.mubr.bf16.gmra.mxu0 %v3127
        %v3428 = vpop.f32.mrf.mxu0
        %v3429 = vadd.f32 %v2836, %v3428
        %v3430 = vpop.f32.mrf.mxu0
        %v3431 = vpop.f32.mrf.mxu0
        %v3432 = vadd.f32 %v2836, %v3431
        %v3433 = vpop.f32.mrf.mxu0
        %3434 = vmatprep.mubr.bf16.mxu0 0
        %3435 = vmatmul.mubr.bf16.gmra.mxu0 %v3130
        %v3436 = vpop.f32.mrf.mxu0
        %v3437 = vadd.f32 %v2836, %v3436
        %v3438 = vpop.f32.mrf.mxu0
        %v3439 = vpop.f32.mrf.mxu0
        %v3440 = vadd.f32 %v2836, %v3439
        %v3441 = vpop.f32.mrf.mxu0
        %3442 = vmatprep.mubr.bf16.mxu0 0
        %3443 = vmatmul.mubr.bf16.gmra.mxu0 %v3133
        %v3444 = vpop.f32.mrf.mxu0
        %v3445 = vadd.f32 %v2836, %v3444
        %v3446 = vpop.f32.mrf.mxu0
        %v3447 = vpop.f32.mrf.mxu0
        %v3448 = vadd.f32 %v2836, %v3447
        %v3449 = vpop.f32.mrf.mxu0
        %3450 = vmatprep.mubr.bf16.mxu0 0
        %3451 = vmatmul.mubr.bf16.gmra.mxu0 %v3136
        %v3452 = vpop.f32.mrf.mxu0
        %v3453 = vadd.f32 %v2836, %v3452
        %v3454 = vpop.f32.mrf.mxu0
        %v3455 = vpop.f32.mrf.mxu0
        %v3456 = vadd.f32 %v2836, %v3455
        %v3457 = vpop.f32.mrf.mxu0
        %3458 = vdwg.mxu0
        %v3459 = vmul.f32 %v3173, 0.2
        %v3460 = vmul.f32 %v3176, 0.2
        %v3461 = vmul.f32 %v3181, 0.2
        %v3462 = vmul.f32 %v3184, 0.2
        %v3463 = vmul.f32 %v3189, 0.2
        %v3464 = vmul.f32 %v3192, 0.2
        %v3465 = vmul.f32 %v3197, 0.2
        %v3466 = vmul.f32 %v3200, 0.2
        %v3467 = vmul.f32 %v3205, 0.2
        %v3468 = vmul.f32 %v3208, 0.2
        %v3469 = vmul.f32 %v3213, 0.2
        %v3470 = vmul.f32 %v3216, 0.2
        %v3471 = vmul.f32 %v3221, 0.2
        %v3472 = vmul.f32 %v3224, 0.2
        %v3473 = vmul.f32 %v3229, 0.2
        %v3474 = vmul.f32 %v3232, 0.2
        %v3475 = vmul.f32 %v3237, 0.2
        %v3476 = vmul.f32 %v3240, 0.2
        %v3477 = vmul.f32 %v3245, 0.2
        %v3478 = vmul.f32 %v3248, 0.2
        %v3479 = vmul.f32 %v3253, 0.2
        %v3480 = vmul.f32 %v3256, 0.2
        %v3481 = vmul.f32 %v3261, 0.2
        %v3482 = vmul.f32 %v3264, 0.2
        %v3483 = vmul.f32 %v3269, 0.2
        %v3484 = vmul.f32 %v3272, 0.2
        %v3485 = vmul.f32 %v3277, 0.2
        %v3486 = vmul.f32 %v3280, 0.2
        %v3487 = vmul.f32 %v3285, 0.2
        %v3488 = vmul.f32 %v3288, 0.2
        %v3489 = vmul.f32 %v3293, 0.2
        %v3490 = vmul.f32 %v3296, 0.2
        %v3491 = vmul.f32 %v3301, 0.2
        %v3492 = vmul.f32 %v3304, 0.2
        %v3493 = vmul.f32 %v3309, 0.2
        %v3494 = vmul.f32 %v3312, 0.2
        %v3495 = vmul.f32 %v3317, 0.2
        %v3496 = vmul.f32 %v3320, 0.2
        %v3497 = vmul.f32 %v3325, 0.2
        %v3498 = vmul.f32 %v3328, 0.2
        %v3499 = vmul.f32 %v3333, 0.2
        %v3500 = vmul.f32 %v3336, 0.2
        %v3501 = vmul.f32 %v3341, 0.2
        %v3502 = vmul.f32 %v3344, 0.2
        %v3503 = vmul.f32 %v3349, 0.2
        %v3504 = vmul.f32 %v3352, 0.2
        %v3505 = vmul.f32 %v3357, 0.2
        %v3506 = vmul.f32 %v3360, 0.2
        %v3507 = vmul.f32 %v3365, 0.2
        %v3508 = vmul.f32 %v3368, 0.2
        %v3509 = vmul.f32 %v3373, 0.2
        %v3510 = vmul.f32 %v3376, 0.2
        %v3511 = vmul.f32 %v3381, 0.2
        %v3512 = vmul.f32 %v3384, 0.2
        %v3513 = vmul.f32 %v3389, 0.2
        %v3514 = vmul.f32 %v3392, 0.2
        %v3515 = vmul.f32 %v3397, 0.2
        %v3516 = vmul.f32 %v3400, 0.2
        %v3517 = vmul.f32 %v3405, 0.2
        %v3518 = vmul.f32 %v3408, 0.2
        %v3519 = vmul.f32 %v3413, 0.2
        %v3520 = vmul.f32 %v3416, 0.2
        %v3521 = vmul.f32 %v3421, 0.2
        %v3522 = vmul.f32 %v3424, 0.2
        %v3523 = vmul.f32 %v3429, 0.2
        %v3524 = vmul.f32 %v3432, 0.2
        %v3525 = vmul.f32 %v3437, 0.2
        %v3526 = vmul.f32 %v3440, 0.2
        %v3527 = vmul.f32 %v3445, 0.2
        %v3528 = vmul.f32 %v3448, 0.2
        %v3529 = vmul.f32 %v3453, 0.2
        %v3530 = vmul.f32 %v3456, 0.2
        %v3531 = vmax.f32 %v3173, %v3459
        %v3532 = vmax.f32 %v3176, %v3460
        %v3533 = vmax.f32 %v3181, %v3461
        %v3534 = vmax.f32 %v3184, %v3462
        %v3535 = vmax.f32 %v3189, %v3463
        %v3536 = vmax.f32 %v3192, %v3464
        %v3537 = vmax.f32 %v3197, %v3465
        %v3538 = vmax.f32 %v3200, %v3466
        %v3539 = vmax.f32 %v3205, %v3467
        %v3540 = vmax.f32 %v3208, %v3468
        %v3541 = vmax.f32 %v3213, %v3469
        %v3542 = vmax.f32 %v3216, %v3470
        %v3543 = vmax.f32 %v3221, %v3471
        %v3544 = vmax.f32 %v3224, %v3472
        %v3545 = vmax.f32 %v3229, %v3473
        %v3546 = vmax.f32 %v3232, %v3474
        %v3547 = vmax.f32 %v3237, %v3475
        %v3548 = vmax.f32 %v3240, %v3476
        %v3549 = vmax.f32 %v3245, %v3477
        %v3550 = vmax.f32 %v3248, %v3478
        %v3551 = vmax.f32 %v3253, %v3479
        %v3552 = vmax.f32 %v3256, %v3480
        %v3553 = vmax.f32 %v3261, %v3481
        %v3554 = vmax.f32 %v3264, %v3482
        %v3555 = vmax.f32 %v3269, %v3483
        %v3556 = vmax.f32 %v3272, %v3484
        %v3557 = vmax.f32 %v3277, %v3485
        %v3558 = vmax.f32 %v3280, %v3486
        %v3559 = vmax.f32 %v3285, %v3487
        %v3560 = vmax.f32 %v3288, %v3488
        %v3561 = vmax.f32 %v3293, %v3489
        %v3562 = vmax.f32 %v3296, %v3490
        %v3563 = vmax.f32 %v3301, %v3491
        %v3564 = vmax.f32 %v3304, %v3492
        %v3565 = vmax.f32 %v3309, %v3493
        %v3566 = vmax.f32 %v3312, %v3494
        %v3567 = vmax.f32 %v3317, %v3495
        %v3568 = vmax.f32 %v3320, %v3496
        %v3569 = vmax.f32 %v3325, %v3497
        %v3570 = vmax.f32 %v3328, %v3498
        %v3571 = vmax.f32 %v3333, %v3499
        %v3572 = vmax.f32 %v3336, %v3500
        %v3573 = vmax.f32 %v3341, %v3501
        %v3574 = vmax.f32 %v3344, %v3502
        %v3575 = vmax.f32 %v3349, %v3503
        %v3576 = vmax.f32 %v3352, %v3504
        %v3577 = vmax.f32 %v3357, %v3505
        %v3578 = vmax.f32 %v3360, %v3506
        %v3579 = vmax.f32 %v3365, %v3507
        %v3580 = vmax.f32 %v3368, %v3508
        %v3581 = vmax.f32 %v3373, %v3509
        %v3582 = vmax.f32 %v3376, %v3510
        %v3583 = vmax.f32 %v3381, %v3511
        %v3584 = vmax.f32 %v3384, %v3512
        %v3585 = vmax.f32 %v3389, %v3513
        %v3586 = vmax.f32 %v3392, %v3514
        %v3587 = vmax.f32 %v3397, %v3515
        %v3588 = vmax.f32 %v3400, %v3516
        %v3589 = vmax.f32 %v3405, %v3517
        %v3590 = vmax.f32 %v3408, %v3518
        %v3591 = vmax.f32 %v3413, %v3519
        %v3592 = vmax.f32 %v3416, %v3520
        %v3593 = vmax.f32 %v3421, %v3521
        %v3594 = vmax.f32 %v3424, %v3522
        %v3595 = vmax.f32 %v3429, %v3523
        %v3596 = vmax.f32 %v3432, %v3524
        %v3597 = vmax.f32 %v3437, %v3525
        %v3598 = vmax.f32 %v3440, %v3526
        %v3599 = vmax.f32 %v3445, %v3527
        %v3600 = vmax.f32 %v3448, %v3528
        %v3601 = vmax.f32 %v3453, %v3529
        %v3602 = vmax.f32 %v3456, %v3530
        %3603 = vst.msk [vmem:[#allocation2 + $0x480] sm:$0xff] %vm1189, %v3531
        %3604 = vst.msk [vmem:[#allocation2 + $0x488] sm:$0xff] %vm1189, %v3532
        %3605 = vst.msk [vmem:[#allocation2 + $0x490] sm:$0xff] %vm1189, %v3533
        %3606 = vst.msk [vmem:[#allocation2 + $0x498] sm:$0xff] %vm1189, %v3534
        %3607 = vst.msk [vmem:[#allocation2 + $0x4a0] sm:$0xff] %vm1189, %v3535
        %3608 = vst.msk [vmem:[#allocation2 + $0x4a8] sm:$0xff] %vm1189, %v3536
        %3609 = vst.msk [vmem:[#allocation2 + $0x4b0] sm:$0xff] %vm1189, %v3537
        %3610 = vst.msk [vmem:[#allocation2 + $0x4b8] sm:$0xff] %vm1189, %v3538
        %3611 = vst.msk [vmem:[#allocation2 + $0x4c0] sm:$0xff] %vm1189, %v3539
        %3612 = vst.msk [vmem:[#allocation2 + $0x4c8] sm:$0xff] %vm1189, %v3540
        %3613 = vst.msk [vmem:[#allocation2 + $0x4d0] sm:$0xff] %vm1189, %v3541
        %3614 = vst.msk [vmem:[#allocation2 + $0x4d8] sm:$0xff] %vm1189, %v3542
        %3615 = vst.msk [vmem:[#allocation2 + $0x4e0] sm:$0xff] %vm1189, %v3543
        %3616 = vst.msk [vmem:[#allocation2 + $0x4e8] sm:$0xff] %vm1189, %v3544
        %3617 = vst.msk [vmem:[#allocation2 + $0x4f0] sm:$0xff] %vm1189, %v3545
        %3618 = vst.msk [vmem:[#allocation2 + $0x4f8] sm:$0xff] %vm1189, %v3546
        %3619 = vst.msk [vmem:[#allocation2 + $0x500] sm:$0xff] %vm1189, %v3547
        %3620 = vst.msk [vmem:[#allocation2 + $0x508] sm:$0xff] %vm1189, %v3548
        %3621 = vst.msk [vmem:[#allocation2 + $0x510] sm:$0xff] %vm1189, %v3549
        %3622 = vst.msk [vmem:[#allocation2 + $0x518] sm:$0xff] %vm1189, %v3550
        %3623 = vst.msk [vmem:[#allocation2 + $0x520] sm:$0xff] %vm1189, %v3551
        %3624 = vst.msk [vmem:[#allocation2 + $0x528] sm:$0xff] %vm1189, %v3552
        %3625 = vst.msk [vmem:[#allocation2 + $0x530] sm:$0xff] %vm1189, %v3553
        %3626 = vst.msk [vmem:[#allocation2 + $0x538] sm:$0xff] %vm1189, %v3554
        %3627 = vst.msk [vmem:[#allocation2 + $0x540] sm:$0xff] %vm1189, %v3555
        %3628 = vst.msk [vmem:[#allocation2 + $0x548] sm:$0xff] %vm1189, %v3556
        %3629 = vst.msk [vmem:[#allocation2 + $0x550] sm:$0xff] %vm1189, %v3557
        %3630 = vst.msk [vmem:[#allocation2 + $0x558] sm:$0xff] %vm1189, %v3558
        %3631 = vst.msk [vmem:[#allocation2 + $0x560] sm:$0xff] %vm1189, %v3559
        %3632 = vst.msk [vmem:[#allocation2 + $0x568] sm:$0xff] %vm1189, %v3560
        %3633 = vst.msk [vmem:[#allocation2 + $0x570] sm:$0xff] %vm1189, %v3561
        %3634 = vst.msk [vmem:[#allocation2 + $0x578] sm:$0xff] %vm1189, %v3562
        %3635 = vst.msk [vmem:[#allocation2 + $0x580] sm:$0xff] %vm1189, %v3563
        %3636 = vst.msk [vmem:[#allocation2 + $0x588] sm:$0xff] %vm1189, %v3564
        %3637 = vst.msk [vmem:[#allocation2 + $0x590] sm:$0xff] %vm1189, %v3565
        %3638 = vst.msk [vmem:[#allocation2 + $0x598] sm:$0xff] %vm1189, %v3566
        %3639 = vst.msk [vmem:[#allocation2 + $0x5a0] sm:$0xff] %vm1189, %v3567
        %3640 = vst.msk [vmem:[#allocation2 + $0x5a8] sm:$0xff] %vm1189, %v3568
        %3641 = vst.msk [vmem:[#allocation2 + $0x5b0] sm:$0xff] %vm1189, %v3569
        %3642 = vst.msk [vmem:[#allocation2 + $0x5b8] sm:$0xff] %vm1189, %v3570
        %3643 = vst.msk [vmem:[#allocation2 + $0x5c0] sm:$0xff] %vm1189, %v3571
        %3644 = vst.msk [vmem:[#allocation2 + $0x5c8] sm:$0xff] %vm1189, %v3572
        %3645 = vst.msk [vmem:[#allocation2 + $0x5d0] sm:$0xff] %vm1189, %v3573
        %3646 = vst.msk [vmem:[#allocation2 + $0x5d8] sm:$0xff] %vm1189, %v3574
        %3647 = vst.msk [vmem:[#allocation2 + $0x5e0] sm:$0xff] %vm1189, %v3575
        %3648 = vst.msk [vmem:[#allocation2 + $0x5e8] sm:$0xff] %vm1189, %v3576
        %3649 = vst.msk [vmem:[#allocation2 + $0x5f0] sm:$0xff] %vm1189, %v3577
        %3650 = vst.msk [vmem:[#allocation2 + $0x5f8] sm:$0xff] %vm1189, %v3578
        %3651 = vst.msk [vmem:[#allocation2 + $0x600] sm:$0xff] %vm1189, %v3579
        %3652 = vst.msk [vmem:[#allocation2 + $0x608] sm:$0xff] %vm1189, %v3580
        %3653 = vst.msk [vmem:[#allocation2 + $0x610] sm:$0xff] %vm1189, %v3581
        %3654 = vst.msk [vmem:[#allocation2 + $0x618] sm:$0xff] %vm1189, %v3582
        %3655 = vst.msk [vmem:[#allocation2 + $0x620] sm:$0xff] %vm1189, %v3583
        %3656 = vst.msk [vmem:[#allocation2 + $0x628] sm:$0xff] %vm1189, %v3584
        %3657 = vst.msk [vmem:[#allocation2 + $0x630] sm:$0xff] %vm1189, %v3585
        %3658 = vst.msk [vmem:[#allocation2 + $0x638] sm:$0xff] %vm1189, %v3586
        %3659 = vst.msk [vmem:[#allocation2 + $0x640] sm:$0xff] %vm1189, %v3587
        %3660 = vst.msk [vmem:[#allocation2 + $0x648] sm:$0xff] %vm1189, %v3588
        %3661 = vst.msk [vmem:[#allocation2 + $0x650] sm:$0xff] %vm1189, %v3589
        %3662 = vst.msk [vmem:[#allocation2 + $0x658] sm:$0xff] %vm1189, %v3590
        %3663 = vst.msk [vmem:[#allocation2 + $0x660] sm:$0xff] %vm1189, %v3591
        %3664 = vst.msk [vmem:[#allocation2 + $0x668] sm:$0xff] %vm1189, %v3592
        %3665 = vst.msk [vmem:[#allocation2 + $0x670] sm:$0xff] %vm1189, %v3593
        %3666 = vst.msk [vmem:[#allocation2 + $0x678] sm:$0xff] %vm1189, %v3594
        %3667 = vst.msk [vmem:[#allocation2 + $0x680] sm:$0xff] %vm1189, %v3595
        %3668 = vst.msk [vmem:[#allocation2 + $0x688] sm:$0xff] %vm1189, %v3596
        %3669 = vst.msk [vmem:[#allocation2 + $0x690] sm:$0xff] %vm1189, %v3597
        %3670 = vst.msk [vmem:[#allocation2 + $0x698] sm:$0xff] %vm1189, %v3598
        %3671 = vst.msk [vmem:[#allocation2 + $0x6a0] sm:$0xff] %vm1189, %v3599
        %3672 = vst.msk [vmem:[#allocation2 + $0x6a8] sm:$0xff] %vm1189, %v3600
        %3673 = vst.msk [vmem:[#allocation2 + $0x6b0] sm:$0xff] %vm1189, %v3601
        %3674 = vst.msk [vmem:[#allocation2 + $0x6b8] sm:$0xff] %vm1189, %v3602
        %v3675 = vld [vmem:[%s913 + $0x360] sm:$0xf]
        %v3676 = vld [vmem:[%s913 + $0x364] sm:$0xf]
        %v3677 = vld [vmem:[%s913 + $0x368] sm:$0xf]
        %v3678 = vld [vmem:[%s913 + $0x36c] sm:$0xf]
        %v3679 = vld [vmem:[%s913 + $0x370] sm:$0xf]
        %v3680 = vld [vmem:[%s913 + $0x374] sm:$0xf]
        %v3681 = vld [vmem:[%s913 + $0x378] sm:$0xf]
        %v3682 = vld [vmem:[%s913 + $0x37c] sm:$0xf]
        %v3683 = vld [vmem:[%s913 + $0x380] sm:$0xf]
        %v3684 = vld [vmem:[%s913 + $0x384] sm:$0xf]
        %v3685 = vld [vmem:[%s913 + $0x388] sm:$0xf]
        %v3686 = vld [vmem:[%s913 + $0x38c] sm:$0xf]
        %v3687 = vld [vmem:[%s913 + $0x390] sm:$0xf]
        %v3688 = vld [vmem:[%s913 + $0x394] sm:$0xf]
        %v3689 = vld [vmem:[%s913 + $0x398] sm:$0xf]
        %v3690 = vld [vmem:[%s913 + $0x39c] sm:$0xf]
        %v3691 = vld [vmem:[%s913 + $0x3a0] sm:$0xf]
        %v3692 = vld [vmem:[%s913 + $0x3a4] sm:$0xf]
        %v3693 = vld [vmem:[%s913 + $0x3a8] sm:$0xf]
        %v3694 = vld [vmem:[%s913 + $0x3ac] sm:$0xf]
        %v3695 = vld [vmem:[%s913 + $0x3b0] sm:$0xf]
        %v3696 = vld [vmem:[%s913 + $0x3b4] sm:$0xf]
        %v3697 = vld [vmem:[%s913 + $0x3b8] sm:$0xf]
        %v3698 = vld [vmem:[%s913 + $0x3bc] sm:$0xf]
        %v3699 = vld [vmem:[%s913 + $0x3c0] sm:$0xf]
        %v3700 = vld [vmem:[%s913 + $0x3c4] sm:$0xf]
        %v3701 = vld [vmem:[%s913 + $0x3c8] sm:$0xf]
        %v3702 = vld [vmem:[%s913 + $0x3cc] sm:$0xf]
        %v3703 = vld [vmem:[%s913 + $0x3d0] sm:$0xf]
        %v3704 = vld [vmem:[%s913 + $0x3d4] sm:$0xf]
        %v3705 = vld [vmem:[%s913 + $0x3d8] sm:$0xf]
        %v3706 = vld [vmem:[%s913 + $0x3dc] sm:$0xf]
        %v3707 = vld [vmem:[%s913 + $0x3e0] sm:$0xf]
        %v3708 = vld [vmem:[%s913 + $0x3e4] sm:$0xf]
        %v3709 = vld [vmem:[%s913 + $0x3e8] sm:$0xf]
        %v3710 = vld [vmem:[%s913 + $0x3ec] sm:$0xf]
        %v3711 = vld [vmem:[%s913 + $0x3f0] sm:$0xf]
        %v3712 = vld [vmem:[%s913 + $0x3f4] sm:$0xf]
        %v3713 = vld [vmem:[%s913 + $0x3f8] sm:$0xf]
        %v3714 = vld [vmem:[%s913 + $0x3fc] sm:$0xf]
        %v3715 = vld [vmem:[%s913 + $0x400] sm:$0xf]
        %v3716 = vld [vmem:[%s913 + $0x404] sm:$0xf]
        %v3717 = vld [vmem:[%s913 + $0x408] sm:$0xf]
        %v3718 = vld [vmem:[%s913 + $0x40c] sm:$0xf]
        %v3719 = vld [vmem:[%s913 + $0x410] sm:$0xf]
        %v3720 = vld [vmem:[%s913 + $0x414] sm:$0xf]
        %v3721 = vld [vmem:[%s913 + $0x418] sm:$0xf]
        %v3722 = vld [vmem:[%s913 + $0x41c] sm:$0xf]
        %v3723 = vld [vmem:[%s913 + $0x420] sm:$0xf]
        %v3724 = vld [vmem:[%s913 + $0x424] sm:$0xf]
        %v3725 = vld [vmem:[%s913 + $0x428] sm:$0xf]
        %v3726 = vld [vmem:[%s913 + $0x42c] sm:$0xf]
        %v3727 = vld [vmem:[%s913 + $0x430] sm:$0xf]
        %v3728 = vld [vmem:[%s913 + $0x434] sm:$0xf]
        %v3729 = vld [vmem:[%s913 + $0x438] sm:$0xf]
        %v3730 = vld [vmem:[%s913 + $0x43c] sm:$0xf]
        %v3731 = vld [vmem:[%s913 + $0x440] sm:$0xf]
        %v3732 = vld [vmem:[%s913 + $0x444] sm:$0xf]
        %v3733 = vld [vmem:[%s913 + $0x448] sm:$0xf]
        %v3734 = vld [vmem:[%s913 + $0x44c] sm:$0xf]
        %v3735 = vld [vmem:[%s913 + $0x450] sm:$0xf]
        %v3736 = vld [vmem:[%s913 + $0x454] sm:$0xf]
        %v3737 = vld [vmem:[%s913 + $0x458] sm:$0xf]
        %v3738 = vld [vmem:[%s913 + $0x45c] sm:$0xf]
        %v3739 = vld [vmem:[%s913 + $0x460] sm:$0xf]
        %v3740 = vld [vmem:[%s913 + $0x464] sm:$0xf]
        %v3741 = vld [vmem:[%s913 + $0x468] sm:$0xf]
        %v3742 = vld [vmem:[%s913 + $0x46c] sm:$0xf]
        %v3743 = vld [vmem:[%s913 + $0x470] sm:$0xf]
        %v3744 = vld [vmem:[%s913 + $0x474] sm:$0xf]
        %v3745 = vld [vmem:[%s913 + $0x478] sm:$0xf]
        %v3746 = vld [vmem:[%s913 + $0x47c] sm:$0xf]
        %v3747 = vld [vmem:[%s2] sm:$0xf]
        %v3748 = vld [vmem:[%s2 + $0x4] sm:$0xf]
        %v3749 = vld [vmem:[%s2 + $0x8] sm:$0xf]
        %v3750 = vld [vmem:[%s2 + $0xc] sm:$0xf]
        %v3751 = vld [vmem:[%s3] sm:$0x1]
        %v3753 = vlaneseq
        %v3754 = vshrl.u32 %v3753, 7
        %v3755 = vsub.s32 0, %v3754
        %v3756 = vrot.slane %v3751, %v3755
        %v3830 = vunpack.c.l.b16 %v3675
        %v3831 = vunpack.c.l.b16 %v3676
        %v3832 = vunpack.c.l.b16 %v3677
        %v3833 = vunpack.c.l.b16 %v3678
        %v3834 = vunpack.c.l.b16 %v3679
        %v3835 = vunpack.c.l.b16 %v3680
        %v3836 = vunpack.c.l.b16 %v3681
        %v3837 = vunpack.c.l.b16 %v3682
        %v3838 = vunpack.c.l.b16 %v3683
        %v3839 = vunpack.c.l.b16 %v3684
        %v3840 = vunpack.c.l.b16 %v3685
        %v3841 = vunpack.c.l.b16 %v3686
        %v3842 = vunpack.c.l.b16 %v3687
        %v3843 = vunpack.c.l.b16 %v3688
        %v3844 = vunpack.c.l.b16 %v3689
        %v3845 = vunpack.c.l.b16 %v3690
        %v3846 = vunpack.c.l.b16 %v3691
        %v3847 = vunpack.c.l.b16 %v3692
        %v3848 = vunpack.c.l.b16 %v3693
        %v3849 = vunpack.c.l.b16 %v3694
        %v3850 = vunpack.c.l.b16 %v3695
        %v3851 = vunpack.c.l.b16 %v3696
        %v3852 = vunpack.c.l.b16 %v3697
        %v3853 = vunpack.c.l.b16 %v3698
        %v3854 = vunpack.c.l.b16 %v3699
        %v3855 = vunpack.c.l.b16 %v3700
        %v3856 = vunpack.c.l.b16 %v3701
        %v3857 = vunpack.c.l.b16 %v3702
        %v3858 = vunpack.c.l.b16 %v3703
        %v3859 = vunpack.c.l.b16 %v3704
        %v3860 = vunpack.c.l.b16 %v3705
        %v3861 = vunpack.c.l.b16 %v3706
        %v3862 = vunpack.c.l.b16 %v3707
        %v3863 = vunpack.c.l.b16 %v3708
        %v3864 = vunpack.c.l.b16 %v3709
        %v3865 = vunpack.c.l.b16 %v3710
        %v3866 = vunpack.c.l.b16 %v3711
        %v3867 = vunpack.c.l.b16 %v3712
        %v3868 = vunpack.c.l.b16 %v3713
        %v3869 = vunpack.c.l.b16 %v3714
        %v3870 = vunpack.c.l.b16 %v3715
        %v3871 = vunpack.c.l.b16 %v3716
        %v3872 = vunpack.c.l.b16 %v3717
        %v3873 = vunpack.c.l.b16 %v3718
        %v3874 = vunpack.c.l.b16 %v3719
        %v3875 = vunpack.c.l.b16 %v3720
        %v3876 = vunpack.c.l.b16 %v3721
        %v3877 = vunpack.c.l.b16 %v3722
        %v3878 = vunpack.c.l.b16 %v3723
        %v3879 = vunpack.c.l.b16 %v3724
        %v3880 = vunpack.c.l.b16 %v3725
        %v3881 = vunpack.c.l.b16 %v3726
        %v3882 = vunpack.c.l.b16 %v3727
        %v3883 = vunpack.c.l.b16 %v3728
        %v3884 = vunpack.c.l.b16 %v3729
        %v3885 = vunpack.c.l.b16 %v3730
        %v3886 = vunpack.c.l.b16 %v3731
        %v3887 = vunpack.c.l.b16 %v3732
        %v3888 = vunpack.c.l.b16 %v3733
        %v3889 = vunpack.c.l.b16 %v3734
        %v3890 = vunpack.c.l.b16 %v3735
        %v3891 = vunpack.c.l.b16 %v3736
        %v3892 = vunpack.c.l.b16 %v3737
        %v3893 = vunpack.c.l.b16 %v3738
        %v3894 = vunpack.c.l.b16 %v3739
        %v3895 = vunpack.c.l.b16 %v3740
        %v3896 = vunpack.c.l.b16 %v3741
        %v3897 = vunpack.c.l.b16 %v3742
        %v3898 = vunpack.c.l.b16 %v3743
        %v3899 = vunpack.c.l.b16 %v3744
        %v3900 = vunpack.c.l.b16 %v3745
        %v3901 = vunpack.c.l.b16 %v3746
        %v3902 = vpack.c.b16 %v3831, %v3830
        %v3903 = vpack.c.b16 %v3833, %v3832
        %v3904 = vpack.c.b16 %v3835, %v3834
        %v3905 = vpack.c.b16 %v3837, %v3836
        %v3906 = vpack.c.b16 %v3839, %v3838
        %v3907 = vpack.c.b16 %v3841, %v3840
        %v3908 = vpack.c.b16 %v3843, %v3842
        %v3909 = vpack.c.b16 %v3845, %v3844
        %v3910 = vpack.c.b16 %v3847, %v3846
        %v3911 = vpack.c.b16 %v3849, %v3848
        %v3912 = vpack.c.b16 %v3851, %v3850
        %v3913 = vpack.c.b16 %v3853, %v3852
        %v3914 = vpack.c.b16 %v3855, %v3854
        %v3915 = vpack.c.b16 %v3857, %v3856
        %v3916 = vpack.c.b16 %v3859, %v3858
        %v3917 = vpack.c.b16 %v3861, %v3860
        %v3918 = vpack.c.b16 %v3863, %v3862
        %v3919 = vpack.c.b16 %v3865, %v3864
        %v3920 = vpack.c.b16 %v3867, %v3866
        %v3921 = vpack.c.b16 %v3869, %v3868
        %v3922 = vpack.c.b16 %v3871, %v3870
        %v3923 = vpack.c.b16 %v3873, %v3872
        %v3924 = vpack.c.b16 %v3875, %v3874
        %v3925 = vpack.c.b16 %v3877, %v3876
        %v3926 = vpack.c.b16 %v3879, %v3878
        %v3927 = vpack.c.b16 %v3881, %v3880
        %v3928 = vpack.c.b16 %v3883, %v3882
        %v3929 = vpack.c.b16 %v3885, %v3884
        %v3930 = vpack.c.b16 %v3887, %v3886
        %v3931 = vpack.c.b16 %v3889, %v3888
        %v3932 = vpack.c.b16 %v3891, %v3890
        %v3933 = vpack.c.b16 %v3893, %v3892
        %v3934 = vpack.c.b16 %v3895, %v3894
        %v3935 = vpack.c.b16 %v3897, %v3896
        %v3936 = vpack.c.b16 %v3899, %v3898
        %v3937 = vpack.c.b16 %v3901, %v3900
        %v3942 = vunpack.c.l.b16 %v3747
        %v3943 = vunpack.c.l.b16 %v3748
        %v3944 = vunpack.c.l.b16 %v3749
        %v3945 = vunpack.c.l.b16 %v3750
        %v3946 = vpack.c.b16 %v3943, %v3942
        %v3947 = vpack.c.b16 %v3945, %v3944
        %v3951 = vsel %vm1189, %v3902, 0
        %v3954 = vsel %vm1189, %v3903, 0
        %v3957 = vsel %vm1189, %v3904, 0
        %v3960 = vsel %vm1189, %v3905, 0
        %v3963 = vsel %vm1189, %v3906, 0
        %v3966 = vsel %vm1189, %v3907, 0
        %v3969 = vsel %vm1189, %v3908, 0
        %v3972 = vsel %vm1189, %v3909, 0
        %v3975 = vsel %vm1189, %v3910, 0
        %v3978 = vsel %vm1189, %v3911, 0
        %v3981 = vsel %vm1189, %v3912, 0
        %v3984 = vsel %vm1189, %v3913, 0
        %v3987 = vsel %vm1189, %v3914, 0
        %v3990 = vsel %vm1189, %v3915, 0
        %v3993 = vsel %vm1189, %v3916, 0
        %v3996 = vsel %vm1189, %v3917, 0
        %v3999 = vsel %vm1189, %v3918, 0
        %v4002 = vsel %vm1189, %v3919, 0
        %v4005 = vsel %vm1189, %v3920, 0
        %v4008 = vsel %vm1189, %v3921, 0
        %v4011 = vsel %vm1189, %v3922, 0
        %v4014 = vsel %vm1189, %v3923, 0
        %v4017 = vsel %vm1189, %v3924, 0
        %v4020 = vsel %vm1189, %v3925, 0
        %v4023 = vsel %vm1189, %v3926, 0
        %v4026 = vsel %vm1189, %v3927, 0
        %v4029 = vsel %vm1189, %v3928, 0
        %v4032 = vsel %vm1189, %v3929, 0
        %v4035 = vsel %vm1189, %v3930, 0
        %v4038 = vsel %vm1189, %v3931, 0
        %v4041 = vsel %vm1189, %v3932, 0
        %v4044 = vsel %vm1189, %v3933, 0
        %v4047 = vsel %vm1189, %v3934, 0
        %v4050 = vsel %vm1189, %v3935, 0
        %v4053 = vsel %vm1189, %v3936, 0
        %v4056 = vsel %vm1189, %v3937, 0
        %4058 = vmatprep.subr.bf16.mxu0 0
        %4059 = vmatpush1.bf16.msra.mxu0 0
        %4060 = vmatprep.subr.bf16.mxu0 0
        %4061 = vmatpush1.bf16.msra.mxu0 0
        %4062 = vmatprep.subr.bf16.mxu0 0
        %4063 = vmatpush1.bf16.msra.mxu0 0
        %4064 = vmatprep.subr.bf16.mxu0 0
        %4065 = vmatpush1.bf16.msra.mxu0 0
        %4066 = vmatprep.subr.bf16.mxu0 0
        %4067 = vmatpush1.bf16.msra.mxu0 0
        %4068 = vmatprep.subr.bf16.mxu0 0
        %4069 = vmatpush1.bf16.msra.mxu0 0
        %4070 = vmatprep.subr.bf16.mxu0 0
        %4071 = vmatpush1.bf16.msra.mxu0 %v3947
        %4072 = vmatprep.subr.bf16.mxu0 0
        %4073 = vmatpush1.bf16.msra.mxu0 %v3946
        %4074 = vmatprep.subr.bf16.mxu0 0
        %4075 = vmatpush2.bf16.msra.mxu0 0
        %4076 = vmatprep.subr.bf16.mxu0 0
        %4077 = vmatpush2.bf16.msra.mxu0 0
        %4078 = vmatprep.subr.bf16.mxu0 0
        %4079 = vmatpush2.bf16.msra.mxu0 0
        %4080 = vmatprep.subr.bf16.mxu0 0
        %4081 = vmatpush2.bf16.msra.mxu0 0
        %4082 = vmatprep.subr.bf16.mxu0 0
        %4083 = vmatpush2.bf16.msra.mxu0 0
        %4084 = vmatprep.subr.bf16.mxu0 0
        %4085 = vmatpush2.bf16.msra.mxu0 0
        %4086 = vmatprep.subr.bf16.mxu0 0
        %4087 = vmatpush2.bf16.msra.mxu0 0
        %4088 = vmatprep.subr.bf16.mxu0 0
        %4089 = vmatpush2.bf16.msra.mxu0 0
        %4090 = vmatprep.mubr.bf16.mxu0 0
        %4091 = vmatmul.mubr.bf16.gmra.mxu0 %v3951
        %v4092 = vpop.f32.mrf.mxu0
        %v4093 = vadd.f32 %v3756, %v4092
        %v4094 = vpop.f32.mrf.mxu0
        %v4095 = vpop.f32.mrf.mxu0
        %v4096 = vadd.f32 %v3756, %v4095
        %v4097 = vpop.f32.mrf.mxu0
        %4098 = vmatprep.mubr.bf16.mxu0 0
        %4099 = vmatmul.mubr.bf16.gmra.mxu0 %v3954
        %v4100 = vpop.f32.mrf.mxu0
        %v4101 = vadd.f32 %v3756, %v4100
        %v4102 = vpop.f32.mrf.mxu0
        %v4103 = vpop.f32.mrf.mxu0
        %v4104 = vadd.f32 %v3756, %v4103
        %v4105 = vpop.f32.mrf.mxu0
        %4106 = vmatprep.mubr.bf16.mxu0 0
        %4107 = vmatmul.mubr.bf16.gmra.mxu0 %v3957
        %v4108 = vpop.f32.mrf.mxu0
        %v4109 = vadd.f32 %v3756, %v4108
        %v4110 = vpop.f32.mrf.mxu0
        %v4111 = vpop.f32.mrf.mxu0
        %v4112 = vadd.f32 %v3756, %v4111
        %v4113 = vpop.f32.mrf.mxu0
        %4114 = vmatprep.mubr.bf16.mxu0 0
        %4115 = vmatmul.mubr.bf16.gmra.mxu0 %v3960
        %v4116 = vpop.f32.mrf.mxu0
        %v4117 = vadd.f32 %v3756, %v4116
        %v4118 = vpop.f32.mrf.mxu0
        %v4119 = vpop.f32.mrf.mxu0
        %v4120 = vadd.f32 %v3756, %v4119
        %v4121 = vpop.f32.mrf.mxu0
        %4122 = vmatprep.mubr.bf16.mxu0 0
        %4123 = vmatmul.mubr.bf16.gmra.mxu0 %v3963
        %v4124 = vpop.f32.mrf.mxu0
        %v4125 = vadd.f32 %v3756, %v4124
        %v4126 = vpop.f32.mrf.mxu0
        %v4127 = vpop.f32.mrf.mxu0
        %v4128 = vadd.f32 %v3756, %v4127
        %v4129 = vpop.f32.mrf.mxu0
        %4130 = vmatprep.mubr.bf16.mxu0 0
        %4131 = vmatmul.mubr.bf16.gmra.mxu0 %v3966
        %v4132 = vpop.f32.mrf.mxu0
        %v4133 = vadd.f32 %v3756, %v4132
        %v4134 = vpop.f32.mrf.mxu0
        %v4135 = vpop.f32.mrf.mxu0
        %v4136 = vadd.f32 %v3756, %v4135
        %v4137 = vpop.f32.mrf.mxu0
        %4138 = vmatprep.mubr.bf16.mxu0 0
        %4139 = vmatmul.mubr.bf16.gmra.mxu0 %v3969
        %v4140 = vpop.f32.mrf.mxu0
        %v4141 = vadd.f32 %v3756, %v4140
        %v4142 = vpop.f32.mrf.mxu0
        %v4143 = vpop.f32.mrf.mxu0
        %v4144 = vadd.f32 %v3756, %v4143
        %v4145 = vpop.f32.mrf.mxu0
        %4146 = vmatprep.mubr.bf16.mxu0 0
        %4147 = vmatmul.mubr.bf16.gmra.mxu0 %v3972
        %v4148 = vpop.f32.mrf.mxu0
        %v4149 = vadd.f32 %v3756, %v4148
        %v4150 = vpop.f32.mrf.mxu0
        %v4151 = vpop.f32.mrf.mxu0
        %v4152 = vadd.f32 %v3756, %v4151
        %v4153 = vpop.f32.mrf.mxu0
        %4154 = vmatprep.mubr.bf16.mxu0 0
        %4155 = vmatmul.mubr.bf16.gmra.mxu0 %v3975
        %v4156 = vpop.f32.mrf.mxu0
        %v4157 = vadd.f32 %v3756, %v4156
        %v4158 = vpop.f32.mrf.mxu0
        %v4159 = vpop.f32.mrf.mxu0
        %v4160 = vadd.f32 %v3756, %v4159
        %v4161 = vpop.f32.mrf.mxu0
        %4162 = vmatprep.mubr.bf16.mxu0 0
        %4163 = vmatmul.mubr.bf16.gmra.mxu0 %v3978
        %v4164 = vpop.f32.mrf.mxu0
        %v4165 = vadd.f32 %v3756, %v4164
        %v4166 = vpop.f32.mrf.mxu0
        %v4167 = vpop.f32.mrf.mxu0
        %v4168 = vadd.f32 %v3756, %v4167
        %v4169 = vpop.f32.mrf.mxu0
        %4170 = vmatprep.mubr.bf16.mxu0 0
        %4171 = vmatmul.mubr.bf16.gmra.mxu0 %v3981
        %v4172 = vpop.f32.mrf.mxu0
        %v4173 = vadd.f32 %v3756, %v4172
        %v4174 = vpop.f32.mrf.mxu0
        %v4175 = vpop.f32.mrf.mxu0
        %v4176 = vadd.f32 %v3756, %v4175
        %v4177 = vpop.f32.mrf.mxu0
        %4178 = vmatprep.mubr.bf16.mxu0 0
        %4179 = vmatmul.mubr.bf16.gmra.mxu0 %v3984
        %v4180 = vpop.f32.mrf.mxu0
        %v4181 = vadd.f32 %v3756, %v4180
        %v4182 = vpop.f32.mrf.mxu0
        %v4183 = vpop.f32.mrf.mxu0
        %v4184 = vadd.f32 %v3756, %v4183
        %v4185 = vpop.f32.mrf.mxu0
        %4186 = vmatprep.mubr.bf16.mxu0 0
        %4187 = vmatmul.mubr.bf16.gmra.mxu0 %v3987
        %v4188 = vpop.f32.mrf.mxu0
        %v4189 = vadd.f32 %v3756, %v4188
        %v4190 = vpop.f32.mrf.mxu0
        %v4191 = vpop.f32.mrf.mxu0
        %v4192 = vadd.f32 %v3756, %v4191
        %v4193 = vpop.f32.mrf.mxu0
        %4194 = vmatprep.mubr.bf16.mxu0 0
        %4195 = vmatmul.mubr.bf16.gmra.mxu0 %v3990
        %v4196 = vpop.f32.mrf.mxu0
        %v4197 = vadd.f32 %v3756, %v4196
        %v4198 = vpop.f32.mrf.mxu0
        %v4199 = vpop.f32.mrf.mxu0
        %v4200 = vadd.f32 %v3756, %v4199
        %v4201 = vpop.f32.mrf.mxu0
        %4202 = vmatprep.mubr.bf16.mxu0 0
        %4203 = vmatmul.mubr.bf16.gmra.mxu0 %v3993
        %v4204 = vpop.f32.mrf.mxu0
        %v4205 = vadd.f32 %v3756, %v4204
        %v4206 = vpop.f32.mrf.mxu0
        %v4207 = vpop.f32.mrf.mxu0
        %v4208 = vadd.f32 %v3756, %v4207
        %v4209 = vpop.f32.mrf.mxu0
        %4210 = vmatprep.mubr.bf16.mxu0 0
        %4211 = vmatmul.mubr.bf16.gmra.mxu0 %v3996
        %v4212 = vpop.f32.mrf.mxu0
        %v4213 = vadd.f32 %v3756, %v4212
        %v4214 = vpop.f32.mrf.mxu0
        %v4215 = vpop.f32.mrf.mxu0
        %v4216 = vadd.f32 %v3756, %v4215
        %v4217 = vpop.f32.mrf.mxu0
        %4218 = vmatprep.mubr.bf16.mxu0 0
        %4219 = vmatmul.mubr.bf16.gmra.mxu0 %v3999
        %v4220 = vpop.f32.mrf.mxu0
        %v4221 = vadd.f32 %v3756, %v4220
        %v4222 = vpop.f32.mrf.mxu0
        %v4223 = vpop.f32.mrf.mxu0
        %v4224 = vadd.f32 %v3756, %v4223
        %v4225 = vpop.f32.mrf.mxu0
        %4226 = vmatprep.mubr.bf16.mxu0 0
        %4227 = vmatmul.mubr.bf16.gmra.mxu0 %v4002
        %v4228 = vpop.f32.mrf.mxu0
        %v4229 = vadd.f32 %v3756, %v4228
        %v4230 = vpop.f32.mrf.mxu0
        %v4231 = vpop.f32.mrf.mxu0
        %v4232 = vadd.f32 %v3756, %v4231
        %v4233 = vpop.f32.mrf.mxu0
        %4234 = vmatprep.mubr.bf16.mxu0 0
        %4235 = vmatmul.mubr.bf16.gmra.mxu0 %v4005
        %v4236 = vpop.f32.mrf.mxu0
        %v4237 = vadd.f32 %v3756, %v4236
        %v4238 = vpop.f32.mrf.mxu0
        %v4239 = vpop.f32.mrf.mxu0
        %v4240 = vadd.f32 %v3756, %v4239
        %v4241 = vpop.f32.mrf.mxu0
        %4242 = vmatprep.mubr.bf16.mxu0 0
        %4243 = vmatmul.mubr.bf16.gmra.mxu0 %v4008
        %v4244 = vpop.f32.mrf.mxu0
        %v4245 = vadd.f32 %v3756, %v4244
        %v4246 = vpop.f32.mrf.mxu0
        %v4247 = vpop.f32.mrf.mxu0
        %v4248 = vadd.f32 %v3756, %v4247
        %v4249 = vpop.f32.mrf.mxu0
        %4250 = vmatprep.mubr.bf16.mxu0 0
        %4251 = vmatmul.mubr.bf16.gmra.mxu0 %v4011
        %v4252 = vpop.f32.mrf.mxu0
        %v4253 = vadd.f32 %v3756, %v4252
        %v4254 = vpop.f32.mrf.mxu0
        %v4255 = vpop.f32.mrf.mxu0
        %v4256 = vadd.f32 %v3756, %v4255
        %v4257 = vpop.f32.mrf.mxu0
        %4258 = vmatprep.mubr.bf16.mxu0 0
        %4259 = vmatmul.mubr.bf16.gmra.mxu0 %v4014
        %v4260 = vpop.f32.mrf.mxu0
        %v4261 = vadd.f32 %v3756, %v4260
        %v4262 = vpop.f32.mrf.mxu0
        %v4263 = vpop.f32.mrf.mxu0
        %v4264 = vadd.f32 %v3756, %v4263
        %v4265 = vpop.f32.mrf.mxu0
        %4266 = vmatprep.mubr.bf16.mxu0 0
        %4267 = vmatmul.mubr.bf16.gmra.mxu0 %v4017
        %v4268 = vpop.f32.mrf.mxu0
        %v4269 = vadd.f32 %v3756, %v4268
        %v4270 = vpop.f32.mrf.mxu0
        %v4271 = vpop.f32.mrf.mxu0
        %v4272 = vadd.f32 %v3756, %v4271
        %v4273 = vpop.f32.mrf.mxu0
        %4274 = vmatprep.mubr.bf16.mxu0 0
        %4275 = vmatmul.mubr.bf16.gmra.mxu0 %v4020
        %v4276 = vpop.f32.mrf.mxu0
        %v4277 = vadd.f32 %v3756, %v4276
        %v4278 = vpop.f32.mrf.mxu0
        %v4279 = vpop.f32.mrf.mxu0
        %v4280 = vadd.f32 %v3756, %v4279
        %v4281 = vpop.f32.mrf.mxu0
        %4282 = vmatprep.mubr.bf16.mxu0 0
        %4283 = vmatmul.mubr.bf16.gmra.mxu0 %v4023
        %v4284 = vpop.f32.mrf.mxu0
        %v4285 = vadd.f32 %v3756, %v4284
        %v4286 = vpop.f32.mrf.mxu0
        %v4287 = vpop.f32.mrf.mxu0
        %v4288 = vadd.f32 %v3756, %v4287
        %v4289 = vpop.f32.mrf.mxu0
        %4290 = vmatprep.mubr.bf16.mxu0 0
        %4291 = vmatmul.mubr.bf16.gmra.mxu0 %v4026
        %v4292 = vpop.f32.mrf.mxu0
        %v4293 = vadd.f32 %v3756, %v4292
        %v4294 = vpop.f32.mrf.mxu0
        %v4295 = vpop.f32.mrf.mxu0
        %v4296 = vadd.f32 %v3756, %v4295
        %v4297 = vpop.f32.mrf.mxu0
        %4298 = vmatprep.mubr.bf16.mxu0 0
        %4299 = vmatmul.mubr.bf16.gmra.mxu0 %v4029
        %v4300 = vpop.f32.mrf.mxu0
        %v4301 = vadd.f32 %v3756, %v4300
        %v4302 = vpop.f32.mrf.mxu0
        %v4303 = vpop.f32.mrf.mxu0
        %v4304 = vadd.f32 %v3756, %v4303
        %v4305 = vpop.f32.mrf.mxu0
        %4306 = vmatprep.mubr.bf16.mxu0 0
        %4307 = vmatmul.mubr.bf16.gmra.mxu0 %v4032
        %v4308 = vpop.f32.mrf.mxu0
        %v4309 = vadd.f32 %v3756, %v4308
        %v4310 = vpop.f32.mrf.mxu0
        %v4311 = vpop.f32.mrf.mxu0
        %v4312 = vadd.f32 %v3756, %v4311
        %v4313 = vpop.f32.mrf.mxu0
        %4314 = vmatprep.mubr.bf16.mxu0 0
        %4315 = vmatmul.mubr.bf16.gmra.mxu0 %v4035
        %v4316 = vpop.f32.mrf.mxu0
        %v4317 = vadd.f32 %v3756, %v4316
        %v4318 = vpop.f32.mrf.mxu0
        %v4319 = vpop.f32.mrf.mxu0
        %v4320 = vadd.f32 %v3756, %v4319
        %v4321 = vpop.f32.mrf.mxu0
        %4322 = vmatprep.mubr.bf16.mxu0 0
        %4323 = vmatmul.mubr.bf16.gmra.mxu0 %v4038
        %v4324 = vpop.f32.mrf.mxu0
        %v4325 = vadd.f32 %v3756, %v4324
        %v4326 = vpop.f32.mrf.mxu0
        %v4327 = vpop.f32.mrf.mxu0
        %v4328 = vadd.f32 %v3756, %v4327
        %v4329 = vpop.f32.mrf.mxu0
        %4330 = vmatprep.mubr.bf16.mxu0 0
        %4331 = vmatmul.mubr.bf16.gmra.mxu0 %v4041
        %v4332 = vpop.f32.mrf.mxu0
        %v4333 = vadd.f32 %v3756, %v4332
        %v4334 = vpop.f32.mrf.mxu0
        %v4335 = vpop.f32.mrf.mxu0
        %v4336 = vadd.f32 %v3756, %v4335
        %v4337 = vpop.f32.mrf.mxu0
        %4338 = vmatprep.mubr.bf16.mxu0 0
        %4339 = vmatmul.mubr.bf16.gmra.mxu0 %v4044
        %v4340 = vpop.f32.mrf.mxu0
        %v4341 = vadd.f32 %v3756, %v4340
        %v4342 = vpop.f32.mrf.mxu0
        %v4343 = vpop.f32.mrf.mxu0
        %v4344 = vadd.f32 %v3756, %v4343
        %v4345 = vpop.f32.mrf.mxu0
        %4346 = vmatprep.mubr.bf16.mxu0 0
        %4347 = vmatmul.mubr.bf16.gmra.mxu0 %v4047
        %v4348 = vpop.f32.mrf.mxu0
        %v4349 = vadd.f32 %v3756, %v4348
        %v4350 = vpop.f32.mrf.mxu0
        %v4351 = vpop.f32.mrf.mxu0
        %v4352 = vadd.f32 %v3756, %v4351
        %v4353 = vpop.f32.mrf.mxu0
        %4354 = vmatprep.mubr.bf16.mxu0 0
        %4355 = vmatmul.mubr.bf16.gmra.mxu0 %v4050
        %v4356 = vpop.f32.mrf.mxu0
        %v4357 = vadd.f32 %v3756, %v4356
        %v4358 = vpop.f32.mrf.mxu0
        %v4359 = vpop.f32.mrf.mxu0
        %v4360 = vadd.f32 %v3756, %v4359
        %v4361 = vpop.f32.mrf.mxu0
        %4362 = vmatprep.mubr.bf16.mxu0 0
        %4363 = vmatmul.mubr.bf16.gmra.mxu0 %v4053
        %v4364 = vpop.f32.mrf.mxu0
        %v4365 = vadd.f32 %v3756, %v4364
        %v4366 = vpop.f32.mrf.mxu0
        %v4367 = vpop.f32.mrf.mxu0
        %v4368 = vadd.f32 %v3756, %v4367
        %v4369 = vpop.f32.mrf.mxu0
        %4370 = vmatprep.mubr.bf16.mxu0 0
        %4371 = vmatmul.mubr.bf16.gmra.mxu0 %v4056
        %v4372 = vpop.f32.mrf.mxu0
        %v4373 = vadd.f32 %v3756, %v4372
        %v4374 = vpop.f32.mrf.mxu0
        %v4375 = vpop.f32.mrf.mxu0
        %v4376 = vadd.f32 %v3756, %v4375
        %v4377 = vpop.f32.mrf.mxu0
        %4378 = vdwg.mxu0
        %v4379 = vmul.f32 %v4093, 0.2
        %v4380 = vmul.f32 %v4096, 0.2
        %v4381 = vmul.f32 %v4101, 0.2
        %v4382 = vmul.f32 %v4104, 0.2
        %v4383 = vmul.f32 %v4109, 0.2
        %v4384 = vmul.f32 %v4112, 0.2
        %v4385 = vmul.f32 %v4117, 0.2
        %v4386 = vmul.f32 %v4120, 0.2
        %v4387 = vmul.f32 %v4125, 0.2
        %v4388 = vmul.f32 %v4128, 0.2
        %v4389 = vmul.f32 %v4133, 0.2
        %v4390 = vmul.f32 %v4136, 0.2
        %v4391 = vmul.f32 %v4141, 0.2
        %v4392 = vmul.f32 %v4144, 0.2
        %v4393 = vmul.f32 %v4149, 0.2
        %v4394 = vmul.f32 %v4152, 0.2
        %v4395 = vmul.f32 %v4157, 0.2
        %v4396 = vmul.f32 %v4160, 0.2
        %v4397 = vmul.f32 %v4165, 0.2
        %v4398 = vmul.f32 %v4168, 0.2
        %v4399 = vmul.f32 %v4173, 0.2
        %v4400 = vmul.f32 %v4176, 0.2
        %v4401 = vmul.f32 %v4181, 0.2
        %v4402 = vmul.f32 %v4184, 0.2
        %v4403 = vmul.f32 %v4189, 0.2
        %v4404 = vmul.f32 %v4192, 0.2
        %v4405 = vmul.f32 %v4197, 0.2
        %v4406 = vmul.f32 %v4200, 0.2
        %v4407 = vmul.f32 %v4205, 0.2
        %v4408 = vmul.f32 %v4208, 0.2
        %v4409 = vmul.f32 %v4213, 0.2
        %v4410 = vmul.f32 %v4216, 0.2
        %v4411 = vmul.f32 %v4221, 0.2
        %v4412 = vmul.f32 %v4224, 0.2
        %v4413 = vmul.f32 %v4229, 0.2
        %v4414 = vmul.f32 %v4232, 0.2
        %v4415 = vmul.f32 %v4237, 0.2
        %v4416 = vmul.f32 %v4240, 0.2
        %v4417 = vmul.f32 %v4245, 0.2
        %v4418 = vmul.f32 %v4248, 0.2
        %v4419 = vmul.f32 %v4253, 0.2
        %v4420 = vmul.f32 %v4256, 0.2
        %v4421 = vmul.f32 %v4261, 0.2
        %v4422 = vmul.f32 %v4264, 0.2
        %v4423 = vmul.f32 %v4269, 0.2
        %v4424 = vmul.f32 %v4272, 0.2
        %v4425 = vmul.f32 %v4277, 0.2
        %v4426 = vmul.f32 %v4280, 0.2
        %v4427 = vmul.f32 %v4285, 0.2
        %v4428 = vmul.f32 %v4288, 0.2
        %v4429 = vmul.f32 %v4293, 0.2
        %v4430 = vmul.f32 %v4296, 0.2
        %v4431 = vmul.f32 %v4301, 0.2
        %v4432 = vmul.f32 %v4304, 0.2
        %v4433 = vmul.f32 %v4309, 0.2
        %v4434 = vmul.f32 %v4312, 0.2
        %v4435 = vmul.f32 %v4317, 0.2
        %v4436 = vmul.f32 %v4320, 0.2
        %v4437 = vmul.f32 %v4325, 0.2
        %v4438 = vmul.f32 %v4328, 0.2
        %v4439 = vmul.f32 %v4333, 0.2
        %v4440 = vmul.f32 %v4336, 0.2
        %v4441 = vmul.f32 %v4341, 0.2
        %v4442 = vmul.f32 %v4344, 0.2
        %v4443 = vmul.f32 %v4349, 0.2
        %v4444 = vmul.f32 %v4352, 0.2
        %v4445 = vmul.f32 %v4357, 0.2
        %v4446 = vmul.f32 %v4360, 0.2
        %v4447 = vmul.f32 %v4365, 0.2
        %v4448 = vmul.f32 %v4368, 0.2
        %v4449 = vmul.f32 %v4373, 0.2
        %v4450 = vmul.f32 %v4376, 0.2
        %v4451 = vmax.f32 %v4093, %v4379
        %v4452 = vmax.f32 %v4096, %v4380
        %v4453 = vmax.f32 %v4101, %v4381
        %v4454 = vmax.f32 %v4104, %v4382
        %v4455 = vmax.f32 %v4109, %v4383
        %v4456 = vmax.f32 %v4112, %v4384
        %v4457 = vmax.f32 %v4117, %v4385
        %v4458 = vmax.f32 %v4120, %v4386
        %v4459 = vmax.f32 %v4125, %v4387
        %v4460 = vmax.f32 %v4128, %v4388
        %v4461 = vmax.f32 %v4133, %v4389
        %v4462 = vmax.f32 %v4136, %v4390
        %v4463 = vmax.f32 %v4141, %v4391
        %v4464 = vmax.f32 %v4144, %v4392
        %v4465 = vmax.f32 %v4149, %v4393
        %v4466 = vmax.f32 %v4152, %v4394
        %v4467 = vmax.f32 %v4157, %v4395
        %v4468 = vmax.f32 %v4160, %v4396
        %v4469 = vmax.f32 %v4165, %v4397
        %v4470 = vmax.f32 %v4168, %v4398
        %v4471 = vmax.f32 %v4173, %v4399
        %v4472 = vmax.f32 %v4176, %v4400
        %v4473 = vmax.f32 %v4181, %v4401
        %v4474 = vmax.f32 %v4184, %v4402
        %v4475 = vmax.f32 %v4189, %v4403
        %v4476 = vmax.f32 %v4192, %v4404
        %v4477 = vmax.f32 %v4197, %v4405
        %v4478 = vmax.f32 %v4200, %v4406
        %v4479 = vmax.f32 %v4205, %v4407
        %v4480 = vmax.f32 %v4208, %v4408
        %v4481 = vmax.f32 %v4213, %v4409
        %v4482 = vmax.f32 %v4216, %v4410
        %v4483 = vmax.f32 %v4221, %v4411
        %v4484 = vmax.f32 %v4224, %v4412
        %v4485 = vmax.f32 %v4229, %v4413
        %v4486 = vmax.f32 %v4232, %v4414
        %v4487 = vmax.f32 %v4237, %v4415
        %v4488 = vmax.f32 %v4240, %v4416
        %v4489 = vmax.f32 %v4245, %v4417
        %v4490 = vmax.f32 %v4248, %v4418
        %v4491 = vmax.f32 %v4253, %v4419
        %v4492 = vmax.f32 %v4256, %v4420
        %v4493 = vmax.f32 %v4261, %v4421
        %v4494 = vmax.f32 %v4264, %v4422
        %v4495 = vmax.f32 %v4269, %v4423
        %v4496 = vmax.f32 %v4272, %v4424
        %v4497 = vmax.f32 %v4277, %v4425
        %v4498 = vmax.f32 %v4280, %v4426
        %v4499 = vmax.f32 %v4285, %v4427
        %v4500 = vmax.f32 %v4288, %v4428
        %v4501 = vmax.f32 %v4293, %v4429
        %v4502 = vmax.f32 %v4296, %v4430
        %v4503 = vmax.f32 %v4301, %v4431
        %v4504 = vmax.f32 %v4304, %v4432
        %v4505 = vmax.f32 %v4309, %v4433
        %v4506 = vmax.f32 %v4312, %v4434
        %v4507 = vmax.f32 %v4317, %v4435
        %v4508 = vmax.f32 %v4320, %v4436
        %v4509 = vmax.f32 %v4325, %v4437
        %v4510 = vmax.f32 %v4328, %v4438
        %v4511 = vmax.f32 %v4333, %v4439
        %v4512 = vmax.f32 %v4336, %v4440
        %v4513 = vmax.f32 %v4341, %v4441
        %v4514 = vmax.f32 %v4344, %v4442
        %v4515 = vmax.f32 %v4349, %v4443
        %v4516 = vmax.f32 %v4352, %v4444
        %v4517 = vmax.f32 %v4357, %v4445
        %v4518 = vmax.f32 %v4360, %v4446
        %v4519 = vmax.f32 %v4365, %v4447
        %v4520 = vmax.f32 %v4368, %v4448
        %v4521 = vmax.f32 %v4373, %v4449
        %v4522 = vmax.f32 %v4376, %v4450
        %4523 = vst.msk [vmem:[#allocation2 + $0x6c0] sm:$0xff] %vm1189, %v4451
        %4524 = vst.msk [vmem:[#allocation2 + $0x6c8] sm:$0xff] %vm1189, %v4452
        %4525 = vst.msk [vmem:[#allocation2 + $0x6d0] sm:$0xff] %vm1189, %v4453
        %4526 = vst.msk [vmem:[#allocation2 + $0x6d8] sm:$0xff] %vm1189, %v4454
        %4527 = vst.msk [vmem:[#allocation2 + $0x6e0] sm:$0xff] %vm1189, %v4455
        %4528 = vst.msk [vmem:[#allocation2 + $0x6e8] sm:$0xff] %vm1189, %v4456
        %4529 = vst.msk [vmem:[#allocation2 + $0x6f0] sm:$0xff] %vm1189, %v4457
        %4530 = vst.msk [vmem:[#allocation2 + $0x6f8] sm:$0xff] %vm1189, %v4458
        %4531 = vst.msk [vmem:[#allocation2 + $0x700] sm:$0xff] %vm1189, %v4459
        %4532 = vst.msk [vmem:[#allocation2 + $0x708] sm:$0xff] %vm1189, %v4460
        %4533 = vst.msk [vmem:[#allocation2 + $0x710] sm:$0xff] %vm1189, %v4461
        %4534 = vst.msk [vmem:[#allocation2 + $0x718] sm:$0xff] %vm1189, %v4462
        %4535 = vst.msk [vmem:[#allocation2 + $0x720] sm:$0xff] %vm1189, %v4463
        %4536 = vst.msk [vmem:[#allocation2 + $0x728] sm:$0xff] %vm1189, %v4464
        %4537 = vst.msk [vmem:[#allocation2 + $0x730] sm:$0xff] %vm1189, %v4465
        %4538 = vst.msk [vmem:[#allocation2 + $0x738] sm:$0xff] %vm1189, %v4466
        %4539 = vst.msk [vmem:[#allocation2 + $0x740] sm:$0xff] %vm1189, %v4467
        %4540 = vst.msk [vmem:[#allocation2 + $0x748] sm:$0xff] %vm1189, %v4468
        %4541 = vst.msk [vmem:[#allocation2 + $0x750] sm:$0xff] %vm1189, %v4469
        %4542 = vst.msk [vmem:[#allocation2 + $0x758] sm:$0xff] %vm1189, %v4470
        %4543 = vst.msk [vmem:[#allocation2 + $0x760] sm:$0xff] %vm1189, %v4471
        %4544 = vst.msk [vmem:[#allocation2 + $0x768] sm:$0xff] %vm1189, %v4472
        %4545 = vst.msk [vmem:[#allocation2 + $0x770] sm:$0xff] %vm1189, %v4473
        %4546 = vst.msk [vmem:[#allocation2 + $0x778] sm:$0xff] %vm1189, %v4474
        %4547 = vst.msk [vmem:[#allocation2 + $0x780] sm:$0xff] %vm1189, %v4475
        %4548 = vst.msk [vmem:[#allocation2 + $0x788] sm:$0xff] %vm1189, %v4476
        %4549 = vst.msk [vmem:[#allocation2 + $0x790] sm:$0xff] %vm1189, %v4477
        %4550 = vst.msk [vmem:[#allocation2 + $0x798] sm:$0xff] %vm1189, %v4478
        %4551 = vst.msk [vmem:[#allocation2 + $0x7a0] sm:$0xff] %vm1189, %v4479
        %4552 = vst.msk [vmem:[#allocation2 + $0x7a8] sm:$0xff] %vm1189, %v4480
        %4553 = vst.msk [vmem:[#allocation2 + $0x7b0] sm:$0xff] %vm1189, %v4481
        %4554 = vst.msk [vmem:[#allocation2 + $0x7b8] sm:$0xff] %vm1189, %v4482
        %4555 = vst.msk [vmem:[#allocation2 + $0x7c0] sm:$0xff] %vm1189, %v4483
        %4556 = vst.msk [vmem:[#allocation2 + $0x7c8] sm:$0xff] %vm1189, %v4484
        %4557 = vst.msk [vmem:[#allocation2 + $0x7d0] sm:$0xff] %vm1189, %v4485
        %4558 = vst.msk [vmem:[#allocation2 + $0x7d8] sm:$0xff] %vm1189, %v4486
        %4559 = vst.msk [vmem:[#allocation2 + $0x7e0] sm:$0xff] %vm1189, %v4487
        %4560 = vst.msk [vmem:[#allocation2 + $0x7e8] sm:$0xff] %vm1189, %v4488
        %4561 = vst.msk [vmem:[#allocation2 + $0x7f0] sm:$0xff] %vm1189, %v4489
        %4562 = vst.msk [vmem:[#allocation2 + $0x7f8] sm:$0xff] %vm1189, %v4490
        %4563 = vst.msk [vmem:[#allocation2 + $0x800] sm:$0xff] %vm1189, %v4491
        %4564 = vst.msk [vmem:[#allocation2 + $0x808] sm:$0xff] %vm1189, %v4492
        %4565 = vst.msk [vmem:[#allocation2 + $0x810] sm:$0xff] %vm1189, %v4493
        %4566 = vst.msk [vmem:[#allocation2 + $0x818] sm:$0xff] %vm1189, %v4494
        %4567 = vst.msk [vmem:[#allocation2 + $0x820] sm:$0xff] %vm1189, %v4495
        %4568 = vst.msk [vmem:[#allocation2 + $0x828] sm:$0xff] %vm1189, %v4496
        %4569 = vst.msk [vmem:[#allocation2 + $0x830] sm:$0xff] %vm1189, %v4497
        %4570 = vst.msk [vmem:[#allocation2 + $0x838] sm:$0xff] %vm1189, %v4498
        %4571 = vst.msk [vmem:[#allocation2 + $0x840] sm:$0xff] %vm1189, %v4499
        %4572 = vst.msk [vmem:[#allocation2 + $0x848] sm:$0xff] %vm1189, %v4500
        %4573 = vst.msk [vmem:[#allocation2 + $0x850] sm:$0xff] %vm1189, %v4501
        %4574 = vst.msk [vmem:[#allocation2 + $0x858] sm:$0xff] %vm1189, %v4502
        %4575 = vst.msk [vmem:[#allocation2 + $0x860] sm:$0xff] %vm1189, %v4503
        %4576 = vst.msk [vmem:[#allocation2 + $0x868] sm:$0xff] %vm1189, %v4504
        %4577 = vst.msk [vmem:[#allocation2 + $0x870] sm:$0xff] %vm1189, %v4505
        %4578 = vst.msk [vmem:[#allocation2 + $0x878] sm:$0xff] %vm1189, %v4506
        %4579 = vst.msk [vmem:[#allocation2 + $0x880] sm:$0xff] %vm1189, %v4507
        %4580 = vst.msk [vmem:[#allocation2 + $0x888] sm:$0xff] %vm1189, %v4508
        %4581 = vst.msk [vmem:[#allocation2 + $0x890] sm:$0xff] %vm1189, %v4509
        %4582 = vst.msk [vmem:[#allocation2 + $0x898] sm:$0xff] %vm1189, %v4510
        %4583 = vst.msk [vmem:[#allocation2 + $0x8a0] sm:$0xff] %vm1189, %v4511
        %4584 = vst.msk [vmem:[#allocation2 + $0x8a8] sm:$0xff] %vm1189, %v4512
        %4585 = vst.msk [vmem:[#allocation2 + $0x8b0] sm:$0xff] %vm1189, %v4513
        %4586 = vst.msk [vmem:[#allocation2 + $0x8b8] sm:$0xff] %vm1189, %v4514
        %4587 = vst.msk [vmem:[#allocation2 + $0x8c0] sm:$0xff] %vm1189, %v4515
        %4588 = vst.msk [vmem:[#allocation2 + $0x8c8] sm:$0xff] %vm1189, %v4516
        %4589 = vst.msk [vmem:[#allocation2 + $0x8d0] sm:$0xff] %vm1189, %v4517
        %4590 = vst.msk [vmem:[#allocation2 + $0x8d8] sm:$0xff] %vm1189, %v4518
        %4591 = vst.msk [vmem:[#allocation2 + $0x8e0] sm:$0xff] %vm1189, %v4519
        %4592 = vst.msk [vmem:[#allocation2 + $0x8e8] sm:$0xff] %vm1189, %v4520
        %4593 = vst.msk [vmem:[#allocation2 + $0x8f0] sm:$0xff] %vm1189, %v4521
        %4594 = vst.msk [vmem:[#allocation2 + $0x8f8] sm:$0xff] %vm1189, %v4522
        %v4595 = vld [vmem:[#allocation2 + $0x6a7] sm:$0xff]
        %v4596 = vld [vmem:[#allocation2 + $0x6af] sm:$0xff]
        %v4597 = vld [vmem:[#allocation2 + $0x6b7] sm:$0xff]
        %v4598 = vld [vmem:[#allocation2 + $0x6bf] sm:$0xff]
        %v4599 = vld [vmem:[#allocation2 + $0x6c7] sm:$0xff]
        %v4600 = vld [vmem:[#allocation2 + $0x6cf] sm:$0xff]
        %v4601 = vld [vmem:[#allocation2 + $0x6d7] sm:$0xff]
        %v4602 = vld [vmem:[#allocation2 + $0x6df] sm:$0xff]
        %v4603 = vld [vmem:[#allocation2 + $0x6e7] sm:$0xff]
        %v4604 = vld [vmem:[#allocation2 + $0x6ef] sm:$0xff]
        %v4605 = vld [vmem:[#allocation2 + $0x6f7] sm:$0xff]
        %v4606 = vld [vmem:[#allocation2 + $0x6ff] sm:$0xff]
        %v4607 = vld [vmem:[#allocation2 + $0x707] sm:$0xff]
        %v4608 = vld [vmem:[#allocation2 + $0x70f] sm:$0xff]
        %v4609 = vld [vmem:[#allocation2 + $0x717] sm:$0xff]
        %v4610 = vld [vmem:[#allocation2 + $0x71f] sm:$0xff]
        %v4611 = vld [vmem:[#allocation2 + $0x727] sm:$0xff]
        %v4612 = vld [vmem:[#allocation2 + $0x72f] sm:$0xff]
        %v4613 = vld [vmem:[#allocation2 + $0x737] sm:$0xff]
        %v4614 = vld [vmem:[#allocation2 + $0x73f] sm:$0xff]
        %v4615 = vld [vmem:[#allocation2 + $0x747] sm:$0xff]
        %v4616 = vld [vmem:[#allocation2 + $0x74f] sm:$0xff]
        %v4617 = vld [vmem:[#allocation2 + $0x757] sm:$0xff]
        %v4618 = vld [vmem:[#allocation2 + $0x75f] sm:$0xff]
        %v4619 = vld [vmem:[#allocation2 + $0x767] sm:$0xff]
        %v4620 = vld [vmem:[#allocation2 + $0x76f] sm:$0xff]
        %v4621 = vld [vmem:[#allocation2 + $0x777] sm:$0xff]
        %v4622 = vld [vmem:[#allocation2 + $0x77f] sm:$0xff]
        %v4623 = vld [vmem:[#allocation2 + $0x787] sm:$0xff]
        %v4624 = vld [vmem:[#allocation2 + $0x78f] sm:$0xff]
        %v4625 = vld [vmem:[#allocation2 + $0x797] sm:$0xff]
        %v4626 = vld [vmem:[#allocation2 + $0x79f] sm:$0xff]
        %v4627 = vld [vmem:[#allocation2 + $0x7a7] sm:$0xff]
        %v4628 = vld [vmem:[#allocation2 + $0x7af] sm:$0xff]
        %v4629 = vld [vmem:[#allocation2 + $0x7b7] sm:$0xff]
        %v4630 = vld [vmem:[#allocation2 + $0x7bf] sm:$0xff]
        %v4631 = vld [vmem:[#allocation2 + $0x7c7] sm:$0xff]
        %v4632 = vld [vmem:[#allocation2 + $0x7cf] sm:$0xff]
        %v4633 = vld [vmem:[#allocation2 + $0x7d7] sm:$0xff]
        %v4634 = vld [vmem:[#allocation2 + $0x7df] sm:$0xff]
        %v4635 = vld [vmem:[#allocation2 + $0x7e7] sm:$0xff]
        %v4636 = vld [vmem:[#allocation2 + $0x7ef] sm:$0xff]
        %v4637 = vld [vmem:[#allocation2 + $0x7f7] sm:$0xff]
        %v4638 = vld [vmem:[#allocation2 + $0x7ff] sm:$0xff]
        %v4639 = vld [vmem:[#allocation2 + $0x807] sm:$0xff]
        %v4640 = vld [vmem:[#allocation2 + $0x80f] sm:$0xff]
        %v4641 = vld [vmem:[#allocation2 + $0x817] sm:$0xff]
        %v4642 = vld [vmem:[#allocation2 + $0x81f] sm:$0xff]
        %v4643 = vld [vmem:[#allocation2 + $0x827] sm:$0xff]
        %v4644 = vld [vmem:[#allocation2 + $0x82f] sm:$0xff]
        %v4645 = vld [vmem:[#allocation2 + $0x837] sm:$0xff]
        %v4646 = vld [vmem:[#allocation2 + $0x83f] sm:$0xff]
        %v4647 = vld [vmem:[#allocation2 + $0x847] sm:$0xff]
        %v4648 = vld [vmem:[#allocation2 + $0x84f] sm:$0xff]
        %v4649 = vld [vmem:[#allocation2 + $0x857] sm:$0xff]
        %v4650 = vld [vmem:[#allocation2 + $0x85f] sm:$0xff]
        %v4651 = vld [vmem:[#allocation2 + $0x867] sm:$0xff]
        %v4652 = vld [vmem:[#allocation2 + $0x86f] sm:$0xff]
        %v4653 = vld [vmem:[#allocation2 + $0x877] sm:$0xff]
        %v4654 = vld [vmem:[#allocation2 + $0x87f] sm:$0xff]
        %v4655 = vld [vmem:[#allocation2 + $0x887] sm:$0xff]
        %v4656 = vld [vmem:[#allocation2 + $0x88f] sm:$0xff]
        %v4657 = vld [vmem:[#allocation2 + $0x897] sm:$0xff]
        %v4658 = vld [vmem:[#allocation2 + $0x89f] sm:$0xff]
        %v4659 = vld [vmem:[#allocation2 + $0x8a7] sm:$0xff]
        %v4660 = vld [vmem:[#allocation2 + $0x8af] sm:$0xff]
        %v4661 = vld [vmem:[#allocation2 + $0x8b7] sm:$0xff]
        %v4662 = vld [vmem:[#allocation2 + $0x8bf] sm:$0xff]
        %v4663 = vld [vmem:[#allocation2 + $0x8c7] sm:$0xff]
        %v4664 = vld [vmem:[#allocation2 + $0x8cf] sm:$0xff]
        %v4665 = vld [vmem:[#allocation2 + $0x8d7] sm:$0xff]
        %v4666 = vld [vmem:[#allocation2 + $0x8df] sm:$0xff]
        %v4667 = vsel %vm832, 1, 0
        %v4668 = vsel %vm833, 1, 0
        %v4669 = vsel %vm834, 1, 0
        %v4670 = vsel %vm835, 1, 0
        %v4671 = vsel %vm836, 1, 0
        %v4672 = vsel %vm837, 1, 0
        %v4673 = vsel %vm838, 1, 0
        %v4674 = vsel %vm839, 1, 0
        %v4675 = vsel %vm840, 1, 0
        %v4676 = vsel %vm841, 1, 0
        %v4677 = vsel %vm842, 1, 0
        %v4678 = vsel %vm843, 1, 0
        %v4679 = vsel %vm844, 1, 0
        %v4680 = vsel %vm845, 1, 0
        %v4681 = vsel %vm846, 1, 0
        %v4682 = vsel %vm847, 1, 0
        %v4683 = vsel %vm848, 1, 0
        %v4684 = vsel %vm849, 1, 0
        %v4685 = vsel %vm850, 1, 0
        %v4686 = vsel %vm851, 1, 0
        %v4687 = vsel %vm852, 1, 0
        %v4688 = vsel %vm853, 1, 0
        %v4689 = vsel %vm854, 1, 0
        %v4690 = vsel %vm855, 1, 0
        %v4691 = vsel %vm856, 1, 0
        %v4692 = vsel %vm857, 1, 0
        %v4693 = vsel %vm858, 1, 0
        %v4694 = vsel %vm859, 1, 0
        %v4695 = vsel %vm860, 1, 0
        %v4696 = vsel %vm861, 1, 0
        %v4697 = vsel %vm862, 1, 0
        %v4698 = vsel %vm863, 1, 0
        %v4699 = vsel %vm864, 1, 0
        %v4700 = vsel %vm865, 1, 0
        %v4701 = vsel %vm866, 1, 0
        %v4702 = vsel %vm867, 1, 0
        %v4703 = vsel %vm868, 1, 0
        %v4704 = vsel %vm869, 1, 0
        %v4705 = vsel %vm870, 1, 0
        %v4706 = vsel %vm871, 1, 0
        %v4707 = vsel %vm872, 1, 0
        %v4708 = vsel %vm873, 1, 0
        %v4709 = vsel %vm874, 1, 0
        %v4710 = vsel %vm875, 1, 0
        %v4711 = vsel %vm876, 1, 0
        %v4712 = vsel %vm877, 1, 0
        %v4713 = vsel %vm878, 1, 0
        %v4714 = vsel %vm879, 1, 0
        %v4715 = vsel %vm880, 1, 0
        %v4716 = vsel %vm881, 1, 0
        %v4717 = vsel %vm882, 1, 0
        %v4718 = vsel %vm883, 1, 0
        %v4719 = vsel %vm884, 1, 0
        %v4720 = vsel %vm885, 1, 0
        %v4721 = vsel %vm886, 1, 0
        %v4722 = vsel %vm887, 1, 0
        %v4723 = vsel %vm888, 1, 0
        %v4724 = vsel %vm889, 1, 0
        %v4725 = vsel %vm890, 1, 0
        %v4726 = vsel %vm891, 1, 0
        %v4727 = vsel %vm892, 1, 0
        %v4728 = vsel %vm893, 1, 0
        %v4729 = vsel %vm894, 1, 0
        %v4730 = vsel %vm895, 1, 0
        %v4731 = vsel %vm896, 1, 0
        %v4732 = vsel %vm897, 1, 0
        %v4733 = vsel %vm898, 1, 0
        %v4734 = vsel %vm899, 1, 0
        %v4735 = vsel %vm900, 1, 0
        %v4736 = vsel %vm901, 1, 0
        %v4737 = vsel %vm902, 1, 0
        %v4738 = vsel %vm903, 1, 0
        %vm4739 = vcmp.eq.s32.totalorder %v4667, 1
        %vm4740 = vcmp.eq.s32.totalorder %v4668, 1
        %vm4741 = vcmp.eq.s32.totalorder %v4669, 1
        %vm4742 = vcmp.eq.s32.totalorder %v4670, 1
        %vm4743 = vcmp.eq.s32.totalorder %v4671, 1
        %vm4744 = vcmp.eq.s32.totalorder %v4672, 1
        %vm4745 = vcmp.eq.s32.totalorder %v4673, 1
        %vm4746 = vcmp.eq.s32.totalorder %v4674, 1
        %vm4747 = vcmp.eq.s32.totalorder %v4675, 1
        %vm4748 = vcmp.eq.s32.totalorder %v4676, 1
        %vm4749 = vcmp.eq.s32.totalorder %v4677, 1
        %vm4750 = vcmp.eq.s32.totalorder %v4678, 1
        %vm4751 = vcmp.eq.s32.totalorder %v4679, 1
        %vm4752 = vcmp.eq.s32.totalorder %v4680, 1
        %vm4753 = vcmp.eq.s32.totalorder %v4681, 1
        %vm4754 = vcmp.eq.s32.totalorder %v4682, 1
        %vm4755 = vcmp.eq.s32.totalorder %v4683, 1
        %vm4756 = vcmp.eq.s32.totalorder %v4684, 1
        %vm4757 = vcmp.eq.s32.totalorder %v4685, 1
        %vm4758 = vcmp.eq.s32.totalorder %v4686, 1
        %vm4759 = vcmp.eq.s32.totalorder %v4687, 1
        %vm4760 = vcmp.eq.s32.totalorder %v4688, 1
        %vm4761 = vcmp.eq.s32.totalorder %v4689, 1
        %vm4762 = vcmp.eq.s32.totalorder %v4690, 1
        %vm4763 = vcmp.eq.s32.totalorder %v4691, 1
        %vm4764 = vcmp.eq.s32.totalorder %v4692, 1
        %vm4765 = vcmp.eq.s32.totalorder %v4693, 1
        %vm4766 = vcmp.eq.s32.totalorder %v4694, 1
        %vm4767 = vcmp.eq.s32.totalorder %v4695, 1
        %vm4768 = vcmp.eq.s32.totalorder %v4696, 1
        %vm4769 = vcmp.eq.s32.totalorder %v4697, 1
        %vm4770 = vcmp.eq.s32.totalorder %v4698, 1
        %vm4771 = vcmp.eq.s32.totalorder %v4699, 1
        %vm4772 = vcmp.eq.s32.totalorder %v4700, 1
        %vm4773 = vcmp.eq.s32.totalorder %v4701, 1
        %vm4774 = vcmp.eq.s32.totalorder %v4702, 1
        %vm4775 = vcmp.eq.s32.totalorder %v4703, 1
        %vm4776 = vcmp.eq.s32.totalorder %v4704, 1
        %vm4777 = vcmp.eq.s32.totalorder %v4705, 1
        %vm4778 = vcmp.eq.s32.totalorder %v4706, 1
        %vm4779 = vcmp.eq.s32.totalorder %v4707, 1
        %vm4780 = vcmp.eq.s32.totalorder %v4708, 1
        %vm4781 = vcmp.eq.s32.totalorder %v4709, 1
        %vm4782 = vcmp.eq.s32.totalorder %v4710, 1
        %vm4783 = vcmp.eq.s32.totalorder %v4711, 1
        %vm4784 = vcmp.eq.s32.totalorder %v4712, 1
        %vm4785 = vcmp.eq.s32.totalorder %v4713, 1
        %vm4786 = vcmp.eq.s32.totalorder %v4714, 1
        %vm4787 = vcmp.eq.s32.totalorder %v4715, 1
        %vm4788 = vcmp.eq.s32.totalorder %v4716, 1
        %vm4789 = vcmp.eq.s32.totalorder %v4717, 1
        %vm4790 = vcmp.eq.s32.totalorder %v4718, 1
        %vm4791 = vcmp.eq.s32.totalorder %v4719, 1
        %vm4792 = vcmp.eq.s32.totalorder %v4720, 1
        %vm4793 = vcmp.eq.s32.totalorder %v4721, 1
        %vm4794 = vcmp.eq.s32.totalorder %v4722, 1
        %vm4795 = vcmp.eq.s32.totalorder %v4723, 1
        %vm4796 = vcmp.eq.s32.totalorder %v4724, 1
        %vm4797 = vcmp.eq.s32.totalorder %v4725, 1
        %vm4798 = vcmp.eq.s32.totalorder %v4726, 1
        %vm4799 = vcmp.eq.s32.totalorder %v4727, 1
        %vm4800 = vcmp.eq.s32.totalorder %v4728, 1
        %vm4801 = vcmp.eq.s32.totalorder %v4729, 1
        %vm4802 = vcmp.eq.s32.totalorder %v4730, 1
        %vm4803 = vcmp.eq.s32.totalorder %v4731, 1
        %vm4804 = vcmp.eq.s32.totalorder %v4732, 1
        %vm4805 = vcmp.eq.s32.totalorder %v4733, 1
        %vm4806 = vcmp.eq.s32.totalorder %v4734, 1
        %vm4807 = vcmp.eq.s32.totalorder %v4735, 1
        %vm4808 = vcmp.eq.s32.totalorder %v4736, 1
        %vm4809 = vcmp.eq.s32.totalorder %v4737, 1
        %vm4810 = vcmp.eq.s32.totalorder %v4738, 1
        %v4811 = vsel %vm4739, %v4595, 0.0
        %v4812 = vsel %vm4740, %v4596, 0.0
        %v4813 = vsel %vm4741, %v4597, 0.0
        %v4814 = vsel %vm4742, %v4598, 0.0
        %v4815 = vsel %vm4743, %v4599, 0.0
        %v4816 = vsel %vm4744, %v4600, 0.0
        %v4817 = vsel %vm4745, %v4601, 0.0
        %v4818 = vsel %vm4746, %v4602, 0.0
        %v4819 = vsel %vm4747, %v4603, 0.0
        %v4820 = vsel %vm4748, %v4604, 0.0
        %v4821 = vsel %vm4749, %v4605, 0.0
        %v4822 = vsel %vm4750, %v4606, 0.0
        %v4823 = vsel %vm4751, %v4607, 0.0
        %v4824 = vsel %vm4752, %v4608, 0.0
        %v4825 = vsel %vm4753, %v4609, 0.0
        %v4826 = vsel %vm4754, %v4610, 0.0
        %v4827 = vsel %vm4755, %v4611, 0.0
        %v4828 = vsel %vm4756, %v4612, 0.0
        %v4829 = vsel %vm4757, %v4613, 0.0
        %v4830 = vsel %vm4758, %v4614, 0.0
        %v4831 = vsel %vm4759, %v4615, 0.0
        %v4832 = vsel %vm4760, %v4616, 0.0
        %v4833 = vsel %vm4761, %v4617, 0.0
        %v4834 = vsel %vm4762, %v4618, 0.0
        %v4835 = vsel %vm4763, %v4619, 0.0
        %v4836 = vsel %vm4764, %v4620, 0.0
        %v4837 = vsel %vm4765, %v4621, 0.0
        %v4838 = vsel %vm4766, %v4622, 0.0
        %v4839 = vsel %vm4767, %v4623, 0.0
        %v4840 = vsel %vm4768, %v4624, 0.0
        %v4841 = vsel %vm4769, %v4625, 0.0
        %v4842 = vsel %vm4770, %v4626, 0.0
        %v4843 = vsel %vm4771, %v4627, 0.0
        %v4844 = vsel %vm4772, %v4628, 0.0
        %v4845 = vsel %vm4773, %v4629, 0.0
        %v4846 = vsel %vm4774, %v4630, 0.0
        %v4847 = vsel %vm4775, %v4631, 0.0
        %v4848 = vsel %vm4776, %v4632, 0.0
        %v4849 = vsel %vm4777, %v4633, 0.0
        %v4850 = vsel %vm4778, %v4634, 0.0
        %v4851 = vsel %vm4779, %v4635, 0.0
        %v4852 = vsel %vm4780, %v4636, 0.0
        %v4853 = vsel %vm4781, %v4637, 0.0
        %v4854 = vsel %vm4782, %v4638, 0.0
        %v4855 = vsel %vm4783, %v4639, 0.0
        %v4856 = vsel %vm4784, %v4640, 0.0
        %v4857 = vsel %vm4785, %v4641, 0.0
        %v4858 = vsel %vm4786, %v4642, 0.0
        %v4859 = vsel %vm4787, %v4643, 0.0
        %v4860 = vsel %vm4788, %v4644, 0.0
        %v4861 = vsel %vm4789, %v4645, 0.0
        %v4862 = vsel %vm4790, %v4646, 0.0
        %v4863 = vsel %vm4791, %v4647, 0.0
        %v4864 = vsel %vm4792, %v4648, 0.0
        %v4865 = vsel %vm4793, %v4649, 0.0
        %v4866 = vsel %vm4794, %v4650, 0.0
        %v4867 = vsel %vm4795, %v4651, 0.0
        %v4868 = vsel %vm4796, %v4652, 0.0
        %v4869 = vsel %vm4797, %v4653, 0.0
        %v4870 = vsel %vm4798, %v4654, 0.0
        %v4871 = vsel %vm4799, %v4655, 0.0
        %v4872 = vsel %vm4800, %v4656, 0.0
        %v4873 = vsel %vm4801, %v4657, 0.0
        %v4874 = vsel %vm4802, %v4658, 0.0
        %v4875 = vsel %vm4803, %v4659, 0.0
        %v4876 = vsel %vm4804, %v4660, 0.0
        %v4877 = vsel %vm4805, %v4661, 0.0
        %v4878 = vsel %vm4806, %v4662, 0.0
        %v4879 = vsel %vm4807, %v4663, 0.0
        %v4880 = vsel %vm4808, %v4664, 0.0
        %v4881 = vsel %vm4809, %v4665, 0.0
        %v4882 = vsel %vm4810, %v4666, 0.0
        %v4883 = vpack.c.bf16 %v4812, %v4811
        %v4884 = vpack.c.bf16 %v4814, %v4813
        %v4885 = vpack.c.bf16 %v4816, %v4815
        %v4886 = vpack.c.bf16 %v4818, %v4817
        %v4887 = vpack.c.bf16 %v4820, %v4819
        %v4888 = vpack.c.bf16 %v4822, %v4821
        %v4889 = vpack.c.bf16 %v4824, %v4823
        %v4890 = vpack.c.bf16 %v4826, %v4825
        %v4891 = vpack.c.bf16 %v4828, %v4827
        %v4892 = vpack.c.bf16 %v4830, %v4829
        %v4893 = vpack.c.bf16 %v4832, %v4831
        %v4894 = vpack.c.bf16 %v4834, %v4833
        %v4895 = vpack.c.bf16 %v4836, %v4835
        %v4896 = vpack.c.bf16 %v4838, %v4837
        %v4897 = vpack.c.bf16 %v4840, %v4839
        %v4898 = vpack.c.bf16 %v4842, %v4841
        %v4899 = vpack.c.bf16 %v4844, %v4843
        %v4900 = vpack.c.bf16 %v4846, %v4845
        %v4901 = vpack.c.bf16 %v4848, %v4847
        %v4902 = vpack.c.bf16 %v4850, %v4849
        %v4903 = vpack.c.bf16 %v4852, %v4851
        %v4904 = vpack.c.bf16 %v4854, %v4853
        %v4905 = vpack.c.bf16 %v4856, %v4855
        %v4906 = vpack.c.bf16 %v4858, %v4857
        %v4907 = vpack.c.bf16 %v4860, %v4859
        %v4908 = vpack.c.bf16 %v4862, %v4861
        %v4909 = vpack.c.bf16 %v4864, %v4863
        %v4910 = vpack.c.bf16 %v4866, %v4865
        %v4911 = vpack.c.bf16 %v4868, %v4867
        %v4912 = vpack.c.bf16 %v4870, %v4869
        %v4913 = vpack.c.bf16 %v4872, %v4871
        %v4914 = vpack.c.bf16 %v4874, %v4873
        %v4915 = vpack.c.bf16 %v4876, %v4875
        %v4916 = vpack.c.bf16 %v4878, %v4877
        %v4917 = vpack.c.bf16 %v4880, %v4879
        %v4918 = vpack.c.bf16 %v4882, %v4881
        %v4919 = vld [vmem:[#allocation2 + $0x468] sm:$0xff]
        %v4920 = vld [vmem:[#allocation2 + $0x470] sm:$0xff]
        %v4921 = vld [vmem:[#allocation2 + $0x478] sm:$0xff]
        %v4922 = vld [vmem:[#allocation2 + $0x480] sm:$0xff]
        %v4923 = vld [vmem:[#allocation2 + $0x488] sm:$0xff]
        %v4924 = vld [vmem:[#allocation2 + $0x490] sm:$0xff]
        %v4925 = vld [vmem:[#allocation2 + $0x498] sm:$0xff]
        %v4926 = vld [vmem:[#allocation2 + $0x4a0] sm:$0xff]
        %v4927 = vld [vmem:[#allocation2 + $0x4a8] sm:$0xff]
        %v4928 = vld [vmem:[#allocation2 + $0x4b0] sm:$0xff]
        %v4929 = vld [vmem:[#allocation2 + $0x4b8] sm:$0xff]
        %v4930 = vld [vmem:[#allocation2 + $0x4c0] sm:$0xff]
        %v4931 = vld [vmem:[#allocation2 + $0x4c8] sm:$0xff]
        %v4932 = vld [vmem:[#allocation2 + $0x4d0] sm:$0xff]
        %v4933 = vld [vmem:[#allocation2 + $0x4d8] sm:$0xff]
        %v4934 = vld [vmem:[#allocation2 + $0x4e0] sm:$0xff]
        %v4935 = vld [vmem:[#allocation2 + $0x4e8] sm:$0xff]
        %v4936 = vld [vmem:[#allocation2 + $0x4f0] sm:$0xff]
        %v4937 = vld [vmem:[#allocation2 + $0x4f8] sm:$0xff]
        %v4938 = vld [vmem:[#allocation2 + $0x500] sm:$0xff]
        %v4939 = vld [vmem:[#allocation2 + $0x508] sm:$0xff]
        %v4940 = vld [vmem:[#allocation2 + $0x510] sm:$0xff]
        %v4941 = vld [vmem:[#allocation2 + $0x518] sm:$0xff]
        %v4942 = vld [vmem:[#allocation2 + $0x520] sm:$0xff]
        %v4943 = vld [vmem:[#allocation2 + $0x528] sm:$0xff]
        %v4944 = vld [vmem:[#allocation2 + $0x530] sm:$0xff]
        %v4945 = vld [vmem:[#allocation2 + $0x538] sm:$0xff]
        %v4946 = vld [vmem:[#allocation2 + $0x540] sm:$0xff]
        %v4947 = vld [vmem:[#allocation2 + $0x548] sm:$0xff]
        %v4948 = vld [vmem:[#allocation2 + $0x550] sm:$0xff]
        %v4949 = vld [vmem:[#allocation2 + $0x558] sm:$0xff]
        %v4950 = vld [vmem:[#allocation2 + $0x560] sm:$0xff]
        %v4951 = vld [vmem:[#allocation2 + $0x568] sm:$0xff]
        %v4952 = vld [vmem:[#allocation2 + $0x570] sm:$0xff]
        %v4953 = vld [vmem:[#allocation2 + $0x578] sm:$0xff]
        %v4954 = vld [vmem:[#allocation2 + $0x580] sm:$0xff]
        %v4955 = vld [vmem:[#allocation2 + $0x588] sm:$0xff]
        %v4956 = vld [vmem:[#allocation2 + $0x590] sm:$0xff]
        %v4957 = vld [vmem:[#allocation2 + $0x598] sm:$0xff]
        %v4958 = vld [vmem:[#allocation2 + $0x5a0] sm:$0xff]
        %v4959 = vld [vmem:[#allocation2 + $0x5a8] sm:$0xff]
        %v4960 = vld [vmem:[#allocation2 + $0x5b0] sm:$0xff]
        %v4961 = vld [vmem:[#allocation2 + $0x5b8] sm:$0xff]
        %v4962 = vld [vmem:[#allocation2 + $0x5c0] sm:$0xff]
        %v4963 = vld [vmem:[#allocation2 + $0x5c8] sm:$0xff]
        %v4964 = vld [vmem:[#allocation2 + $0x5d0] sm:$0xff]
        %v4965 = vld [vmem:[#allocation2 + $0x5d8] sm:$0xff]
        %v4966 = vld [vmem:[#allocation2 + $0x5e0] sm:$0xff]
        %v4967 = vld [vmem:[#allocation2 + $0x5e8] sm:$0xff]
        %v4968 = vld [vmem:[#allocation2 + $0x5f0] sm:$0xff]
        %v4969 = vld [vmem:[#allocation2 + $0x5f8] sm:$0xff]
        %v4970 = vld [vmem:[#allocation2 + $0x600] sm:$0xff]
        %v4971 = vld [vmem:[#allocation2 + $0x608] sm:$0xff]
        %v4972 = vld [vmem:[#allocation2 + $0x610] sm:$0xff]
        %v4973 = vld [vmem:[#allocation2 + $0x618] sm:$0xff]
        %v4974 = vld [vmem:[#allocation2 + $0x620] sm:$0xff]
        %v4975 = vld [vmem:[#allocation2 + $0x628] sm:$0xff]
        %v4976 = vld [vmem:[#allocation2 + $0x630] sm:$0xff]
        %v4977 = vld [vmem:[#allocation2 + $0x638] sm:$0xff]
        %v4978 = vld [vmem:[#allocation2 + $0x640] sm:$0xff]
        %v4979 = vld [vmem:[#allocation2 + $0x648] sm:$0xff]
        %v4980 = vld [vmem:[#allocation2 + $0x650] sm:$0xff]
        %v4981 = vld [vmem:[#allocation2 + $0x658] sm:$0xff]
        %v4982 = vld [vmem:[#allocation2 + $0x660] sm:$0xff]
        %v4983 = vld [vmem:[#allocation2 + $0x668] sm:$0xff]
        %v4984 = vld [vmem:[#allocation2 + $0x670] sm:$0xff]
        %v4985 = vld [vmem:[#allocation2 + $0x678] sm:$0xff]
        %v4986 = vld [vmem:[#allocation2 + $0x680] sm:$0xff]
        %v4987 = vld [vmem:[#allocation2 + $0x688] sm:$0xff]
        %v4988 = vld [vmem:[#allocation2 + $0x690] sm:$0xff]
        %v4989 = vld [vmem:[#allocation2 + $0x698] sm:$0xff]
        %v4990 = vld [vmem:[#allocation2 + $0x6a0] sm:$0xff]
        %v4991 = vsel %vm616, 1, 0
        %v4992 = vsel %vm617, 1, 0
        %v4993 = vsel %vm618, 1, 0
        %v4994 = vsel %vm619, 1, 0
        %v4995 = vsel %vm620, 1, 0
        %v4996 = vsel %vm621, 1, 0
        %v4997 = vsel %vm622, 1, 0
        %v4998 = vsel %vm623, 1, 0
        %v4999 = vsel %vm624, 1, 0
        %v5000 = vsel %vm625, 1, 0
        %v5001 = vsel %vm626, 1, 0
        %v5002 = vsel %vm627, 1, 0
        %v5003 = vsel %vm628, 1, 0
        %v5004 = vsel %vm629, 1, 0
        %v5005 = vsel %vm630, 1, 0
        %v5006 = vsel %vm631, 1, 0
        %v5007 = vsel %vm632, 1, 0
        %v5008 = vsel %vm633, 1, 0
        %v5009 = vsel %vm634, 1, 0
        %v5010 = vsel %vm635, 1, 0
        %v5011 = vsel %vm636, 1, 0
        %v5012 = vsel %vm637, 1, 0
        %v5013 = vsel %vm638, 1, 0
        %v5014 = vsel %vm639, 1, 0
        %v5015 = vsel %vm640, 1, 0
        %v5016 = vsel %vm641, 1, 0
        %v5017 = vsel %vm642, 1, 0
        %v5018 = vsel %vm643, 1, 0
        %v5019 = vsel %vm644, 1, 0
        %v5020 = vsel %vm645, 1, 0
        %v5021 = vsel %vm646, 1, 0
        %v5022 = vsel %vm647, 1, 0
        %v5023 = vsel %vm648, 1, 0
        %v5024 = vsel %vm649, 1, 0
        %v5025 = vsel %vm650, 1, 0
        %v5026 = vsel %vm651, 1, 0
        %v5027 = vsel %vm652, 1, 0
        %v5028 = vsel %vm653, 1, 0
        %v5029 = vsel %vm654, 1, 0
        %v5030 = vsel %vm655, 1, 0
        %v5031 = vsel %vm656, 1, 0
        %v5032 = vsel %vm657, 1, 0
        %v5033 = vsel %vm658, 1, 0
        %v5034 = vsel %vm659, 1, 0
        %v5035 = vsel %vm660, 1, 0
        %v5036 = vsel %vm661, 1, 0
        %v5037 = vsel %vm662, 1, 0
        %v5038 = vsel %vm663, 1, 0
        %v5039 = vsel %vm664, 1, 0
        %v5040 = vsel %vm665, 1, 0
        %v5041 = vsel %vm666, 1, 0
        %v5042 = vsel %vm667, 1, 0
        %v5043 = vsel %vm668, 1, 0
        %v5044 = vsel %vm669, 1, 0
        %v5045 = vsel %vm670, 1, 0
        %v5046 = vsel %vm671, 1, 0
        %v5047 = vsel %vm672, 1, 0
        %v5048 = vsel %vm673, 1, 0
        %v5049 = vsel %vm674, 1, 0
        %v5050 = vsel %vm675, 1, 0
        %v5051 = vsel %vm676, 1, 0
        %v5052 = vsel %vm677, 1, 0
        %v5053 = vsel %vm678, 1, 0
        %v5054 = vsel %vm679, 1, 0
        %v5055 = vsel %vm680, 1, 0
        %v5056 = vsel %vm681, 1, 0
        %v5057 = vsel %vm682, 1, 0
        %v5058 = vsel %vm683, 1, 0
        %v5059 = vsel %vm684, 1, 0
        %v5060 = vsel %vm685, 1, 0
        %v5061 = vsel %vm686, 1, 0
        %v5062 = vsel %vm687, 1, 0
        %vm5063 = vcmp.eq.s32.totalorder %v4991, 1
        %vm5064 = vcmp.eq.s32.totalorder %v4992, 1
        %vm5065 = vcmp.eq.s32.totalorder %v4993, 1
        %vm5066 = vcmp.eq.s32.totalorder %v4994, 1
        %vm5067 = vcmp.eq.s32.totalorder %v4995, 1
        %vm5068 = vcmp.eq.s32.totalorder %v4996, 1
        %vm5069 = vcmp.eq.s32.totalorder %v4997, 1
        %vm5070 = vcmp.eq.s32.totalorder %v4998, 1
        %vm5071 = vcmp.eq.s32.totalorder %v4999, 1
        %vm5072 = vcmp.eq.s32.totalorder %v5000, 1
        %vm5073 = vcmp.eq.s32.totalorder %v5001, 1
        %vm5074 = vcmp.eq.s32.totalorder %v5002, 1
        %vm5075 = vcmp.eq.s32.totalorder %v5003, 1
        %vm5076 = vcmp.eq.s32.totalorder %v5004, 1
        %vm5077 = vcmp.eq.s32.totalorder %v5005, 1
        %vm5078 = vcmp.eq.s32.totalorder %v5006, 1
        %vm5079 = vcmp.eq.s32.totalorder %v5007, 1
        %vm5080 = vcmp.eq.s32.totalorder %v5008, 1
        %vm5081 = vcmp.eq.s32.totalorder %v5009, 1
        %vm5082 = vcmp.eq.s32.totalorder %v5010, 1
        %vm5083 = vcmp.eq.s32.totalorder %v5011, 1
        %vm5084 = vcmp.eq.s32.totalorder %v5012, 1
        %vm5085 = vcmp.eq.s32.totalorder %v5013, 1
        %vm5086 = vcmp.eq.s32.totalorder %v5014, 1
        %vm5087 = vcmp.eq.s32.totalorder %v5015, 1
        %vm5088 = vcmp.eq.s32.totalorder %v5016, 1
        %vm5089 = vcmp.eq.s32.totalorder %v5017, 1
        %vm5090 = vcmp.eq.s32.totalorder %v5018, 1
        %vm5091 = vcmp.eq.s32.totalorder %v5019, 1
        %vm5092 = vcmp.eq.s32.totalorder %v5020, 1
        %vm5093 = vcmp.eq.s32.totalorder %v5021, 1
        %vm5094 = vcmp.eq.s32.totalorder %v5022, 1
        %vm5095 = vcmp.eq.s32.totalorder %v5023, 1
        %vm5096 = vcmp.eq.s32.totalorder %v5024, 1
        %vm5097 = vcmp.eq.s32.totalorder %v5025, 1
        %vm5098 = vcmp.eq.s32.totalorder %v5026, 1
        %vm5099 = vcmp.eq.s32.totalorder %v5027, 1
        %vm5100 = vcmp.eq.s32.totalorder %v5028, 1
        %vm5101 = vcmp.eq.s32.totalorder %v5029, 1
        %vm5102 = vcmp.eq.s32.totalorder %v5030, 1
        %vm5103 = vcmp.eq.s32.totalorder %v5031, 1
        %vm5104 = vcmp.eq.s32.totalorder %v5032, 1
        %vm5105 = vcmp.eq.s32.totalorder %v5033, 1
        %vm5106 = vcmp.eq.s32.totalorder %v5034, 1
        %vm5107 = vcmp.eq.s32.totalorder %v5035, 1
        %vm5108 = vcmp.eq.s32.totalorder %v5036, 1
        %vm5109 = vcmp.eq.s32.totalorder %v5037, 1
        %vm5110 = vcmp.eq.s32.totalorder %v5038, 1
        %vm5111 = vcmp.eq.s32.totalorder %v5039, 1
        %vm5112 = vcmp.eq.s32.totalorder %v5040, 1
        %vm5113 = vcmp.eq.s32.totalorder %v5041, 1
        %vm5114 = vcmp.eq.s32.totalorder %v5042, 1
        %vm5115 = vcmp.eq.s32.totalorder %v5043, 1
        %vm5116 = vcmp.eq.s32.totalorder %v5044, 1
        %vm5117 = vcmp.eq.s32.totalorder %v5045, 1
        %vm5118 = vcmp.eq.s32.totalorder %v5046, 1
        %vm5119 = vcmp.eq.s32.totalorder %v5047, 1
        %vm5120 = vcmp.eq.s32.totalorder %v5048, 1
        %vm5121 = vcmp.eq.s32.totalorder %v5049, 1
        %vm5122 = vcmp.eq.s32.totalorder %v5050, 1
        %vm5123 = vcmp.eq.s32.totalorder %v5051, 1
        %vm5124 = vcmp.eq.s32.totalorder %v5052, 1
        %vm5125 = vcmp.eq.s32.totalorder %v5053, 1
        %vm5126 = vcmp.eq.s32.totalorder %v5054, 1
        %vm5127 = vcmp.eq.s32.totalorder %v5055, 1
        %vm5128 = vcmp.eq.s32.totalorder %v5056, 1
        %vm5129 = vcmp.eq.s32.totalorder %v5057, 1
        %vm5130 = vcmp.eq.s32.totalorder %v5058, 1
        %vm5131 = vcmp.eq.s32.totalorder %v5059, 1
        %vm5132 = vcmp.eq.s32.totalorder %v5060, 1
        %vm5133 = vcmp.eq.s32.totalorder %v5061, 1
        %vm5134 = vcmp.eq.s32.totalorder %v5062, 1
        %v5135 = vsel %vm5063, %v4919, 0.0
        %v5136 = vsel %vm5064, %v4920, 0.0
        %v5137 = vsel %vm5065, %v4921, 0.0
        %v5138 = vsel %vm5066, %v4922, 0.0
        %v5139 = vsel %vm5067, %v4923, 0.0
        %v5140 = vsel %vm5068, %v4924, 0.0
        %v5141 = vsel %vm5069, %v4925, 0.0
        %v5142 = vsel %vm5070, %v4926, 0.0
        %v5143 = vsel %vm5071, %v4927, 0.0
        %v5144 = vsel %vm5072, %v4928, 0.0
        %v5145 = vsel %vm5073, %v4929, 0.0
        %v5146 = vsel %vm5074, %v4930, 0.0
        %v5147 = vsel %vm5075, %v4931, 0.0
        %v5148 = vsel %vm5076, %v4932, 0.0
        %v5149 = vsel %vm5077, %v4933, 0.0
        %v5150 = vsel %vm5078, %v4934, 0.0
        %v5151 = vsel %vm5079, %v4935, 0.0
        %v5152 = vsel %vm5080, %v4936, 0.0
        %v5153 = vsel %vm5081, %v4937, 0.0
        %v5154 = vsel %vm5082, %v4938, 0.0
        %v5155 = vsel %vm5083, %v4939, 0.0
        %v5156 = vsel %vm5084, %v4940, 0.0
        %v5157 = vsel %vm5085, %v4941, 0.0
        %v5158 = vsel %vm5086, %v4942, 0.0
        %v5159 = vsel %vm5087, %v4943, 0.0
        %v5160 = vsel %vm5088, %v4944, 0.0
        %v5161 = vsel %vm5089, %v4945, 0.0
        %v5162 = vsel %vm5090, %v4946, 0.0
        %v5163 = vsel %vm5091, %v4947, 0.0
        %v5164 = vsel %vm5092, %v4948, 0.0
        %v5165 = vsel %vm5093, %v4949, 0.0
        %v5166 = vsel %vm5094, %v4950, 0.0
        %v5167 = vsel %vm5095, %v4951, 0.0
        %v5168 = vsel %vm5096, %v4952, 0.0
        %v5169 = vsel %vm5097, %v4953, 0.0
        %v5170 = vsel %vm5098, %v4954, 0.0
        %v5171 = vsel %vm5099, %v4955, 0.0
        %v5172 = vsel %vm5100, %v4956, 0.0
        %v5173 = vsel %vm5101, %v4957, 0.0
        %v5174 = vsel %vm5102, %v4958, 0.0
        %v5175 = vsel %vm5103, %v4959, 0.0
        %v5176 = vsel %vm5104, %v4960, 0.0
        %v5177 = vsel %vm5105, %v4961, 0.0
        %v5178 = vsel %vm5106, %v4962, 0.0
        %v5179 = vsel %vm5107, %v4963, 0.0
        %v5180 = vsel %vm5108, %v4964, 0.0
        %v5181 = vsel %vm5109, %v4965, 0.0
        %v5182 = vsel %vm5110, %v4966, 0.0
        %v5183 = vsel %vm5111, %v4967, 0.0
        %v5184 = vsel %vm5112, %v4968, 0.0
        %v5185 = vsel %vm5113, %v4969, 0.0
        %v5186 = vsel %vm5114, %v4970, 0.0
        %v5187 = vsel %vm5115, %v4971, 0.0
        %v5188 = vsel %vm5116, %v4972, 0.0
        %v5189 = vsel %vm5117, %v4973, 0.0
        %v5190 = vsel %vm5118, %v4974, 0.0
        %v5191 = vsel %vm5119, %v4975, 0.0
        %v5192 = vsel %vm5120, %v4976, 0.0
        %v5193 = vsel %vm5121, %v4977, 0.0
        %v5194 = vsel %vm5122, %v4978, 0.0
        %v5195 = vsel %vm5123, %v4979, 0.0
        %v5196 = vsel %vm5124, %v4980, 0.0
        %v5197 = vsel %vm5125, %v4981, 0.0
        %v5198 = vsel %vm5126, %v4982, 0.0
        %v5199 = vsel %vm5127, %v4983, 0.0
        %v5200 = vsel %vm5128, %v4984, 0.0
        %v5201 = vsel %vm5129, %v4985, 0.0
        %v5202 = vsel %vm5130, %v4986, 0.0
        %v5203 = vsel %vm5131, %v4987, 0.0
        %v5204 = vsel %vm5132, %v4988, 0.0
        %v5205 = vsel %vm5133, %v4989, 0.0
        %v5206 = vsel %vm5134, %v4990, 0.0
        %v5207 = vpack.c.bf16 %v5136, %v5135
        %v5208 = vpack.c.bf16 %v5138, %v5137
        %v5209 = vpack.c.bf16 %v5140, %v5139
        %v5210 = vpack.c.bf16 %v5142, %v5141
        %v5211 = vpack.c.bf16 %v5144, %v5143
        %v5212 = vpack.c.bf16 %v5146, %v5145
        %v5213 = vpack.c.bf16 %v5148, %v5147
        %v5214 = vpack.c.bf16 %v5150, %v5149
        %v5215 = vpack.c.bf16 %v5152, %v5151
        %v5216 = vpack.c.bf16 %v5154, %v5153
        %v5217 = vpack.c.bf16 %v5156, %v5155
        %v5218 = vpack.c.bf16 %v5158, %v5157
        %v5219 = vpack.c.bf16 %v5160, %v5159
        %v5220 = vpack.c.bf16 %v5162, %v5161
        %v5221 = vpack.c.bf16 %v5164, %v5163
        %v5222 = vpack.c.bf16 %v5166, %v5165
        %v5223 = vpack.c.bf16 %v5168, %v5167
        %v5224 = vpack.c.bf16 %v5170, %v5169
        %v5225 = vpack.c.bf16 %v5172, %v5171
        %v5226 = vpack.c.bf16 %v5174, %v5173
        %v5227 = vpack.c.bf16 %v5176, %v5175
        %v5228 = vpack.c.bf16 %v5178, %v5177
        %v5229 = vpack.c.bf16 %v5180, %v5179
        %v5230 = vpack.c.bf16 %v5182, %v5181
        %v5231 = vpack.c.bf16 %v5184, %v5183
        %v5232 = vpack.c.bf16 %v5186, %v5185
        %v5233 = vpack.c.bf16 %v5188, %v5187
        %v5234 = vpack.c.bf16 %v5190, %v5189
        %v5235 = vpack.c.bf16 %v5192, %v5191
        %v5236 = vpack.c.bf16 %v5194, %v5193
        %v5237 = vpack.c.bf16 %v5196, %v5195
        %v5238 = vpack.c.bf16 %v5198, %v5197
        %v5239 = vpack.c.bf16 %v5200, %v5199
        %v5240 = vpack.c.bf16 %v5202, %v5201
        %v5241 = vpack.c.bf16 %v5204, %v5203
        %v5242 = vpack.c.bf16 %v5206, %v5205
        %v5243 = vld [vmem:[#allocation2 + $0x6a8] sm:$0xff]
        %v5244 = vld [vmem:[#allocation2 + $0x6b0] sm:$0xff]
        %v5245 = vld [vmem:[#allocation2 + $0x6b8] sm:$0xff]
        %v5246 = vld [vmem:[#allocation2 + $0x6c0] sm:$0xff]
        %v5247 = vld [vmem:[#allocation2 + $0x6c8] sm:$0xff]
        %v5248 = vld [vmem:[#allocation2 + $0x6d0] sm:$0xff]
        %v5249 = vld [vmem:[#allocation2 + $0x6d8] sm:$0xff]
        %v5250 = vld [vmem:[#allocation2 + $0x6e0] sm:$0xff]
        %v5251 = vld [vmem:[#allocation2 + $0x6e8] sm:$0xff]
        %v5252 = vld [vmem:[#allocation2 + $0x6f0] sm:$0xff]
        %v5253 = vld [vmem:[#allocation2 + $0x6f8] sm:$0xff]
        %v5254 = vld [vmem:[#allocation2 + $0x700] sm:$0xff]
        %v5255 = vld [vmem:[#allocation2 + $0x708] sm:$0xff]
        %v5256 = vld [vmem:[#allocation2 + $0x710] sm:$0xff]
        %v5257 = vld [vmem:[#allocation2 + $0x718] sm:$0xff]
        %v5258 = vld [vmem:[#allocation2 + $0x720] sm:$0xff]
        %v5259 = vld [vmem:[#allocation2 + $0x728] sm:$0xff]
        %v5260 = vld [vmem:[#allocation2 + $0x730] sm:$0xff]
        %v5261 = vld [vmem:[#allocation2 + $0x738] sm:$0xff]
        %v5262 = vld [vmem:[#allocation2 + $0x740] sm:$0xff]
        %v5263 = vld [vmem:[#allocation2 + $0x748] sm:$0xff]
        %v5264 = vld [vmem:[#allocation2 + $0x750] sm:$0xff]
        %v5265 = vld [vmem:[#allocation2 + $0x758] sm:$0xff]
        %v5266 = vld [vmem:[#allocation2 + $0x760] sm:$0xff]
        %v5267 = vld [vmem:[#allocation2 + $0x768] sm:$0xff]
        %v5268 = vld [vmem:[#allocation2 + $0x770] sm:$0xff]
        %v5269 = vld [vmem:[#allocation2 + $0x778] sm:$0xff]
        %v5270 = vld [vmem:[#allocation2 + $0x780] sm:$0xff]
        %v5271 = vld [vmem:[#allocation2 + $0x788] sm:$0xff]
        %v5272 = vld [vmem:[#allocation2 + $0x790] sm:$0xff]
        %v5273 = vld [vmem:[#allocation2 + $0x798] sm:$0xff]
        %v5274 = vld [vmem:[#allocation2 + $0x7a0] sm:$0xff]
        %v5275 = vld [vmem:[#allocation2 + $0x7a8] sm:$0xff]
        %v5276 = vld [vmem:[#allocation2 + $0x7b0] sm:$0xff]
        %v5277 = vld [vmem:[#allocation2 + $0x7b8] sm:$0xff]
        %v5278 = vld [vmem:[#allocation2 + $0x7c0] sm:$0xff]
        %v5279 = vld [vmem:[#allocation2 + $0x7c8] sm:$0xff]
        %v5280 = vld [vmem:[#allocation2 + $0x7d0] sm:$0xff]
        %v5281 = vld [vmem:[#allocation2 + $0x7d8] sm:$0xff]
        %v5282 = vld [vmem:[#allocation2 + $0x7e0] sm:$0xff]
        %v5283 = vld [vmem:[#allocation2 + $0x7e8] sm:$0xff]
        %v5284 = vld [vmem:[#allocation2 + $0x7f0] sm:$0xff]
        %v5285 = vld [vmem:[#allocation2 + $0x7f8] sm:$0xff]
        %v5286 = vld [vmem:[#allocation2 + $0x800] sm:$0xff]
        %v5287 = vld [vmem:[#allocation2 + $0x808] sm:$0xff]
        %v5288 = vld [vmem:[#allocation2 + $0x810] sm:$0xff]
        %v5289 = vld [vmem:[#allocation2 + $0x818] sm:$0xff]
        %v5290 = vld [vmem:[#allocation2 + $0x820] sm:$0xff]
        %v5291 = vld [vmem:[#allocation2 + $0x828] sm:$0xff]
        %v5292 = vld [vmem:[#allocation2 + $0x830] sm:$0xff]
        %v5293 = vld [vmem:[#allocation2 + $0x838] sm:$0xff]
        %v5294 = vld [vmem:[#allocation2 + $0x840] sm:$0xff]
        %v5295 = vld [vmem:[#allocation2 + $0x848] sm:$0xff]
        %v5296 = vld [vmem:[#allocation2 + $0x850] sm:$0xff]
        %v5297 = vld [vmem:[#allocation2 + $0x858] sm:$0xff]
        %v5298 = vld [vmem:[#allocation2 + $0x860] sm:$0xff]
        %v5299 = vld [vmem:[#allocation2 + $0x868] sm:$0xff]
        %v5300 = vld [vmem:[#allocation2 + $0x870] sm:$0xff]
        %v5301 = vld [vmem:[#allocation2 + $0x878] sm:$0xff]
        %v5302 = vld [vmem:[#allocation2 + $0x880] sm:$0xff]
        %v5303 = vld [vmem:[#allocation2 + $0x888] sm:$0xff]
        %v5304 = vld [vmem:[#allocation2 + $0x890] sm:$0xff]
        %v5305 = vld [vmem:[#allocation2 + $0x898] sm:$0xff]
        %v5306 = vld [vmem:[#allocation2 + $0x8a0] sm:$0xff]
        %v5307 = vld [vmem:[#allocation2 + $0x8a8] sm:$0xff]
        %v5308 = vld [vmem:[#allocation2 + $0x8b0] sm:$0xff]
        %v5309 = vld [vmem:[#allocation2 + $0x8b8] sm:$0xff]
        %v5310 = vld [vmem:[#allocation2 + $0x8c0] sm:$0xff]
        %v5311 = vld [vmem:[#allocation2 + $0x8c8] sm:$0xff]
        %v5312 = vld [vmem:[#allocation2 + $0x8d0] sm:$0xff]
        %v5313 = vld [vmem:[#allocation2 + $0x8d8] sm:$0xff]
        %v5314 = vld [vmem:[#allocation2 + $0x8e0] sm:$0xff]
        %v5315 = vsel %vm5063, %v5243, 0.0
        %v5316 = vsel %vm5064, %v5244, 0.0
        %v5317 = vsel %vm5065, %v5245, 0.0
        %v5318 = vsel %vm5066, %v5246, 0.0
        %v5319 = vsel %vm5067, %v5247, 0.0
        %v5320 = vsel %vm5068, %v5248, 0.0
        %v5321 = vsel %vm5069, %v5249, 0.0
        %v5322 = vsel %vm5070, %v5250, 0.0
        %v5323 = vsel %vm5071, %v5251, 0.0
        %v5324 = vsel %vm5072, %v5252, 0.0
        %v5325 = vsel %vm5073, %v5253, 0.0
        %v5326 = vsel %vm5074, %v5254, 0.0
        %v5327 = vsel %vm5075, %v5255, 0.0
        %v5328 = vsel %vm5076, %v5256, 0.0
        %v5329 = vsel %vm5077, %v5257, 0.0
        %v5330 = vsel %vm5078, %v5258, 0.0
        %v5331 = vsel %vm5079, %v5259, 0.0
        %v5332 = vsel %vm5080, %v5260, 0.0
        %v5333 = vsel %vm5081, %v5261, 0.0
        %v5334 = vsel %vm5082, %v5262, 0.0
        %v5335 = vsel %vm5083, %v5263, 0.0
        %v5336 = vsel %vm5084, %v5264, 0.0
        %v5337 = vsel %vm5085, %v5265, 0.0
        %v5338 = vsel %vm5086, %v5266, 0.0
        %v5339 = vsel %vm5087, %v5267, 0.0
        %v5340 = vsel %vm5088, %v5268, 0.0
        %v5341 = vsel %vm5089, %v5269, 0.0
        %v5342 = vsel %vm5090, %v5270, 0.0
        %v5343 = vsel %vm5091, %v5271, 0.0
        %v5344 = vsel %vm5092, %v5272, 0.0
        %v5345 = vsel %vm5093, %v5273, 0.0
        %v5346 = vsel %vm5094, %v5274, 0.0
        %v5347 = vsel %vm5095, %v5275, 0.0
        %v5348 = vsel %vm5096, %v5276, 0.0
        %v5349 = vsel %vm5097, %v5277, 0.0
        %v5350 = vsel %vm5098, %v5278, 0.0
        %v5351 = vsel %vm5099, %v5279, 0.0
        %v5352 = vsel %vm5100, %v5280, 0.0
        %v5353 = vsel %vm5101, %v5281, 0.0
        %v5354 = vsel %vm5102, %v5282, 0.0
        %v5355 = vsel %vm5103, %v5283, 0.0
        %v5356 = vsel %vm5104, %v5284, 0.0
        %v5357 = vsel %vm5105, %v5285, 0.0
        %v5358 = vsel %vm5106, %v5286, 0.0
        %v5359 = vsel %vm5107, %v5287, 0.0
        %v5360 = vsel %vm5108, %v5288, 0.0
        %v5361 = vsel %vm5109, %v5289, 0.0
        %v5362 = vsel %vm5110, %v5290, 0.0
        %v5363 = vsel %vm5111, %v5291, 0.0
        %v5364 = vsel %vm5112, %v5292, 0.0
        %v5365 = vsel %vm5113, %v5293, 0.0
        %v5366 = vsel %vm5114, %v5294, 0.0
        %v5367 = vsel %vm5115, %v5295, 0.0
        %v5368 = vsel %vm5116, %v5296, 0.0
        %v5369 = vsel %vm5117, %v5297, 0.0
        %v5370 = vsel %vm5118, %v5298, 0.0
        %v5371 = vsel %vm5119, %v5299, 0.0
        %v5372 = vsel %vm5120, %v5300, 0.0
        %v5373 = vsel %vm5121, %v5301, 0.0
        %v5374 = vsel %vm5122, %v5302, 0.0
        %v5375 = vsel %vm5123, %v5303, 0.0
        %v5376 = vsel %vm5124, %v5304, 0.0
        %v5377 = vsel %vm5125, %v5305, 0.0
        %v5378 = vsel %vm5126, %v5306, 0.0
        %v5379 = vsel %vm5127, %v5307, 0.0
        %v5380 = vsel %vm5128, %v5308, 0.0
        %v5381 = vsel %vm5129, %v5309, 0.0
        %v5382 = vsel %vm5130, %v5310, 0.0
        %v5383 = vsel %vm5131, %v5311, 0.0
        %v5384 = vsel %vm5132, %v5312, 0.0
        %v5385 = vsel %vm5133, %v5313, 0.0
        %v5386 = vsel %vm5134, %v5314, 0.0
        %v5387 = vpack.c.bf16 %v5316, %v5315
        %v5388 = vpack.c.bf16 %v5318, %v5317
        %v5389 = vpack.c.bf16 %v5320, %v5319
        %v5390 = vpack.c.bf16 %v5322, %v5321
        %v5391 = vpack.c.bf16 %v5324, %v5323
        %v5392 = vpack.c.bf16 %v5326, %v5325
        %v5393 = vpack.c.bf16 %v5328, %v5327
        %v5394 = vpack.c.bf16 %v5330, %v5329
        %v5395 = vpack.c.bf16 %v5332, %v5331
        %v5396 = vpack.c.bf16 %v5334, %v5333
        %v5397 = vpack.c.bf16 %v5336, %v5335
        %v5398 = vpack.c.bf16 %v5338, %v5337
        %v5399 = vpack.c.bf16 %v5340, %v5339
        %v5400 = vpack.c.bf16 %v5342, %v5341
        %v5401 = vpack.c.bf16 %v5344, %v5343
        %v5402 = vpack.c.bf16 %v5346, %v5345
        %v5403 = vpack.c.bf16 %v5348, %v5347
        %v5404 = vpack.c.bf16 %v5350, %v5349
        %v5405 = vpack.c.bf16 %v5352, %v5351
        %v5406 = vpack.c.bf16 %v5354, %v5353
        %v5407 = vpack.c.bf16 %v5356, %v5355
        %v5408 = vpack.c.bf16 %v5358, %v5357
        %v5409 = vpack.c.bf16 %v5360, %v5359
        %v5410 = vpack.c.bf16 %v5362, %v5361
        %v5411 = vpack.c.bf16 %v5364, %v5363
        %v5412 = vpack.c.bf16 %v5366, %v5365
        %v5413 = vpack.c.bf16 %v5368, %v5367
        %v5414 = vpack.c.bf16 %v5370, %v5369
        %v5415 = vpack.c.bf16 %v5372, %v5371
        %v5416 = vpack.c.bf16 %v5374, %v5373
        %v5417 = vpack.c.bf16 %v5376, %v5375
        %v5418 = vpack.c.bf16 %v5378, %v5377
        %v5419 = vpack.c.bf16 %v5380, %v5379
        %v5420 = vpack.c.bf16 %v5382, %v5381
        %v5421 = vpack.c.bf16 %v5384, %v5383
        %v5422 = vpack.c.bf16 %v5386, %v5385
        %v5423 = vld [vmem:[#allocation2 + $0x23f] sm:$0xff]
        %v5424 = vld [vmem:[#allocation2 + $0x247] sm:$0xff]
        %v5425 = vld [vmem:[#allocation2 + $0x24f] sm:$0xff]
        %v5426 = vld [vmem:[#allocation2 + $0x257] sm:$0xff]
        %v5427 = vld [vmem:[#allocation2 + $0x25f] sm:$0xff]
        %v5428 = vld [vmem:[#allocation2 + $0x267] sm:$0xff]
        %v5429 = vld [vmem:[#allocation2 + $0x26f] sm:$0xff]
        %v5430 = vld [vmem:[#allocation2 + $0x277] sm:$0xff]
        %v5431 = vld [vmem:[#allocation2 + $0x27f] sm:$0xff]
        %v5432 = vld [vmem:[#allocation2 + $0x287] sm:$0xff]
        %v5433 = vld [vmem:[#allocation2 + $0x28f] sm:$0xff]
        %v5434 = vld [vmem:[#allocation2 + $0x297] sm:$0xff]
        %v5435 = vld [vmem:[#allocation2 + $0x29f] sm:$0xff]
        %v5436 = vld [vmem:[#allocation2 + $0x2a7] sm:$0xff]
        %v5437 = vld [vmem:[#allocation2 + $0x2af] sm:$0xff]
        %v5438 = vld [vmem:[#allocation2 + $0x2b7] sm:$0xff]
        %v5439 = vld [vmem:[#allocation2 + $0x2bf] sm:$0xff]
        %v5440 = vld [vmem:[#allocation2 + $0x2c7] sm:$0xff]
        %v5441 = vld [vmem:[#allocation2 + $0x2cf] sm:$0xff]
        %v5442 = vld [vmem:[#allocation2 + $0x2d7] sm:$0xff]
        %v5443 = vld [vmem:[#allocation2 + $0x2df] sm:$0xff]
        %v5444 = vld [vmem:[#allocation2 + $0x2e7] sm:$0xff]
        %v5445 = vld [vmem:[#allocation2 + $0x2ef] sm:$0xff]
        %v5446 = vld [vmem:[#allocation2 + $0x2f7] sm:$0xff]
        %v5447 = vld [vmem:[#allocation2 + $0x2ff] sm:$0xff]
        %v5448 = vld [vmem:[#allocation2 + $0x307] sm:$0xff]
        %v5449 = vld [vmem:[#allocation2 + $0x30f] sm:$0xff]
        %v5450 = vld [vmem:[#allocation2 + $0x317] sm:$0xff]
        %v5451 = vld [vmem:[#allocation2 + $0x31f] sm:$0xff]
        %v5452 = vld [vmem:[#allocation2 + $0x327] sm:$0xff]
        %v5453 = vld [vmem:[#allocation2 + $0x32f] sm:$0xff]
        %v5454 = vld [vmem:[#allocation2 + $0x337] sm:$0xff]
        %v5455 = vld [vmem:[#allocation2 + $0x33f] sm:$0xff]
        %v5456 = vld [vmem:[#allocation2 + $0x347] sm:$0xff]
        %v5457 = vld [vmem:[#allocation2 + $0x34f] sm:$0xff]
        %v5458 = vld [vmem:[#allocation2 + $0x357] sm:$0xff]
        %v5459 = vld [vmem:[#allocation2 + $0x35f] sm:$0xff]
        %v5460 = vld [vmem:[#allocation2 + $0x367] sm:$0xff]
        %v5461 = vld [vmem:[#allocation2 + $0x36f] sm:$0xff]
        %v5462 = vld [vmem:[#allocation2 + $0x377] sm:$0xff]
        %v5463 = vld [vmem:[#allocation2 + $0x37f] sm:$0xff]
        %v5464 = vld [vmem:[#allocation2 + $0x387] sm:$0xff]
        %v5465 = vld [vmem:[#allocation2 + $0x38f] sm:$0xff]
        %v5466 = vld [vmem:[#allocation2 + $0x397] sm:$0xff]
        %v5467 = vld [vmem:[#allocation2 + $0x39f] sm:$0xff]
        %v5468 = vld [vmem:[#allocation2 + $0x3a7] sm:$0xff]
        %v5469 = vld [vmem:[#allocation2 + $0x3af] sm:$0xff]
        %v5470 = vld [vmem:[#allocation2 + $0x3b7] sm:$0xff]
        %v5471 = vld [vmem:[#allocation2 + $0x3bf] sm:$0xff]
        %v5472 = vld [vmem:[#allocation2 + $0x3c7] sm:$0xff]
        %v5473 = vld [vmem:[#allocation2 + $0x3cf] sm:$0xff]
        %v5474 = vld [vmem:[#allocation2 + $0x3d7] sm:$0xff]
        %v5475 = vld [vmem:[#allocation2 + $0x3df] sm:$0xff]
        %v5476 = vld [vmem:[#allocation2 + $0x3e7] sm:$0xff]
        %v5477 = vld [vmem:[#allocation2 + $0x3ef] sm:$0xff]
        %v5478 = vld [vmem:[#allocation2 + $0x3f7] sm:$0xff]
        %v5479 = vld [vmem:[#allocation2 + $0x3ff] sm:$0xff]
        %v5480 = vld [vmem:[#allocation2 + $0x407] sm:$0xff]
        %v5481 = vld [vmem:[#allocation2 + $0x40f] sm:$0xff]
        %v5482 = vld [vmem:[#allocation2 + $0x417] sm:$0xff]
        %v5483 = vld [vmem:[#allocation2 + $0x41f] sm:$0xff]
        %v5484 = vld [vmem:[#allocation2 + $0x427] sm:$0xff]
        %v5485 = vld [vmem:[#allocation2 + $0x42f] sm:$0xff]
        %v5486 = vld [vmem:[#allocation2 + $0x437] sm:$0xff]
        %v5487 = vld [vmem:[#allocation2 + $0x43f] sm:$0xff]
        %v5488 = vld [vmem:[#allocation2 + $0x447] sm:$0xff]
        %v5489 = vld [vmem:[#allocation2 + $0x44f] sm:$0xff]
        %v5490 = vld [vmem:[#allocation2 + $0x457] sm:$0xff]
        %v5491 = vld [vmem:[#allocation2 + $0x45f] sm:$0xff]
        %v5492 = vld [vmem:[#allocation2 + $0x467] sm:$0xff]
        %v5493 = vld [vmem:[#allocation2 + $0x46f] sm:$0xff]
        %v5494 = vld [vmem:[#allocation2 + $0x477] sm:$0xff]
        %v5495 = vsel %vm760, 1, 0
        %v5496 = vsel %vm761, 1, 0
        %v5497 = vsel %vm762, 1, 0
        %v5498 = vsel %vm763, 1, 0
        %v5499 = vsel %vm764, 1, 0
        %v5500 = vsel %vm765, 1, 0
        %v5501 = vsel %vm766, 1, 0
        %v5502 = vsel %vm767, 1, 0
        %v5503 = vsel %vm768, 1, 0
        %v5504 = vsel %vm769, 1, 0
        %v5505 = vsel %vm770, 1, 0
        %v5506 = vsel %vm771, 1, 0
        %v5507 = vsel %vm772, 1, 0
        %v5508 = vsel %vm773, 1, 0
        %v5509 = vsel %vm774, 1, 0
        %v5510 = vsel %vm775, 1, 0
        %v5511 = vsel %vm776, 1, 0
        %v5512 = vsel %vm777, 1, 0
        %v5513 = vsel %vm778, 1, 0
        %v5514 = vsel %vm779, 1, 0
        %v5515 = vsel %vm780, 1, 0
        %v5516 = vsel %vm781, 1, 0
        %v5517 = vsel %vm782, 1, 0
        %v5518 = vsel %vm783, 1, 0
        %v5519 = vsel %vm784, 1, 0
        %v5520 = vsel %vm785, 1, 0
        %v5521 = vsel %vm786, 1, 0
        %v5522 = vsel %vm787, 1, 0
        %v5523 = vsel %vm788, 1, 0
        %v5524 = vsel %vm789, 1, 0
        %v5525 = vsel %vm790, 1, 0
        %v5526 = vsel %vm791, 1, 0
        %v5527 = vsel %vm792, 1, 0
        %v5528 = vsel %vm793, 1, 0
        %v5529 = vsel %vm794, 1, 0
        %v5530 = vsel %vm795, 1, 0
        %v5531 = vsel %vm796, 1, 0
        %v5532 = vsel %vm797, 1, 0
        %v5533 = vsel %vm798, 1, 0
        %v5534 = vsel %vm799, 1, 0
        %v5535 = vsel %vm800, 1, 0
        %v5536 = vsel %vm801, 1, 0
        %v5537 = vsel %vm802, 1, 0
        %v5538 = vsel %vm803, 1, 0
        %v5539 = vsel %vm804, 1, 0
        %v5540 = vsel %vm805, 1, 0
        %v5541 = vsel %vm806, 1, 0
        %v5542 = vsel %vm807, 1, 0
        %v5543 = vsel %vm808, 1, 0
        %v5544 = vsel %vm809, 1, 0
        %v5545 = vsel %vm810, 1, 0
        %v5546 = vsel %vm811, 1, 0
        %v5547 = vsel %vm812, 1, 0
        %v5548 = vsel %vm813, 1, 0
        %v5549 = vsel %vm814, 1, 0
        %v5550 = vsel %vm815, 1, 0
        %v5551 = vsel %vm816, 1, 0
        %v5552 = vsel %vm817, 1, 0
        %v5553 = vsel %vm818, 1, 0
        %v5554 = vsel %vm819, 1, 0
        %v5555 = vsel %vm820, 1, 0
        %v5556 = vsel %vm821, 1, 0
        %v5557 = vsel %vm822, 1, 0
        %v5558 = vsel %vm823, 1, 0
        %v5559 = vsel %vm824, 1, 0
        %v5560 = vsel %vm825, 1, 0
        %v5561 = vsel %vm826, 1, 0
        %v5562 = vsel %vm827, 1, 0
        %v5563 = vsel %vm828, 1, 0
        %v5564 = vsel %vm829, 1, 0
        %v5565 = vsel %vm830, 1, 0
        %v5566 = vsel %vm831, 1, 0
        %vm5567 = vcmp.eq.s32.totalorder %v5495, 1
        %vm5568 = vcmp.eq.s32.totalorder %v5496, 1
        %vm5569 = vcmp.eq.s32.totalorder %v5497, 1
        %vm5570 = vcmp.eq.s32.totalorder %v5498, 1
        %vm5571 = vcmp.eq.s32.totalorder %v5499, 1
        %vm5572 = vcmp.eq.s32.totalorder %v5500, 1
        %vm5573 = vcmp.eq.s32.totalorder %v5501, 1
        %vm5574 = vcmp.eq.s32.totalorder %v5502, 1
        %vm5575 = vcmp.eq.s32.totalorder %v5503, 1
        %vm5576 = vcmp.eq.s32.totalorder %v5504, 1
        %vm5577 = vcmp.eq.s32.totalorder %v5505, 1
        %vm5578 = vcmp.eq.s32.totalorder %v5506, 1
        %vm5579 = vcmp.eq.s32.totalorder %v5507, 1
        %vm5580 = vcmp.eq.s32.totalorder %v5508, 1
        %vm5581 = vcmp.eq.s32.totalorder %v5509, 1
        %vm5582 = vcmp.eq.s32.totalorder %v5510, 1
        %vm5583 = vcmp.eq.s32.totalorder %v5511, 1
        %vm5584 = vcmp.eq.s32.totalorder %v5512, 1
        %vm5585 = vcmp.eq.s32.totalorder %v5513, 1
        %vm5586 = vcmp.eq.s32.totalorder %v5514, 1
        %vm5587 = vcmp.eq.s32.totalorder %v5515, 1
        %vm5588 = vcmp.eq.s32.totalorder %v5516, 1
        %vm5589 = vcmp.eq.s32.totalorder %v5517, 1
        %vm5590 = vcmp.eq.s32.totalorder %v5518, 1
        %vm5591 = vcmp.eq.s32.totalorder %v5519, 1
        %vm5592 = vcmp.eq.s32.totalorder %v5520, 1
        %vm5593 = vcmp.eq.s32.totalorder %v5521, 1
        %vm5594 = vcmp.eq.s32.totalorder %v5522, 1
        %vm5595 = vcmp.eq.s32.totalorder %v5523, 1
        %vm5596 = vcmp.eq.s32.totalorder %v5524, 1
        %vm5597 = vcmp.eq.s32.totalorder %v5525, 1
        %vm5598 = vcmp.eq.s32.totalorder %v5526, 1
        %vm5599 = vcmp.eq.s32.totalorder %v5527, 1
        %vm5600 = vcmp.eq.s32.totalorder %v5528, 1
        %vm5601 = vcmp.eq.s32.totalorder %v5529, 1
        %vm5602 = vcmp.eq.s32.totalorder %v5530, 1
        %vm5603 = vcmp.eq.s32.totalorder %v5531, 1
        %vm5604 = vcmp.eq.s32.totalorder %v5532, 1
        %vm5605 = vcmp.eq.s32.totalorder %v5533, 1
        %vm5606 = vcmp.eq.s32.totalorder %v5534, 1
        %vm5607 = vcmp.eq.s32.totalorder %v5535, 1
        %vm5608 = vcmp.eq.s32.totalorder %v5536, 1
        %vm5609 = vcmp.eq.s32.totalorder %v5537, 1
        %vm5610 = vcmp.eq.s32.totalorder %v5538, 1
        %vm5611 = vcmp.eq.s32.totalorder %v5539, 1
        %vm5612 = vcmp.eq.s32.totalorder %v5540, 1
        %vm5613 = vcmp.eq.s32.totalorder %v5541, 1
        %vm5614 = vcmp.eq.s32.totalorder %v5542, 1
        %vm5615 = vcmp.eq.s32.totalorder %v5543, 1
        %vm5616 = vcmp.eq.s32.totalorder %v5544, 1
        %vm5617 = vcmp.eq.s32.totalorder %v5545, 1
        %vm5618 = vcmp.eq.s32.totalorder %v5546, 1
        %vm5619 = vcmp.eq.s32.totalorder %v5547, 1
        %vm5620 = vcmp.eq.s32.totalorder %v5548, 1
        %vm5621 = vcmp.eq.s32.totalorder %v5549, 1
        %vm5622 = vcmp.eq.s32.totalorder %v5550, 1
        %vm5623 = vcmp.eq.s32.totalorder %v5551, 1
        %vm5624 = vcmp.eq.s32.totalorder %v5552, 1
        %vm5625 = vcmp.eq.s32.totalorder %v5553, 1
        %vm5626 = vcmp.eq.s32.totalorder %v5554, 1
        %vm5627 = vcmp.eq.s32.totalorder %v5555, 1
        %vm5628 = vcmp.eq.s32.totalorder %v5556, 1
        %vm5629 = vcmp.eq.s32.totalorder %v5557, 1
        %vm5630 = vcmp.eq.s32.totalorder %v5558, 1
        %vm5631 = vcmp.eq.s32.totalorder %v5559, 1
        %vm5632 = vcmp.eq.s32.totalorder %v5560, 1
        %vm5633 = vcmp.eq.s32.totalorder %v5561, 1
        %vm5634 = vcmp.eq.s32.totalorder %v5562, 1
        %vm5635 = vcmp.eq.s32.totalorder %v5563, 1
        %vm5636 = vcmp.eq.s32.totalorder %v5564, 1
        %vm5637 = vcmp.eq.s32.totalorder %v5565, 1
        %vm5638 = vcmp.eq.s32.totalorder %v5566, 1
        %v5639 = vsel %vm5567, %v5423, 0.0
        %v5640 = vsel %vm5568, %v5424, 0.0
        %v5641 = vsel %vm5569, %v5425, 0.0
        %v5642 = vsel %vm5570, %v5426, 0.0
        %v5643 = vsel %vm5571, %v5427, 0.0
        %v5644 = vsel %vm5572, %v5428, 0.0
        %v5645 = vsel %vm5573, %v5429, 0.0
        %v5646 = vsel %vm5574, %v5430, 0.0
        %v5647 = vsel %vm5575, %v5431, 0.0
        %v5648 = vsel %vm5576, %v5432, 0.0
        %v5649 = vsel %vm5577, %v5433, 0.0
        %v5650 = vsel %vm5578, %v5434, 0.0
        %v5651 = vsel %vm5579, %v5435, 0.0
        %v5652 = vsel %vm5580, %v5436, 0.0
        %v5653 = vsel %vm5581, %v5437, 0.0
        %v5654 = vsel %vm5582, %v5438, 0.0
        %v5655 = vsel %vm5583, %v5439, 0.0
        %v5656 = vsel %vm5584, %v5440, 0.0
        %v5657 = vsel %vm5585, %v5441, 0.0
        %v5658 = vsel %vm5586, %v5442, 0.0
        %v5659 = vsel %vm5587, %v5443, 0.0
        %v5660 = vsel %vm5588, %v5444, 0.0
        %v5661 = vsel %vm5589, %v5445, 0.0
        %v5662 = vsel %vm5590, %v5446, 0.0
        %v5663 = vsel %vm5591, %v5447, 0.0
        %v5664 = vsel %vm5592, %v5448, 0.0
        %v5665 = vsel %vm5593, %v5449, 0.0
        %v5666 = vsel %vm5594, %v5450, 0.0
        %v5667 = vsel %vm5595, %v5451, 0.0
        %v5668 = vsel %vm5596, %v5452, 0.0
        %v5669 = vsel %vm5597, %v5453, 0.0
        %v5670 = vsel %vm5598, %v5454, 0.0
        %v5671 = vsel %vm5599, %v5455, 0.0
        %v5672 = vsel %vm5600, %v5456, 0.0
        %v5673 = vsel %vm5601, %v5457, 0.0
        %v5674 = vsel %vm5602, %v5458, 0.0
        %v5675 = vsel %vm5603, %v5459, 0.0
        %v5676 = vsel %vm5604, %v5460, 0.0
        %v5677 = vsel %vm5605, %v5461, 0.0
        %v5678 = vsel %vm5606, %v5462, 0.0
        %v5679 = vsel %vm5607, %v5463, 0.0
        %v5680 = vsel %vm5608, %v5464, 0.0
        %v5681 = vsel %vm5609, %v5465, 0.0
        %v5682 = vsel %vm5610, %v5466, 0.0
        %v5683 = vsel %vm5611, %v5467, 0.0
        %v5684 = vsel %vm5612, %v5468, 0.0
        %v5685 = vsel %vm5613, %v5469, 0.0
        %v5686 = vsel %vm5614, %v5470, 0.0
        %v5687 = vsel %vm5615, %v5471, 0.0
        %v5688 = vsel %vm5616, %v5472, 0.0
        %v5689 = vsel %vm5617, %v5473, 0.0
        %v5690 = vsel %vm5618, %v5474, 0.0
        %v5691 = vsel %vm5619, %v5475, 0.0
        %v5692 = vsel %vm5620, %v5476, 0.0
        %v5693 = vsel %vm5621, %v5477, 0.0
        %v5694 = vsel %vm5622, %v5478, 0.0
        %v5695 = vsel %vm5623, %v5479, 0.0
        %v5696 = vsel %vm5624, %v5480, 0.0
        %v5697 = vsel %vm5625, %v5481, 0.0
        %v5698 = vsel %vm5626, %v5482, 0.0
        %v5699 = vsel %vm5627, %v5483, 0.0
        %v5700 = vsel %vm5628, %v5484, 0.0
        %v5701 = vsel %vm5629, %v5485, 0.0
        %v5702 = vsel %vm5630, %v5486, 0.0
        %v5703 = vsel %vm5631, %v5487, 0.0
        %v5704 = vsel %vm5632, %v5488, 0.0
        %v5705 = vsel %vm5633, %v5489, 0.0
        %v5706 = vsel %vm5634, %v5490, 0.0
        %v5707 = vsel %vm5635, %v5491, 0.0
        %v5708 = vsel %vm5636, %v5492, 0.0
        %v5709 = vsel %vm5637, %v5493, 0.0
        %v5710 = vsel %vm5638, %v5494, 0.0
        %v5711 = vpack.c.bf16 %v5640, %v5639
        %v5712 = vpack.c.bf16 %v5642, %v5641
        %v5713 = vpack.c.bf16 %v5644, %v5643
        %v5714 = vpack.c.bf16 %v5646, %v5645
        %v5715 = vpack.c.bf16 %v5648, %v5647
        %v5716 = vpack.c.bf16 %v5650, %v5649
        %v5717 = vpack.c.bf16 %v5652, %v5651
        %v5718 = vpack.c.bf16 %v5654, %v5653
        %v5719 = vpack.c.bf16 %v5656, %v5655
        %v5720 = vpack.c.bf16 %v5658, %v5657
        %v5721 = vpack.c.bf16 %v5660, %v5659
        %v5722 = vpack.c.bf16 %v5662, %v5661
        %v5723 = vpack.c.bf16 %v5664, %v5663
        %v5724 = vpack.c.bf16 %v5666, %v5665
        %v5725 = vpack.c.bf16 %v5668, %v5667
        %v5726 = vpack.c.bf16 %v5670, %v5669
        %v5727 = vpack.c.bf16 %v5672, %v5671
        %v5728 = vpack.c.bf16 %v5674, %v5673
        %v5729 = vpack.c.bf16 %v5676, %v5675
        %v5730 = vpack.c.bf16 %v5678, %v5677
        %v5731 = vpack.c.bf16 %v5680, %v5679
        %v5732 = vpack.c.bf16 %v5682, %v5681
        %v5733 = vpack.c.bf16 %v5684, %v5683
        %v5734 = vpack.c.bf16 %v5686, %v5685
        %v5735 = vpack.c.bf16 %v5688, %v5687
        %v5736 = vpack.c.bf16 %v5690, %v5689
        %v5737 = vpack.c.bf16 %v5692, %v5691
        %v5738 = vpack.c.bf16 %v5694, %v5693
        %v5739 = vpack.c.bf16 %v5696, %v5695
        %v5740 = vpack.c.bf16 %v5698, %v5697
        %v5741 = vpack.c.bf16 %v5700, %v5699
        %v5742 = vpack.c.bf16 %v5702, %v5701
        %v5743 = vpack.c.bf16 %v5704, %v5703
        %v5744 = vpack.c.bf16 %v5706, %v5705
        %v5745 = vpack.c.bf16 %v5708, %v5707
        %v5746 = vpack.c.bf16 %v5710, %v5709
        %v5747 = vld [vmem:[#allocation2] sm:$0xff]
        %v5748 = vld [vmem:[#allocation2 + $0x8] sm:$0xff]
        %v5749 = vld [vmem:[#allocation2 + $0x10] sm:$0xff]
        %v5750 = vld [vmem:[#allocation2 + $0x18] sm:$0xff]
        %v5751 = vld [vmem:[#allocation2 + $0x20] sm:$0xff]
        %v5752 = vld [vmem:[#allocation2 + $0x28] sm:$0xff]
        %v5753 = vld [vmem:[#allocation2 + $0x30] sm:$0xff]
        %v5754 = vld [vmem:[#allocation2 + $0x38] sm:$0xff]
        %v5755 = vld [vmem:[#allocation2 + $0x40] sm:$0xff]
        %v5756 = vld [vmem:[#allocation2 + $0x48] sm:$0xff]
        %v5757 = vld [vmem:[#allocation2 + $0x50] sm:$0xff]
        %v5758 = vld [vmem:[#allocation2 + $0x58] sm:$0xff]
        %v5759 = vld [vmem:[#allocation2 + $0x60] sm:$0xff]
        %v5760 = vld [vmem:[#allocation2 + $0x68] sm:$0xff]
        %v5761 = vld [vmem:[#allocation2 + $0x70] sm:$0xff]
        %v5762 = vld [vmem:[#allocation2 + $0x78] sm:$0xff]
        %v5763 = vld [vmem:[#allocation2 + $0x80] sm:$0xff]
        %v5764 = vld [vmem:[#allocation2 + $0x88] sm:$0xff]
        %v5765 = vld [vmem:[#allocation2 + $0x90] sm:$0xff]
        %v5766 = vld [vmem:[#allocation2 + $0x98] sm:$0xff]
        %v5767 = vld [vmem:[#allocation2 + $0xa0] sm:$0xff]
        %v5768 = vld [vmem:[#allocation2 + $0xa8] sm:$0xff]
        %v5769 = vld [vmem:[#allocation2 + $0xb0] sm:$0xff]
        %v5770 = vld [vmem:[#allocation2 + $0xb8] sm:$0xff]
        %v5771 = vld [vmem:[#allocation2 + $0xc0] sm:$0xff]
        %v5772 = vld [vmem:[#allocation2 + $0xc8] sm:$0xff]
        %v5773 = vld [vmem:[#allocation2 + $0xd0] sm:$0xff]
        %v5774 = vld [vmem:[#allocation2 + $0xd8] sm:$0xff]
        %v5775 = vld [vmem:[#allocation2 + $0xe0] sm:$0xff]
        %v5776 = vld [vmem:[#allocation2 + $0xe8] sm:$0xff]
        %v5777 = vld [vmem:[#allocation2 + $0xf0] sm:$0xff]
        %v5778 = vld [vmem:[#allocation2 + $0xf8] sm:$0xff]
        %v5779 = vld [vmem:[#allocation2 + $0x100] sm:$0xff]
        %v5780 = vld [vmem:[#allocation2 + $0x108] sm:$0xff]
        %v5781 = vld [vmem:[#allocation2 + $0x110] sm:$0xff]
        %v5782 = vld [vmem:[#allocation2 + $0x118] sm:$0xff]
        %v5783 = vld [vmem:[#allocation2 + $0x120] sm:$0xff]
        %v5784 = vld [vmem:[#allocation2 + $0x128] sm:$0xff]
        %v5785 = vld [vmem:[#allocation2 + $0x130] sm:$0xff]
        %v5786 = vld [vmem:[#allocation2 + $0x138] sm:$0xff]
        %v5787 = vld [vmem:[#allocation2 + $0x140] sm:$0xff]
        %v5788 = vld [vmem:[#allocation2 + $0x148] sm:$0xff]
        %v5789 = vld [vmem:[#allocation2 + $0x150] sm:$0xff]
        %v5790 = vld [vmem:[#allocation2 + $0x158] sm:$0xff]
        %v5791 = vld [vmem:[#allocation2 + $0x160] sm:$0xff]
        %v5792 = vld [vmem:[#allocation2 + $0x168] sm:$0xff]
        %v5793 = vld [vmem:[#allocation2 + $0x170] sm:$0xff]
        %v5794 = vld [vmem:[#allocation2 + $0x178] sm:$0xff]
        %v5795 = vld [vmem:[#allocation2 + $0x180] sm:$0xff]
        %v5796 = vld [vmem:[#allocation2 + $0x188] sm:$0xff]
        %v5797 = vld [vmem:[#allocation2 + $0x190] sm:$0xff]
        %v5798 = vld [vmem:[#allocation2 + $0x198] sm:$0xff]
        %v5799 = vld [vmem:[#allocation2 + $0x1a0] sm:$0xff]
        %v5800 = vld [vmem:[#allocation2 + $0x1a8] sm:$0xff]
        %v5801 = vld [vmem:[#allocation2 + $0x1b0] sm:$0xff]
        %v5802 = vld [vmem:[#allocation2 + $0x1b8] sm:$0xff]
        %v5803 = vld [vmem:[#allocation2 + $0x1c0] sm:$0xff]
        %v5804 = vld [vmem:[#allocation2 + $0x1c8] sm:$0xff]
        %v5805 = vld [vmem:[#allocation2 + $0x1d0] sm:$0xff]
        %v5806 = vld [vmem:[#allocation2 + $0x1d8] sm:$0xff]
        %v5807 = vld [vmem:[#allocation2 + $0x1e0] sm:$0xff]
        %v5808 = vld [vmem:[#allocation2 + $0x1e8] sm:$0xff]
        %v5809 = vld [vmem:[#allocation2 + $0x1f0] sm:$0xff]
        %v5810 = vld [vmem:[#allocation2 + $0x1f8] sm:$0xff]
        %v5811 = vld [vmem:[#allocation2 + $0x200] sm:$0xff]
        %v5812 = vld [vmem:[#allocation2 + $0x208] sm:$0xff]
        %v5813 = vld [vmem:[#allocation2 + $0x210] sm:$0xff]
        %v5814 = vld [vmem:[#allocation2 + $0x218] sm:$0xff]
        %v5815 = vld [vmem:[#allocation2 + $0x220] sm:$0xff]
        %v5816 = vld [vmem:[#allocation2 + $0x228] sm:$0xff]
        %v5817 = vld [vmem:[#allocation2 + $0x230] sm:$0xff]
        %v5818 = vld [vmem:[#allocation2 + $0x238] sm:$0xff]
        %v5819 = vpack.c.bf16 %v5748, %v5747
        %v5820 = vpack.c.bf16 %v5750, %v5749
        %v5821 = vpack.c.bf16 %v5752, %v5751
        %v5822 = vpack.c.bf16 %v5754, %v5753
        %v5823 = vpack.c.bf16 %v5756, %v5755
        %v5824 = vpack.c.bf16 %v5758, %v5757
        %v5825 = vpack.c.bf16 %v5760, %v5759
        %v5826 = vpack.c.bf16 %v5762, %v5761
        %v5827 = vpack.c.bf16 %v5764, %v5763
        %v5828 = vpack.c.bf16 %v5766, %v5765
        %v5829 = vpack.c.bf16 %v5768, %v5767
        %v5830 = vpack.c.bf16 %v5770, %v5769
        %v5831 = vpack.c.bf16 %v5772, %v5771
        %v5832 = vpack.c.bf16 %v5774, %v5773
        %v5833 = vpack.c.bf16 %v5776, %v5775
        %v5834 = vpack.c.bf16 %v5778, %v5777
        %v5835 = vpack.c.bf16 %v5780, %v5779
        %v5836 = vpack.c.bf16 %v5782, %v5781
        %v5837 = vpack.c.bf16 %v5784, %v5783
        %v5838 = vpack.c.bf16 %v5786, %v5785
        %v5839 = vpack.c.bf16 %v5788, %v5787
        %v5840 = vpack.c.bf16 %v5790, %v5789
        %v5841 = vpack.c.bf16 %v5792, %v5791
        %v5842 = vpack.c.bf16 %v5794, %v5793
        %v5843 = vpack.c.bf16 %v5796, %v5795
        %v5844 = vpack.c.bf16 %v5798, %v5797
        %v5845 = vpack.c.bf16 %v5800, %v5799
        %v5846 = vpack.c.bf16 %v5802, %v5801
        %v5847 = vpack.c.bf16 %v5804, %v5803
        %v5848 = vpack.c.bf16 %v5806, %v5805
        %v5849 = vpack.c.bf16 %v5808, %v5807
        %v5850 = vpack.c.bf16 %v5810, %v5809
        %v5851 = vpack.c.bf16 %v5812, %v5811
        %v5852 = vpack.c.bf16 %v5814, %v5813
        %v5853 = vpack.c.bf16 %v5816, %v5815
        %v5854 = vpack.c.bf16 %v5818, %v5817
        %v5855 = vld [vmem:[#allocation2 + $0x240] sm:$0xff]
        %v5856 = vld [vmem:[#allocation2 + $0x248] sm:$0xff]
        %v5857 = vld [vmem:[#allocation2 + $0x250] sm:$0xff]
        %v5858 = vld [vmem:[#allocation2 + $0x258] sm:$0xff]
        %v5859 = vld [vmem:[#allocation2 + $0x260] sm:$0xff]
        %v5860 = vld [vmem:[#allocation2 + $0x268] sm:$0xff]
        %v5861 = vld [vmem:[#allocation2 + $0x270] sm:$0xff]
        %v5862 = vld [vmem:[#allocation2 + $0x278] sm:$0xff]
        %v5863 = vld [vmem:[#allocation2 + $0x280] sm:$0xff]
        %v5864 = vld [vmem:[#allocation2 + $0x288] sm:$0xff]
        %v5865 = vld [vmem:[#allocation2 + $0x290] sm:$0xff]
        %v5866 = vld [vmem:[#allocation2 + $0x298] sm:$0xff]
        %v5867 = vld [vmem:[#allocation2 + $0x2a0] sm:$0xff]
        %v5868 = vld [vmem:[#allocation2 + $0x2a8] sm:$0xff]
        %v5869 = vld [vmem:[#allocation2 + $0x2b0] sm:$0xff]
        %v5870 = vld [vmem:[#allocation2 + $0x2b8] sm:$0xff]
        %v5871 = vld [vmem:[#allocation2 + $0x2c0] sm:$0xff]
        %v5872 = vld [vmem:[#allocation2 + $0x2c8] sm:$0xff]
        %v5873 = vld [vmem:[#allocation2 + $0x2d0] sm:$0xff]
        %v5874 = vld [vmem:[#allocation2 + $0x2d8] sm:$0xff]
        %v5875 = vld [vmem:[#allocation2 + $0x2e0] sm:$0xff]
        %v5876 = vld [vmem:[#allocation2 + $0x2e8] sm:$0xff]
        %v5877 = vld [vmem:[#allocation2 + $0x2f0] sm:$0xff]
        %v5878 = vld [vmem:[#allocation2 + $0x2f8] sm:$0xff]
        %v5879 = vld [vmem:[#allocation2 + $0x300] sm:$0xff]
        %v5880 = vld [vmem:[#allocation2 + $0x308] sm:$0xff]
        %v5881 = vld [vmem:[#allocation2 + $0x310] sm:$0xff]
        %v5882 = vld [vmem:[#allocation2 + $0x318] sm:$0xff]
        %v5883 = vld [vmem:[#allocation2 + $0x320] sm:$0xff]
        %v5884 = vld [vmem:[#allocation2 + $0x328] sm:$0xff]
        %v5885 = vld [vmem:[#allocation2 + $0x330] sm:$0xff]
        %v5886 = vld [vmem:[#allocation2 + $0x338] sm:$0xff]
        %v5887 = vld [vmem:[#allocation2 + $0x340] sm:$0xff]
        %v5888 = vld [vmem:[#allocation2 + $0x348] sm:$0xff]
        %v5889 = vld [vmem:[#allocation2 + $0x350] sm:$0xff]
        %v5890 = vld [vmem:[#allocation2 + $0x358] sm:$0xff]
        %v5891 = vld [vmem:[#allocation2 + $0x360] sm:$0xff]
        %v5892 = vld [vmem:[#allocation2 + $0x368] sm:$0xff]
        %v5893 = vld [vmem:[#allocation2 + $0x370] sm:$0xff]
        %v5894 = vld [vmem:[#allocation2 + $0x378] sm:$0xff]
        %v5895 = vld [vmem:[#allocation2 + $0x380] sm:$0xff]
        %v5896 = vld [vmem:[#allocation2 + $0x388] sm:$0xff]
        %v5897 = vld [vmem:[#allocation2 + $0x390] sm:$0xff]
        %v5898 = vld [vmem:[#allocation2 + $0x398] sm:$0xff]
        %v5899 = vld [vmem:[#allocation2 + $0x3a0] sm:$0xff]
        %v5900 = vld [vmem:[#allocation2 + $0x3a8] sm:$0xff]
        %v5901 = vld [vmem:[#allocation2 + $0x3b0] sm:$0xff]
        %v5902 = vld [vmem:[#allocation2 + $0x3b8] sm:$0xff]
        %v5903 = vld [vmem:[#allocation2 + $0x3c0] sm:$0xff]
        %v5904 = vld [vmem:[#allocation2 + $0x3c8] sm:$0xff]
        %v5905 = vld [vmem:[#allocation2 + $0x3d0] sm:$0xff]
        %v5906 = vld [vmem:[#allocation2 + $0x3d8] sm:$0xff]
        %v5907 = vld [vmem:[#allocation2 + $0x3e0] sm:$0xff]
        %v5908 = vld [vmem:[#allocation2 + $0x3e8] sm:$0xff]
        %v5909 = vld [vmem:[#allocation2 + $0x3f0] sm:$0xff]
        %v5910 = vld [vmem:[#allocation2 + $0x3f8] sm:$0xff]
        %v5911 = vld [vmem:[#allocation2 + $0x400] sm:$0xff]
        %v5912 = vld [vmem:[#allocation2 + $0x408] sm:$0xff]
        %v5913 = vld [vmem:[#allocation2 + $0x410] sm:$0xff]
        %v5914 = vld [vmem:[#allocation2 + $0x418] sm:$0xff]
        %v5915 = vld [vmem:[#allocation2 + $0x420] sm:$0xff]
        %v5916 = vld [vmem:[#allocation2 + $0x428] sm:$0xff]
        %v5917 = vld [vmem:[#allocation2 + $0x430] sm:$0xff]
        %v5918 = vld [vmem:[#allocation2 + $0x438] sm:$0xff]
        %v5919 = vld [vmem:[#allocation2 + $0x440] sm:$0xff]
        %v5920 = vld [vmem:[#allocation2 + $0x448] sm:$0xff]
        %v5921 = vld [vmem:[#allocation2 + $0x450] sm:$0xff]
        %v5922 = vld [vmem:[#allocation2 + $0x458] sm:$0xff]
        %v5923 = vld [vmem:[#allocation2 + $0x460] sm:$0xff]
        %v5924 = vpack.c.bf16 %v5856, %v5855
        %v5925 = vpack.c.bf16 %v5858, %v5857
        %v5926 = vpack.c.bf16 %v5860, %v5859
        %v5927 = vpack.c.bf16 %v5862, %v5861
        %v5928 = vpack.c.bf16 %v5864, %v5863
        %v5929 = vpack.c.bf16 %v5866, %v5865
        %v5930 = vpack.c.bf16 %v5868, %v5867
        %v5931 = vpack.c.bf16 %v5870, %v5869
        %v5932 = vpack.c.bf16 %v5872, %v5871
        %v5933 = vpack.c.bf16 %v5874, %v5873
        %v5934 = vpack.c.bf16 %v5876, %v5875
        %v5935 = vpack.c.bf16 %v5878, %v5877
        %v5936 = vpack.c.bf16 %v5880, %v5879
        %v5937 = vpack.c.bf16 %v5882, %v5881
        %v5938 = vpack.c.bf16 %v5884, %v5883
        %v5939 = vpack.c.bf16 %v5886, %v5885
        %v5940 = vpack.c.bf16 %v5888, %v5887
        %v5941 = vpack.c.bf16 %v5890, %v5889
        %v5942 = vpack.c.bf16 %v5892, %v5891
        %v5943 = vpack.c.bf16 %v5894, %v5893
        %v5944 = vpack.c.bf16 %v5896, %v5895
        %v5945 = vpack.c.bf16 %v5898, %v5897
        %v5946 = vpack.c.bf16 %v5900, %v5899
        %v5947 = vpack.c.bf16 %v5902, %v5901
        %v5948 = vpack.c.bf16 %v5904, %v5903
        %v5949 = vpack.c.bf16 %v5906, %v5905
        %v5950 = vpack.c.bf16 %v5908, %v5907
        %v5951 = vpack.c.bf16 %v5910, %v5909
        %v5952 = vpack.c.bf16 %v5912, %v5911
        %v5953 = vpack.c.bf16 %v5914, %v5913
        %v5954 = vpack.c.bf16 %v5916, %v5915
        %v5955 = vpack.c.bf16 %v5918, %v5917
        %v5956 = vpack.c.bf16 %v5920, %v5919
        %v5957 = vpack.c.bf16 %v5922, %v5921
        %v5958 = vpack.c.bf16 %v4919, %v5923
        %v5959 = vpack.c.bf16 %v4921, %v4920
        %v5960 = vld [vmem:[#allocation2 + $0x8e7] sm:$0xff]
        %v5961 = vld [vmem:[#allocation2 + $0x8ef] sm:$0xff]
        %v5962 = vld [vmem:[#allocation2 + $0x8f7] sm:$0xff]
        %v5963 = vsel %vm5567, %v4598, 0.0
        %v5964 = vsel %vm5568, %v4599, 0.0
        %v5965 = vsel %vm5569, %v4600, 0.0
        %v5966 = vsel %vm5570, %v4601, 0.0
        %v5967 = vsel %vm5571, %v4602, 0.0
        %v5968 = vsel %vm5572, %v4603, 0.0
        %v5969 = vsel %vm5573, %v4604, 0.0
        %v5970 = vsel %vm5574, %v4605, 0.0
        %v5971 = vsel %vm5575, %v4606, 0.0
        %v5972 = vsel %vm5576, %v4607, 0.0
        %v5973 = vsel %vm5577, %v4608, 0.0
        %v5974 = vsel %vm5578, %v4609, 0.0
        %v5975 = vsel %vm5579, %v4610, 0.0
        %v5976 = vsel %vm5580, %v4611, 0.0
        %v5977 = vsel %vm5581, %v4612, 0.0
        %v5978 = vsel %vm5582, %v4613, 0.0
        %v5979 = vsel %vm5583, %v4614, 0.0
        %v5980 = vsel %vm5584, %v4615, 0.0
        %v5981 = vsel %vm5585, %v4616, 0.0
        %v5982 = vsel %vm5586, %v4617, 0.0
        %v5983 = vsel %vm5587, %v4618, 0.0
        %v5984 = vsel %vm5588, %v4619, 0.0
        %v5985 = vsel %vm5589, %v4620, 0.0
        %v5986 = vsel %vm5590, %v4621, 0.0
        %v5987 = vsel %vm5591, %v4622, 0.0
        %v5988 = vsel %vm5592, %v4623, 0.0
        %v5989 = vsel %vm5593, %v4624, 0.0
        %v5990 = vsel %vm5594, %v4625, 0.0
        %v5991 = vsel %vm5595, %v4626, 0.0
        %v5992 = vsel %vm5596, %v4627, 0.0
        %v5993 = vsel %vm5597, %v4628, 0.0
        %v5994 = vsel %vm5598, %v4629, 0.0
        %v5995 = vsel %vm5599, %v4630, 0.0
        %v5996 = vsel %vm5600, %v4631, 0.0
        %v5997 = vsel %vm5601, %v4632, 0.0
        %v5998 = vsel %vm5602, %v4633, 0.0
        %v5999 = vsel %vm5603, %v4634, 0.0
        %v6000 = vsel %vm5604, %v4635, 0.0
        %v6001 = vsel %vm5605, %v4636, 0.0
        %v6002 = vsel %vm5606, %v4637, 0.0
        %v6003 = vsel %vm5607, %v4638, 0.0
        %v6004 = vsel %vm5608, %v4639, 0.0
        %v6005 = vsel %vm5609, %v4640, 0.0
        %v6006 = vsel %vm5610, %v4641, 0.0
        %v6007 = vsel %vm5611, %v4642, 0.0
        %v6008 = vsel %vm5612, %v4643, 0.0
        %v6009 = vsel %vm5613, %v4644, 0.0
        %v6010 = vsel %vm5614, %v4645, 0.0
        %v6011 = vsel %vm5615, %v4646, 0.0
        %v6012 = vsel %vm5616, %v4647, 0.0
        %v6013 = vsel %vm5617, %v4648, 0.0
        %v6014 = vsel %vm5618, %v4649, 0.0
        %v6015 = vsel %vm5619, %v4650, 0.0
        %v6016 = vsel %vm5620, %v4651, 0.0
        %v6017 = vsel %vm5621, %v4652, 0.0
        %v6018 = vsel %vm5622, %v4653, 0.0
        %v6019 = vsel %vm5623, %v4654, 0.0
        %v6020 = vsel %vm5624, %v4655, 0.0
        %v6021 = vsel %vm5625, %v4656, 0.0
        %v6022 = vsel %vm5626, %v4657, 0.0
        %v6023 = vsel %vm5627, %v4658, 0.0
        %v6024 = vsel %vm5628, %v4659, 0.0
        %v6025 = vsel %vm5629, %v4660, 0.0
        %v6026 = vsel %vm5630, %v4661, 0.0
        %v6027 = vsel %vm5631, %v4662, 0.0
        %v6028 = vsel %vm5632, %v4663, 0.0
        %v6029 = vsel %vm5633, %v4664, 0.0
        %v6030 = vsel %vm5634, %v4665, 0.0
        %v6031 = vsel %vm5635, %v4666, 0.0
        %v6032 = vsel %vm5636, %v5960, 0.0
        %v6033 = vsel %vm5637, %v5961, 0.0
        %v6034 = vsel %vm5638, %v5962, 0.0
        %v6035 = vpack.c.bf16 %v5964, %v5963
        %v6036 = vpack.c.bf16 %v5966, %v5965
        %v6037 = vpack.c.bf16 %v5968, %v5967
        %v6038 = vpack.c.bf16 %v5970, %v5969
        %v6039 = vpack.c.bf16 %v5972, %v5971
        %v6040 = vpack.c.bf16 %v5974, %v5973
        %v6041 = vpack.c.bf16 %v5976, %v5975
        %v6042 = vpack.c.bf16 %v5978, %v5977
        %v6043 = vpack.c.bf16 %v5980, %v5979
        %v6044 = vpack.c.bf16 %v5982, %v5981
        %v6045 = vpack.c.bf16 %v5984, %v5983
        %v6046 = vpack.c.bf16 %v5986, %v5985
        %v6047 = vpack.c.bf16 %v5988, %v5987
        %v6048 = vpack.c.bf16 %v5990, %v5989
        %v6049 = vpack.c.bf16 %v5992, %v5991
        %v6050 = vpack.c.bf16 %v5994, %v5993
        %v6051 = vpack.c.bf16 %v5996, %v5995
        %v6052 = vpack.c.bf16 %v5998, %v5997
        %v6053 = vpack.c.bf16 %v6000, %v5999
        %v6054 = vpack.c.bf16 %v6002, %v6001
        %v6055 = vpack.c.bf16 %v6004, %v6003
        %v6056 = vpack.c.bf16 %v6006, %v6005
        %v6057 = vpack.c.bf16 %v6008, %v6007
        %v6058 = vpack.c.bf16 %v6010, %v6009
        %v6059 = vpack.c.bf16 %v6012, %v6011
        %v6060 = vpack.c.bf16 %v6014, %v6013
        %v6061 = vpack.c.bf16 %v6016, %v6015
        %v6062 = vpack.c.bf16 %v6018, %v6017
        %v6063 = vpack.c.bf16 %v6020, %v6019
        %v6064 = vpack.c.bf16 %v6022, %v6021
        %v6065 = vpack.c.bf16 %v6024, %v6023
        %v6066 = vpack.c.bf16 %v6026, %v6025
        %v6067 = vpack.c.bf16 %v6028, %v6027
        %v6068 = vpack.c.bf16 %v6030, %v6029
        %v6069 = vpack.c.bf16 %v6032, %v6031
        %v6070 = vpack.c.bf16 %v6034, %v6033
        %v6071 = vpack.c.bf16 %v4923, %v4922
        %v6072 = vpack.c.bf16 %v4925, %v4924
        %v6073 = vpack.c.bf16 %v4927, %v4926
        %v6074 = vpack.c.bf16 %v4929, %v4928
        %v6075 = vpack.c.bf16 %v4931, %v4930
        %v6076 = vpack.c.bf16 %v4933, %v4932
        %v6077 = vpack.c.bf16 %v4935, %v4934
        %v6078 = vpack.c.bf16 %v4937, %v4936
        %v6079 = vpack.c.bf16 %v4939, %v4938
        %v6080 = vpack.c.bf16 %v4941, %v4940
        %v6081 = vpack.c.bf16 %v4943, %v4942
        %v6082 = vpack.c.bf16 %v4945, %v4944
        %v6083 = vpack.c.bf16 %v4947, %v4946
        %v6084 = vpack.c.bf16 %v4949, %v4948
        %v6085 = vpack.c.bf16 %v4951, %v4950
        %v6086 = vpack.c.bf16 %v4953, %v4952
        %v6087 = vpack.c.bf16 %v4955, %v4954
        %v6088 = vpack.c.bf16 %v4957, %v4956
        %v6089 = vpack.c.bf16 %v4959, %v4958
        %v6090 = vpack.c.bf16 %v4961, %v4960
        %v6091 = vpack.c.bf16 %v4963, %v4962
        %v6092 = vpack.c.bf16 %v4965, %v4964
        %v6093 = vpack.c.bf16 %v4967, %v4966
        %v6094 = vpack.c.bf16 %v4969, %v4968
        %v6095 = vpack.c.bf16 %v4971, %v4970
        %v6096 = vpack.c.bf16 %v4973, %v4972
        %v6097 = vpack.c.bf16 %v4975, %v4974
        %v6098 = vpack.c.bf16 %v4977, %v4976
        %v6099 = vpack.c.bf16 %v4979, %v4978
        %v6100 = vpack.c.bf16 %v4981, %v4980
        %v6101 = vpack.c.bf16 %v4983, %v4982
        %v6102 = vpack.c.bf16 %v4985, %v4984
        %v6103 = vpack.c.bf16 %v4987, %v4986
        %v6104 = vpack.c.bf16 %v4989, %v4988
        %v6105 = vpack.c.bf16 %v5243, %v4990
        %v6106 = vpack.c.bf16 %v5245, %v5244
        %v6107 = vld [vmem:[#allocation2 + $0x8e8] sm:$0xff]
        %v6108 = vld [vmem:[#allocation2 + $0x8f0] sm:$0xff]
        %v6109 = vld [vmem:[#allocation2 + $0x8f8] sm:$0xff]
        %v6110 = vpack.c.bf16 %v5247, %v5246
        %v6111 = vpack.c.bf16 %v5249, %v5248
        %v6112 = vpack.c.bf16 %v5251, %v5250
        %v6113 = vpack.c.bf16 %v5253, %v5252
        %v6114 = vpack.c.bf16 %v5255, %v5254
        %v6115 = vpack.c.bf16 %v5257, %v5256
        %v6116 = vpack.c.bf16 %v5259, %v5258
        %v6117 = vpack.c.bf16 %v5261, %v5260
        %v6118 = vpack.c.bf16 %v5263, %v5262
        %v6119 = vpack.c.bf16 %v5265, %v5264
        %v6120 = vpack.c.bf16 %v5267, %v5266
        %v6121 = vpack.c.bf16 %v5269, %v5268
        %v6122 = vpack.c.bf16 %v5271, %v5270
        %v6123 = vpack.c.bf16 %v5273, %v5272
        %v6124 = vpack.c.bf16 %v5275, %v5274
        %v6125 = vpack.c.bf16 %v5277, %v5276
        %v6126 = vpack.c.bf16 %v5279, %v5278
        %v6127 = vpack.c.bf16 %v5281, %v5280
        %v6128 = vpack.c.bf16 %v5283, %v5282
        %v6129 = vpack.c.bf16 %v5285, %v5284
        %v6130 = vpack.c.bf16 %v5287, %v5286
        %v6131 = vpack.c.bf16 %v5289, %v5288
        %v6132 = vpack.c.bf16 %v5291, %v5290
        %v6133 = vpack.c.bf16 %v5293, %v5292
        %v6134 = vpack.c.bf16 %v5295, %v5294
        %v6135 = vpack.c.bf16 %v5297, %v5296
        %v6136 = vpack.c.bf16 %v5299, %v5298
        %v6137 = vpack.c.bf16 %v5301, %v5300
        %v6138 = vpack.c.bf16 %v5303, %v5302
        %v6139 = vpack.c.bf16 %v5305, %v5304
        %v6140 = vpack.c.bf16 %v5307, %v5306
        %v6141 = vpack.c.bf16 %v5309, %v5308
        %v6142 = vpack.c.bf16 %v5311, %v5310
        %v6143 = vpack.c.bf16 %v5313, %v5312
        %v6144 = vpack.c.bf16 %v6107, %v5314
        %v6145 = vpack.c.bf16 %v6109, %v6108
        %6182 = vrot.lane.b32.xlu0 %v5207, 32
        %v6183 = vpop.permute.xlu0 %6182
        %6184 = vrot.lane.b32.xlu0 %v5208, 32
        %v6185 = vpop.permute.xlu0 %6184
        %6186 = vrot.lane.b32.xlu0 %v5209, 32
        %v6187 = vpop.permute.xlu0 %6186
        %6188 = vrot.lane.b32.xlu0 %v5210, 32
        %v6189 = vpop.permute.xlu0 %6188
        %6190 = vrot.lane.b32.xlu0 %v5211, 32
        %v6191 = vpop.permute.xlu0 %6190
        %6192 = vrot.lane.b32.xlu0 %v5212, 32
        %v6193 = vpop.permute.xlu0 %6192
        %6194 = vrot.lane.b32.xlu0 %v5213, 32
        %v6195 = vpop.permute.xlu0 %6194
        %6196 = vrot.lane.b32.xlu0 %v5214, 32
        %v6197 = vpop.permute.xlu0 %6196
        %6198 = vrot.lane.b32.xlu0 %v5215, 32
        %v6199 = vpop.permute.xlu0 %6198
        %6200 = vrot.lane.b32.xlu0 %v5216, 32
        %v6201 = vpop.permute.xlu0 %6200
        %6202 = vrot.lane.b32.xlu0 %v5217, 32
        %v6203 = vpop.permute.xlu0 %6202
        %6204 = vrot.lane.b32.xlu0 %v5218, 32
        %v6205 = vpop.permute.xlu0 %6204
        %6206 = vrot.lane.b32.xlu0 %v5219, 32
        %v6207 = vpop.permute.xlu0 %6206
        %6208 = vrot.lane.b32.xlu0 %v5220, 32
        %v6209 = vpop.permute.xlu0 %6208
        %6210 = vrot.lane.b32.xlu0 %v5221, 32
        %v6211 = vpop.permute.xlu0 %6210
        %6212 = vrot.lane.b32.xlu0 %v5222, 32
        %v6213 = vpop.permute.xlu0 %6212
        %6214 = vrot.lane.b32.xlu0 %v5223, 32
        %v6215 = vpop.permute.xlu0 %6214
        %6216 = vrot.lane.b32.xlu0 %v5224, 32
        %v6217 = vpop.permute.xlu0 %6216
        %6218 = vrot.lane.b32.xlu0 %v5225, 32
        %v6219 = vpop.permute.xlu0 %6218
        %6220 = vrot.lane.b32.xlu0 %v5226, 32
        %v6221 = vpop.permute.xlu0 %6220
        %6222 = vrot.lane.b32.xlu0 %v5227, 32
        %v6223 = vpop.permute.xlu0 %6222
        %6224 = vrot.lane.b32.xlu0 %v5228, 32
        %v6225 = vpop.permute.xlu0 %6224
        %6226 = vrot.lane.b32.xlu0 %v5229, 32
        %v6227 = vpop.permute.xlu0 %6226
        %6228 = vrot.lane.b32.xlu0 %v5230, 32
        %v6229 = vpop.permute.xlu0 %6228
        %6230 = vrot.lane.b32.xlu0 %v5231, 32
        %v6231 = vpop.permute.xlu0 %6230
        %6232 = vrot.lane.b32.xlu0 %v5232, 32
        %v6233 = vpop.permute.xlu0 %6232
        %6234 = vrot.lane.b32.xlu0 %v5233, 32
        %v6235 = vpop.permute.xlu0 %6234
        %6236 = vrot.lane.b32.xlu0 %v5234, 32
        %v6237 = vpop.permute.xlu0 %6236
        %6238 = vrot.lane.b32.xlu0 %v5235, 32
        %v6239 = vpop.permute.xlu0 %6238
        %6240 = vrot.lane.b32.xlu0 %v5236, 32
        %v6241 = vpop.permute.xlu0 %6240
        %6242 = vrot.lane.b32.xlu0 %v5237, 32
        %v6243 = vpop.permute.xlu0 %6242
        %6244 = vrot.lane.b32.xlu0 %v5238, 32
        %v6245 = vpop.permute.xlu0 %6244
        %6246 = vrot.lane.b32.xlu0 %v5239, 32
        %v6247 = vpop.permute.xlu0 %6246
        %6248 = vrot.lane.b32.xlu0 %v5240, 32
        %v6249 = vpop.permute.xlu0 %6248
        %6250 = vrot.lane.b32.xlu0 %v5241, 32
        %v6251 = vpop.permute.xlu0 %6250
        %6252 = vrot.lane.b32.xlu0 %v5242, 32
        %v6253 = vpop.permute.xlu0 %6252
        %6290 = vrot.lane.b32.xlu0 %v5387, 64
        %v6291 = vpop.permute.xlu0 %6290
        %6292 = vrot.lane.b32.xlu0 %v5388, 64
        %v6293 = vpop.permute.xlu0 %6292
        %6294 = vrot.lane.b32.xlu0 %v5389, 64
        %v6295 = vpop.permute.xlu0 %6294
        %6296 = vrot.lane.b32.xlu0 %v5390, 64
        %v6297 = vpop.permute.xlu0 %6296
        %6298 = vrot.lane.b32.xlu0 %v5391, 64
        %v6299 = vpop.permute.xlu0 %6298
        %6300 = vrot.lane.b32.xlu0 %v5392, 64
        %v6301 = vpop.permute.xlu0 %6300
        %6302 = vrot.lane.b32.xlu0 %v5393, 64
        %v6303 = vpop.permute.xlu0 %6302
        %6304 = vrot.lane.b32.xlu0 %v5394, 64
        %v6305 = vpop.permute.xlu0 %6304
        %6306 = vrot.lane.b32.xlu0 %v5395, 64
        %v6307 = vpop.permute.xlu0 %6306
        %6308 = vrot.lane.b32.xlu0 %v5396, 64
        %v6309 = vpop.permute.xlu0 %6308
        %6310 = vrot.lane.b32.xlu0 %v5397, 64
        %v6311 = vpop.permute.xlu0 %6310
        %6312 = vrot.lane.b32.xlu0 %v5398, 64
        %v6313 = vpop.permute.xlu0 %6312
        %6314 = vrot.lane.b32.xlu0 %v5399, 64
        %v6315 = vpop.permute.xlu0 %6314
        %6316 = vrot.lane.b32.xlu0 %v5400, 64
        %v6317 = vpop.permute.xlu0 %6316
        %6318 = vrot.lane.b32.xlu0 %v5401, 64
        %v6319 = vpop.permute.xlu0 %6318
        %6320 = vrot.lane.b32.xlu0 %v5402, 64
        %v6321 = vpop.permute.xlu0 %6320
        %6322 = vrot.lane.b32.xlu0 %v5403, 64
        %v6323 = vpop.permute.xlu0 %6322
        %6324 = vrot.lane.b32.xlu0 %v5404, 64
        %v6325 = vpop.permute.xlu0 %6324
        %6326 = vrot.lane.b32.xlu0 %v5405, 64
        %v6327 = vpop.permute.xlu0 %6326
        %6328 = vrot.lane.b32.xlu0 %v5406, 64
        %v6329 = vpop.permute.xlu0 %6328
        %6330 = vrot.lane.b32.xlu0 %v5407, 64
        %v6331 = vpop.permute.xlu0 %6330
        %6332 = vrot.lane.b32.xlu0 %v5408, 64
        %v6333 = vpop.permute.xlu0 %6332
        %6334 = vrot.lane.b32.xlu0 %v5409, 64
        %v6335 = vpop.permute.xlu0 %6334
        %6336 = vrot.lane.b32.xlu0 %v5410, 64
        %v6337 = vpop.permute.xlu0 %6336
        %6338 = vrot.lane.b32.xlu0 %v5411, 64
        %v6339 = vpop.permute.xlu0 %6338
        %6340 = vrot.lane.b32.xlu0 %v5412, 64
        %v6341 = vpop.permute.xlu0 %6340
        %6342 = vrot.lane.b32.xlu0 %v5413, 64
        %v6343 = vpop.permute.xlu0 %6342
        %6344 = vrot.lane.b32.xlu0 %v5414, 64
        %v6345 = vpop.permute.xlu0 %6344
        %6346 = vrot.lane.b32.xlu0 %v5415, 64
        %v6347 = vpop.permute.xlu0 %6346
        %6348 = vrot.lane.b32.xlu0 %v5416, 64
        %v6349 = vpop.permute.xlu0 %6348
        %6350 = vrot.lane.b32.xlu0 %v5417, 64
        %v6351 = vpop.permute.xlu0 %6350
        %6352 = vrot.lane.b32.xlu0 %v5418, 64
        %v6353 = vpop.permute.xlu0 %6352
        %6354 = vrot.lane.b32.xlu0 %v5419, 64
        %v6355 = vpop.permute.xlu0 %6354
        %6356 = vrot.lane.b32.xlu0 %v5420, 64
        %v6357 = vpop.permute.xlu0 %6356
        %6358 = vrot.lane.b32.xlu0 %v5421, 64
        %v6359 = vpop.permute.xlu0 %6358
        %6360 = vrot.lane.b32.xlu0 %v5422, 64
        %v6361 = vpop.permute.xlu0 %6360
        %6398 = vrot.lane.b32.xlu0 %v5711, 96
        %v6399 = vpop.permute.xlu0 %6398
        %6400 = vrot.lane.b32.xlu0 %v5712, 96
        %v6401 = vpop.permute.xlu0 %6400
        %6402 = vrot.lane.b32.xlu0 %v5713, 96
        %v6403 = vpop.permute.xlu0 %6402
        %6404 = vrot.lane.b32.xlu0 %v5714, 96
        %v6405 = vpop.permute.xlu0 %6404
        %6406 = vrot.lane.b32.xlu0 %v5715, 96
        %v6407 = vpop.permute.xlu0 %6406
        %6408 = vrot.lane.b32.xlu0 %v5716, 96
        %v6409 = vpop.permute.xlu0 %6408
        %6410 = vrot.lane.b32.xlu0 %v5717, 96
        %v6411 = vpop.permute.xlu0 %6410
        %6412 = vrot.lane.b32.xlu0 %v5718, 96
        %v6413 = vpop.permute.xlu0 %6412
        %6414 = vrot.lane.b32.xlu0 %v5719, 96
        %v6415 = vpop.permute.xlu0 %6414
        %6416 = vrot.lane.b32.xlu0 %v5720, 96
        %v6417 = vpop.permute.xlu0 %6416
        %6418 = vrot.lane.b32.xlu0 %v5721, 96
        %v6419 = vpop.permute.xlu0 %6418
        %6420 = vrot.lane.b32.xlu0 %v5722, 96
        %v6421 = vpop.permute.xlu0 %6420
        %6422 = vrot.lane.b32.xlu0 %v5723, 96
        %v6423 = vpop.permute.xlu0 %6422
        %6424 = vrot.lane.b32.xlu0 %v5724, 96
        %v6425 = vpop.permute.xlu0 %6424
        %6426 = vrot.lane.b32.xlu0 %v5725, 96
        %v6427 = vpop.permute.xlu0 %6426
        %6428 = vrot.lane.b32.xlu0 %v5726, 96
        %v6429 = vpop.permute.xlu0 %6428
        %6430 = vrot.lane.b32.xlu0 %v5727, 96
        %v6431 = vpop.permute.xlu0 %6430
        %6432 = vrot.lane.b32.xlu0 %v5728, 96
        %v6433 = vpop.permute.xlu0 %6432
        %6434 = vrot.lane.b32.xlu0 %v5729, 96
        %v6435 = vpop.permute.xlu0 %6434
        %6436 = vrot.lane.b32.xlu0 %v5730, 96
        %v6437 = vpop.permute.xlu0 %6436
        %6438 = vrot.lane.b32.xlu0 %v5731, 96
        %v6439 = vpop.permute.xlu0 %6438
        %6440 = vrot.lane.b32.xlu0 %v5732, 96
        %v6441 = vpop.permute.xlu0 %6440
        %6442 = vrot.lane.b32.xlu0 %v5733, 96
        %v6443 = vpop.permute.xlu0 %6442
        %6444 = vrot.lane.b32.xlu0 %v5734, 96
        %v6445 = vpop.permute.xlu0 %6444
        %6446 = vrot.lane.b32.xlu0 %v5735, 96
        %v6447 = vpop.permute.xlu0 %6446
        %6448 = vrot.lane.b32.xlu0 %v5736, 96
        %v6449 = vpop.permute.xlu0 %6448
        %6450 = vrot.lane.b32.xlu0 %v5737, 96
        %v6451 = vpop.permute.xlu0 %6450
        %6452 = vrot.lane.b32.xlu0 %v5738, 96
        %v6453 = vpop.permute.xlu0 %6452
        %6454 = vrot.lane.b32.xlu0 %v5739, 96
        %v6455 = vpop.permute.xlu0 %6454
        %6456 = vrot.lane.b32.xlu0 %v5740, 96
        %v6457 = vpop.permute.xlu0 %6456
        %6458 = vrot.lane.b32.xlu0 %v5741, 96
        %v6459 = vpop.permute.xlu0 %6458
        %6460 = vrot.lane.b32.xlu0 %v5742, 96
        %v6461 = vpop.permute.xlu0 %6460
        %6462 = vrot.lane.b32.xlu0 %v5743, 96
        %v6463 = vpop.permute.xlu0 %6462
        %6464 = vrot.lane.b32.xlu0 %v5744, 96
        %v6465 = vpop.permute.xlu0 %6464
        %6466 = vrot.lane.b32.xlu0 %v5745, 96
        %v6467 = vpop.permute.xlu0 %6466
        %6468 = vrot.lane.b32.xlu0 %v5746, 96
        %v6469 = vpop.permute.xlu0 %6468
        %6506 = vrot.lane.b32.xlu0 %v5924, 32
        %v6507 = vpop.permute.xlu0 %6506
        %6508 = vrot.lane.b32.xlu0 %v5925, 32
        %v6509 = vpop.permute.xlu0 %6508
        %6510 = vrot.lane.b32.xlu0 %v5926, 32
        %v6511 = vpop.permute.xlu0 %6510
        %6512 = vrot.lane.b32.xlu0 %v5927, 32
        %v6513 = vpop.permute.xlu0 %6512
        %6514 = vrot.lane.b32.xlu0 %v5928, 32
        %v6515 = vpop.permute.xlu0 %6514
        %6516 = vrot.lane.b32.xlu0 %v5929, 32
        %v6517 = vpop.permute.xlu0 %6516
        %6518 = vrot.lane.b32.xlu0 %v5930, 32
        %v6519 = vpop.permute.xlu0 %6518
        %6520 = vrot.lane.b32.xlu0 %v5931, 32
        %v6521 = vpop.permute.xlu0 %6520
        %6522 = vrot.lane.b32.xlu0 %v5932, 32
        %v6523 = vpop.permute.xlu0 %6522
        %6524 = vrot.lane.b32.xlu0 %v5933, 32
        %v6525 = vpop.permute.xlu0 %6524
        %6526 = vrot.lane.b32.xlu0 %v5934, 32
        %v6527 = vpop.permute.xlu0 %6526
        %6528 = vrot.lane.b32.xlu0 %v5935, 32
        %v6529 = vpop.permute.xlu0 %6528
        %6530 = vrot.lane.b32.xlu0 %v5936, 32
        %v6531 = vpop.permute.xlu0 %6530
        %6532 = vrot.lane.b32.xlu0 %v5937, 32
        %v6533 = vpop.permute.xlu0 %6532
        %6534 = vrot.lane.b32.xlu0 %v5938, 32
        %v6535 = vpop.permute.xlu0 %6534
        %6536 = vrot.lane.b32.xlu0 %v5939, 32
        %v6537 = vpop.permute.xlu0 %6536
        %6538 = vrot.lane.b32.xlu0 %v5940, 32
        %v6539 = vpop.permute.xlu0 %6538
        %6540 = vrot.lane.b32.xlu0 %v5941, 32
        %v6541 = vpop.permute.xlu0 %6540
        %6542 = vrot.lane.b32.xlu0 %v5942, 32
        %v6543 = vpop.permute.xlu0 %6542
        %6544 = vrot.lane.b32.xlu0 %v5943, 32
        %v6545 = vpop.permute.xlu0 %6544
        %6546 = vrot.lane.b32.xlu0 %v5944, 32
        %v6547 = vpop.permute.xlu0 %6546
        %6548 = vrot.lane.b32.xlu0 %v5945, 32
        %v6549 = vpop.permute.xlu0 %6548
        %6550 = vrot.lane.b32.xlu0 %v5946, 32
        %v6551 = vpop.permute.xlu0 %6550
        %6552 = vrot.lane.b32.xlu0 %v5947, 32
        %v6553 = vpop.permute.xlu0 %6552
        %6554 = vrot.lane.b32.xlu0 %v5948, 32
        %v6555 = vpop.permute.xlu0 %6554
        %6556 = vrot.lane.b32.xlu0 %v5949, 32
        %v6557 = vpop.permute.xlu0 %6556
        %6558 = vrot.lane.b32.xlu0 %v5950, 32
        %v6559 = vpop.permute.xlu0 %6558
        %6560 = vrot.lane.b32.xlu0 %v5951, 32
        %v6561 = vpop.permute.xlu0 %6560
        %6562 = vrot.lane.b32.xlu0 %v5952, 32
        %v6563 = vpop.permute.xlu0 %6562
        %6564 = vrot.lane.b32.xlu0 %v5953, 32
        %v6565 = vpop.permute.xlu0 %6564
        %6566 = vrot.lane.b32.xlu0 %v5954, 32
        %v6567 = vpop.permute.xlu0 %6566
        %6568 = vrot.lane.b32.xlu0 %v5955, 32
        %v6569 = vpop.permute.xlu0 %6568
        %6570 = vrot.lane.b32.xlu0 %v5956, 32
        %v6571 = vpop.permute.xlu0 %6570
        %6572 = vrot.lane.b32.xlu0 %v5957, 32
        %v6573 = vpop.permute.xlu0 %6572
        %6574 = vrot.lane.b32.xlu0 %v5958, 32
        %v6575 = vpop.permute.xlu0 %6574
        %6576 = vrot.lane.b32.xlu0 %v5959, 32
        %v6577 = vpop.permute.xlu0 %6576
        %6614 = vrot.lane.b32.xlu0 %v6035, 64
        %v6615 = vpop.permute.xlu0 %6614
        %6616 = vrot.lane.b32.xlu0 %v6036, 64
        %v6617 = vpop.permute.xlu0 %6616
        %6618 = vrot.lane.b32.xlu0 %v6037, 64
        %v6619 = vpop.permute.xlu0 %6618
        %6620 = vrot.lane.b32.xlu0 %v6038, 64
        %v6621 = vpop.permute.xlu0 %6620
        %6622 = vrot.lane.b32.xlu0 %v6039, 64
        %v6623 = vpop.permute.xlu0 %6622
        %6624 = vrot.lane.b32.xlu0 %v6040, 64
        %v6625 = vpop.permute.xlu0 %6624
        %6626 = vrot.lane.b32.xlu0 %v6041, 64
        %v6627 = vpop.permute.xlu0 %6626
        %6628 = vrot.lane.b32.xlu0 %v6042, 64
        %v6629 = vpop.permute.xlu0 %6628
        %6630 = vrot.lane.b32.xlu0 %v6043, 64
        %v6631 = vpop.permute.xlu0 %6630
        %6632 = vrot.lane.b32.xlu0 %v6044, 64
        %v6633 = vpop.permute.xlu0 %6632
        %6634 = vrot.lane.b32.xlu0 %v6045, 64
        %v6635 = vpop.permute.xlu0 %6634
        %6636 = vrot.lane.b32.xlu0 %v6046, 64
        %v6637 = vpop.permute.xlu0 %6636
        %6638 = vrot.lane.b32.xlu0 %v6047, 64
        %v6639 = vpop.permute.xlu0 %6638
        %6640 = vrot.lane.b32.xlu0 %v6048, 64
        %v6641 = vpop.permute.xlu0 %6640
        %6642 = vrot.lane.b32.xlu0 %v6049, 64
        %v6643 = vpop.permute.xlu0 %6642
        %6644 = vrot.lane.b32.xlu0 %v6050, 64
        %v6645 = vpop.permute.xlu0 %6644
        %6646 = vrot.lane.b32.xlu0 %v6051, 64
        %v6647 = vpop.permute.xlu0 %6646
        %6648 = vrot.lane.b32.xlu0 %v6052, 64
        %v6649 = vpop.permute.xlu0 %6648
        %6650 = vrot.lane.b32.xlu0 %v6053, 64
        %v6651 = vpop.permute.xlu0 %6650
        %6652 = vrot.lane.b32.xlu0 %v6054, 64
        %v6653 = vpop.permute.xlu0 %6652
        %6654 = vrot.lane.b32.xlu0 %v6055, 64
        %v6655 = vpop.permute.xlu0 %6654
        %6656 = vrot.lane.b32.xlu0 %v6056, 64
        %v6657 = vpop.permute.xlu0 %6656
        %6658 = vrot.lane.b32.xlu0 %v6057, 64
        %v6659 = vpop.permute.xlu0 %6658
        %6660 = vrot.lane.b32.xlu0 %v6058, 64
        %v6661 = vpop.permute.xlu0 %6660
        %6662 = vrot.lane.b32.xlu0 %v6059, 64
        %v6663 = vpop.permute.xlu0 %6662
        %6664 = vrot.lane.b32.xlu0 %v6060, 64
        %v6665 = vpop.permute.xlu0 %6664
        %6666 = vrot.lane.b32.xlu0 %v6061, 64
        %v6667 = vpop.permute.xlu0 %6666
        %6668 = vrot.lane.b32.xlu0 %v6062, 64
        %v6669 = vpop.permute.xlu0 %6668
        %6670 = vrot.lane.b32.xlu0 %v6063, 64
        %v6671 = vpop.permute.xlu0 %6670
        %6672 = vrot.lane.b32.xlu0 %v6064, 64
        %v6673 = vpop.permute.xlu0 %6672
        %6674 = vrot.lane.b32.xlu0 %v6065, 64
        %v6675 = vpop.permute.xlu0 %6674
        %6676 = vrot.lane.b32.xlu0 %v6066, 64
        %v6677 = vpop.permute.xlu0 %6676
        %6678 = vrot.lane.b32.xlu0 %v6067, 64
        %v6679 = vpop.permute.xlu0 %6678
        %6680 = vrot.lane.b32.xlu0 %v6068, 64
        %v6681 = vpop.permute.xlu0 %6680
        %6682 = vrot.lane.b32.xlu0 %v6069, 64
        %v6683 = vpop.permute.xlu0 %6682
        %6684 = vrot.lane.b32.xlu0 %v6070, 64
        %v6685 = vpop.permute.xlu0 %6684
        %6722 = vrot.lane.b32.xlu0 %v6071, 96
        %v6723 = vpop.permute.xlu0 %6722
        %6724 = vrot.lane.b32.xlu0 %v6072, 96
        %v6725 = vpop.permute.xlu0 %6724
        %6726 = vrot.lane.b32.xlu0 %v6073, 96
        %v6727 = vpop.permute.xlu0 %6726
        %6728 = vrot.lane.b32.xlu0 %v6074, 96
        %v6729 = vpop.permute.xlu0 %6728
        %6730 = vrot.lane.b32.xlu0 %v6075, 96
        %v6731 = vpop.permute.xlu0 %6730
        %6732 = vrot.lane.b32.xlu0 %v6076, 96
        %v6733 = vpop.permute.xlu0 %6732
        %6734 = vrot.lane.b32.xlu0 %v6077, 96
        %v6735 = vpop.permute.xlu0 %6734
        %6736 = vrot.lane.b32.xlu0 %v6078, 96
        %v6737 = vpop.permute.xlu0 %6736
        %6738 = vrot.lane.b32.xlu0 %v6079, 96
        %v6739 = vpop.permute.xlu0 %6738
        %6740 = vrot.lane.b32.xlu0 %v6080, 96
        %v6741 = vpop.permute.xlu0 %6740
        %6742 = vrot.lane.b32.xlu0 %v6081, 96
        %v6743 = vpop.permute.xlu0 %6742
        %6744 = vrot.lane.b32.xlu0 %v6082, 96
        %v6745 = vpop.permute.xlu0 %6744
        %6746 = vrot.lane.b32.xlu0 %v6083, 96
        %v6747 = vpop.permute.xlu0 %6746
        %6748 = vrot.lane.b32.xlu0 %v6084, 96
        %v6749 = vpop.permute.xlu0 %6748
        %6750 = vrot.lane.b32.xlu0 %v6085, 96
        %v6751 = vpop.permute.xlu0 %6750
        %6752 = vrot.lane.b32.xlu0 %v6086, 96
        %v6753 = vpop.permute.xlu0 %6752
        %6754 = vrot.lane.b32.xlu0 %v6087, 96
        %v6755 = vpop.permute.xlu0 %6754
        %6756 = vrot.lane.b32.xlu0 %v6088, 96
        %v6757 = vpop.permute.xlu0 %6756
        %6758 = vrot.lane.b32.xlu0 %v6089, 96
        %v6759 = vpop.permute.xlu0 %6758
        %6760 = vrot.lane.b32.xlu0 %v6090, 96
        %v6761 = vpop.permute.xlu0 %6760
        %6762 = vrot.lane.b32.xlu0 %v6091, 96
        %v6763 = vpop.permute.xlu0 %6762
        %6764 = vrot.lane.b32.xlu0 %v6092, 96
        %v6765 = vpop.permute.xlu0 %6764
        %6766 = vrot.lane.b32.xlu0 %v6093, 96
        %v6767 = vpop.permute.xlu0 %6766
        %6768 = vrot.lane.b32.xlu0 %v6094, 96
        %v6769 = vpop.permute.xlu0 %6768
        %6770 = vrot.lane.b32.xlu0 %v6095, 96
        %v6771 = vpop.permute.xlu0 %6770
        %6772 = vrot.lane.b32.xlu0 %v6096, 96
        %v6773 = vpop.permute.xlu0 %6772
        %6774 = vrot.lane.b32.xlu0 %v6097, 96
        %v6775 = vpop.permute.xlu0 %6774
        %6776 = vrot.lane.b32.xlu0 %v6098, 96
        %v6777 = vpop.permute.xlu0 %6776
        %6778 = vrot.lane.b32.xlu0 %v6099, 96
        %v6779 = vpop.permute.xlu0 %6778
        %6780 = vrot.lane.b32.xlu0 %v6100, 96
        %v6781 = vpop.permute.xlu0 %6780
        %6782 = vrot.lane.b32.xlu0 %v6101, 96
        %v6783 = vpop.permute.xlu0 %6782
        %6784 = vrot.lane.b32.xlu0 %v6102, 96
        %v6785 = vpop.permute.xlu0 %6784
        %6786 = vrot.lane.b32.xlu0 %v6103, 96
        %v6787 = vpop.permute.xlu0 %6786
        %6788 = vrot.lane.b32.xlu0 %v6104, 96
        %v6789 = vpop.permute.xlu0 %6788
        %6790 = vrot.lane.b32.xlu0 %v6105, 96
        %v6791 = vpop.permute.xlu0 %6790
        %6792 = vrot.lane.b32.xlu0 %v6106, 96
        %v6793 = vpop.permute.xlu0 %6792
        %v6796 = vsel %vm1189, %v4883, %v6183
        %v6799 = vsel %vm1189, %v4884, %v6185
        %v6802 = vsel %vm1189, %v4885, %v6187
        %v6805 = vsel %vm1189, %v4886, %v6189
        %v6808 = vsel %vm1189, %v4887, %v6191
        %v6811 = vsel %vm1189, %v4888, %v6193
        %v6814 = vsel %vm1189, %v4889, %v6195
        %v6817 = vsel %vm1189, %v4890, %v6197
        %v6820 = vsel %vm1189, %v4891, %v6199
        %v6823 = vsel %vm1189, %v4892, %v6201
        %v6826 = vsel %vm1189, %v4893, %v6203
        %v6829 = vsel %vm1189, %v4894, %v6205
        %v6832 = vsel %vm1189, %v4895, %v6207
        %v6835 = vsel %vm1189, %v4896, %v6209
        %v6838 = vsel %vm1189, %v4897, %v6211
        %v6841 = vsel %vm1189, %v4898, %v6213
        %v6844 = vsel %vm1189, %v4899, %v6215
        %v6847 = vsel %vm1189, %v4900, %v6217
        %v6850 = vsel %vm1189, %v4901, %v6219
        %v6853 = vsel %vm1189, %v4902, %v6221
        %v6856 = vsel %vm1189, %v4903, %v6223
        %v6859 = vsel %vm1189, %v4904, %v6225
        %v6862 = vsel %vm1189, %v4905, %v6227
        %v6865 = vsel %vm1189, %v4906, %v6229
        %v6868 = vsel %vm1189, %v4907, %v6231
        %v6871 = vsel %vm1189, %v4908, %v6233
        %v6874 = vsel %vm1189, %v4909, %v6235
        %v6877 = vsel %vm1189, %v4910, %v6237
        %v6880 = vsel %vm1189, %v4911, %v6239
        %v6883 = vsel %vm1189, %v4912, %v6241
        %v6886 = vsel %vm1189, %v4913, %v6243
        %v6889 = vsel %vm1189, %v4914, %v6245
        %v6892 = vsel %vm1189, %v4915, %v6247
        %v6895 = vsel %vm1189, %v4916, %v6249
        %v6898 = vsel %vm1189, %v4917, %v6251
        %v6901 = vsel %vm1189, %v4918, %v6253
        %vm6902 = vcmask 523264
        %v6904 = vsel %vm6902, %v6796, %v6291
        %v6906 = vsel %vm6902, %v6799, %v6293
        %v6908 = vsel %vm6902, %v6802, %v6295
        %v6910 = vsel %vm6902, %v6805, %v6297
        %v6912 = vsel %vm6902, %v6808, %v6299
        %v6914 = vsel %vm6902, %v6811, %v6301
        %v6916 = vsel %vm6902, %v6814, %v6303
        %v6918 = vsel %vm6902, %v6817, %v6305
        %v6920 = vsel %vm6902, %v6820, %v6307
        %v6922 = vsel %vm6902, %v6823, %v6309
        %v6924 = vsel %vm6902, %v6826, %v6311
        %v6926 = vsel %vm6902, %v6829, %v6313
        %v6928 = vsel %vm6902, %v6832, %v6315
        %v6930 = vsel %vm6902, %v6835, %v6317
        %v6932 = vsel %vm6902, %v6838, %v6319
        %v6934 = vsel %vm6902, %v6841, %v6321
        %v6936 = vsel %vm6902, %v6844, %v6323
        %v6938 = vsel %vm6902, %v6847, %v6325
        %v6940 = vsel %vm6902, %v6850, %v6327
        %v6942 = vsel %vm6902, %v6853, %v6329
        %v6944 = vsel %vm6902, %v6856, %v6331
        %v6946 = vsel %vm6902, %v6859, %v6333
        %v6948 = vsel %vm6902, %v6862, %v6335
        %v6950 = vsel %vm6902, %v6865, %v6337
        %v6952 = vsel %vm6902, %v6868, %v6339
        %v6954 = vsel %vm6902, %v6871, %v6341
        %v6956 = vsel %vm6902, %v6874, %v6343
        %v6958 = vsel %vm6902, %v6877, %v6345
        %v6960 = vsel %vm6902, %v6880, %v6347
        %v6962 = vsel %vm6902, %v6883, %v6349
        %v6964 = vsel %vm6902, %v6886, %v6351
        %v6966 = vsel %vm6902, %v6889, %v6353
        %v6968 = vsel %vm6902, %v6892, %v6355
        %v6970 = vsel %vm6902, %v6895, %v6357
        %v6972 = vsel %vm6902, %v6898, %v6359
        %v6974 = vsel %vm6902, %v6901, %v6361
        %vm6975 = vcmask 785408
        %v6977 = vsel %vm6975, %v6904, %v6399
        %v6980 = vsel %vm6975, %v6906, %v6401
        %v6983 = vsel %vm6975, %v6908, %v6403
        %v6986 = vsel %vm6975, %v6910, %v6405
        %v6989 = vsel %vm6975, %v6912, %v6407
        %v6992 = vsel %vm6975, %v6914, %v6409
        %v6995 = vsel %vm6975, %v6916, %v6411
        %v6998 = vsel %vm6975, %v6918, %v6413
        %v7001 = vsel %vm6975, %v6920, %v6415
        %v7004 = vsel %vm6975, %v6922, %v6417
        %v7007 = vsel %vm6975, %v6924, %v6419
        %v7010 = vsel %vm6975, %v6926, %v6421
        %v7013 = vsel %vm6975, %v6928, %v6423
        %v7016 = vsel %vm6975, %v6930, %v6425
        %v7019 = vsel %vm6975, %v6932, %v6427
        %v7022 = vsel %vm6975, %v6934, %v6429
        %v7025 = vsel %vm6975, %v6936, %v6431
        %v7028 = vsel %vm6975, %v6938, %v6433
        %v7031 = vsel %vm6975, %v6940, %v6435
        %v7034 = vsel %vm6975, %v6942, %v6437
        %v7037 = vsel %vm6975, %v6944, %v6439
        %v7040 = vsel %vm6975, %v6946, %v6441
        %v7043 = vsel %vm6975, %v6948, %v6443
        %v7046 = vsel %vm6975, %v6950, %v6445
        %v7049 = vsel %vm6975, %v6952, %v6447
        %v7052 = vsel %vm6975, %v6954, %v6449
        %v7055 = vsel %vm6975, %v6956, %v6451
        %v7058 = vsel %vm6975, %v6958, %v6453
        %v7061 = vsel %vm6975, %v6960, %v6455
        %v7064 = vsel %vm6975, %v6962, %v6457
        %v7067 = vsel %vm6975, %v6964, %v6459
        %v7070 = vsel %vm6975, %v6966, %v6461
        %v7073 = vsel %vm6975, %v6968, %v6463
        %v7076 = vsel %vm6975, %v6970, %v6465
        %v7079 = vsel %vm6975, %v6972, %v6467
        %v7082 = vsel %vm6975, %v6974, %v6469
        %v7086 = vsel %vm1189, %v5819, %v6507
        %v7089 = vsel %vm1189, %v5820, %v6509
        %v7092 = vsel %vm1189, %v5821, %v6511
        %v7095 = vsel %vm1189, %v5822, %v6513
        %v7098 = vsel %vm1189, %v5823, %v6515
        %v7101 = vsel %vm1189, %v5824, %v6517
        %v7104 = vsel %vm1189, %v5825, %v6519
        %v7107 = vsel %vm1189, %v5826, %v6521
        %v7110 = vsel %vm1189, %v5827, %v6523
        %v7113 = vsel %vm1189, %v5828, %v6525
        %v7116 = vsel %vm1189, %v5829, %v6527
        %v7119 = vsel %vm1189, %v5830, %v6529
        %v7122 = vsel %vm1189, %v5831, %v6531
        %v7125 = vsel %vm1189, %v5832, %v6533
        %v7128 = vsel %vm1189, %v5833, %v6535
        %v7131 = vsel %vm1189, %v5834, %v6537
        %v7134 = vsel %vm1189, %v5835, %v6539
        %v7137 = vsel %vm1189, %v5836, %v6541
        %v7140 = vsel %vm1189, %v5837, %v6543
        %v7143 = vsel %vm1189, %v5838, %v6545
        %v7146 = vsel %vm1189, %v5839, %v6547
        %v7149 = vsel %vm1189, %v5840, %v6549
        %v7152 = vsel %vm1189, %v5841, %v6551
        %v7155 = vsel %vm1189, %v5842, %v6553
        %v7158 = vsel %vm1189, %v5843, %v6555
        %v7161 = vsel %vm1189, %v5844, %v6557
        %v7164 = vsel %vm1189, %v5845, %v6559
        %v7167 = vsel %vm1189, %v5846, %v6561
        %v7170 = vsel %vm1189, %v5847, %v6563
        %v7173 = vsel %vm1189, %v5848, %v6565
        %v7176 = vsel %vm1189, %v5849, %v6567
        %v7179 = vsel %vm1189, %v5850, %v6569
        %v7182 = vsel %vm1189, %v5851, %v6571
        %v7185 = vsel %vm1189, %v5852, %v6573
        %v7188 = vsel %vm1189, %v5853, %v6575
        %v7191 = vsel %vm1189, %v5854, %v6577
        %v7193 = vsel %vm6902, %v7086, %v6615
        %v7195 = vsel %vm6902, %v7089, %v6617
        %v7197 = vsel %vm6902, %v7092, %v6619
        %v7199 = vsel %vm6902, %v7095, %v6621
        %v7201 = vsel %vm6902, %v7098, %v6623
        %v7203 = vsel %vm6902, %v7101, %v6625
        %v7205 = vsel %vm6902, %v7104, %v6627
        %v7207 = vsel %vm6902, %v7107, %v6629
        %v7209 = vsel %vm6902, %v7110, %v6631
        %v7211 = vsel %vm6902, %v7113, %v6633
        %v7213 = vsel %vm6902, %v7116, %v6635
        %v7215 = vsel %vm6902, %v7119, %v6637
        %v7217 = vsel %vm6902, %v7122, %v6639
        %v7219 = vsel %vm6902, %v7125, %v6641
        %v7221 = vsel %vm6902, %v7128, %v6643
        %v7223 = vsel %vm6902, %v7131, %v6645
        %v7225 = vsel %vm6902, %v7134, %v6647
        %v7227 = vsel %vm6902, %v7137, %v6649
        %v7229 = vsel %vm6902, %v7140, %v6651
        %v7231 = vsel %vm6902, %v7143, %v6653
        %v7233 = vsel %vm6902, %v7146, %v6655
        %v7235 = vsel %vm6902, %v7149, %v6657
        %v7237 = vsel %vm6902, %v7152, %v6659
        %v7239 = vsel %vm6902, %v7155, %v6661
        %v7241 = vsel %vm6902, %v7158, %v6663
        %v7243 = vsel %vm6902, %v7161, %v6665
        %v7245 = vsel %vm6902, %v7164, %v6667
        %v7247 = vsel %vm6902, %v7167, %v6669
        %v7249 = vsel %vm6902, %v7170, %v6671
        %v7251 = vsel %vm6902, %v7173, %v6673
        %v7253 = vsel %vm6902, %v7176, %v6675
        %v7255 = vsel %vm6902, %v7179, %v6677
        %v7257 = vsel %vm6902, %v7182, %v6679
        %v7259 = vsel %vm6902, %v7185, %v6681
        %v7261 = vsel %vm6902, %v7188, %v6683
        %v7263 = vsel %vm6902, %v7191, %v6685
        %v7265 = vsel %vm6975, %v7193, %v6723
        %v7268 = vsel %vm6975, %v7195, %v6725
        %v7271 = vsel %vm6975, %v7197, %v6727
        %v7274 = vsel %vm6975, %v7199, %v6729
        %v7277 = vsel %vm6975, %v7201, %v6731
        %v7280 = vsel %vm6975, %v7203, %v6733
        %v7283 = vsel %vm6975, %v7205, %v6735
        %v7286 = vsel %vm6975, %v7207, %v6737
        %v7289 = vsel %vm6975, %v7209, %v6739
        %v7292 = vsel %vm6975, %v7211, %v6741
        %v7295 = vsel %vm6975, %v7213, %v6743
        %v7298 = vsel %vm6975, %v7215, %v6745
        %v7301 = vsel %vm6975, %v7217, %v6747
        %v7304 = vsel %vm6975, %v7219, %v6749
        %v7307 = vsel %vm6975, %v7221, %v6751
        %v7310 = vsel %vm6975, %v7223, %v6753
        %v7313 = vsel %vm6975, %v7225, %v6755
        %v7316 = vsel %vm6975, %v7227, %v6757
        %v7319 = vsel %vm6975, %v7229, %v6759
        %v7322 = vsel %vm6975, %v7231, %v6761
        %v7325 = vsel %vm6975, %v7233, %v6763
        %v7328 = vsel %vm6975, %v7235, %v6765
        %v7331 = vsel %vm6975, %v7237, %v6767
        %v7334 = vsel %vm6975, %v7239, %v6769
        %v7337 = vsel %vm6975, %v7241, %v6771
        %v7340 = vsel %vm6975, %v7243, %v6773
        %v7343 = vsel %vm6975, %v7245, %v6775
        %v7346 = vsel %vm6975, %v7247, %v6777
        %v7349 = vsel %vm6975, %v7249, %v6779
        %v7352 = vsel %vm6975, %v7251, %v6781
        %v7355 = vsel %vm6975, %v7253, %v6783
        %v7358 = vsel %vm6975, %v7255, %v6785
        %v7361 = vsel %vm6975, %v7257, %v6787
        %v7364 = vsel %vm6975, %v7259, %v6789
        %v7367 = vsel %vm6975, %v7261, %v6791
        %v7370 = vsel %vm6975, %v7263, %v6793
        %v7372 = vld [vmem:[%s4] sm:$0xf]
        %v7373 = vld [vmem:[%s4 + $0x4] sm:$0xf]
        %v7374 = vld [vmem:[%s4 + $0x8] sm:$0xf]
        %v7375 = vld [vmem:[%s4 + $0xc] sm:$0xf]
        %v7376 = vld [vmem:[%s4 + $0x10] sm:$0xf]
        %v7377 = vld [vmem:[%s4 + $0x14] sm:$0xf]
        %v7378 = vld [vmem:[%s4 + $0x18] sm:$0xf]
        %v7379 = vld [vmem:[%s4 + $0x1c] sm:$0xf]
        %v7380 = vld [vmem:[%s4 + $0x20] sm:$0xf]
        %v7381 = vld [vmem:[%s4 + $0x24] sm:$0xf]
        %v7382 = vld [vmem:[%s4 + $0x28] sm:$0xf]
        %v7383 = vld [vmem:[%s4 + $0x2c] sm:$0xf]
        %v7384 = vld [vmem:[%s4 + $0x30] sm:$0xf]
        %v7385 = vld [vmem:[%s4 + $0x34] sm:$0xf]
        %v7386 = vld [vmem:[%s4 + $0x38] sm:$0xf]
        %v7387 = vld [vmem:[%s4 + $0x3c] sm:$0xf]
        %v7388 = vld [vmem:[%s4 + $0x40] sm:$0xf]
        %v7389 = vld [vmem:[%s4 + $0x44] sm:$0xf]
        %v7390 = vld [vmem:[%s4 + $0x48] sm:$0xf]
        %v7391 = vld [vmem:[%s4 + $0x4c] sm:$0xf]
        %v7392 = vld [vmem:[%s4 + $0x50] sm:$0xf]
        %v7393 = vld [vmem:[%s4 + $0x54] sm:$0xf]
        %v7394 = vld [vmem:[%s4 + $0x58] sm:$0xf]
        %v7395 = vld [vmem:[%s4 + $0x5c] sm:$0xf]
        %v7396 = vld [vmem:[%s4 + $0x60] sm:$0xf]
        %v7397 = vld [vmem:[%s4 + $0x64] sm:$0xf]
        %v7398 = vld [vmem:[%s4 + $0x68] sm:$0xf]
        %v7399 = vld [vmem:[%s4 + $0x6c] sm:$0xf]
        %v7400 = vld [vmem:[%s4 + $0x70] sm:$0xf]
        %v7401 = vld [vmem:[%s4 + $0x74] sm:$0xf]
        %v7402 = vld [vmem:[%s4 + $0x78] sm:$0xf]
        %v7403 = vld [vmem:[%s4 + $0x7c] sm:$0xf]
        %v7404 = vld [vmem:[%s4 + $0x80] sm:$0xf]
        %v7405 = vld [vmem:[%s4 + $0x84] sm:$0xf]
        %v7406 = vld [vmem:[%s4 + $0x88] sm:$0xf]
        %v7407 = vld [vmem:[%s4 + $0x8c] sm:$0xf]
        %v7408 = vld [vmem:[%s5] sm:$0x1]
        %v7410 = vlaneseq
        %v7411 = vshrl.u32 %v7410, 7
        %v7412 = vsub.s32 0, %v7411
        %v7413 = vrot.slane %v7408, %v7412
        %v7451 = vunpack.c.l.b16 %v7372
        %v7452 = vunpack.c.l.b16 %v7373
        %v7453 = vunpack.c.l.b16 %v7374
        %v7454 = vunpack.c.l.b16 %v7375
        %v7455 = vunpack.c.l.b16 %v7376
        %v7456 = vunpack.c.l.b16 %v7377
        %v7457 = vunpack.c.l.b16 %v7378
        %v7458 = vunpack.c.l.b16 %v7379
        %v7459 = vunpack.c.l.b16 %v7380
        %v7460 = vunpack.c.l.b16 %v7381
        %v7461 = vunpack.c.l.b16 %v7382
        %v7462 = vunpack.c.l.b16 %v7383
        %v7463 = vunpack.c.l.b16 %v7384
        %v7464 = vunpack.c.l.b16 %v7385
        %v7465 = vunpack.c.l.b16 %v7386
        %v7466 = vunpack.c.l.b16 %v7387
        %v7467 = vunpack.c.l.b16 %v7388
        %v7468 = vunpack.c.l.b16 %v7389
        %v7469 = vunpack.c.l.b16 %v7390
        %v7470 = vunpack.c.l.b16 %v7391
        %v7471 = vunpack.c.l.b16 %v7392
        %v7472 = vunpack.c.l.b16 %v7393
        %v7473 = vunpack.c.l.b16 %v7394
        %v7474 = vunpack.c.l.b16 %v7395
        %v7475 = vunpack.c.l.b16 %v7396
        %v7476 = vunpack.c.l.b16 %v7397
        %v7477 = vunpack.c.l.b16 %v7398
        %v7478 = vunpack.c.l.b16 %v7399
        %v7479 = vunpack.c.l.b16 %v7400
        %v7480 = vunpack.c.l.b16 %v7401
        %v7481 = vunpack.c.l.b16 %v7402
        %v7482 = vunpack.c.l.b16 %v7403
        %v7483 = vunpack.c.l.b16 %v7404
        %v7484 = vunpack.c.l.b16 %v7405
        %v7485 = vunpack.c.l.b16 %v7406
        %v7486 = vunpack.c.l.b16 %v7407
        %v7487 = vpack.c.b16 %v7452, %v7451
        %v7488 = vpack.c.b16 %v7454, %v7453
        %v7489 = vpack.c.b16 %v7456, %v7455
        %v7490 = vpack.c.b16 %v7458, %v7457
        %v7491 = vpack.c.b16 %v7460, %v7459
        %v7492 = vpack.c.b16 %v7462, %v7461
        %v7493 = vpack.c.b16 %v7464, %v7463
        %v7494 = vpack.c.b16 %v7466, %v7465
        %v7495 = vpack.c.b16 %v7468, %v7467
        %v7496 = vpack.c.b16 %v7470, %v7469
        %v7497 = vpack.c.b16 %v7472, %v7471
        %v7498 = vpack.c.b16 %v7474, %v7473
        %v7499 = vpack.c.b16 %v7476, %v7475
        %v7500 = vpack.c.b16 %v7478, %v7477
        %v7501 = vpack.c.b16 %v7480, %v7479
        %v7502 = vpack.c.b16 %v7482, %v7481
        %v7503 = vpack.c.b16 %v7484, %v7483
        %v7504 = vpack.c.b16 %v7486, %v7485
        %v7524 = vsel %vm1189, %v6110, 0
        %v7527 = vsel %vm1189, %v6111, 0
        %v7530 = vsel %vm1189, %v6112, 0
        %v7533 = vsel %vm1189, %v6113, 0
        %v7536 = vsel %vm1189, %v6114, 0
        %v7539 = vsel %vm1189, %v6115, 0
        %v7542 = vsel %vm1189, %v6116, 0
        %v7545 = vsel %vm1189, %v6117, 0
        %v7548 = vsel %vm1189, %v6118, 0
        %v7551 = vsel %vm1189, %v6119, 0
        %v7554 = vsel %vm1189, %v6120, 0
        %v7557 = vsel %vm1189, %v6121, 0
        %v7560 = vsel %vm1189, %v6122, 0
        %v7563 = vsel %vm1189, %v6123, 0
        %v7566 = vsel %vm1189, %v6124, 0
        %v7569 = vsel %vm1189, %v6125, 0
        %v7572 = vsel %vm1189, %v6126, 0
        %v7575 = vsel %vm1189, %v6127, 0
        %v7578 = vsel %vm1189, %v6128, 0
        %v7581 = vsel %vm1189, %v6129, 0
        %v7584 = vsel %vm1189, %v6130, 0
        %v7587 = vsel %vm1189, %v6131, 0
        %v7590 = vsel %vm1189, %v6132, 0
        %v7593 = vsel %vm1189, %v6133, 0
        %v7596 = vsel %vm1189, %v6134, 0
        %v7599 = vsel %vm1189, %v6135, 0
        %v7602 = vsel %vm1189, %v6136, 0
        %v7605 = vsel %vm1189, %v6137, 0
        %v7608 = vsel %vm1189, %v6138, 0
        %v7611 = vsel %vm1189, %v6139, 0
        %v7614 = vsel %vm1189, %v6140, 0
        %v7617 = vsel %vm1189, %v6141, 0
        %v7620 = vsel %vm1189, %v6142, 0
        %v7623 = vsel %vm1189, %v6143, 0
        %v7626 = vsel %vm1189, %v6144, 0
        %v7629 = vsel %vm1189, %v6145, 0
        %7631 = vmatprep.subr.bf16.mxu0 0
        %7632 = vmatpush1.bf16.msra.mxu0 %v7494
        %7633 = vmatprep.subr.bf16.mxu0 0
        %7634 = vmatpush1.bf16.msra.mxu0 %v7493
        %7635 = vmatprep.subr.bf16.mxu0 0
        %7636 = vmatpush1.bf16.msra.mxu0 %v7492
        %7637 = vmatprep.subr.bf16.mxu0 0
        %7638 = vmatpush1.bf16.msra.mxu0 %v7491
        %7639 = vmatprep.subr.bf16.mxu0 0
        %7640 = vmatpush1.bf16.msra.mxu0 %v7490
        %7641 = vmatprep.subr.bf16.mxu0 0
        %7642 = vmatpush1.bf16.msra.mxu0 %v7489
        %7643 = vmatprep.subr.bf16.mxu0 0
        %7644 = vmatpush1.bf16.msra.mxu0 %v7488
        %7645 = vmatprep.subr.bf16.mxu0 0
        %7646 = vmatpush1.bf16.msra.mxu0 %v7487
        %7647 = vmatprep.subr.bf16.mxu0 0
        %7648 = vmatpush2.bf16.msra.mxu0 %v7502
        %7649 = vmatprep.subr.bf16.mxu0 0
        %7650 = vmatpush2.bf16.msra.mxu0 %v7501
        %7651 = vmatprep.subr.bf16.mxu0 0
        %7652 = vmatpush2.bf16.msra.mxu0 %v7500
        %7653 = vmatprep.subr.bf16.mxu0 0
        %7654 = vmatpush2.bf16.msra.mxu0 %v7499
        %7655 = vmatprep.subr.bf16.mxu0 0
        %7656 = vmatpush2.bf16.msra.mxu0 %v7498
        %7657 = vmatprep.subr.bf16.mxu0 0
        %7658 = vmatpush2.bf16.msra.mxu0 %v7497
        %7659 = vmatprep.subr.bf16.mxu0 0
        %7660 = vmatpush2.bf16.msra.mxu0 %v7496
        %7661 = vmatprep.subr.bf16.mxu0 0
        %7662 = vmatpush2.bf16.msra.mxu0 %v7495
        %7663 = vmatprep.mubr.bf16.mxu0 %v7265
        %7664 = vmatmul.mubr.bf16.gmra.mxu0 %v6977
        %v7665 = vpop.f32.mrf.mxu0
        %v7666 = vadd.f32 %v7413, %v7665
        %v7667 = vpop.f32.mrf.mxu0
        %v7668 = vpop.f32.mrf.mxu0
        %v7669 = vadd.f32 %v7413, %v7668
        %v7670 = vpop.f32.mrf.mxu0
        %7671 = vmatprep.mubr.bf16.mxu0 %v7268
        %7672 = vmatmul.mubr.bf16.gmra.mxu0 %v6980
        %v7673 = vpop.f32.mrf.mxu0
        %v7674 = vadd.f32 %v7413, %v7673
        %v7675 = vpop.f32.mrf.mxu0
        %v7676 = vpop.f32.mrf.mxu0
        %v7677 = vadd.f32 %v7413, %v7676
        %v7678 = vpop.f32.mrf.mxu0
        %7679 = vmatprep.mubr.bf16.mxu0 %v7271
        %7680 = vmatmul.mubr.bf16.gmra.mxu0 %v6983
        %v7681 = vpop.f32.mrf.mxu0
        %v7682 = vadd.f32 %v7413, %v7681
        %v7683 = vpop.f32.mrf.mxu0
        %v7684 = vpop.f32.mrf.mxu0
        %v7685 = vadd.f32 %v7413, %v7684
        %v7686 = vpop.f32.mrf.mxu0
        %7687 = vmatprep.mubr.bf16.mxu0 %v7274
        %7688 = vmatmul.mubr.bf16.gmra.mxu0 %v6986
        %v7689 = vpop.f32.mrf.mxu0
        %v7690 = vadd.f32 %v7413, %v7689
        %v7691 = vpop.f32.mrf.mxu0
        %v7692 = vpop.f32.mrf.mxu0
        %v7693 = vadd.f32 %v7413, %v7692
        %v7694 = vpop.f32.mrf.mxu0
        %7695 = vmatprep.mubr.bf16.mxu0 %v7277
        %7696 = vmatmul.mubr.bf16.gmra.mxu0 %v6989
        %v7697 = vpop.f32.mrf.mxu0
        %v7698 = vadd.f32 %v7413, %v7697
        %v7699 = vpop.f32.mrf.mxu0
        %v7700 = vpop.f32.mrf.mxu0
        %v7701 = vadd.f32 %v7413, %v7700
        %v7702 = vpop.f32.mrf.mxu0
        %7703 = vmatprep.mubr.bf16.mxu0 %v7280
        %7704 = vmatmul.mubr.bf16.gmra.mxu0 %v6992
        %v7705 = vpop.f32.mrf.mxu0
        %v7706 = vadd.f32 %v7413, %v7705
        %v7707 = vpop.f32.mrf.mxu0
        %v7708 = vpop.f32.mrf.mxu0
        %v7709 = vadd.f32 %v7413, %v7708
        %v7710 = vpop.f32.mrf.mxu0
        %7711 = vmatprep.mubr.bf16.mxu0 %v7283
        %7712 = vmatmul.mubr.bf16.gmra.mxu0 %v6995
        %v7713 = vpop.f32.mrf.mxu0
        %v7714 = vadd.f32 %v7413, %v7713
        %v7715 = vpop.f32.mrf.mxu0
        %v7716 = vpop.f32.mrf.mxu0
        %v7717 = vadd.f32 %v7413, %v7716
        %v7718 = vpop.f32.mrf.mxu0
        %7719 = vmatprep.mubr.bf16.mxu0 %v7286
        %7720 = vmatmul.mubr.bf16.gmra.mxu0 %v6998
        %v7721 = vpop.f32.mrf.mxu0
        %v7722 = vadd.f32 %v7413, %v7721
        %v7723 = vpop.f32.mrf.mxu0
        %v7724 = vpop.f32.mrf.mxu0
        %v7725 = vadd.f32 %v7413, %v7724
        %v7726 = vpop.f32.mrf.mxu0
        %7727 = vmatprep.mubr.bf16.mxu0 %v7289
        %7728 = vmatmul.mubr.bf16.gmra.mxu0 %v7001
        %v7729 = vpop.f32.mrf.mxu0
        %v7730 = vadd.f32 %v7413, %v7729
        %v7731 = vpop.f32.mrf.mxu0
        %v7732 = vpop.f32.mrf.mxu0
        %v7733 = vadd.f32 %v7413, %v7732
        %v7734 = vpop.f32.mrf.mxu0
        %7735 = vmatprep.mubr.bf16.mxu0 %v7292
        %7736 = vmatmul.mubr.bf16.gmra.mxu0 %v7004
        %v7737 = vpop.f32.mrf.mxu0
        %v7738 = vadd.f32 %v7413, %v7737
        %v7739 = vpop.f32.mrf.mxu0
        %v7740 = vpop.f32.mrf.mxu0
        %v7741 = vadd.f32 %v7413, %v7740
        %v7742 = vpop.f32.mrf.mxu0
        %7743 = vmatprep.mubr.bf16.mxu0 %v7295
        %7744 = vmatmul.mubr.bf16.gmra.mxu0 %v7007
        %v7745 = vpop.f32.mrf.mxu0
        %v7746 = vadd.f32 %v7413, %v7745
        %v7747 = vpop.f32.mrf.mxu0
        %v7748 = vpop.f32.mrf.mxu0
        %v7749 = vadd.f32 %v7413, %v7748
        %v7750 = vpop.f32.mrf.mxu0
        %7751 = vmatprep.mubr.bf16.mxu0 %v7298
        %7752 = vmatmul.mubr.bf16.gmra.mxu0 %v7010
        %v7753 = vpop.f32.mrf.mxu0
        %v7754 = vadd.f32 %v7413, %v7753
        %v7755 = vpop.f32.mrf.mxu0
        %v7756 = vpop.f32.mrf.mxu0
        %v7757 = vadd.f32 %v7413, %v7756
        %v7758 = vpop.f32.mrf.mxu0
        %7759 = vmatprep.mubr.bf16.mxu0 %v7301
        %7760 = vmatmul.mubr.bf16.gmra.mxu0 %v7013
        %v7761 = vpop.f32.mrf.mxu0
        %v7762 = vadd.f32 %v7413, %v7761
        %v7763 = vpop.f32.mrf.mxu0
        %v7764 = vpop.f32.mrf.mxu0
        %v7765 = vadd.f32 %v7413, %v7764
        %v7766 = vpop.f32.mrf.mxu0
        %7767 = vmatprep.mubr.bf16.mxu0 %v7304
        %7768 = vmatmul.mubr.bf16.gmra.mxu0 %v7016
        %v7769 = vpop.f32.mrf.mxu0
        %v7770 = vadd.f32 %v7413, %v7769
        %v7771 = vpop.f32.mrf.mxu0
        %v7772 = vpop.f32.mrf.mxu0
        %v7773 = vadd.f32 %v7413, %v7772
        %v7774 = vpop.f32.mrf.mxu0
        %7775 = vmatprep.mubr.bf16.mxu0 %v7307
        %7776 = vmatmul.mubr.bf16.gmra.mxu0 %v7019
        %v7777 = vpop.f32.mrf.mxu0
        %v7778 = vadd.f32 %v7413, %v7777
        %v7779 = vpop.f32.mrf.mxu0
        %v7780 = vpop.f32.mrf.mxu0
        %v7781 = vadd.f32 %v7413, %v7780
        %v7782 = vpop.f32.mrf.mxu0
        %7783 = vmatprep.mubr.bf16.mxu0 %v7310
        %7784 = vmatmul.mubr.bf16.gmra.mxu0 %v7022
        %v7785 = vpop.f32.mrf.mxu0
        %v7786 = vadd.f32 %v7413, %v7785
        %v7787 = vpop.f32.mrf.mxu0
        %v7788 = vpop.f32.mrf.mxu0
        %v7789 = vadd.f32 %v7413, %v7788
        %v7790 = vpop.f32.mrf.mxu0
        %7791 = vmatprep.mubr.bf16.mxu0 %v7313
        %7792 = vmatmul.mubr.bf16.gmra.mxu0 %v7025
        %v7793 = vpop.f32.mrf.mxu0
        %v7794 = vadd.f32 %v7413, %v7793
        %v7795 = vpop.f32.mrf.mxu0
        %v7796 = vpop.f32.mrf.mxu0
        %v7797 = vadd.f32 %v7413, %v7796
        %v7798 = vpop.f32.mrf.mxu0
        %7799 = vmatprep.mubr.bf16.mxu0 %v7316
        %7800 = vmatmul.mubr.bf16.gmra.mxu0 %v7028
        %v7801 = vpop.f32.mrf.mxu0
        %v7802 = vadd.f32 %v7413, %v7801
        %v7803 = vpop.f32.mrf.mxu0
        %v7804 = vpop.f32.mrf.mxu0
        %v7805 = vadd.f32 %v7413, %v7804
        %v7806 = vpop.f32.mrf.mxu0
        %7807 = vmatprep.mubr.bf16.mxu0 %v7319
        %7808 = vmatmul.mubr.bf16.gmra.mxu0 %v7031
        %v7809 = vpop.f32.mrf.mxu0
        %v7810 = vadd.f32 %v7413, %v7809
        %v7811 = vpop.f32.mrf.mxu0
        %v7812 = vpop.f32.mrf.mxu0
        %v7813 = vadd.f32 %v7413, %v7812
        %v7814 = vpop.f32.mrf.mxu0
        %7815 = vmatprep.mubr.bf16.mxu0 %v7322
        %7816 = vmatmul.mubr.bf16.gmra.mxu0 %v7034
        %v7817 = vpop.f32.mrf.mxu0
        %v7818 = vadd.f32 %v7413, %v7817
        %v7819 = vpop.f32.mrf.mxu0
        %v7820 = vpop.f32.mrf.mxu0
        %v7821 = vadd.f32 %v7413, %v7820
        %v7822 = vpop.f32.mrf.mxu0
        %7823 = vmatprep.mubr.bf16.mxu0 %v7325
        %7824 = vmatmul.mubr.bf16.gmra.mxu0 %v7037
        %v7825 = vpop.f32.mrf.mxu0
        %v7826 = vadd.f32 %v7413, %v7825
        %v7827 = vpop.f32.mrf.mxu0
        %v7828 = vpop.f32.mrf.mxu0
        %v7829 = vadd.f32 %v7413, %v7828
        %v7830 = vpop.f32.mrf.mxu0
        %7831 = vmatprep.mubr.bf16.mxu0 %v7328
        %7832 = vmatmul.mubr.bf16.gmra.mxu0 %v7040
        %v7833 = vpop.f32.mrf.mxu0
        %v7834 = vadd.f32 %v7413, %v7833
        %v7835 = vpop.f32.mrf.mxu0
        %v7836 = vpop.f32.mrf.mxu0
        %v7837 = vadd.f32 %v7413, %v7836
        %v7838 = vpop.f32.mrf.mxu0
        %7839 = vmatprep.mubr.bf16.mxu0 %v7331
        %7840 = vmatmul.mubr.bf16.gmra.mxu0 %v7043
        %v7841 = vpop.f32.mrf.mxu0
        %v7842 = vadd.f32 %v7413, %v7841
        %v7843 = vpop.f32.mrf.mxu0
        %v7844 = vpop.f32.mrf.mxu0
        %v7845 = vadd.f32 %v7413, %v7844
        %v7846 = vpop.f32.mrf.mxu0
        %7847 = vmatprep.mubr.bf16.mxu0 %v7334
        %7848 = vmatmul.mubr.bf16.gmra.mxu0 %v7046
        %v7849 = vpop.f32.mrf.mxu0
        %v7850 = vadd.f32 %v7413, %v7849
        %v7851 = vpop.f32.mrf.mxu0
        %v7852 = vpop.f32.mrf.mxu0
        %v7853 = vadd.f32 %v7413, %v7852
        %v7854 = vpop.f32.mrf.mxu0
        %7855 = vmatprep.mubr.bf16.mxu0 %v7337
        %7856 = vmatmul.mubr.bf16.gmra.mxu0 %v7049
        %v7857 = vpop.f32.mrf.mxu0
        %v7858 = vadd.f32 %v7413, %v7857
        %v7859 = vpop.f32.mrf.mxu0
        %v7860 = vpop.f32.mrf.mxu0
        %v7861 = vadd.f32 %v7413, %v7860
        %v7862 = vpop.f32.mrf.mxu0
        %7863 = vmatprep.mubr.bf16.mxu0 %v7340
        %7864 = vmatmul.mubr.bf16.gmra.mxu0 %v7052
        %v7865 = vpop.f32.mrf.mxu0
        %v7866 = vadd.f32 %v7413, %v7865
        %v7867 = vpop.f32.mrf.mxu0
        %v7868 = vpop.f32.mrf.mxu0
        %v7869 = vadd.f32 %v7413, %v7868
        %v7870 = vpop.f32.mrf.mxu0
        %7871 = vmatprep.mubr.bf16.mxu0 %v7343
        %7872 = vmatmul.mubr.bf16.gmra.mxu0 %v7055
        %v7873 = vpop.f32.mrf.mxu0
        %v7874 = vadd.f32 %v7413, %v7873
        %v7875 = vpop.f32.mrf.mxu0
        %v7876 = vpop.f32.mrf.mxu0
        %v7877 = vadd.f32 %v7413, %v7876
        %v7878 = vpop.f32.mrf.mxu0
        %7879 = vmatprep.mubr.bf16.mxu0 %v7346
        %7880 = vmatmul.mubr.bf16.gmra.mxu0 %v7058
        %v7881 = vpop.f32.mrf.mxu0
        %v7882 = vadd.f32 %v7413, %v7881
        %v7883 = vpop.f32.mrf.mxu0
        %v7884 = vpop.f32.mrf.mxu0
        %v7885 = vadd.f32 %v7413, %v7884
        %v7886 = vpop.f32.mrf.mxu0
        %7887 = vmatprep.mubr.bf16.mxu0 %v7349
        %7888 = vmatmul.mubr.bf16.gmra.mxu0 %v7061
        %v7889 = vpop.f32.mrf.mxu0
        %v7890 = vadd.f32 %v7413, %v7889
        %v7891 = vpop.f32.mrf.mxu0
        %v7892 = vpop.f32.mrf.mxu0
        %v7893 = vadd.f32 %v7413, %v7892
        %v7894 = vpop.f32.mrf.mxu0
        %7895 = vmatprep.mubr.bf16.mxu0 %v7352
        %7896 = vmatmul.mubr.bf16.gmra.mxu0 %v7064
        %v7897 = vpop.f32.mrf.mxu0
        %v7898 = vadd.f32 %v7413, %v7897
        %v7899 = vpop.f32.mrf.mxu0
        %v7900 = vpop.f32.mrf.mxu0
        %v7901 = vadd.f32 %v7413, %v7900
        %v7902 = vpop.f32.mrf.mxu0
        %7903 = vmatprep.mubr.bf16.mxu0 %v7355
        %7904 = vmatmul.mubr.bf16.gmra.mxu0 %v7067
        %v7905 = vpop.f32.mrf.mxu0
        %v7906 = vadd.f32 %v7413, %v7905
        %v7907 = vpop.f32.mrf.mxu0
        %v7908 = vpop.f32.mrf.mxu0
        %v7909 = vadd.f32 %v7413, %v7908
        %v7910 = vpop.f32.mrf.mxu0
        %7911 = vmatprep.mubr.bf16.mxu0 %v7358
        %7912 = vmatmul.mubr.bf16.gmra.mxu0 %v7070
        %v7913 = vpop.f32.mrf.mxu0
        %v7914 = vadd.f32 %v7413, %v7913
        %v7915 = vpop.f32.mrf.mxu0
        %v7916 = vpop.f32.mrf.mxu0
        %v7917 = vadd.f32 %v7413, %v7916
        %v7918 = vpop.f32.mrf.mxu0
        %7919 = vmatprep.mubr.bf16.mxu0 %v7361
        %7920 = vmatmul.mubr.bf16.gmra.mxu0 %v7073
        %v7921 = vpop.f32.mrf.mxu0
        %v7922 = vadd.f32 %v7413, %v7921
        %v7923 = vpop.f32.mrf.mxu0
        %v7924 = vpop.f32.mrf.mxu0
        %v7925 = vadd.f32 %v7413, %v7924
        %v7926 = vpop.f32.mrf.mxu0
        %7927 = vmatprep.mubr.bf16.mxu0 %v7364
        %7928 = vmatmul.mubr.bf16.gmra.mxu0 %v7076
        %v7929 = vpop.f32.mrf.mxu0
        %v7930 = vadd.f32 %v7413, %v7929
        %v7931 = vpop.f32.mrf.mxu0
        %v7932 = vpop.f32.mrf.mxu0
        %v7933 = vadd.f32 %v7413, %v7932
        %v7934 = vpop.f32.mrf.mxu0
        %7935 = vmatprep.mubr.bf16.mxu0 %v7367
        %7936 = vmatmul.mubr.bf16.gmra.mxu0 %v7079
        %v7937 = vpop.f32.mrf.mxu0
        %v7938 = vadd.f32 %v7413, %v7937
        %v7939 = vpop.f32.mrf.mxu0
        %v7940 = vpop.f32.mrf.mxu0
        %v7941 = vadd.f32 %v7413, %v7940
        %v7942 = vpop.f32.mrf.mxu0
        %7943 = vmatprep.mubr.bf16.mxu0 %v7370
        %7944 = vmatmul.mubr.bf16.gmra.mxu0 %v7082
        %v7945 = vpop.f32.mrf.mxu0
        %v7946 = vadd.f32 %v7413, %v7945
        %v7947 = vpop.f32.mrf.mxu0
        %v7948 = vpop.f32.mrf.mxu0
        %v7949 = vadd.f32 %v7413, %v7948
        %v7950 = vpop.f32.mrf.mxu0
        %7951 = vdwg.mxu0
        %7952 = vmatprep.subr.bf16.mxu0 0
        %7953 = vmatpush1.bf16.msra.mxu0 0
        %7954 = vmatprep.subr.bf16.mxu0 0
        %7955 = vmatpush1.bf16.msra.mxu0 0
        %7956 = vmatprep.subr.bf16.mxu0 0
        %7957 = vmatpush1.bf16.msra.mxu0 0
        %7958 = vmatprep.subr.bf16.mxu0 0
        %7959 = vmatpush1.bf16.msra.mxu0 0
        %7960 = vmatprep.subr.bf16.mxu0 0
        %7961 = vmatpush1.bf16.msra.mxu0 0
        %7962 = vmatprep.subr.bf16.mxu0 0
        %7963 = vmatpush1.bf16.msra.mxu0 0
        %7964 = vmatprep.subr.bf16.mxu0 0
        %7965 = vmatpush1.bf16.msra.mxu0 %v7504
        %7966 = vmatprep.subr.bf16.mxu0 0
        %7967 = vmatpush1.bf16.msra.mxu0 %v7503
        %7968 = vmatprep.subr.bf16.mxu0 0
        %7969 = vmatpush2.bf16.msra.mxu0 0
        %7970 = vmatprep.subr.bf16.mxu0 0
        %7971 = vmatpush2.bf16.msra.mxu0 0
        %7972 = vmatprep.subr.bf16.mxu0 0
        %7973 = vmatpush2.bf16.msra.mxu0 0
        %7974 = vmatprep.subr.bf16.mxu0 0
        %7975 = vmatpush2.bf16.msra.mxu0 0
        %7976 = vmatprep.subr.bf16.mxu0 0
        %7977 = vmatpush2.bf16.msra.mxu0 0
        %7978 = vmatprep.subr.bf16.mxu0 0
        %7979 = vmatpush2.bf16.msra.mxu0 0
        %7980 = vmatprep.subr.bf16.mxu0 0
        %7981 = vmatpush2.bf16.msra.mxu0 0
        %7982 = vmatprep.subr.bf16.mxu0 0
        %7983 = vmatpush2.bf16.msra.mxu0 0
        %7984 = vmatprep.mubr.bf16.mxu0 0
        %7985 = vmatmul.mubr.bf16.gmra.mxu0 %v7524
        %v7986 = vpop.f32.mrf.mxu0
        %v7987 = vadd.f32 %v7666, %v7986
        %v7988 = vpop.f32.mrf.mxu0
        %v7989 = vpop.f32.mrf.mxu0
        %v7990 = vadd.f32 %v7669, %v7989
        %v7991 = vpop.f32.mrf.mxu0
        %7992 = vmatprep.mubr.bf16.mxu0 0
        %7993 = vmatmul.mubr.bf16.gmra.mxu0 %v7527
        %v7994 = vpop.f32.mrf.mxu0
        %v7995 = vadd.f32 %v7674, %v7994
        %v7996 = vpop.f32.mrf.mxu0
        %v7997 = vpop.f32.mrf.mxu0
        %v7998 = vadd.f32 %v7677, %v7997
        %v7999 = vpop.f32.mrf.mxu0
        %8000 = vmatprep.mubr.bf16.mxu0 0
        %8001 = vmatmul.mubr.bf16.gmra.mxu0 %v7530
        %v8002 = vpop.f32.mrf.mxu0
        %v8003 = vadd.f32 %v7682, %v8002
        %v8004 = vpop.f32.mrf.mxu0
        %v8005 = vpop.f32.mrf.mxu0
        %v8006 = vadd.f32 %v7685, %v8005
        %v8007 = vpop.f32.mrf.mxu0
        %8008 = vmatprep.mubr.bf16.mxu0 0
        %8009 = vmatmul.mubr.bf16.gmra.mxu0 %v7533
        %v8010 = vpop.f32.mrf.mxu0
        %v8011 = vadd.f32 %v7690, %v8010
        %v8012 = vpop.f32.mrf.mxu0
        %v8013 = vpop.f32.mrf.mxu0
        %v8014 = vadd.f32 %v7693, %v8013
        %v8015 = vpop.f32.mrf.mxu0
        %8016 = vmatprep.mubr.bf16.mxu0 0
        %8017 = vmatmul.mubr.bf16.gmra.mxu0 %v7536
        %v8018 = vpop.f32.mrf.mxu0
        %v8019 = vadd.f32 %v7698, %v8018
        %v8020 = vpop.f32.mrf.mxu0
        %v8021 = vpop.f32.mrf.mxu0
        %v8022 = vadd.f32 %v7701, %v8021
        %v8023 = vpop.f32.mrf.mxu0
        %8024 = vmatprep.mubr.bf16.mxu0 0
        %8025 = vmatmul.mubr.bf16.gmra.mxu0 %v7539
        %v8026 = vpop.f32.mrf.mxu0
        %v8027 = vadd.f32 %v7706, %v8026
        %v8028 = vpop.f32.mrf.mxu0
        %v8029 = vpop.f32.mrf.mxu0
        %v8030 = vadd.f32 %v7709, %v8029
        %v8031 = vpop.f32.mrf.mxu0
        %8032 = vmatprep.mubr.bf16.mxu0 0
        %8033 = vmatmul.mubr.bf16.gmra.mxu0 %v7542
        %v8034 = vpop.f32.mrf.mxu0
        %v8035 = vadd.f32 %v7714, %v8034
        %v8036 = vpop.f32.mrf.mxu0
        %v8037 = vpop.f32.mrf.mxu0
        %v8038 = vadd.f32 %v7717, %v8037
        %v8039 = vpop.f32.mrf.mxu0
        %8040 = vmatprep.mubr.bf16.mxu0 0
        %8041 = vmatmul.mubr.bf16.gmra.mxu0 %v7545
        %v8042 = vpop.f32.mrf.mxu0
        %v8043 = vadd.f32 %v7722, %v8042
        %v8044 = vpop.f32.mrf.mxu0
        %v8045 = vpop.f32.mrf.mxu0
        %v8046 = vadd.f32 %v7725, %v8045
        %v8047 = vpop.f32.mrf.mxu0
        %8048 = vmatprep.mubr.bf16.mxu0 0
        %8049 = vmatmul.mubr.bf16.gmra.mxu0 %v7548
        %v8050 = vpop.f32.mrf.mxu0
        %v8051 = vadd.f32 %v7730, %v8050
        %v8052 = vpop.f32.mrf.mxu0
        %v8053 = vpop.f32.mrf.mxu0
        %v8054 = vadd.f32 %v7733, %v8053
        %v8055 = vpop.f32.mrf.mxu0
        %8056 = vmatprep.mubr.bf16.mxu0 0
        %8057 = vmatmul.mubr.bf16.gmra.mxu0 %v7551
        %v8058 = vpop.f32.mrf.mxu0
        %v8059 = vadd.f32 %v7738, %v8058
        %v8060 = vpop.f32.mrf.mxu0
        %v8061 = vpop.f32.mrf.mxu0
        %v8062 = vadd.f32 %v7741, %v8061
        %v8063 = vpop.f32.mrf.mxu0
        %8064 = vmatprep.mubr.bf16.mxu0 0
        %8065 = vmatmul.mubr.bf16.gmra.mxu0 %v7554
        %v8066 = vpop.f32.mrf.mxu0
        %v8067 = vadd.f32 %v7746, %v8066
        %v8068 = vpop.f32.mrf.mxu0
        %v8069 = vpop.f32.mrf.mxu0
        %v8070 = vadd.f32 %v7749, %v8069
        %v8071 = vpop.f32.mrf.mxu0
        %8072 = vmatprep.mubr.bf16.mxu0 0
        %8073 = vmatmul.mubr.bf16.gmra.mxu0 %v7557
        %v8074 = vpop.f32.mrf.mxu0
        %v8075 = vadd.f32 %v7754, %v8074
        %v8076 = vpop.f32.mrf.mxu0
        %v8077 = vpop.f32.mrf.mxu0
        %v8078 = vadd.f32 %v7757, %v8077
        %v8079 = vpop.f32.mrf.mxu0
        %8080 = vmatprep.mubr.bf16.mxu0 0
        %8081 = vmatmul.mubr.bf16.gmra.mxu0 %v7560
        %v8082 = vpop.f32.mrf.mxu0
        %v8083 = vadd.f32 %v7762, %v8082
        %v8084 = vpop.f32.mrf.mxu0
        %v8085 = vpop.f32.mrf.mxu0
        %v8086 = vadd.f32 %v7765, %v8085
        %v8087 = vpop.f32.mrf.mxu0
        %8088 = vmatprep.mubr.bf16.mxu0 0
        %8089 = vmatmul.mubr.bf16.gmra.mxu0 %v7563
        %v8090 = vpop.f32.mrf.mxu0
        %v8091 = vadd.f32 %v7770, %v8090
        %v8092 = vpop.f32.mrf.mxu0
        %v8093 = vpop.f32.mrf.mxu0
        %v8094 = vadd.f32 %v7773, %v8093
        %v8095 = vpop.f32.mrf.mxu0
        %8096 = vmatprep.mubr.bf16.mxu0 0
        %8097 = vmatmul.mubr.bf16.gmra.mxu0 %v7566
        %v8098 = vpop.f32.mrf.mxu0
        %v8099 = vadd.f32 %v7778, %v8098
        %v8100 = vpop.f32.mrf.mxu0
        %v8101 = vpop.f32.mrf.mxu0
        %v8102 = vadd.f32 %v7781, %v8101
        %v8103 = vpop.f32.mrf.mxu0
        %8104 = vmatprep.mubr.bf16.mxu0 0
        %8105 = vmatmul.mubr.bf16.gmra.mxu0 %v7569
        %v8106 = vpop.f32.mrf.mxu0
        %v8107 = vadd.f32 %v7786, %v8106
        %v8108 = vpop.f32.mrf.mxu0
        %v8109 = vpop.f32.mrf.mxu0
        %v8110 = vadd.f32 %v7789, %v8109
        %v8111 = vpop.f32.mrf.mxu0
        %8112 = vmatprep.mubr.bf16.mxu0 0
        %8113 = vmatmul.mubr.bf16.gmra.mxu0 %v7572
        %v8114 = vpop.f32.mrf.mxu0
        %v8115 = vadd.f32 %v7794, %v8114
        %v8116 = vpop.f32.mrf.mxu0
        %v8117 = vpop.f32.mrf.mxu0
        %v8118 = vadd.f32 %v7797, %v8117
        %v8119 = vpop.f32.mrf.mxu0
        %8120 = vmatprep.mubr.bf16.mxu0 0
        %8121 = vmatmul.mubr.bf16.gmra.mxu0 %v7575
        %v8122 = vpop.f32.mrf.mxu0
        %v8123 = vadd.f32 %v7802, %v8122
        %v8124 = vpop.f32.mrf.mxu0
        %v8125 = vpop.f32.mrf.mxu0
        %v8126 = vadd.f32 %v7805, %v8125
        %v8127 = vpop.f32.mrf.mxu0
        %8128 = vmatprep.mubr.bf16.mxu0 0
        %8129 = vmatmul.mubr.bf16.gmra.mxu0 %v7578
        %v8130 = vpop.f32.mrf.mxu0
        %v8131 = vadd.f32 %v7810, %v8130
        %v8132 = vpop.f32.mrf.mxu0
        %v8133 = vpop.f32.mrf.mxu0
        %v8134 = vadd.f32 %v7813, %v8133
        %v8135 = vpop.f32.mrf.mxu0
        %8136 = vmatprep.mubr.bf16.mxu0 0
        %8137 = vmatmul.mubr.bf16.gmra.mxu0 %v7581
        %v8138 = vpop.f32.mrf.mxu0
        %v8139 = vadd.f32 %v7818, %v8138
        %v8140 = vpop.f32.mrf.mxu0
        %v8141 = vpop.f32.mrf.mxu0
        %v8142 = vadd.f32 %v7821, %v8141
        %v8143 = vpop.f32.mrf.mxu0
        %8144 = vmatprep.mubr.bf16.mxu0 0
        %8145 = vmatmul.mubr.bf16.gmra.mxu0 %v7584
        %v8146 = vpop.f32.mrf.mxu0
        %v8147 = vadd.f32 %v7826, %v8146
        %v8148 = vpop.f32.mrf.mxu0
        %v8149 = vpop.f32.mrf.mxu0
        %v8150 = vadd.f32 %v7829, %v8149
        %v8151 = vpop.f32.mrf.mxu0
        %8152 = vmatprep.mubr.bf16.mxu0 0
        %8153 = vmatmul.mubr.bf16.gmra.mxu0 %v7587
        %v8154 = vpop.f32.mrf.mxu0
        %v8155 = vadd.f32 %v7834, %v8154
        %v8156 = vpop.f32.mrf.mxu0
        %v8157 = vpop.f32.mrf.mxu0
        %v8158 = vadd.f32 %v7837, %v8157
        %v8159 = vpop.f32.mrf.mxu0
        %8160 = vmatprep.mubr.bf16.mxu0 0
        %8161 = vmatmul.mubr.bf16.gmra.mxu0 %v7590
        %v8162 = vpop.f32.mrf.mxu0
        %v8163 = vadd.f32 %v7842, %v8162
        %v8164 = vpop.f32.mrf.mxu0
        %v8165 = vpop.f32.mrf.mxu0
        %v8166 = vadd.f32 %v7845, %v8165
        %v8167 = vpop.f32.mrf.mxu0
        %8168 = vmatprep.mubr.bf16.mxu0 0
        %8169 = vmatmul.mubr.bf16.gmra.mxu0 %v7593
        %v8170 = vpop.f32.mrf.mxu0
        %v8171 = vadd.f32 %v7850, %v8170
        %v8172 = vpop.f32.mrf.mxu0
        %v8173 = vpop.f32.mrf.mxu0
        %v8174 = vadd.f32 %v7853, %v8173
        %v8175 = vpop.f32.mrf.mxu0
        %8176 = vmatprep.mubr.bf16.mxu0 0
        %8177 = vmatmul.mubr.bf16.gmra.mxu0 %v7596
        %v8178 = vpop.f32.mrf.mxu0
        %v8179 = vadd.f32 %v7858, %v8178
        %v8180 = vpop.f32.mrf.mxu0
        %v8181 = vpop.f32.mrf.mxu0
        %v8182 = vadd.f32 %v7861, %v8181
        %v8183 = vpop.f32.mrf.mxu0
        %8184 = vmatprep.mubr.bf16.mxu0 0
        %8185 = vmatmul.mubr.bf16.gmra.mxu0 %v7599
        %v8186 = vpop.f32.mrf.mxu0
        %v8187 = vadd.f32 %v7866, %v8186
        %v8188 = vpop.f32.mrf.mxu0
        %v8189 = vpop.f32.mrf.mxu0
        %v8190 = vadd.f32 %v7869, %v8189
        %v8191 = vpop.f32.mrf.mxu0
        %8192 = vmatprep.mubr.bf16.mxu0 0
        %8193 = vmatmul.mubr.bf16.gmra.mxu0 %v7602
        %v8194 = vpop.f32.mrf.mxu0
        %v8195 = vadd.f32 %v7874, %v8194
        %v8196 = vpop.f32.mrf.mxu0
        %v8197 = vpop.f32.mrf.mxu0
        %v8198 = vadd.f32 %v7877, %v8197
        %v8199 = vpop.f32.mrf.mxu0
        %8200 = vmatprep.mubr.bf16.mxu0 0
        %8201 = vmatmul.mubr.bf16.gmra.mxu0 %v7605
        %v8202 = vpop.f32.mrf.mxu0
        %v8203 = vadd.f32 %v7882, %v8202
        %v8204 = vpop.f32.mrf.mxu0
        %v8205 = vpop.f32.mrf.mxu0
        %v8206 = vadd.f32 %v7885, %v8205
        %v8207 = vpop.f32.mrf.mxu0
        %8208 = vmatprep.mubr.bf16.mxu0 0
        %8209 = vmatmul.mubr.bf16.gmra.mxu0 %v7608
        %v8210 = vpop.f32.mrf.mxu0
        %v8211 = vadd.f32 %v7890, %v8210
        %v8212 = vpop.f32.mrf.mxu0
        %v8213 = vpop.f32.mrf.mxu0
        %v8214 = vadd.f32 %v7893, %v8213
        %v8215 = vpop.f32.mrf.mxu0
        %8216 = vmatprep.mubr.bf16.mxu0 0
        %8217 = vmatmul.mubr.bf16.gmra.mxu0 %v7611
        %v8218 = vpop.f32.mrf.mxu0
        %v8219 = vadd.f32 %v7898, %v8218
        %v8220 = vpop.f32.mrf.mxu0
        %v8221 = vpop.f32.mrf.mxu0
        %v8222 = vadd.f32 %v7901, %v8221
        %v8223 = vpop.f32.mrf.mxu0
        %8224 = vmatprep.mubr.bf16.mxu0 0
        %8225 = vmatmul.mubr.bf16.gmra.mxu0 %v7614
        %v8226 = vpop.f32.mrf.mxu0
        %v8227 = vadd.f32 %v7906, %v8226
        %v8228 = vpop.f32.mrf.mxu0
        %v8229 = vpop.f32.mrf.mxu0
        %v8230 = vadd.f32 %v7909, %v8229
        %v8231 = vpop.f32.mrf.mxu0
        %8232 = vmatprep.mubr.bf16.mxu0 0
        %8233 = vmatmul.mubr.bf16.gmra.mxu0 %v7617
        %v8234 = vpop.f32.mrf.mxu0
        %v8235 = vadd.f32 %v7914, %v8234
        %v8236 = vpop.f32.mrf.mxu0
        %v8237 = vpop.f32.mrf.mxu0
        %v8238 = vadd.f32 %v7917, %v8237
        %v8239 = vpop.f32.mrf.mxu0
        %8240 = vmatprep.mubr.bf16.mxu0 0
        %8241 = vmatmul.mubr.bf16.gmra.mxu0 %v7620
        %v8242 = vpop.f32.mrf.mxu0
        %v8243 = vadd.f32 %v7922, %v8242
        %v8244 = vpop.f32.mrf.mxu0
        %v8245 = vpop.f32.mrf.mxu0
        %v8246 = vadd.f32 %v7925, %v8245
        %v8247 = vpop.f32.mrf.mxu0
        %8248 = vmatprep.mubr.bf16.mxu0 0
        %8249 = vmatmul.mubr.bf16.gmra.mxu0 %v7623
        %v8250 = vpop.f32.mrf.mxu0
        %v8251 = vadd.f32 %v7930, %v8250
        %v8252 = vpop.f32.mrf.mxu0
        %v8253 = vpop.f32.mrf.mxu0
        %v8254 = vadd.f32 %v7933, %v8253
        %v8255 = vpop.f32.mrf.mxu0
        %8256 = vmatprep.mubr.bf16.mxu0 0
        %8257 = vmatmul.mubr.bf16.gmra.mxu0 %v7626
        %v8258 = vpop.f32.mrf.mxu0
        %v8259 = vadd.f32 %v7938, %v8258
        %v8260 = vpop.f32.mrf.mxu0
        %v8261 = vpop.f32.mrf.mxu0
        %v8262 = vadd.f32 %v7941, %v8261
        %v8263 = vpop.f32.mrf.mxu0
        %8264 = vmatprep.mubr.bf16.mxu0 0
        %8265 = vmatmul.mubr.bf16.gmra.mxu0 %v7629
        %v8266 = vpop.f32.mrf.mxu0
        %v8267 = vadd.f32 %v7946, %v8266
        %v8268 = vpop.f32.mrf.mxu0
        %v8269 = vpop.f32.mrf.mxu0
        %v8270 = vadd.f32 %v7949, %v8269
        %v8271 = vpop.f32.mrf.mxu0
        %8272 = vdwg.mxu0
        %v8273 = vmul.f32 %v7987, 0.2
        %v8274 = vmul.f32 %v7990, 0.2
        %v8275 = vmul.f32 %v7995, 0.2
        %v8276 = vmul.f32 %v7998, 0.2
        %v8277 = vmul.f32 %v8003, 0.2
        %v8278 = vmul.f32 %v8006, 0.2
        %v8279 = vmul.f32 %v8011, 0.2
        %v8280 = vmul.f32 %v8014, 0.2
        %v8281 = vmul.f32 %v8019, 0.2
        %v8282 = vmul.f32 %v8022, 0.2
        %v8283 = vmul.f32 %v8027, 0.2
        %v8284 = vmul.f32 %v8030, 0.2
        %v8285 = vmul.f32 %v8035, 0.2
        %v8286 = vmul.f32 %v8038, 0.2
        %v8287 = vmul.f32 %v8043, 0.2
        %v8288 = vmul.f32 %v8046, 0.2
        %v8289 = vmul.f32 %v8051, 0.2
        %v8290 = vmul.f32 %v8054, 0.2
        %v8291 = vmul.f32 %v8059, 0.2
        %v8292 = vmul.f32 %v8062, 0.2
        %v8293 = vmul.f32 %v8067, 0.2
        %v8294 = vmul.f32 %v8070, 0.2
        %v8295 = vmul.f32 %v8075, 0.2
        %v8296 = vmul.f32 %v8078, 0.2
        %v8297 = vmul.f32 %v8083, 0.2
        %v8298 = vmul.f32 %v8086, 0.2
        %v8299 = vmul.f32 %v8091, 0.2
        %v8300 = vmul.f32 %v8094, 0.2
        %v8301 = vmul.f32 %v8099, 0.2
        %v8302 = vmul.f32 %v8102, 0.2
        %v8303 = vmul.f32 %v8107, 0.2
        %v8304 = vmul.f32 %v8110, 0.2
        %v8305 = vmul.f32 %v8115, 0.2
        %v8306 = vmul.f32 %v8118, 0.2
        %v8307 = vmul.f32 %v8123, 0.2
        %v8308 = vmul.f32 %v8126, 0.2
        %v8309 = vmul.f32 %v8131, 0.2
        %v8310 = vmul.f32 %v8134, 0.2
        %v8311 = vmul.f32 %v8139, 0.2
        %v8312 = vmul.f32 %v8142, 0.2
        %v8313 = vmul.f32 %v8147, 0.2
        %v8314 = vmul.f32 %v8150, 0.2
        %v8315 = vmul.f32 %v8155, 0.2
        %v8316 = vmul.f32 %v8158, 0.2
        %v8317 = vmul.f32 %v8163, 0.2
        %v8318 = vmul.f32 %v8166, 0.2
        %v8319 = vmul.f32 %v8171, 0.2
        %v8320 = vmul.f32 %v8174, 0.2
        %v8321 = vmul.f32 %v8179, 0.2
        %v8322 = vmul.f32 %v8182, 0.2
        %v8323 = vmul.f32 %v8187, 0.2
        %v8324 = vmul.f32 %v8190, 0.2
        %v8325 = vmul.f32 %v8195, 0.2
        %v8326 = vmul.f32 %v8198, 0.2
        %v8327 = vmul.f32 %v8203, 0.2
        %v8328 = vmul.f32 %v8206, 0.2
        %v8329 = vmul.f32 %v8211, 0.2
        %v8330 = vmul.f32 %v8214, 0.2
        %v8331 = vmul.f32 %v8219, 0.2
        %v8332 = vmul.f32 %v8222, 0.2
        %v8333 = vmul.f32 %v8227, 0.2
        %v8334 = vmul.f32 %v8230, 0.2
        %v8335 = vmul.f32 %v8235, 0.2
        %v8336 = vmul.f32 %v8238, 0.2
        %v8337 = vmul.f32 %v8243, 0.2
        %v8338 = vmul.f32 %v8246, 0.2
        %v8339 = vmul.f32 %v8251, 0.2
        %v8340 = vmul.f32 %v8254, 0.2
        %v8341 = vmul.f32 %v8259, 0.2
        %v8342 = vmul.f32 %v8262, 0.2
        %v8343 = vmul.f32 %v8267, 0.2
        %v8344 = vmul.f32 %v8270, 0.2
        %v8345 = vmax.f32 %v7987, %v8273
        %v8346 = vmax.f32 %v7990, %v8274
        %v8347 = vmax.f32 %v7995, %v8275
        %v8348 = vmax.f32 %v7998, %v8276
        %v8349 = vmax.f32 %v8003, %v8277
        %v8350 = vmax.f32 %v8006, %v8278
        %v8351 = vmax.f32 %v8011, %v8279
        %v8352 = vmax.f32 %v8014, %v8280
        %v8353 = vmax.f32 %v8019, %v8281
        %v8354 = vmax.f32 %v8022, %v8282
        %v8355 = vmax.f32 %v8027, %v8283
        %v8356 = vmax.f32 %v8030, %v8284
        %v8357 = vmax.f32 %v8035, %v8285
        %v8358 = vmax.f32 %v8038, %v8286
        %v8359 = vmax.f32 %v8043, %v8287
        %v8360 = vmax.f32 %v8046, %v8288
        %v8361 = vmax.f32 %v8051, %v8289
        %v8362 = vmax.f32 %v8054, %v8290
        %v8363 = vmax.f32 %v8059, %v8291
        %v8364 = vmax.f32 %v8062, %v8292
        %v8365 = vmax.f32 %v8067, %v8293
        %v8366 = vmax.f32 %v8070, %v8294
        %v8367 = vmax.f32 %v8075, %v8295
        %v8368 = vmax.f32 %v8078, %v8296
        %v8369 = vmax.f32 %v8083, %v8297
        %v8370 = vmax.f32 %v8086, %v8298
        %v8371 = vmax.f32 %v8091, %v8299
        %v8372 = vmax.f32 %v8094, %v8300
        %v8373 = vmax.f32 %v8099, %v8301
        %v8374 = vmax.f32 %v8102, %v8302
        %v8375 = vmax.f32 %v8107, %v8303
        %v8376 = vmax.f32 %v8110, %v8304
        %v8377 = vmax.f32 %v8115, %v8305
        %v8378 = vmax.f32 %v8118, %v8306
        %v8379 = vmax.f32 %v8123, %v8307
        %v8380 = vmax.f32 %v8126, %v8308
        %v8381 = vmax.f32 %v8131, %v8309
        %v8382 = vmax.f32 %v8134, %v8310
        %v8383 = vmax.f32 %v8139, %v8311
        %v8384 = vmax.f32 %v8142, %v8312
        %v8385 = vmax.f32 %v8147, %v8313
        %v8386 = vmax.f32 %v8150, %v8314
        %v8387 = vmax.f32 %v8155, %v8315
        %v8388 = vmax.f32 %v8158, %v8316
        %v8389 = vmax.f32 %v8163, %v8317
        %v8390 = vmax.f32 %v8166, %v8318
        %v8391 = vmax.f32 %v8171, %v8319
        %v8392 = vmax.f32 %v8174, %v8320
        %v8393 = vmax.f32 %v8179, %v8321
        %v8394 = vmax.f32 %v8182, %v8322
        %v8395 = vmax.f32 %v8187, %v8323
        %v8396 = vmax.f32 %v8190, %v8324
        %v8397 = vmax.f32 %v8195, %v8325
        %v8398 = vmax.f32 %v8198, %v8326
        %v8399 = vmax.f32 %v8203, %v8327
        %v8400 = vmax.f32 %v8206, %v8328
        %v8401 = vmax.f32 %v8211, %v8329
        %v8402 = vmax.f32 %v8214, %v8330
        %v8403 = vmax.f32 %v8219, %v8331
        %v8404 = vmax.f32 %v8222, %v8332
        %v8405 = vmax.f32 %v8227, %v8333
        %v8406 = vmax.f32 %v8230, %v8334
        %v8407 = vmax.f32 %v8235, %v8335
        %v8408 = vmax.f32 %v8238, %v8336
        %v8409 = vmax.f32 %v8243, %v8337
        %v8410 = vmax.f32 %v8246, %v8338
        %v8411 = vmax.f32 %v8251, %v8339
        %v8412 = vmax.f32 %v8254, %v8340
        %v8413 = vmax.f32 %v8259, %v8341
        %v8414 = vmax.f32 %v8262, %v8342
        %v8415 = vmax.f32 %v8267, %v8343
        %v8416 = vmax.f32 %v8270, %v8344
        %v8417 = vsel %vm6902, %v8345, 0.0
        %v8418 = vsel %vm6902, %v8346, 0.0
        %v8419 = vadd.f32 %v8417, %v8418
        %v8420 = vsel %vm6902, %v8347, 0.0
        %v8421 = vadd.f32 %v8419, %v8420
        %v8422 = vsel %vm6902, %v8348, 0.0
        %v8423 = vadd.f32 %v8421, %v8422
        %v8424 = vsel %vm6902, %v8349, 0.0
        %v8425 = vadd.f32 %v8423, %v8424
        %v8426 = vsel %vm6902, %v8350, 0.0
        %v8427 = vadd.f32 %v8425, %v8426
        %v8428 = vsel %vm6902, %v8351, 0.0
        %v8429 = vadd.f32 %v8427, %v8428
        %v8430 = vsel %vm6902, %v8352, 0.0
        %v8431 = vadd.f32 %v8429, %v8430
        %v8432 = vsel %vm6902, %v8353, 0.0
        %v8433 = vadd.f32 %v8431, %v8432
        %v8434 = vsel %vm6902, %v8354, 0.0
        %v8435 = vadd.f32 %v8433, %v8434
        %v8436 = vsel %vm6902, %v8355, 0.0
        %v8437 = vadd.f32 %v8435, %v8436
        %v8438 = vsel %vm6902, %v8356, 0.0
        %v8439 = vadd.f32 %v8437, %v8438
        %v8440 = vsel %vm6902, %v8357, 0.0
        %v8441 = vadd.f32 %v8439, %v8440
        %v8442 = vsel %vm6902, %v8358, 0.0
        %v8443 = vadd.f32 %v8441, %v8442
        %v8444 = vsel %vm6902, %v8359, 0.0
        %v8445 = vadd.f32 %v8443, %v8444
        %v8446 = vsel %vm6902, %v8360, 0.0
        %v8447 = vadd.f32 %v8445, %v8446
        %v8448 = vsel %vm6902, %v8361, 0.0
        %v8449 = vadd.f32 %v8447, %v8448
        %v8450 = vsel %vm6902, %v8362, 0.0
        %v8451 = vadd.f32 %v8449, %v8450
        %v8452 = vsel %vm6902, %v8363, 0.0
        %v8453 = vadd.f32 %v8451, %v8452
        %v8454 = vsel %vm6902, %v8364, 0.0
        %v8455 = vadd.f32 %v8453, %v8454
        %v8456 = vsel %vm6902, %v8365, 0.0
        %v8457 = vadd.f32 %v8455, %v8456
        %v8458 = vsel %vm6902, %v8366, 0.0
        %v8459 = vadd.f32 %v8457, %v8458
        %v8460 = vsel %vm6902, %v8367, 0.0
        %v8461 = vadd.f32 %v8459, %v8460
        %v8462 = vsel %vm6902, %v8368, 0.0
        %v8463 = vadd.f32 %v8461, %v8462
        %v8464 = vsel %vm6902, %v8369, 0.0
        %v8465 = vadd.f32 %v8463, %v8464
        %v8466 = vsel %vm6902, %v8370, 0.0
        %v8467 = vadd.f32 %v8465, %v8466
        %v8468 = vsel %vm6902, %v8371, 0.0
        %v8469 = vadd.f32 %v8467, %v8468
        %v8470 = vsel %vm6902, %v8372, 0.0
        %v8471 = vadd.f32 %v8469, %v8470
        %v8472 = vsel %vm6902, %v8373, 0.0
        %v8473 = vadd.f32 %v8471, %v8472
        %v8474 = vsel %vm6902, %v8374, 0.0
        %v8475 = vadd.f32 %v8473, %v8474
        %v8476 = vsel %vm6902, %v8375, 0.0
        %v8477 = vadd.f32 %v8475, %v8476
        %v8478 = vsel %vm6902, %v8376, 0.0
        %v8479 = vadd.f32 %v8477, %v8478
        %v8480 = vsel %vm6902, %v8377, 0.0
        %v8481 = vadd.f32 %v8479, %v8480
        %v8482 = vsel %vm6902, %v8378, 0.0
        %v8483 = vadd.f32 %v8481, %v8482
        %v8484 = vsel %vm6902, %v8379, 0.0
        %v8485 = vadd.f32 %v8483, %v8484
        %v8486 = vsel %vm6902, %v8380, 0.0
        %v8487 = vadd.f32 %v8485, %v8486
        %v8488 = vsel %vm6902, %v8381, 0.0
        %v8489 = vadd.f32 %v8487, %v8488
        %v8490 = vsel %vm6902, %v8382, 0.0
        %v8491 = vadd.f32 %v8489, %v8490
        %v8492 = vsel %vm6902, %v8383, 0.0
        %v8493 = vadd.f32 %v8491, %v8492
        %v8494 = vsel %vm6902, %v8384, 0.0
        %v8495 = vadd.f32 %v8493, %v8494
        %v8496 = vsel %vm6902, %v8385, 0.0
        %v8497 = vadd.f32 %v8495, %v8496
        %v8498 = vsel %vm6902, %v8386, 0.0
        %v8499 = vadd.f32 %v8497, %v8498
        %v8500 = vsel %vm6902, %v8387, 0.0
        %v8501 = vadd.f32 %v8499, %v8500
        %v8502 = vsel %vm6902, %v8388, 0.0
        %v8503 = vadd.f32 %v8501, %v8502
        %v8504 = vsel %vm6902, %v8389, 0.0
        %v8505 = vadd.f32 %v8503, %v8504
        %v8506 = vsel %vm6902, %v8390, 0.0
        %v8507 = vadd.f32 %v8505, %v8506
        %v8508 = vsel %vm6902, %v8391, 0.0
        %v8509 = vadd.f32 %v8507, %v8508
        %v8510 = vsel %vm6902, %v8392, 0.0
        %v8511 = vadd.f32 %v8509, %v8510
        %v8512 = vsel %vm6902, %v8393, 0.0
        %v8513 = vadd.f32 %v8511, %v8512
        %v8514 = vsel %vm6902, %v8394, 0.0
        %v8515 = vadd.f32 %v8513, %v8514
        %v8516 = vsel %vm6902, %v8395, 0.0
        %v8517 = vadd.f32 %v8515, %v8516
        %v8518 = vsel %vm6902, %v8396, 0.0
        %v8519 = vadd.f32 %v8517, %v8518
        %v8520 = vsel %vm6902, %v8397, 0.0
        %v8521 = vadd.f32 %v8519, %v8520
        %v8522 = vsel %vm6902, %v8398, 0.0
        %v8523 = vadd.f32 %v8521, %v8522
        %v8524 = vsel %vm6902, %v8399, 0.0
        %v8525 = vadd.f32 %v8523, %v8524
        %v8526 = vsel %vm6902, %v8400, 0.0
        %v8527 = vadd.f32 %v8525, %v8526
        %v8528 = vsel %vm6902, %v8401, 0.0
        %v8529 = vadd.f32 %v8527, %v8528
        %v8530 = vsel %vm6902, %v8402, 0.0
        %v8531 = vadd.f32 %v8529, %v8530
        %v8532 = vsel %vm6902, %v8403, 0.0
        %v8533 = vadd.f32 %v8531, %v8532
        %v8534 = vsel %vm6902, %v8404, 0.0
        %v8535 = vadd.f32 %v8533, %v8534
        %v8536 = vsel %vm6902, %v8405, 0.0
        %v8537 = vadd.f32 %v8535, %v8536
        %v8538 = vsel %vm6902, %v8406, 0.0
        %v8539 = vadd.f32 %v8537, %v8538
        %v8540 = vsel %vm6902, %v8407, 0.0
        %v8541 = vadd.f32 %v8539, %v8540
        %v8542 = vsel %vm6902, %v8408, 0.0
        %v8543 = vadd.f32 %v8541, %v8542
        %v8544 = vsel %vm6902, %v8409, 0.0
        %v8545 = vadd.f32 %v8543, %v8544
        %v8546 = vsel %vm6902, %v8410, 0.0
        %v8547 = vadd.f32 %v8545, %v8546
        %v8548 = vsel %vm6902, %v8411, 0.0
        %v8549 = vadd.f32 %v8547, %v8548
        %v8550 = vsel %vm6902, %v8412, 0.0
        %v8551 = vadd.f32 %v8549, %v8550
        %v8552 = vsel %vm6902, %v8413, 0.0
        %v8553 = vadd.f32 %v8551, %v8552
        %v8554 = vsel %vm6902, %v8414, 0.0
        %v8555 = vadd.f32 %v8553, %v8554
        %v8556 = vsel %vm6902, %v8415, 0.0
        %v8557 = vadd.f32 %v8555, %v8556
        %v8558 = vsel %vm6902, %v8416, 0.0
        %v8559 = vadd.f32 %v8557, %v8558
        %v8560 = vrot.slane %v8559, 4
        %v8561 = vadd.f32 %v8559, %v8560
        %v8562 = vrot.slane %v8561, 2
        %v8563 = vadd.f32 %v8561, %v8562
        %v8564 = vrot.slane %v8563, 1
        %v8565 = vadd.f32 %v8563, %v8564
        %v8566 = vrcp.pop 576.0
        %v8567 = vmul.f32 %v8565, %v8566
        %v8568 = vstv %s905
        %vm8569 = vcmp.eq.s32.totalorder %v328, %v8568
        %v8570 = vsel %vm8569, 1, 0
        %vm8571 = vcmp.eq.s32.totalorder %v8570, 1
        %v8572 = vsel %vm8571, %v8567, %v910
      $region57: #{classification_forward.1} parent=51 // loop_footer
        %s909 = sadd.s32 1, %s905
      $region58: #{classification_forward.1} parent=51 // loop_footer_branch
        %904 = sbr.rel target = $region54
      $region59: #{classification_forward.1} parent=51 // loop_exit
        _
      %v8573 = vld [vmem:[%s6] sm:$0xff]
      %v8574 = vld [vmem:[%s6 + $0x8] sm:$0xff]
      %v8575 = vld [vmem:[%s6 + $0x10] sm:$0xff]
      %v8576 = vld [vmem:[%s6 + $0x18] sm:$0xff]
      %v8577 = vld [vmem:[%s6 + $0x20] sm:$0xff]
      %v8578 = vld [vmem:[%s6 + $0x28] sm:$0xff]
      %v8579 = vld [vmem:[%s6 + $0x30] sm:$0xff]
      %v8580 = vld [vmem:[%s6 + $0x38] sm:$0xff]
      %v8581 = vld [vmem:[%s321] sm:$0xff]
      %vm8582 = vcmask 523264
      %v8584 = vsel %vm8582, %v910, 0
      %8586 = vmatprep.subr.mxu0 0.0
      %8587 = vmatpush1.msra.mxu0 0.0
      %8588 = vmatprep.subr.mxu0 0.0
      %8589 = vmatpush1.msra.mxu0 0.0
      %8590 = vmatprep.subr.mxu0 0.0
      %8591 = vmatpush1.msra.mxu0 0.0
      %8592 = vmatprep.subr.mxu0 0.0
      %8593 = vmatpush1.msra.mxu0 0.0
      %8594 = vmatprep.subr.mxu0 0.0
      %8595 = vmatpush1.msra.mxu0 0.0
      %8596 = vmatprep.subr.mxu0 0.0
      %8597 = vmatpush1.msra.mxu0 0.0
      %8598 = vmatprep.subr.mxu0 0.0
      %8599 = vmatpush1.msra.mxu0 0.0
      %8600 = vmatprep.subr.mxu0 0.0
      %8601 = vmatpush1.msra.mxu0 0.0
      %8602 = vmatprep.subr.mxu0 0.0
      %8603 = vmatpush1.msra.mxu0 %v8580
      %8604 = vmatprep.subr.mxu0 0.0
      %8605 = vmatpush1.msra.mxu0 %v8579
      %8606 = vmatprep.subr.mxu0 0.0
      %8607 = vmatpush1.msra.mxu0 %v8578
      %8608 = vmatprep.subr.mxu0 0.0
      %8609 = vmatpush1.msra.mxu0 %v8577
      %8610 = vmatprep.subr.mxu0 0.0
      %8611 = vmatpush1.msra.mxu0 %v8576
      %8612 = vmatprep.subr.mxu0 0.0
      %8613 = vmatpush1.msra.mxu0 %v8575
      %8614 = vmatprep.subr.mxu0 0.0
      %8615 = vmatpush1.msra.mxu0 %v8574
      %8616 = vmatprep.subr.mxu0 0.0
      %8617 = vmatpush1.msra.mxu0 %v8573
      %8618 = vmatprep.subr.mxu0 0.0
      %8619 = vmatpush2.msra.mxu0 0.0
      %8620 = vmatprep.subr.mxu0 0.0
      %8621 = vmatpush2.msra.mxu0 0.0
      %8622 = vmatprep.subr.mxu0 0.0
      %8623 = vmatpush2.msra.mxu0 0.0
      %8624 = vmatprep.subr.mxu0 0.0
      %8625 = vmatpush2.msra.mxu0 0.0
      %8626 = vmatprep.subr.mxu0 0.0
      %8627 = vmatpush2.msra.mxu0 0.0
      %8628 = vmatprep.subr.mxu0 0.0
      %8629 = vmatpush2.msra.mxu0 0.0
      %8630 = vmatprep.subr.mxu0 0.0
      %8631 = vmatpush2.msra.mxu0 0.0
      %8632 = vmatprep.subr.mxu0 0.0
      %8633 = vmatpush2.msra.mxu0 0.0
      %8634 = vmatprep.subr.mxu0 0.0
      %8635 = vmatpush2.msra.mxu0 0.0
      %8636 = vmatprep.subr.mxu0 0.0
      %8637 = vmatpush2.msra.mxu0 0.0
      %8638 = vmatprep.subr.mxu0 0.0
      %8639 = vmatpush2.msra.mxu0 0.0
      %8640 = vmatprep.subr.mxu0 0.0
      %8641 = vmatpush2.msra.mxu0 0.0
      %8642 = vmatprep.subr.mxu0 0.0
      %8643 = vmatpush2.msra.mxu0 0.0
      %8644 = vmatprep.subr.mxu0 0.0
      %8645 = vmatpush2.msra.mxu0 0.0
      %8646 = vmatprep.subr.mxu0 0.0
      %8647 = vmatpush2.msra.mxu0 0.0
      %8648 = vmatprep.subr.mxu0 0.0
      %8649 = vmatpush2.msra.mxu0 0.0
      %8650 = vmatprep.mubr.f32.mxu0 0.0
      %8651 = vmatmul.mubr.f32.gmra.mxu0 %v8584
      %v8652 = vpop.f32.mrf.mxu0
      %v8653 = vadd.f32 %v8581, %v8652
      %v8654 = vpop.f32.mrf.mxu0
      %8655 = vdwg.mxu0
      %v8656 = vmul.f32 %v8653, 0.2
      %v8657 = vmax.f32 %v8653, %v8656
      %v8658 = vld [vmem:[%s7] sm:$0xff]
      %v8659 = vld [vmem:[%s7 + $0x8] sm:$0xff]
      %v8660 = vld [vmem:[%s7 + $0x10] sm:$0xff]
      %v8661 = vld [vmem:[%s7 + $0x18] sm:$0xff]
      %v8662 = vld [vmem:[%s7 + $0x20] sm:$0xff]
      %v8663 = vld [vmem:[%s7 + $0x28] sm:$0xff]
      %v8664 = vld [vmem:[%s7 + $0x30] sm:$0xff]
      %v8665 = vld [vmem:[%s7 + $0x38] sm:$0xff]
      %v8666 = vld [vmem:[%s7 + $0x40] sm:$0xff]
      %v8667 = vld [vmem:[%s7 + $0x48] sm:$0xff]
      %v8668 = vld [vmem:[%s7 + $0x50] sm:$0xff]
      %v8669 = vld [vmem:[%s7 + $0x58] sm:$0xff]
      %v8670 = vld [vmem:[%s7 + $0x60] sm:$0xff]
      %v8671 = vld [vmem:[%s7 + $0x68] sm:$0xff]
      %v8672 = vld [vmem:[%s7 + $0x70] sm:$0xff]
      %v8673 = vld [vmem:[%s7 + $0x78] sm:$0xff]
      %8674 = vmatprep.subr.mxu0 0.0
      %8675 = vmatpush1.msra.mxu0 %v8673
      %8676 = vmatprep.subr.mxu0 0.0
      %8677 = vmatpush1.msra.mxu0 %v8672
      %8678 = vmatprep.subr.mxu0 0.0
      %8679 = vmatpush1.msra.mxu0 %v8671
      %8680 = vmatprep.subr.mxu0 0.0
      %8681 = vmatpush1.msra.mxu0 %v8670
      %8682 = vmatprep.subr.mxu0 0.0
      %8683 = vmatpush1.msra.mxu0 %v8669
      %8684 = vmatprep.subr.mxu0 0.0
      %8685 = vmatpush1.msra.mxu0 %v8668
      %8686 = vmatprep.subr.mxu0 0.0
      %8687 = vmatpush1.msra.mxu0 %v8667
      %8688 = vmatprep.subr.mxu0 0.0
      %8689 = vmatpush1.msra.mxu0 %v8666
      %8690 = vmatprep.subr.mxu0 0.0
      %8691 = vmatpush1.msra.mxu0 %v8665
      %8692 = vmatprep.subr.mxu0 0.0
      %8693 = vmatpush1.msra.mxu0 %v8664
      %8694 = vmatprep.subr.mxu0 0.0
      %8695 = vmatpush1.msra.mxu0 %v8663
      %8696 = vmatprep.subr.mxu0 0.0
      %8697 = vmatpush1.msra.mxu0 %v8662
      %8698 = vmatprep.subr.mxu0 0.0
      %8699 = vmatpush1.msra.mxu0 %v8661
      %8700 = vmatprep.subr.mxu0 0.0
      %8701 = vmatpush1.msra.mxu0 %v8660
      %8702 = vmatprep.subr.mxu0 0.0
      %8703 = vmatpush1.msra.mxu0 %v8659
      %8704 = vmatprep.subr.mxu0 0.0
      %8705 = vmatpush1.msra.mxu0 %v8658
      %8706 = vmatprep.subr.mxu0 0.0
      %8707 = vmatpush2.msra.mxu0 0.0
      %8708 = vmatprep.subr.mxu0 0.0
      %8709 = vmatpush2.msra.mxu0 0.0
      %8710 = vmatprep.subr.mxu0 0.0
      %8711 = vmatpush2.msra.mxu0 0.0
      %8712 = vmatprep.subr.mxu0 0.0
      %8713 = vmatpush2.msra.mxu0 0.0
      %8714 = vmatprep.subr.mxu0 0.0
      %8715 = vmatpush2.msra.mxu0 0.0
      %8716 = vmatprep.subr.mxu0 0.0
      %8717 = vmatpush2.msra.mxu0 0.0
      %8718 = vmatprep.subr.mxu0 0.0
      %8719 = vmatpush2.msra.mxu0 0.0
      %8720 = vmatprep.subr.mxu0 0.0
      %8721 = vmatpush2.msra.mxu0 0.0
      %8722 = vmatprep.subr.mxu0 0.0
      %8723 = vmatpush2.msra.mxu0 0.0
      %8724 = vmatprep.subr.mxu0 0.0
      %8725 = vmatpush2.msra.mxu0 0.0
      %8726 = vmatprep.subr.mxu0 0.0
      %8727 = vmatpush2.msra.mxu0 0.0
      %8728 = vmatprep.subr.mxu0 0.0
      %8729 = vmatpush2.msra.mxu0 0.0
      %8730 = vmatprep.subr.mxu0 0.0
      %8731 = vmatpush2.msra.mxu0 0.0
      %8732 = vmatprep.subr.mxu0 0.0
      %8733 = vmatpush2.msra.mxu0 0.0
      %8734 = vmatprep.subr.mxu0 0.0
      %8735 = vmatpush2.msra.mxu0 0.0
      %8736 = vmatprep.subr.mxu0 0.0
      %8737 = vmatpush2.msra.mxu0 0.0
      %8738 = vmatprep.mubr.f32.mxu0 0.0
      %8739 = vmatmul.mubr.f32.gmra.mxu0 %v8657
      %v8740 = vpop.f32.mrf.mxu0
      %v8741 = vadd.f32 0.0, %v8740
      %v8742 = vpop.f32.mrf.mxu0
      %8743 = vdwg.mxu0
      %8744 = vst [vmem:[%s325] sm:$0xff] %v8741
      %p8745 = scmp.lt.s32.totalorder %s19, 1
      %s8746 = scalar_select %p8745, %s19, 1
      %s8747 = smul.addr %s8746, 8
      %s8748 = scalar_lea.vmem %s8, %s8747
      // Predicated region
      $region60: #{classification_forward.1} parent=51 // pred_check
        %p8749 = pneg %p215
      $region61: #{classification_forward.1} parent=51 // pred_check_branch
        %8751 = sbr.rel (%p8749) target = $region63
      $region62: #{classification_forward.1} parent=51 // pred_region
        _
      $region63: #{classification_forward.1} parent=51 // pred_fallthru
        _
    $region52: #{classification_forward.1} parent=5 // pred_fallthru
      _
    %p8752 = scmp.le.s32.totalorder 2, %s14
    // Predicated region
    $region64: #{classification_forward.1} parent=5 // pred_check
      %p8753 = pneg %p8752
    $region65: #{classification_forward.1} parent=5 // pred_check_branch
      %8755 = sbr.rel (%p8753) target = $region67
    $region66: #{classification_forward.1} parent=5 // pred_region
      %s8756 = ssub.s32 %s14, 2
      // Predicated region
      $region68: #{classification_forward.1} parent=66 // pred_check
        %p8757 = pneg %p221
      $region69: #{classification_forward.1} parent=66 // pred_check_branch
        %8759 = sbr.rel (%p8757) target = $region71
      $region70: #{classification_forward.1} parent=66 // pred_region
        %p8760 = scmp.lt.s32.totalorder %s20, 1
        %s8761 = scalar_select %p8760, %s20, 1
        %s8762 = smul.addr %s8761, 8
        %s8763 = scalar_lea.vmem %s8, %s8762
      $region71: #{classification_forward.1} parent=66 // pred_fallthru
        _
    $region67: #{classification_forward.1} parent=5 // pred_fallthru
      _
  $region6: #{classification_forward.1} parent=0 // loop_footer
    %s18 = sadd.s32 1, %s14
  $region7: #{classification_forward.1} parent=0 // loop_footer_branch
    %13 = sbr.rel target = $region3
  $region8: #{classification_forward.1} parent=0 // loop_exit
    _

</llo_original>
